<compile_context>
chip_gen: v7x
topology: tpu7x:2x2x1
jax: 0.10.0
libtpu: 0.0.40
codegen_flags: <defaults>
</compile_context>

<pallas_src>
import jax
import jax.numpy as jnp
from jax.experimental import pallas as pl
from jax.experimental.pallas import tpu as pltpu

_PW = 32                 # padded height/width (28 + 2*2)
_S = _PW * _PW           # 1024 = flattened padded spatial size (8 lane tiles)
_OFF = 128               # zero margin on each side of the activation buffer
_BUF = _S + 2 * _OFF     # 1280


def _fused_forward_kernel(x_ref, w1_ref, b1_ref, w2_ref, b2_ref, w3_ref, b3_ref,
                          mask_ref, selx_ref, chmask_ref, fw1_ref, fb1_ref,
                          fw2_ref, fb2_ref, out_ref, abuf, icol, featbuf):
    """B images per grid step; activations are (C, 1024) lane-dense f32."""
    B = x_ref.shape[0]
    mask = mask_ref[...]                        # (1, 1024): 1 on the 28x28 interior
    w1 = w1_ref[...]; b1 = b1_ref[...]          # (4, 25) f32 / (4, 1) f32
    w2 = w2_ref[...]; b2 = b2_ref[...]          # (8, 100) bf16 / (8, 1) f32
    w3 = w3_ref[...]; b3 = b3_ref[...]          # (8, 200) bf16 / (8, 1) f32
    selx = selx_ref[...]                        # (1024, 64) bf16, one-hot anchors
    chmask = chmask_ref[...]                    # (8, 512) f32 block-diagonal mask

    # Keep the 128-lane margin bands zero (nothing else ever writes them; the
    # interior [_OFF, _OFF+_S) is fully rewritten for every image).
    abuf[:, 0:_OFF] = jnp.zeros((8, _OFF), jnp.float32)
    abuf[:, _OFF + _S:_BUF] = jnp.zeros((8, _OFF), jnp.float32)

    def tap_start(t):
        ky, kx = divmod(t, 5)
        return _OFF + (ky - 2) * _PW + (kx - 2)

    def conv1_vpu(wv, bv):
        # cin == 1: 25 broadcast multiply-adds on the VPU (f32, v5e friendly)
        acc = None
        for t in range(25):
            s = tap_start(t)
            p = wv[:, t:t + 1] * abuf[0:1, s:s + _S]        # (4,1)*(1,1024)
            acc = p if acc is None else acc + p
        return jnp.maximum(acc + bv, 0.0) * mask            # (4, 1024)

    def conv_mxu(cin, wv, bv):
        # stage the 25 shifted taps -> icol[0:25*cin], then ONE im2col matmul
        for t in range(25):
            s = tap_start(t)
            icol[t * cin:(t + 1) * cin, :] = abuf[0:cin, s:s + _S]
        a = icol[0:25 * cin, :].astype(jnp.bfloat16)         # (25*cin, 1024)
        acc = jnp.dot(wv, a, preferred_element_type=jnp.float32)   # (cout, 1024)
        # folded BN bias + ReLU; mask re-zeroes the 2-wide padding border
        return jnp.maximum(acc + bv, 0.0) * mask

    for b in range(B):
        abuf[0:1, _OFF:_OFF + _S] = x_ref[b:b + 1, :]        # padded input image
        abuf[0:4, _OFF:_OFF + _S] = conv1_vpu(w1, b1)        # conv1+bn1+relu
        abuf[0:8, _OFF:_OFF + _S] = conv_mxu(4, w2, b2)      # conv2+bn2+relu
        abuf[0:8, _OFF:_OFF + _S] = conv_mxu(8, w3, b3)      # conv3+bn3+relu

        # MaxPool(4,4): dense 4x4-neighbourhood max over the padded grid
        dense = None
        for i in range(4):
            for j in range(4):
                s = _OFF + i * _PW + j
                v = abuf[0:8, s:s + _S]
                dense = v if dense is None else jnp.maximum(dense, v)

        # pick the 49 window anchors (padded to 64 lanes) with ONE matmul,
        # then scatter channel c into lanes [c*64, (c+1)*64) of a (1,512) row
        p64 = jnp.dot(dense.astype(jnp.bfloat16), selx,
                      preferred_element_type=jnp.float32)    # (8, 64)
        p512 = jnp.tile(p64, (1, 8))                         # (8, 512)
        featbuf[b:b + 1, :] = jnp.sum(p512 * chmask, axis=0, keepdims=True)

    # fc1 (+ReLU) and fc2 as single batched bf16 matmuls with f32 accumulation
    h = jnp.dot(featbuf[...].astype(jnp.bfloat16), fw1_ref[...],
                preferred_element_type=jnp.float32) + fb1_ref[...]   # (B, 512)
    h = jnp.maximum(h, 0.0)
    # TODO(synk): F.dropout is identity in eval mode; training-mode dropout not implemented.
    logits = jnp.dot(h.astype(jnp.bfloat16), fw2_ref[...],
                     preferred_element_type=jnp.float32) + fb2_ref[...]  # (B, 128)
    out_ref[...] = logits                                    # cols >= 10 are junk/zero


def model_forward(params, x_nchw):
    """x_nchw: (N, 1, 28, 28) float32 -> logits (N, 10)."""
    N = x_nchw.shape[0]
    B = min(8, N)
    if N >= 2:
        B = min(B, max(1, N // 2))     # keep >= 2 grid steps (v7x megacore)
    G = -(-N // B)
    Npad = G * B

    xp = jnp.pad(x_nchw.astype(jnp.float32),
                 ((0, Npad - N), (0, 0), (2, 2), (2, 2)))    # zero 'same' padding
    xp = xp.reshape(G, B, _S)                                # (G, B, 1024)

    out = pl.pallas_call(
        _fused_forward_kernel,
        out_shape=jax.ShapeDtypeStruct((G, B, 128), jnp.float32),
        grid=(G,),
        in_specs=[
            pl.BlockSpec((None, B, _S), lambda g: (g, 0, 0)),   # padded images
            pl.BlockSpec((4, 25), lambda g: (0, 0)),            # conv1 W (f32, BN-folded)
            pl.BlockSpec((4, 1), lambda g: (0, 0)),             # conv1 folded bias
            pl.BlockSpec((8, 100), lambda g: (0, 0)),           # conv2 W (bf16, im2col)
            pl.BlockSpec((8, 1), lambda g: (0, 0)),             # conv2 folded bias
            pl.BlockSpec((8, 200), lambda g: (0, 0)),           # conv3 W (bf16, im2col)
            pl.BlockSpec((8, 1), lambda g: (0, 0)),             # conv3 folded bias
            pl.BlockSpec((1, _S), lambda g: (0, 0)),            # interior mask
            pl.BlockSpec((_S, 64), lambda g: (0, 0)),           # pool anchor selector
            pl.BlockSpec((8, 512), lambda g: (0, 0)),           # channel scatter mask
            pl.BlockSpec((512, 512), lambda g: (0, 0)),         # fc1 weight (bf16, padded)
            pl.BlockSpec((1, 512), lambda g: (0, 0)),           # fc1 bias (f32)
            pl.BlockSpec((512, 128), lambda g: (0, 0)),         # fc2 weight (bf16, padded)
            pl.BlockSpec((1, 128), lambda g: (0, 0)),           # fc2 bias (padded)
        ],
        out_specs=pl.BlockSpec((None, B, 128), lambda g: (g, 0, 0)),
        scratch_shapes=[pltpu.VMEM((8, _BUF), jnp.float32),     # margin activation buffer
                        pltpu.VMEM((25 * 8, _S), jnp.float32),  # im2col staging buffer
                        pltpu.VMEM((B, 512), jnp.float32)],     # pooled features (B,512)
        compiler_params=pltpu.CompilerParams(dimension_semantics=("parallel",)),
    )(xp, params['w1'], params['b1'], params['w2'], params['b2'],
      params['w3'], params['b3'], params['mask'], params['selx'], params['chmask'],
      params['fw1'], params['fb1'], params['fw2'], params['fb2'])
    return out.reshape(Npad, 128)[:N, :10]


# ---------------- parameter init (deterministic, synthetic) ----------------

def _conv_bn_params(keys, cin, cout, k=5, eps=1e-5, vpu_path=False):
    kw, kb, kg, kbe, km, kv = keys
    w = jax.random.normal(kw, (cout, cin, k, k), jnp.float32) / jnp.sqrt(k * k * cin)
    conv_b = 0.1 * jax.random.normal(kb, (cout,), jnp.float32)
    gamma = 1.0 + 0.1 * jax.random.normal(kg, (cout,), jnp.float32)
    beta = 0.1 * jax.random.normal(kbe, (cout,), jnp.float32)
    run_mean = 0.1 * jax.random.normal(km, (cout,), jnp.float32)
    run_var = 1.0 + 0.1 * jnp.abs(jax.random.normal(kv, (cout,), jnp.float32))
    # fold BatchNorm (eval / running stats) + conv bias: scale into W, rest into bias
    scale = gamma / jnp.sqrt(run_var + eps)                   # (cout,)
    bias = beta + scale * (conv_b - run_mean)                 # (cout,)
    w_scaled = w * scale[:, None, None, None]
    # (cout,cin,ky,kx) -> (cout,ky,kx,cin) -> (cout, 25*cin): im2col column t*cin+ci
    w_packed = jnp.transpose(w_scaled, (0, 2, 3, 1)).reshape(cout, k * k * cin)
    dt = jnp.float32 if vpu_path else jnp.bfloat16
    return w_packed.astype(dt), bias.reshape(cout, 1)


def init_params(key):
    ks = jax.random.split(key, 24)
    p = {}
    p['w1'], p['b1'] = _conv_bn_params(ks[0:6], 1, 4, vpu_path=True)
    p['w2'], p['b2'] = _conv_bn_params(ks[6:12], 4, 8)
    p['w3'], p['b3'] = _conv_bn_params(ks[12:18], 8, 8)

    # fc1: input-major (392, 512); feature index c*49 + py*7 + px; re-indexed to
    # the kernel's padded layout c*64 + j (zero rows for the 15 pad positions).
    fw1 = jax.random.normal(ks[18], (392, 512), jnp.float32) / jnp.sqrt(392.0)
    fw1 = jnp.pad(fw1.reshape(8, 49, 512), ((0, 0), (0, 15), (0, 0)))
    p['fw1'] = fw1.reshape(512, 512).astype(jnp.bfloat16)
    p['fb1'] = (0.1 * jax.random.normal(ks[19], (512,), jnp.float32)).reshape(1, 512)

    fw2 = jax.random.normal(ks[20], (512, 10), jnp.float32) / jnp.sqrt(512.0)
    p['fw2'] = jnp.pad(fw2, ((0, 0), (0, 118))).astype(jnp.bfloat16)     # (512, 128)
    fb2 = 0.1 * jax.random.normal(ks[21], (10,), jnp.float32)
    p['fb2'] = jnp.pad(fb2, (0, 118)).reshape(1, 128)

    # interior mask over the padded 32x32 grid (zero on the 2-wide border)
    e = (jnp.arange(_PW) >= 2) & (jnp.arange(_PW) < 30)
    p['mask'] = (e[:, None] & e[None, :]).astype(jnp.float32).reshape(1, _S)

    # anchor selector: column j = py*7+px is one-hot at spatial (2+4py, 2+4px)
    py, px = jnp.meshgrid(jnp.arange(7), jnp.arange(7), indexing='ij')
    anchors = ((2 + 4 * py) * _PW + (2 + 4 * px)).reshape(49)
    sel = jnp.zeros((_S, 64), jnp.float32).at[anchors, jnp.arange(49)].set(1.0)
    p['selx'] = sel.astype(jnp.bfloat16)

    # channel scatter mask: row c keeps lanes [c*64, (c+1)*64)
    lane = jnp.arange(512)
    p['chmask'] = (lane[None, :] // 64 == jnp.arange(8)[:, None]).astype(jnp.float32)
    return p


if __name__ == "__main__":
    key = jax.random.PRNGKey(0)
    k_param, k_x = jax.random.split(key)
    params = init_params(k_param)
    # MNIST-like input implied by fc1's 28*28//16*8 = 392 input features
    x = jax.random.normal(k_x, (2, 1, 28, 28), jnp.float32)

    out = jax.jit(model_forward)(params, x)
    out = jax.block_until_ready(out)
    assert out.shape == (2, 10) and out.dtype == jnp.float32
    print("KERNEL_OK")
</pallas_src>

<mosaic_0001>
module attributes {stable_mosaic.version = 11 : i64} {
  func.func @_fused_forward_kernel(%arg0: i32, %arg1: memref<1x1x1024xf32, #tpu.memory_space<vmem>>, %arg2: memref<4x25xf32, #tpu.memory_space<vmem>>, %arg3: memref<4x1xf32, #tpu.memory_space<vmem>>, %arg4: memref<8x100xbf16, #tpu.memory_space<vmem>>, %arg5: memref<8x1xf32, #tpu.memory_space<vmem>>, %arg6: memref<8x200xbf16, #tpu.memory_space<vmem>>, %arg7: memref<8x1xf32, #tpu.memory_space<vmem>>, %arg8: memref<1x1024xf32, #tpu.memory_space<vmem>>, %arg9: memref<1024x64xbf16, #tpu.memory_space<vmem>>, %arg10: memref<8x512xf32, #tpu.memory_space<vmem>>, %arg11: memref<512x512xbf16, #tpu.memory_space<vmem>>, %arg12: memref<1x512xf32, #tpu.memory_space<vmem>>, %arg13: memref<512x128xbf16, #tpu.memory_space<vmem>>, %arg14: memref<1x128xf32, #tpu.memory_space<vmem>>, %arg15: memref<1x1x128xf32, #tpu.memory_space<vmem>>, %arg16: memref<8x1280xf32, #tpu.memory_space<vmem>>, %arg17: memref<200x1024xf32, #tpu.memory_space<vmem>>, %arg18: memref<1x512xf32, #tpu.memory_space<vmem>>) attributes {dimension_semantics = [#tpu.dimension_semantics<parallel>], iteration_bounds = array<i64: 2>, scalar_prefetch = 0 : i64, scratch_operands = 3 : i64, tpu.core_type = #tpu.core_type<tc>, window_params = [{transform_indices = @transform_0, window_bounds = array<i64: 1, 1, 1024>}, {pipeline_mode = #tpu.pipeline_mode<synchronous>, transform_indices = @transform_1, window_bounds = array<i64: 4, 25>}, {pipeline_mode = #tpu.pipeline_mode<synchronous>, transform_indices = @transform_2, window_bounds = array<i64: 4, 1>}, {pipeline_mode = #tpu.pipeline_mode<synchronous>, transform_indices = @transform_3, window_bounds = array<i64: 8, 100>}, {pipeline_mode = #tpu.pipeline_mode<synchronous>, transform_indices = @transform_4, window_bounds = array<i64: 8, 1>}, {pipeline_mode = #tpu.pipeline_mode<synchronous>, transform_indices = @transform_5, window_bounds = array<i64: 8, 200>}, {pipeline_mode = #tpu.pipeline_mode<synchronous>, transform_indices = @transform_6, window_bounds = array<i64: 8, 1>}, {pipeline_mode = #tpu.pipeline_mode<synchronous>, transform_indices = @transform_7, window_bounds = array<i64: 1, 1024>}, {pipeline_mode = #tpu.pipeline_mode<synchronous>, transform_indices = @transform_8, window_bounds = array<i64: 1024, 64>}, {pipeline_mode = #tpu.pipeline_mode<synchronous>, transform_indices = @transform_9, window_bounds = array<i64: 8, 512>}, {pipeline_mode = #tpu.pipeline_mode<synchronous>, transform_indices = @transform_10, window_bounds = array<i64: 512, 512>}, {pipeline_mode = #tpu.pipeline_mode<synchronous>, transform_indices = @transform_11, window_bounds = array<i64: 1, 512>}, {pipeline_mode = #tpu.pipeline_mode<synchronous>, transform_indices = @transform_12, window_bounds = array<i64: 512, 128>}, {pipeline_mode = #tpu.pipeline_mode<synchronous>, transform_indices = @transform_13, window_bounds = array<i64: 1, 128>}, {transform_indices = @transform_14, window_bounds = array<i64: 1, 1, 128>}]} {
    %c0 = arith.constant 0 : index
    %c0_0 = arith.constant 0 : index
    %0 = vector.load %arg8[%c0, %c0_0] : memref<1x1024xf32, #tpu.memory_space<vmem>>, vector<1x1024xf32>
    %c0_1 = arith.constant 0 : index
    %c0_2 = arith.constant 0 : index
    %1 = vector.load %arg2[%c0_1, %c0_2] : memref<4x25xf32, #tpu.memory_space<vmem>>, vector<4x25xf32>
    %c0_3 = arith.constant 0 : index
    %c0_4 = arith.constant 0 : index
    %2 = vector.load %arg3[%c0_3, %c0_4] : memref<4x1xf32, #tpu.memory_space<vmem>>, vector<4x1xf32>
    %c0_5 = arith.constant 0 : index
    %c0_6 = arith.constant 0 : index
    %3 = vector.load %arg4[%c0_5, %c0_6] : memref<8x100xbf16, #tpu.memory_space<vmem>>, vector<8x100xbf16>
    %c0_7 = arith.constant 0 : index
    %c0_8 = arith.constant 0 : index
    %4 = vector.load %arg5[%c0_7, %c0_8] : memref<8x1xf32, #tpu.memory_space<vmem>>, vector<8x1xf32>
    %c0_9 = arith.constant 0 : index
    %c0_10 = arith.constant 0 : index
    %5 = vector.load %arg6[%c0_9, %c0_10] : memref<8x200xbf16, #tpu.memory_space<vmem>>, vector<8x200xbf16>
    %c0_11 = arith.constant 0 : index
    %c0_12 = arith.constant 0 : index
    %6 = vector.load %arg7[%c0_11, %c0_12] : memref<8x1xf32, #tpu.memory_space<vmem>>, vector<8x1xf32>
    %c0_13 = arith.constant 0 : index
    %c0_14 = arith.constant 0 : index
    %7 = vector.load %arg9[%c0_13, %c0_14] : memref<1024x64xbf16, #tpu.memory_space<vmem>>, vector<1024x64xbf16>
    %c0_15 = arith.constant 0 : index
    %c0_16 = arith.constant 0 : index
    %8 = vector.load %arg10[%c0_15, %c0_16] : memref<8x512xf32, #tpu.memory_space<vmem>>, vector<8x512xf32>
    %cst = arith.constant 0.000000e+00 : f32
    %9 = vector.broadcast %cst : f32 to vector<8x128xf32>
    %c0_17 = arith.constant 0 : index
    %c0_18 = arith.constant 0 : index
    %10 = vector.load %arg16[%c0_17, %c0_18] : memref<8x1280xf32, #tpu.memory_space<vmem>>, vector<8x128xf32>
    tpu.vector_store %arg16[%c0_17, %c0_18], %9 {strides = array<i32>} : memref<8x1280xf32, #tpu.memory_space<vmem>>, vector<8x128xf32>,
    %cst_19 = arith.constant 0.000000e+00 : f32
    %11 = vector.broadcast %cst_19 : f32 to vector<8x128xf32>
    %c0_20 = arith.constant 0 : index
    %c1152 = arith.constant 1152 : index
    %12 = vector.load %arg16[%c0_20, %c1152] : memref<8x1280xf32, #tpu.memory_space<vmem>>, vector<8x128xf32>
    tpu.vector_store %arg16[%c0_20, %c1152], %11 {strides = array<i32>} : memref<8x1280xf32, #tpu.memory_space<vmem>>, vector<8x128xf32>,
    %c0_21 = arith.constant 0 : index
    %c0_22 = arith.constant 0 : index
    %c0_23 = arith.constant 0 : index
    %13 = vector.load %arg1[%c0_21, %c0_22, %c0_23] : memref<1x1x1024xf32, #tpu.memory_space<vmem>>, vector<1x1x1024xf32>
    %14 = vector.shape_cast %13 : vector<1x1x1024xf32> to vector<1x1024xf32>
    %c0_24 = arith.constant 0 : index
    %c128 = arith.constant 128 : index
    %15 = vector.load %arg16[%c0_24, %c128] : memref<8x1280xf32, #tpu.memory_space<vmem>>, vector<1x1024xf32>
    tpu.vector_store %arg16[%c0_24, %c128], %14 {strides = array<i32>} : memref<8x1280xf32, #tpu.memory_space<vmem>>, vector<1x1024xf32>,
    %16 = vector.extract_strided_slice %1 {offsets = [0, 0], sizes = [4, 1], strides = [1, 1]} : vector<4x25xf32> to vector<4x1xf32>
    %c0_25 = arith.constant 0 : index
    %c62 = arith.constant 62 : index
    %17 = vector.load %arg16[%c0_25, %c62] : memref<8x1280xf32, #tpu.memory_space<vmem>>, vector<1x1024xf32>
    %18 = vector.broadcast %16 : vector<4x1xf32> to vector<4x1024xf32>
    %19 = vector.broadcast %17 : vector<1x1024xf32> to vector<4x1024xf32>
    %20 = arith.mulf %18, %19 : vector<4x1024xf32>
    %21 = vector.extract_strided_slice %1 {offsets = [0, 1], sizes = [4, 1], strides = [1, 1]} : vector<4x25xf32> to vector<4x1xf32>
    %c0_26 = arith.constant 0 : index
    %c63 = arith.constant 63 : index
    %22 = vector.load %arg16[%c0_26, %c63] : memref<8x1280xf32, #tpu.memory_space<vmem>>, vector<1x1024xf32>
    %23 = vector.broadcast %21 : vector<4x1xf32> to vector<4x1024xf32>
    %24 = vector.broadcast %22 : vector<1x1024xf32> to vector<4x1024xf32>
    %25 = arith.mulf %23, %24 : vector<4x1024xf32>
    %26 = arith.addf %20, %25 : vector<4x1024xf32>
    %27 = vector.extract_strided_slice %1 {offsets = [0, 2], sizes = [4, 1], strides = [1, 1]} : vector<4x25xf32> to vector<4x1xf32>
    %c0_27 = arith.constant 0 : index
    %c64 = arith.constant 64 : index
    %28 = vector.load %arg16[%c0_27, %c64] : memref<8x1280xf32, #tpu.memory_space<vmem>>, vector<1x1024xf32>
    %29 = vector.broadcast %27 : vector<4x1xf32> to vector<4x1024xf32>
    %30 = vector.broadcast %28 : vector<1x1024xf32> to vector<4x1024xf32>
    %31 = arith.mulf %29, %30 : vector<4x1024xf32>
    %32 = arith.addf %26, %31 : vector<4x1024xf32>
    %33 = vector.extract_strided_slice %1 {offsets = [0, 3], sizes = [4, 1], strides = [1, 1]} : vector<4x25xf32> to vector<4x1xf32>
    %c0_28 = arith.constant 0 : index
    %c65 = arith.constant 65 : index
    %34 = vector.load %arg16[%c0_28, %c65] : memref<8x1280xf32, #tpu.memory_space<vmem>>, vector<1x1024xf32>
    %35 = vector.broadcast %33 : vector<4x1xf32> to vector<4x1024xf32>
    %36 = vector.broadcast %34 : vector<1x1024xf32> to vector<4x1024xf32>
    %37 = arith.mulf %35, %36 : vector<4x1024xf32>
    %38 = arith.addf %32, %37 : vector<4x1024xf32>
    %39 = vector.extract_strided_slice %1 {offsets = [0, 4], sizes = [4, 1], strides = [1, 1]} : vector<4x25xf32> to vector<4x1xf32>
    %c0_29 = arith.constant 0 : index
    %c66 = arith.constant 66 : index
    %40 = vector.load %arg16[%c0_29, %c66] : memref<8x1280xf32, #tpu.memory_space<vmem>>, vector<1x1024xf32>
    %41 = vector.broadcast %39 : vector<4x1xf32> to vector<4x1024xf32>
    %42 = vector.broadcast %40 : vector<1x1024xf32> to vector<4x1024xf32>
    %43 = arith.mulf %41, %42 : vector<4x1024xf32>
    %44 = arith.addf %38, %43 : vector<4x1024xf32>
    %45 = vector.extract_strided_slice %1 {offsets = [0, 5], sizes = [4, 1], strides = [1, 1]} : vector<4x25xf32> to vector<4x1xf32>
    %c0_30 = arith.constant 0 : index
    %c94 = arith.constant 94 : index
    %46 = vector.load %arg16[%c0_30, %c94] : memref<8x1280xf32, #tpu.memory_space<vmem>>, vector<1x1024xf32>
    %47 = vector.broadcast %45 : vector<4x1xf32> to vector<4x1024xf32>
    %48 = vector.broadcast %46 : vector<1x1024xf32> to vector<4x1024xf32>
    %49 = arith.mulf %47, %48 : vector<4x1024xf32>
    %50 = arith.addf %44, %49 : vector<4x1024xf32>
    %51 = vector.extract_strided_slice %1 {offsets = [0, 6], sizes = [4, 1], strides = [1, 1]} : vector<4x25xf32> to vector<4x1xf32>
    %c0_31 = arith.constant 0 : index
    %c95 = arith.constant 95 : index
    %52 = vector.load %arg16[%c0_31, %c95] : memref<8x1280xf32, #tpu.memory_space<vmem>>, vector<1x1024xf32>
    %53 = vector.broadcast %51 : vector<4x1xf32> to vector<4x1024xf32>
    %54 = vector.broadcast %52 : vector<1x1024xf32> to vector<4x1024xf32>
    %55 = arith.mulf %53, %54 : vector<4x1024xf32>
    %56 = arith.addf %50, %55 : vector<4x1024xf32>
    %57 = vector.extract_strided_slice %1 {offsets = [0, 7], sizes = [4, 1], strides = [1, 1]} : vector<4x25xf32> to vector<4x1xf32>
    %c0_32 = arith.constant 0 : index
    %c96 = arith.constant 96 : index
    %58 = vector.load %arg16[%c0_32, %c96] : memref<8x1280xf32, #tpu.memory_space<vmem>>, vector<1x1024xf32>
    %59 = vector.broadcast %57 : vector<4x1xf32> to vector<4x1024xf32>
    %60 = vector.broadcast %58 : vector<1x1024xf32> to vector<4x1024xf32>
    %61 = arith.mulf %59, %60 : vector<4x1024xf32>
    %62 = arith.addf %56, %61 : vector<4x1024xf32>
    %63 = vector.extract_strided_slice %1 {offsets = [0, 8], sizes = [4, 1], strides = [1, 1]} : vector<4x25xf32> to vector<4x1xf32>
    %c0_33 = arith.constant 0 : index
    %c97 = arith.constant 97 : index
    %64 = vector.load %arg16[%c0_33, %c97] : memref<8x1280xf32, #tpu.memory_space<vmem>>, vector<1x1024xf32>
    %65 = vector.broadcast %63 : vector<4x1xf32> to vector<4x1024xf32>
    %66 = vector.broadcast %64 : vector<1x1024xf32> to vector<4x1024xf32>
    %67 = arith.mulf %65, %66 : vector<4x1024xf32>
    %68 = arith.addf %62, %67 : vector<4x1024xf32>
    %69 = vector.extract_strided_slice %1 {offsets = [0, 9], sizes = [4, 1], strides = [1, 1]} : vector<4x25xf32> to vector<4x1xf32>
    %c0_34 = arith.constant 0 : index
    %c98 = arith.constant 98 : index
    %70 = vector.load %arg16[%c0_34, %c98] : memref<8x1280xf32, #tpu.memory_space<vmem>>, vector<1x1024xf32>
    %71 = vector.broadcast %69 : vector<4x1xf32> to vector<4x1024xf32>
    %72 = vector.broadcast %70 : vector<1x1024xf32> to vector<4x1024xf32>
    %73 = arith.mulf %71, %72 : vector<4x1024xf32>
    %74 = arith.addf %68, %73 : vector<4x1024xf32>
    %75 = vector.extract_strided_slice %1 {offsets = [0, 10], sizes = [4, 1], strides = [1, 1]} : vector<4x25xf32> to vector<4x1xf32>
    %c0_35 = arith.constant 0 : index
    %c126 = arith.constant 126 : index
    %76 = vector.load %arg16[%c0_35, %c126] : memref<8x1280xf32, #tpu.memory_space<vmem>>, vector<1x1024xf32>
    %77 = vector.broadcast %75 : vector<4x1xf32> to vector<4x1024xf32>
    %78 = vector.broadcast %76 : vector<1x1024xf32> to vector<4x1024xf32>
    %79 = arith.mulf %77, %78 : vector<4x1024xf32>
    %80 = arith.addf %74, %79 : vector<4x1024xf32>
    %81 = vector.extract_strided_slice %1 {offsets = [0, 11], sizes = [4, 1], strides = [1, 1]} : vector<4x25xf32> to vector<4x1xf32>
    %c0_36 = arith.constant 0 : index
    %c127 = arith.constant 127 : index
    %82 = vector.load %arg16[%c0_36, %c127] : memref<8x1280xf32, #tpu.memory_space<vmem>>, vector<1x1024xf32>
    %83 = vector.broadcast %81 : vector<4x1xf32> to vector<4x1024xf32>
    %84 = vector.broadcast %82 : vector<1x1024xf32> to vector<4x1024xf32>
    %85 = arith.mulf %83, %84 : vector<4x1024xf32>
    %86 = arith.addf %80, %85 : vector<4x1024xf32>
    %87 = vector.extract_strided_slice %1 {offsets = [0, 12], sizes = [4, 1], strides = [1, 1]} : vector<4x25xf32> to vector<4x1xf32>
    %c0_37 = arith.constant 0 : index
    %c128_38 = arith.constant 128 : index
    %88 = vector.load %arg16[%c0_37, %c128_38] : memref<8x1280xf32, #tpu.memory_space<vmem>>, vector<1x1024xf32>
    %89 = vector.broadcast %87 : vector<4x1xf32> to vector<4x1024xf32>
    %90 = vector.broadcast %88 : vector<1x1024xf32> to vector<4x1024xf32>
    %91 = arith.mulf %89, %90 : vector<4x1024xf32>
    %92 = arith.addf %86, %91 : vector<4x1024xf32>
    %93 = vector.extract_strided_slice %1 {offsets = [0, 13], sizes = [4, 1], strides = [1, 1]} : vector<4x25xf32> to vector<4x1xf32>
    %c0_39 = arith.constant 0 : index
    %c129 = arith.constant 129 : index
    %94 = vector.load %arg16[%c0_39, %c129] : memref<8x1280xf32, #tpu.memory_space<vmem>>, vector<1x1024xf32>
    %95 = vector.broadcast %93 : vector<4x1xf32> to vector<4x1024xf32>
    %96 = vector.broadcast %94 : vector<1x1024xf32> to vector<4x1024xf32>
    %97 = arith.mulf %95, %96 : vector<4x1024xf32>
    %98 = arith.addf %92, %97 : vector<4x1024xf32>
    %99 = vector.extract_strided_slice %1 {offsets = [0, 14], sizes = [4, 1], strides = [1, 1]} : vector<4x25xf32> to vector<4x1xf32>
    %c0_40 = arith.constant 0 : index
    %c130 = arith.constant 130 : index
    %100 = vector.load %arg16[%c0_40, %c130] : memref<8x1280xf32, #tpu.memory_space<vmem>>, vector<1x1024xf32>
    %101 = vector.broadcast %99 : vector<4x1xf32> to vector<4x1024xf32>
    %102 = vector.broadcast %100 : vector<1x1024xf32> to vector<4x1024xf32>
    %103 = arith.mulf %101, %102 : vector<4x1024xf32>
    %104 = arith.addf %98, %103 : vector<4x1024xf32>
    %105 = vector.extract_strided_slice %1 {offsets = [0, 15], sizes = [4, 1], strides = [1, 1]} : vector<4x25xf32> to vector<4x1xf32>
    %c0_41 = arith.constant 0 : index
    %c158 = arith.constant 158 : index
    %106 = vector.load %arg16[%c0_41, %c158] : memref<8x1280xf32, #tpu.memory_space<vmem>>, vector<1x1024xf32>
    %107 = vector.broadcast %105 : vector<4x1xf32> to vector<4x1024xf32>
    %108 = vector.broadcast %106 : vector<1x1024xf32> to vector<4x1024xf32>
    %109 = arith.mulf %107, %108 : vector<4x1024xf32>
    %110 = arith.addf %104, %109 : vector<4x1024xf32>
    %111 = vector.extract_strided_slice %1 {offsets = [0, 16], sizes = [4, 1], strides = [1, 1]} : vector<4x25xf32> to vector<4x1xf32>
    %c0_42 = arith.constant 0 : index
    %c159 = arith.constant 159 : index
    %112 = vector.load %arg16[%c0_42, %c159] : memref<8x1280xf32, #tpu.memory_space<vmem>>, vector<1x1024xf32>
    %113 = vector.broadcast %111 : vector<4x1xf32> to vector<4x1024xf32>
    %114 = vector.broadcast %112 : vector<1x1024xf32> to vector<4x1024xf32>
    %115 = arith.mulf %113, %114 : vector<4x1024xf32>
    %116 = arith.addf %110, %115 : vector<4x1024xf32>
    %117 = vector.extract_strided_slice %1 {offsets = [0, 17], sizes = [4, 1], strides = [1, 1]} : vector<4x25xf32> to vector<4x1xf32>
    %c0_43 = arith.constant 0 : index
    %c160 = arith.constant 160 : index
    %118 = vector.load %arg16[%c0_43, %c160] : memref<8x1280xf32, #tpu.memory_space<vmem>>, vector<1x1024xf32>
    %119 = vector.broadcast %117 : vector<4x1xf32> to vector<4x1024xf32>
    %120 = vector.broadcast %118 : vector<1x1024xf32> to vector<4x1024xf32>
    %121 = arith.mulf %119, %120 : vector<4x1024xf32>
    %122 = arith.addf %116, %121 : vector<4x1024xf32>
    %123 = vector.extract_strided_slice %1 {offsets = [0, 18], sizes = [4, 1], strides = [1, 1]} : vector<4x25xf32> to vector<4x1xf32>
    %c0_44 = arith.constant 0 : index
    %c161 = arith.constant 161 : index
    %124 = vector.load %arg16[%c0_44, %c161] : memref<8x1280xf32, #tpu.memory_space<vmem>>, vector<1x1024xf32>
    %125 = vector.broadcast %123 : vector<4x1xf32> to vector<4x1024xf32>
    %126 = vector.broadcast %124 : vector<1x1024xf32> to vector<4x1024xf32>
    %127 = arith.mulf %125, %126 : vector<4x1024xf32>
    %128 = arith.addf %122, %127 : vector<4x1024xf32>
    %129 = vector.extract_strided_slice %1 {offsets = [0, 19], sizes = [4, 1], strides = [1, 1]} : vector<4x25xf32> to vector<4x1xf32>
    %c0_45 = arith.constant 0 : index
    %c162 = arith.constant 162 : index
    %130 = vector.load %arg16[%c0_45, %c162] : memref<8x1280xf32, #tpu.memory_space<vmem>>, vector<1x1024xf32>
    %131 = vector.broadcast %129 : vector<4x1xf32> to vector<4x1024xf32>
    %132 = vector.broadcast %130 : vector<1x1024xf32> to vector<4x1024xf32>
    %133 = arith.mulf %131, %132 : vector<4x1024xf32>
    %134 = arith.addf %128, %133 : vector<4x1024xf32>
    %135 = vector.extract_strided_slice %1 {offsets = [0, 20], sizes = [4, 1], strides = [1, 1]} : vector<4x25xf32> to vector<4x1xf32>
    %c0_46 = arith.constant 0 : index
    %c190 = arith.constant 190 : index
    %136 = vector.load %arg16[%c0_46, %c190] : memref<8x1280xf32, #tpu.memory_space<vmem>>, vector<1x1024xf32>
    %137 = vector.broadcast %135 : vector<4x1xf32> to vector<4x1024xf32>
    %138 = vector.broadcast %136 : vector<1x1024xf32> to vector<4x1024xf32>
    %139 = arith.mulf %137, %138 : vector<4x1024xf32>
    %140 = arith.addf %134, %139 : vector<4x1024xf32>
    %141 = vector.extract_strided_slice %1 {offsets = [0, 21], sizes = [4, 1], strides = [1, 1]} : vector<4x25xf32> to vector<4x1xf32>
    %c0_47 = arith.constant 0 : index
    %c191 = arith.constant 191 : index
    %142 = vector.load %arg16[%c0_47, %c191] : memref<8x1280xf32, #tpu.memory_space<vmem>>, vector<1x1024xf32>
    %143 = vector.broadcast %141 : vector<4x1xf32> to vector<4x1024xf32>
    %144 = vector.broadcast %142 : vector<1x1024xf32> to vector<4x1024xf32>
    %145 = arith.mulf %143, %144 : vector<4x1024xf32>
    %146 = arith.addf %140, %145 : vector<4x1024xf32>
    %147 = vector.extract_strided_slice %1 {offsets = [0, 22], sizes = [4, 1], strides = [1, 1]} : vector<4x25xf32> to vector<4x1xf32>
    %c0_48 = arith.constant 0 : index
    %c192 = arith.constant 192 : index
    %148 = vector.load %arg16[%c0_48, %c192] : memref<8x1280xf32, #tpu.memory_space<vmem>>, vector<1x1024xf32>
    %149 = vector.broadcast %147 : vector<4x1xf32> to vector<4x1024xf32>
    %150 = vector.broadcast %148 : vector<1x1024xf32> to vector<4x1024xf32>
    %151 = arith.mulf %149, %150 : vector<4x1024xf32>
    %152 = arith.addf %146, %151 : vector<4x1024xf32>
    %153 = vector.extract_strided_slice %1 {offsets = [0, 23], sizes = [4, 1], strides = [1, 1]} : vector<4x25xf32> to vector<4x1xf32>
    %c0_49 = arith.constant 0 : index
    %c193 = arith.constant 193 : index
    %154 = vector.load %arg16[%c0_49, %c193] : memref<8x1280xf32, #tpu.memory_space<vmem>>, vector<1x1024xf32>
    %155 = vector.broadcast %153 : vector<4x1xf32> to vector<4x1024xf32>
    %156 = vector.broadcast %154 : vector<1x1024xf32> to vector<4x1024xf32>
    %157 = arith.mulf %155, %156 : vector<4x1024xf32>
    %158 = arith.addf %152, %157 : vector<4x1024xf32>
    %159 = vector.extract_strided_slice %1 {offsets = [0, 24], sizes = [4, 1], strides = [1, 1]} : vector<4x25xf32> to vector<4x1xf32>
    %c0_50 = arith.constant 0 : index
    %c194 = arith.constant 194 : index
    %160 = vector.load %arg16[%c0_50, %c194] : memref<8x1280xf32, #tpu.memory_space<vmem>>, vector<1x1024xf32>
    %161 = vector.broadcast %159 : vector<4x1xf32> to vector<4x1024xf32>
    %162 = vector.broadcast %160 : vector<1x1024xf32> to vector<4x1024xf32>
    %163 = arith.mulf %161, %162 : vector<4x1024xf32>
    %164 = arith.addf %158, %163 : vector<4x1024xf32>
    %165 = vector.broadcast %2 : vector<4x1xf32> to vector<4x1024xf32>
    %166 = arith.addf %164, %165 : vector<4x1024xf32>
    %cst_51 = arith.constant 0.000000e+00 : f32
    %167 = vector.broadcast %cst_51 : f32 to vector<4x1024xf32>
    %168 = arith.maximumf %166, %167 : vector<4x1024xf32>
    %169 = vector.broadcast %0 : vector<1x1024xf32> to vector<4x1024xf32>
    %170 = arith.mulf %168, %169 : vector<4x1024xf32>
    %c0_52 = arith.constant 0 : index
    %c128_53 = arith.constant 128 : index
    %171 = vector.load %arg16[%c0_52, %c128_53] : memref<8x1280xf32, #tpu.memory_space<vmem>>, vector<4x1024xf32>
    tpu.vector_store %arg16[%c0_52, %c128_53], %170 {strides = array<i32>} : memref<8x1280xf32, #tpu.memory_space<vmem>>, vector<4x1024xf32>,
    %c0_54 = arith.constant 0 : index
    %c62_55 = arith.constant 62 : index
    %172 = vector.load %arg16[%c0_54, %c62_55] : memref<8x1280xf32, #tpu.memory_space<vmem>>, vector<4x1024xf32>
    %c0_56 = arith.constant 0 : index
    %c0_57 = arith.constant 0 : index
    %173 = vector.load %arg17[%c0_56, %c0_57] : memref<200x1024xf32, #tpu.memory_space<vmem>>, vector<4x1024xf32>
    tpu.vector_store %arg17[%c0_56, %c0_57], %172 {strides = array<i32>} : memref<200x1024xf32, #tpu.memory_space<vmem>>, vector<4x1024xf32>,
    %c0_58 = arith.constant 0 : index
    %c63_59 = arith.constant 63 : index
    %174 = vector.load %arg16[%c0_58, %c63_59] : memref<8x1280xf32, #tpu.memory_space<vmem>>, vector<4x1024xf32>
    %c4 = arith.constant 4 : index
    %c0_60 = arith.constant 0 : index
    %175 = vector.load %arg17[%c4, %c0_60] : memref<200x1024xf32, #tpu.memory_space<vmem>>, vector<4x1024xf32>
    tpu.vector_store %arg17[%c4, %c0_60], %174 {strides = array<i32>} : memref<200x1024xf32, #tpu.memory_space<vmem>>, vector<4x1024xf32>,
    %c0_61 = arith.constant 0 : index
    %c64_62 = arith.constant 64 : index
    %176 = vector.load %arg16[%c0_61, %c64_62] : memref<8x1280xf32, #tpu.memory_space<vmem>>, vector<4x1024xf32>
    %c8 = arith.constant 8 : index
    %c0_63 = arith.constant 0 : index
    %177 = vector.load %arg17[%c8, %c0_63] : memref<200x1024xf32, #tpu.memory_space<vmem>>, vector<4x1024xf32>
    tpu.vector_store %arg17[%c8, %c0_63], %176 {strides = array<i32>} : memref<200x1024xf32, #tpu.memory_space<vmem>>, vector<4x1024xf32>,
    %c0_64 = arith.constant 0 : index
    %c65_65 = arith.constant 65 : index
    %178 = vector.load %arg16[%c0_64, %c65_65] : memref<8x1280xf32, #tpu.memory_space<vmem>>, vector<4x1024xf32>
    %c12 = arith.constant 12 : index
    %c0_66 = arith.constant 0 : index
    %179 = vector.load %arg17[%c12, %c0_66] : memref<200x1024xf32, #tpu.memory_space<vmem>>, vector<4x1024xf32>
    tpu.vector_store %arg17[%c12, %c0_66], %178 {strides = array<i32>} : memref<200x1024xf32, #tpu.memory_space<vmem>>, vector<4x1024xf32>,
    %c0_67 = arith.constant 0 : index
    %c66_68 = arith.constant 66 : index
    %180 = vector.load %arg16[%c0_67, %c66_68] : memref<8x1280xf32, #tpu.memory_space<vmem>>, vector<4x1024xf32>
    %c16 = arith.constant 16 : index
    %c0_69 = arith.constant 0 : index
    %181 = vector.load %arg17[%c16, %c0_69] : memref<200x1024xf32, #tpu.memory_space<vmem>>, vector<4x1024xf32>
    tpu.vector_store %arg17[%c16, %c0_69], %180 {strides = array<i32>} : memref<200x1024xf32, #tpu.memory_space<vmem>>, vector<4x1024xf32>,
    %c0_70 = arith.constant 0 : index
    %c94_71 = arith.constant 94 : index
    %182 = vector.load %arg16[%c0_70, %c94_71] : memref<8x1280xf32, #tpu.memory_space<vmem>>, vector<4x1024xf32>
    %c20 = arith.constant 20 : index
    %c0_72 = arith.constant 0 : index
    %183 = vector.load %arg17[%c20, %c0_72] : memref<200x1024xf32, #tpu.memory_space<vmem>>, vector<4x1024xf32>
    tpu.vector_store %arg17[%c20, %c0_72], %182 {strides = array<i32>} : memref<200x1024xf32, #tpu.memory_space<vmem>>, vector<4x1024xf32>,
    %c0_73 = arith.constant 0 : index
    %c95_74 = arith.constant 95 : index
    %184 = vector.load %arg16[%c0_73, %c95_74] : memref<8x1280xf32, #tpu.memory_space<vmem>>, vector<4x1024xf32>
    %c24 = arith.constant 24 : index
    %c0_75 = arith.constant 0 : index
    %185 = vector.load %arg17[%c24, %c0_75] : memref<200x1024xf32, #tpu.memory_space<vmem>>, vector<4x1024xf32>
    tpu.vector_store %arg17[%c24, %c0_75], %184 {strides = array<i32>} : memref<200x1024xf32, #tpu.memory_space<vmem>>, vector<4x1024xf32>,
    %c0_76 = arith.constant 0 : index
    %c96_77 = arith.constant 96 : index
    %186 = vector.load %arg16[%c0_76, %c96_77] : memref<8x1280xf32, #tpu.memory_space<vmem>>, vector<4x1024xf32>
    %c28 = arith.constant 28 : index
    %c0_78 = arith.constant 0 : index
    %187 = vector.load %arg17[%c28, %c0_78] : memref<200x1024xf32, #tpu.memory_space<vmem>>, vector<4x1024xf32>
    tpu.vector_store %arg17[%c28, %c0_78], %186 {strides = array<i32>} : memref<200x1024xf32, #tpu.memory_space<vmem>>, vector<4x1024xf32>,
    %c0_79 = arith.constant 0 : index
    %c97_80 = arith.constant 97 : index
    %188 = vector.load %arg16[%c0_79, %c97_80] : memref<8x1280xf32, #tpu.memory_space<vmem>>, vector<4x1024xf32>
    %c32 = arith.constant 32 : index
    %c0_81 = arith.constant 0 : index
    %189 = vector.load %arg17[%c32, %c0_81] : memref<200x1024xf32, #tpu.memory_space<vmem>>, vector<4x1024xf32>
    tpu.vector_store %arg17[%c32, %c0_81], %188 {strides = array<i32>} : memref<200x1024xf32, #tpu.memory_space<vmem>>, vector<4x1024xf32>,
    %c0_82 = arith.constant 0 : index
    %c98_83 = arith.constant 98 : index
    %190 = vector.load %arg16[%c0_82, %c98_83] : memref<8x1280xf32, #tpu.memory_space<vmem>>, vector<4x1024xf32>
    %c36 = arith.constant 36 : index
    %c0_84 = arith.constant 0 : index
    %191 = vector.load %arg17[%c36, %c0_84] : memref<200x1024xf32, #tpu.memory_space<vmem>>, vector<4x1024xf32>
    tpu.vector_store %arg17[%c36, %c0_84], %190 {strides = array<i32>} : memref<200x1024xf32, #tpu.memory_space<vmem>>, vector<4x1024xf32>,
    %c0_85 = arith.constant 0 : index
    %c126_86 = arith.constant 126 : index
    %192 = vector.load %arg16[%c0_85, %c126_86] : memref<8x1280xf32, #tpu.memory_space<vmem>>, vector<4x1024xf32>
    %c40 = arith.constant 40 : index
    %c0_87 = arith.constant 0 : index
    %193 = vector.load %arg17[%c40, %c0_87] : memref<200x1024xf32, #tpu.memory_space<vmem>>, vector<4x1024xf32>
    tpu.vector_store %arg17[%c40, %c0_87], %192 {strides = array<i32>} : memref<200x1024xf32, #tpu.memory_space<vmem>>, vector<4x1024xf32>,
    %c0_88 = arith.constant 0 : index
    %c127_89 = arith.constant 127 : index
    %194 = vector.load %arg16[%c0_88, %c127_89] : memref<8x1280xf32, #tpu.memory_space<vmem>>, vector<4x1024xf32>
    %c44 = arith.constant 44 : index
    %c0_90 = arith.constant 0 : index
    %195 = vector.load %arg17[%c44, %c0_90] : memref<200x1024xf32, #tpu.memory_space<vmem>>, vector<4x1024xf32>
    tpu.vector_store %arg17[%c44, %c0_90], %194 {strides = array<i32>} : memref<200x1024xf32, #tpu.memory_space<vmem>>, vector<4x1024xf32>,
    %c0_91 = arith.constant 0 : index
    %c128_92 = arith.constant 128 : index
    %196 = vector.load %arg16[%c0_91, %c128_92] : memref<8x1280xf32, #tpu.memory_space<vmem>>, vector<4x1024xf32>
    %c48 = arith.constant 48 : index
    %c0_93 = arith.constant 0 : index
    %197 = vector.load %arg17[%c48, %c0_93] : memref<200x1024xf32, #tpu.memory_space<vmem>>, vector<4x1024xf32>
    tpu.vector_store %arg17[%c48, %c0_93], %196 {strides = array<i32>} : memref<200x1024xf32, #tpu.memory_space<vmem>>, vector<4x1024xf32>,
    %c0_94 = arith.constant 0 : index
    %c129_95 = arith.constant 129 : index
    %198 = vector.load %arg16[%c0_94, %c129_95] : memref<8x1280xf32, #tpu.memory_space<vmem>>, vector<4x1024xf32>
    %c52 = arith.constant 52 : index
    %c0_96 = arith.constant 0 : index
    %199 = vector.load %arg17[%c52, %c0_96] : memref<200x1024xf32, #tpu.memory_space<vmem>>, vector<4x1024xf32>
    tpu.vector_store %arg17[%c52, %c0_96], %198 {strides = array<i32>} : memref<200x1024xf32, #tpu.memory_space<vmem>>, vector<4x1024xf32>,
    %c0_97 = arith.constant 0 : index
    %c130_98 = arith.constant 130 : index
    %200 = vector.load %arg16[%c0_97, %c130_98] : memref<8x1280xf32, #tpu.memory_space<vmem>>, vector<4x1024xf32>
    %c56 = arith.constant 56 : index
    %c0_99 = arith.constant 0 : index
    %201 = vector.load %arg17[%c56, %c0_99] : memref<200x1024xf32, #tpu.memory_space<vmem>>, vector<4x1024xf32>
    tpu.vector_store %arg17[%c56, %c0_99], %200 {strides = array<i32>} : memref<200x1024xf32, #tpu.memory_space<vmem>>, vector<4x1024xf32>,
    %c0_100 = arith.constant 0 : index
    %c158_101 = arith.constant 158 : index
    %202 = vector.load %arg16[%c0_100, %c158_101] : memref<8x1280xf32, #tpu.memory_space<vmem>>, vector<4x1024xf32>
    %c60 = arith.constant 60 : index
    %c0_102 = arith.constant 0 : index
    %203 = vector.load %arg17[%c60, %c0_102] : memref<200x1024xf32, #tpu.memory_space<vmem>>, vector<4x1024xf32>
    tpu.vector_store %arg17[%c60, %c0_102], %202 {strides = array<i32>} : memref<200x1024xf32, #tpu.memory_space<vmem>>, vector<4x1024xf32>,
    %c0_103 = arith.constant 0 : index
    %c159_104 = arith.constant 159 : index
    %204 = vector.load %arg16[%c0_103, %c159_104] : memref<8x1280xf32, #tpu.memory_space<vmem>>, vector<4x1024xf32>
    %c64_105 = arith.constant 64 : index
    %c0_106 = arith.constant 0 : index
    %205 = vector.load %arg17[%c64_105, %c0_106] : memref<200x1024xf32, #tpu.memory_space<vmem>>, vector<4x1024xf32>
    tpu.vector_store %arg17[%c64_105, %c0_106], %204 {strides = array<i32>} : memref<200x1024xf32, #tpu.memory_space<vmem>>, vector<4x1024xf32>,
    %c0_107 = arith.constant 0 : index
    %c160_108 = arith.constant 160 : index
    %206 = vector.load %arg16[%c0_107, %c160_108] : memref<8x1280xf32, #tpu.memory_space<vmem>>, vector<4x1024xf32>
    %c68 = arith.constant 68 : index
    %c0_109 = arith.constant 0 : index
    %207 = vector.load %arg17[%c68, %c0_109] : memref<200x1024xf32, #tpu.memory_space<vmem>>, vector<4x1024xf32>
    tpu.vector_store %arg17[%c68, %c0_109], %206 {strides = array<i32>} : memref<200x1024xf32, #tpu.memory_space<vmem>>, vector<4x1024xf32>,
    %c0_110 = arith.constant 0 : index
    %c161_111 = arith.constant 161 : index
    %208 = vector.load %arg16[%c0_110, %c161_111] : memref<8x1280xf32, #tpu.memory_space<vmem>>, vector<4x1024xf32>
    %c72 = arith.constant 72 : index
    %c0_112 = arith.constant 0 : index
    %209 = vector.load %arg17[%c72, %c0_112] : memref<200x1024xf32, #tpu.memory_space<vmem>>, vector<4x1024xf32>
    tpu.vector_store %arg17[%c72, %c0_112], %208 {strides = array<i32>} : memref<200x1024xf32, #tpu.memory_space<vmem>>, vector<4x1024xf32>,
    %c0_113 = arith.constant 0 : index
    %c162_114 = arith.constant 162 : index
    %210 = vector.load %arg16[%c0_113, %c162_114] : memref<8x1280xf32, #tpu.memory_space<vmem>>, vector<4x1024xf32>
    %c76 = arith.constant 76 : index
    %c0_115 = arith.constant 0 : index
    %211 = vector.load %arg17[%c76, %c0_115] : memref<200x1024xf32, #tpu.memory_space<vmem>>, vector<4x1024xf32>
    tpu.vector_store %arg17[%c76, %c0_115], %210 {strides = array<i32>} : memref<200x1024xf32, #tpu.memory_space<vmem>>, vector<4x1024xf32>,
    %c0_116 = arith.constant 0 : index
    %c190_117 = arith.constant 190 : index
    %212 = vector.load %arg16[%c0_116, %c190_117] : memref<8x1280xf32, #tpu.memory_space<vmem>>, vector<4x1024xf32>
    %c80 = arith.constant 80 : index
    %c0_118 = arith.constant 0 : index
    %213 = vector.load %arg17[%c80, %c0_118] : memref<200x1024xf32, #tpu.memory_space<vmem>>, vector<4x1024xf32>
    tpu.vector_store %arg17[%c80, %c0_118], %212 {strides = array<i32>} : memref<200x1024xf32, #tpu.memory_space<vmem>>, vector<4x1024xf32>,
    %c0_119 = arith.constant 0 : index
    %c191_120 = arith.constant 191 : index
    %214 = vector.load %arg16[%c0_119, %c191_120] : memref<8x1280xf32, #tpu.memory_space<vmem>>, vector<4x1024xf32>
    %c84 = arith.constant 84 : index
    %c0_121 = arith.constant 0 : index
    %215 = vector.load %arg17[%c84, %c0_121] : memref<200x1024xf32, #tpu.memory_space<vmem>>, vector<4x1024xf32>
    tpu.vector_store %arg17[%c84, %c0_121], %214 {strides = array<i32>} : memref<200x1024xf32, #tpu.memory_space<vmem>>, vector<4x1024xf32>,
    %c0_122 = arith.constant 0 : index
    %c192_123 = arith.constant 192 : index
    %216 = vector.load %arg16[%c0_122, %c192_123] : memref<8x1280xf32, #tpu.memory_space<vmem>>, vector<4x1024xf32>
    %c88 = arith.constant 88 : index
    %c0_124 = arith.constant 0 : index
    %217 = vector.load %arg17[%c88, %c0_124] : memref<200x1024xf32, #tpu.memory_space<vmem>>, vector<4x1024xf32>
    tpu.vector_store %arg17[%c88, %c0_124], %216 {strides = array<i32>} : memref<200x1024xf32, #tpu.memory_space<vmem>>, vector<4x1024xf32>,
    %c0_125 = arith.constant 0 : index
    %c193_126 = arith.constant 193 : index
    %218 = vector.load %arg16[%c0_125, %c193_126] : memref<8x1280xf32, #tpu.memory_space<vmem>>, vector<4x1024xf32>
    %c92 = arith.constant 92 : index
    %c0_127 = arith.constant 0 : index
    %219 = vector.load %arg17[%c92, %c0_127] : memref<200x1024xf32, #tpu.memory_space<vmem>>, vector<4x1024xf32>
    tpu.vector_store %arg17[%c92, %c0_127], %218 {strides = array<i32>} : memref<200x1024xf32, #tpu.memory_space<vmem>>, vector<4x1024xf32>,
    %c0_128 = arith.constant 0 : index
    %c194_129 = arith.constant 194 : index
    %220 = vector.load %arg16[%c0_128, %c194_129] : memref<8x1280xf32, #tpu.memory_space<vmem>>, vector<4x1024xf32>
    %c96_130 = arith.constant 96 : index
    %c0_131 = arith.constant 0 : index
    %221 = vector.load %arg17[%c96_130, %c0_131] : memref<200x1024xf32, #tpu.memory_space<vmem>>, vector<4x1024xf32>
    tpu.vector_store %arg17[%c96_130, %c0_131], %220 {strides = array<i32>} : memref<200x1024xf32, #tpu.memory_space<vmem>>, vector<4x1024xf32>,
    %c0_132 = arith.constant 0 : index
    %c0_133 = arith.constant 0 : index
    %222 = vector.load %arg17[%c0_132, %c0_133] : memref<200x1024xf32, #tpu.memory_space<vmem>>, vector<100x1024xf32>
    %223 = arith.truncf %222 : vector<100x1024xf32> to vector<100x1024xbf16>
    %cst_134 = arith.constant dense<0.000000e+00> : vector<8x1024xf32>
    %224 = tpu.matmul %3, %223, %cst_134 {dimension_numbers = #tpu.dot_dimension_numbers<[1], [0], [0], [1], [0, 0, 1, 1], [], []>} : vector<8x100xbf16>, vector<100x1024xbf16>, vector<8x1024xf32> -> vector<8x1024xf32>
    %225 = vector.broadcast %4 : vector<8x1xf32> to vector<8x1024xf32>
    %226 = arith.addf %224, %225 : vector<8x1024xf32>
    %cst_135 = arith.constant 0.000000e+00 : f32
    %227 = vector.broadcast %cst_135 : f32 to vector<8x1024xf32>
    %228 = arith.maximumf %226, %227 : vector<8x1024xf32>
    %229 = vector.broadcast %0 : vector<1x1024xf32> to vector<8x1024xf32>
    %230 = arith.mulf %228, %229 : vector<8x1024xf32>
    %c0_136 = arith.constant 0 : index
    %c128_137 = arith.constant 128 : index
    %231 = vector.load %arg16[%c0_136, %c128_137] : memref<8x1280xf32, #tpu.memory_space<vmem>>, vector<8x1024xf32>
    tpu.vector_store %arg16[%c0_136, %c128_137], %230 {strides = array<i32>} : memref<8x1280xf32, #tpu.memory_space<vmem>>, vector<8x1024xf32>,
    %c0_138 = arith.constant 0 : index
    %c62_139 = arith.constant 62 : index
    %232 = vector.load %arg16[%c0_138, %c62_139] : memref<8x1280xf32, #tpu.memory_space<vmem>>, vector<8x1024xf32>
    %c0_140 = arith.constant 0 : index
    %c0_141 = arith.constant 0 : index
    %233 = vector.load %arg17[%c0_140, %c0_141] : memref<200x1024xf32, #tpu.memory_space<vmem>>, vector<8x1024xf32>
    tpu.vector_store %arg17[%c0_140, %c0_141], %232 {strides = array<i32>} : memref<200x1024xf32, #tpu.memory_space<vmem>>, vector<8x1024xf32>,
    %c0_142 = arith.constant 0 : index
    %c63_143 = arith.constant 63 : index
    %234 = vector.load %arg16[%c0_142, %c63_143] : memref<8x1280xf32, #tpu.memory_space<vmem>>, vector<8x1024xf32>
    %c8_144 = arith.constant 8 : index
    %c0_145 = arith.constant 0 : index
    %235 = vector.load %arg17[%c8_144, %c0_145] : memref<200x1024xf32, #tpu.memory_space<vmem>>, vector<8x1024xf32>
    tpu.vector_store %arg17[%c8_144, %c0_145], %234 {strides = array<i32>} : memref<200x1024xf32, #tpu.memory_space<vmem>>, vector<8x1024xf32>,
    %c0_146 = arith.constant 0 : index
    %c64_147 = arith.constant 64 : index
    %236 = vector.load %arg16[%c0_146, %c64_147] : memref<8x1280xf32, #tpu.memory_space<vmem>>, vector<8x1024xf32>
    %c16_148 = arith.constant 16 : index
    %c0_149 = arith.constant 0 : index
    %237 = vector.load %arg17[%c16_148, %c0_149] : memref<200x1024xf32, #tpu.memory_space<vmem>>, vector<8x1024xf32>
    tpu.vector_store %arg17[%c16_148, %c0_149], %236 {strides = array<i32>} : memref<200x1024xf32, #tpu.memory_space<vmem>>, vector<8x1024xf32>,
    %c0_150 = arith.constant 0 : index
    %c65_151 = arith.constant 65 : index
    %238 = vector.load %arg16[%c0_150, %c65_151] : memref<8x1280xf32, #tpu.memory_space<vmem>>, vector<8x1024xf32>
    %c24_152 = arith.constant 24 : index
    %c0_153 = arith.constant 0 : index
    %239 = vector.load %arg17[%c24_152, %c0_153] : memref<200x1024xf32, #tpu.memory_space<vmem>>, vector<8x1024xf32>
    tpu.vector_store %arg17[%c24_152, %c0_153], %238 {strides = array<i32>} : memref<200x1024xf32, #tpu.memory_space<vmem>>, vector<8x1024xf32>,
    %c0_154 = arith.constant 0 : index
    %c66_155 = arith.constant 66 : index
    %240 = vector.load %arg16[%c0_154, %c66_155] : memref<8x1280xf32, #tpu.memory_space<vmem>>, vector<8x1024xf32>
    %c32_156 = arith.constant 32 : index
    %c0_157 = arith.constant 0 : index
    %241 = vector.load %arg17[%c32_156, %c0_157] : memref<200x1024xf32, #tpu.memory_space<vmem>>, vector<8x1024xf32>
    tpu.vector_store %arg17[%c32_156, %c0_157], %240 {strides = array<i32>} : memref<200x1024xf32, #tpu.memory_space<vmem>>, vector<8x1024xf32>,
    %c0_158 = arith.constant 0 : index
    %c94_159 = arith.constant 94 : index
    %242 = vector.load %arg16[%c0_158, %c94_159] : memref<8x1280xf32, #tpu.memory_space<vmem>>, vector<8x1024xf32>
    %c40_160 = arith.constant 40 : index
    %c0_161 = arith.constant 0 : index
    %243 = vector.load %arg17[%c40_160, %c0_161] : memref<200x1024xf32, #tpu.memory_space<vmem>>, vector<8x1024xf32>
    tpu.vector_store %arg17[%c40_160, %c0_161], %242 {strides = array<i32>} : memref<200x1024xf32, #tpu.memory_space<vmem>>, vector<8x1024xf32>,
    %c0_162 = arith.constant 0 : index
    %c95_163 = arith.constant 95 : index
    %244 = vector.load %arg16[%c0_162, %c95_163] : memref<8x1280xf32, #tpu.memory_space<vmem>>, vector<8x1024xf32>
    %c48_164 = arith.constant 48 : index
    %c0_165 = arith.constant 0 : index
    %245 = vector.load %arg17[%c48_164, %c0_165] : memref<200x1024xf32, #tpu.memory_space<vmem>>, vector<8x1024xf32>
    tpu.vector_store %arg17[%c48_164, %c0_165], %244 {strides = array<i32>} : memref<200x1024xf32, #tpu.memory_space<vmem>>, vector<8x1024xf32>,
    %c0_166 = arith.constant 0 : index
    %c96_167 = arith.constant 96 : index
    %246 = vector.load %arg16[%c0_166, %c96_167] : memref<8x1280xf32, #tpu.memory_space<vmem>>, vector<8x1024xf32>
    %c56_168 = arith.constant 56 : index
    %c0_169 = arith.constant 0 : index
    %247 = vector.load %arg17[%c56_168, %c0_169] : memref<200x1024xf32, #tpu.memory_space<vmem>>, vector<8x1024xf32>
    tpu.vector_store %arg17[%c56_168, %c0_169], %246 {strides = array<i32>} : memref<200x1024xf32, #tpu.memory_space<vmem>>, vector<8x1024xf32>,
    %c0_170 = arith.constant 0 : index
    %c97_171 = arith.constant 97 : index
    %248 = vector.load %arg16[%c0_170, %c97_171] : memref<8x1280xf32, #tpu.memory_space<vmem>>, vector<8x1024xf32>
    %c64_172 = arith.constant 64 : index
    %c0_173 = arith.constant 0 : index
    %249 = vector.load %arg17[%c64_172, %c0_173] : memref<200x1024xf32, #tpu.memory_space<vmem>>, vector<8x1024xf32>
    tpu.vector_store %arg17[%c64_172, %c0_173], %248 {strides = array<i32>} : memref<200x1024xf32, #tpu.memory_space<vmem>>, vector<8x1024xf32>,
    %c0_174 = arith.constant 0 : index
    %c98_175 = arith.constant 98 : index
    %250 = vector.load %arg16[%c0_174, %c98_175] : memref<8x1280xf32, #tpu.memory_space<vmem>>, vector<8x1024xf32>
    %c72_176 = arith.constant 72 : index
    %c0_177 = arith.constant 0 : index
    %251 = vector.load %arg17[%c72_176, %c0_177] : memref<200x1024xf32, #tpu.memory_space<vmem>>, vector<8x1024xf32>
    tpu.vector_store %arg17[%c72_176, %c0_177], %250 {strides = array<i32>} : memref<200x1024xf32, #tpu.memory_space<vmem>>, vector<8x1024xf32>,
    %c0_178 = arith.constant 0 : index
    %c126_179 = arith.constant 126 : index
    %252 = vector.load %arg16[%c0_178, %c126_179] : memref<8x1280xf32, #tpu.memory_space<vmem>>, vector<8x1024xf32>
    %c80_180 = arith.constant 80 : index
    %c0_181 = arith.constant 0 : index
    %253 = vector.load %arg17[%c80_180, %c0_181] : memref<200x1024xf32, #tpu.memory_space<vmem>>, vector<8x1024xf32>
    tpu.vector_store %arg17[%c80_180, %c0_181], %252 {strides = array<i32>} : memref<200x1024xf32, #tpu.memory_space<vmem>>, vector<8x1024xf32>,
    %c0_182 = arith.constant 0 : index
    %c127_183 = arith.constant 127 : index
    %254 = vector.load %arg16[%c0_182, %c127_183] : memref<8x1280xf32, #tpu.memory_space<vmem>>, vector<8x1024xf32>
    %c88_184 = arith.constant 88 : index
    %c0_185 = arith.constant 0 : index
    %255 = vector.load %arg17[%c88_184, %c0_185] : memref<200x1024xf32, #tpu.memory_space<vmem>>, vector<8x1024xf32>
    tpu.vector_store %arg17[%c88_184, %c0_185], %254 {strides = array<i32>} : memref<200x1024xf32, #tpu.memory_space<vmem>>, vector<8x1024xf32>,
    %c0_186 = arith.constant 0 : index
    %c128_187 = arith.constant 128 : index
    %256 = vector.load %arg16[%c0_186, %c128_187] : memref<8x1280xf32, #tpu.memory_space<vmem>>, vector<8x1024xf32>
    %c96_188 = arith.constant 96 : index
    %c0_189 = arith.constant 0 : index
    %257 = vector.load %arg17[%c96_188, %c0_189] : memref<200x1024xf32, #tpu.memory_space<vmem>>, vector<8x1024xf32>
    tpu.vector_store %arg17[%c96_188, %c0_189], %256 {strides = array<i32>} : memref<200x1024xf32, #tpu.memory_space<vmem>>, vector<8x1024xf32>,
    %c0_190 = arith.constant 0 : index
    %c129_191 = arith.constant 129 : index
    %258 = vector.load %arg16[%c0_190, %c129_191] : memref<8x1280xf32, #tpu.memory_space<vmem>>, vector<8x1024xf32>
    %c104 = arith.constant 104 : index
    %c0_192 = arith.constant 0 : index
    %259 = vector.load %arg17[%c104, %c0_192] : memref<200x1024xf32, #tpu.memory_space<vmem>>, vector<8x1024xf32>
    tpu.vector_store %arg17[%c104, %c0_192], %258 {strides = array<i32>} : memref<200x1024xf32, #tpu.memory_space<vmem>>, vector<8x1024xf32>,
    %c0_193 = arith.constant 0 : index
    %c130_194 = arith.constant 130 : index
    %260 = vector.load %arg16[%c0_193, %c130_194] : memref<8x1280xf32, #tpu.memory_space<vmem>>, vector<8x1024xf32>
    %c112 = arith.constant 112 : index
    %c0_195 = arith.constant 0 : index
    %261 = vector.load %arg17[%c112, %c0_195] : memref<200x1024xf32, #tpu.memory_space<vmem>>, vector<8x1024xf32>
    tpu.vector_store %arg17[%c112, %c0_195], %260 {strides = array<i32>} : memref<200x1024xf32, #tpu.memory_space<vmem>>, vector<8x1024xf32>,
    %c0_196 = arith.constant 0 : index
    %c158_197 = arith.constant 158 : index
    %262 = vector.load %arg16[%c0_196, %c158_197] : memref<8x1280xf32, #tpu.memory_space<vmem>>, vector<8x1024xf32>
    %c120 = arith.constant 120 : index
    %c0_198 = arith.constant 0 : index
    %263 = vector.load %arg17[%c120, %c0_198] : memref<200x1024xf32, #tpu.memory_space<vmem>>, vector<8x1024xf32>
    tpu.vector_store %arg17[%c120, %c0_198], %262 {strides = array<i32>} : memref<200x1024xf32, #tpu.memory_space<vmem>>, vector<8x1024xf32>,
    %c0_199 = arith.constant 0 : index
    %c159_200 = arith.constant 159 : index
    %264 = vector.load %arg16[%c0_199, %c159_200] : memref<8x1280xf32, #tpu.memory_space<vmem>>, vector<8x1024xf32>
    %c128_201 = arith.constant 128 : index
    %c0_202 = arith.constant 0 : index
    %265 = vector.load %arg17[%c128_201, %c0_202] : memref<200x1024xf32, #tpu.memory_space<vmem>>, vector<8x1024xf32>
    tpu.vector_store %arg17[%c128_201, %c0_202], %264 {strides = array<i32>} : memref<200x1024xf32, #tpu.memory_space<vmem>>, vector<8x1024xf32>,
    %c0_203 = arith.constant 0 : index
    %c160_204 = arith.constant 160 : index
    %266 = vector.load %arg16[%c0_203, %c160_204] : memref<8x1280xf32, #tpu.memory_space<vmem>>, vector<8x1024xf32>
    %c136 = arith.constant 136 : index
    %c0_205 = arith.constant 0 : index
    %267 = vector.load %arg17[%c136, %c0_205] : memref<200x1024xf32, #tpu.memory_space<vmem>>, vector<8x1024xf32>
    tpu.vector_store %arg17[%c136, %c0_205], %266 {strides = array<i32>} : memref<200x1024xf32, #tpu.memory_space<vmem>>, vector<8x1024xf32>,
    %c0_206 = arith.constant 0 : index
    %c161_207 = arith.constant 161 : index
    %268 = vector.load %arg16[%c0_206, %c161_207] : memref<8x1280xf32, #tpu.memory_space<vmem>>, vector<8x1024xf32>
    %c144 = arith.constant 144 : index
    %c0_208 = arith.constant 0 : index
    %269 = vector.load %arg17[%c144, %c0_208] : memref<200x1024xf32, #tpu.memory_space<vmem>>, vector<8x1024xf32>
    tpu.vector_store %arg17[%c144, %c0_208], %268 {strides = array<i32>} : memref<200x1024xf32, #tpu.memory_space<vmem>>, vector<8x1024xf32>,
    %c0_209 = arith.constant 0 : index
    %c162_210 = arith.constant 162 : index
    %270 = vector.load %arg16[%c0_209, %c162_210] : memref<8x1280xf32, #tpu.memory_space<vmem>>, vector<8x1024xf32>
    %c152 = arith.constant 152 : index
    %c0_211 = arith.constant 0 : index
    %271 = vector.load %arg17[%c152, %c0_211] : memref<200x1024xf32, #tpu.memory_space<vmem>>, vector<8x1024xf32>
    tpu.vector_store %arg17[%c152, %c0_211], %270 {strides = array<i32>} : memref<200x1024xf32, #tpu.memory_space<vmem>>, vector<8x1024xf32>,
    %c0_212 = arith.constant 0 : index
    %c190_213 = arith.constant 190 : index
    %272 = vector.load %arg16[%c0_212, %c190_213] : memref<8x1280xf32, #tpu.memory_space<vmem>>, vector<8x1024xf32>
    %c160_214 = arith.constant 160 : index
    %c0_215 = arith.constant 0 : index
    %273 = vector.load %arg17[%c160_214, %c0_215] : memref<200x1024xf32, #tpu.memory_space<vmem>>, vector<8x1024xf32>
    tpu.vector_store %arg17[%c160_214, %c0_215], %272 {strides = array<i32>} : memref<200x1024xf32, #tpu.memory_space<vmem>>, vector<8x1024xf32>,
    %c0_216 = arith.constant 0 : index
    %c191_217 = arith.constant 191 : index
    %274 = vector.load %arg16[%c0_216, %c191_217] : memref<8x1280xf32, #tpu.memory_space<vmem>>, vector<8x1024xf32>
    %c168 = arith.constant 168 : index
    %c0_218 = arith.constant 0 : index
    %275 = vector.load %arg17[%c168, %c0_218] : memref<200x1024xf32, #tpu.memory_space<vmem>>, vector<8x1024xf32>
    tpu.vector_store %arg17[%c168, %c0_218], %274 {strides = array<i32>} : memref<200x1024xf32, #tpu.memory_space<vmem>>, vector<8x1024xf32>,
    %c0_219 = arith.constant 0 : index
    %c192_220 = arith.constant 192 : index
    %276 = vector.load %arg16[%c0_219, %c192_220] : memref<8x1280xf32, #tpu.memory_space<vmem>>, vector<8x1024xf32>
    %c176 = arith.constant 176 : index
    %c0_221 = arith.constant 0 : index
    %277 = vector.load %arg17[%c176, %c0_221] : memref<200x1024xf32, #tpu.memory_space<vmem>>, vector<8x1024xf32>
    tpu.vector_store %arg17[%c176, %c0_221], %276 {strides = array<i32>} : memref<200x1024xf32, #tpu.memory_space<vmem>>, vector<8x1024xf32>,
    %c0_222 = arith.constant 0 : index
    %c193_223 = arith.constant 193 : index
    %278 = vector.load %arg16[%c0_222, %c193_223] : memref<8x1280xf32, #tpu.memory_space<vmem>>, vector<8x1024xf32>
    %c184 = arith.constant 184 : index
    %c0_224 = arith.constant 0 : index
    %279 = vector.load %arg17[%c184, %c0_224] : memref<200x1024xf32, #tpu.memory_space<vmem>>, vector<8x1024xf32>
    tpu.vector_store %arg17[%c184, %c0_224], %278 {strides = array<i32>} : memref<200x1024xf32, #tpu.memory_space<vmem>>, vector<8x1024xf32>,
    %c0_225 = arith.constant 0 : index
    %c194_226 = arith.constant 194 : index
    %280 = vector.load %arg16[%c0_225, %c194_226] : memref<8x1280xf32, #tpu.memory_space<vmem>>, vector<8x1024xf32>
    %c192_227 = arith.constant 192 : index
    %c0_228 = arith.constant 0 : index
    %281 = vector.load %arg17[%c192_227, %c0_228] : memref<200x1024xf32, #tpu.memory_space<vmem>>, vector<8x1024xf32>
    tpu.vector_store %arg17[%c192_227, %c0_228], %280 {strides = array<i32>} : memref<200x1024xf32, #tpu.memory_space<vmem>>, vector<8x1024xf32>,
    %c0_229 = arith.constant 0 : index
    %c0_230 = arith.constant 0 : index
    %282 = vector.load %arg17[%c0_229, %c0_230] : memref<200x1024xf32, #tpu.memory_space<vmem>>, vector<200x1024xf32>
    %283 = arith.truncf %282 : vector<200x1024xf32> to vector<200x1024xbf16>
    %cst_231 = arith.constant dense<0.000000e+00> : vector<8x1024xf32>
    %284 = tpu.matmul %5, %283, %cst_231 {dimension_numbers = #tpu.dot_dimension_numbers<[1], [0], [0], [1], [0, 0, 1, 1], [], []>} : vector<8x200xbf16>, vector<200x1024xbf16>, vector<8x1024xf32> -> vector<8x1024xf32>
    %285 = vector.broadcast %6 : vector<8x1xf32> to vector<8x1024xf32>
    %286 = arith.addf %284, %285 : vector<8x1024xf32>
    %cst_232 = arith.constant 0.000000e+00 : f32
    %287 = vector.broadcast %cst_232 : f32 to vector<8x1024xf32>
    %288 = arith.maximumf %286, %287 : vector<8x1024xf32>
    %289 = vector.broadcast %0 : vector<1x1024xf32> to vector<8x1024xf32>
    %290 = arith.mulf %288, %289 : vector<8x1024xf32>
    %c0_233 = arith.constant 0 : index
    %c128_234 = arith.constant 128 : index
    %291 = vector.load %arg16[%c0_233, %c128_234] : memref<8x1280xf32, #tpu.memory_space<vmem>>, vector<8x1024xf32>
    tpu.vector_store %arg16[%c0_233, %c128_234], %290 {strides = array<i32>} : memref<8x1280xf32, #tpu.memory_space<vmem>>, vector<8x1024xf32>,
    %c0_235 = arith.constant 0 : index
    %c128_236 = arith.constant 128 : index
    %292 = vector.load %arg16[%c0_235, %c128_236] : memref<8x1280xf32, #tpu.memory_space<vmem>>, vector<8x1024xf32>
    %c0_237 = arith.constant 0 : index
    %c129_238 = arith.constant 129 : index
    %293 = vector.load %arg16[%c0_237, %c129_238] : memref<8x1280xf32, #tpu.memory_space<vmem>>, vector<8x1024xf32>
    %294 = arith.maximumf %292, %293 : vector<8x1024xf32>
    %c0_239 = arith.constant 0 : index
    %c130_240 = arith.constant 130 : index
    %295 = vector.load %arg16[%c0_239, %c130_240] : memref<8x1280xf32, #tpu.memory_space<vmem>>, vector<8x1024xf32>
    %296 = arith.maximumf %294, %295 : vector<8x1024xf32>
    %c0_241 = arith.constant 0 : index
    %c131 = arith.constant 131 : index
    %297 = vector.load %arg16[%c0_241, %c131] : memref<8x1280xf32, #tpu.memory_space<vmem>>, vector<8x1024xf32>
    %298 = arith.maximumf %296, %297 : vector<8x1024xf32>
    %c0_242 = arith.constant 0 : index
    %c160_243 = arith.constant 160 : index
    %299 = vector.load %arg16[%c0_242, %c160_243] : memref<8x1280xf32, #tpu.memory_space<vmem>>, vector<8x1024xf32>
    %300 = arith.maximumf %298, %299 : vector<8x1024xf32>
    %c0_244 = arith.constant 0 : index
    %c161_245 = arith.constant 161 : index
    %301 = vector.load %arg16[%c0_244, %c161_245] : memref<8x1280xf32, #tpu.memory_space<vmem>>, vector<8x1024xf32>
    %302 = arith.maximumf %300, %301 : vector<8x1024xf32>
    %c0_246 = arith.constant 0 : index
    %c162_247 = arith.constant 162 : index
    %303 = vector.load %arg16[%c0_246, %c162_247] : memref<8x1280xf32, #tpu.memory_space<vmem>>, vector<8x1024xf32>
    %304 = arith.maximumf %302, %303 : vector<8x1024xf32>
    %c0_248 = arith.constant 0 : index
    %c163 = arith.constant 163 : index
    %305 = vector.load %arg16[%c0_248, %c163] : memref<8x1280xf32, #tpu.memory_space<vmem>>, vector<8x1024xf32>
    %306 = arith.maximumf %304, %305 : vector<8x1024xf32>
    %c0_249 = arith.constant 0 : index
    %c192_250 = arith.constant 192 : index
    %307 = vector.load %arg16[%c0_249, %c192_250] : memref<8x1280xf32, #tpu.memory_space<vmem>>, vector<8x1024xf32>
    %308 = arith.maximumf %306, %307 : vector<8x1024xf32>
    %c0_251 = arith.constant 0 : index
    %c193_252 = arith.constant 193 : index
    %309 = vector.load %arg16[%c0_251, %c193_252] : memref<8x1280xf32, #tpu.memory_space<vmem>>, vector<8x1024xf32>
    %310 = arith.maximumf %308, %309 : vector<8x1024xf32>
    %c0_253 = arith.constant 0 : index
    %c194_254 = arith.constant 194 : index
    %311 = vector.load %arg16[%c0_253, %c194_254] : memref<8x1280xf32, #tpu.memory_space<vmem>>, vector<8x1024xf32>
    %312 = arith.maximumf %310, %311 : vector<8x1024xf32>
    %c0_255 = arith.constant 0 : index
    %c195 = arith.constant 195 : index
    %313 = vector.load %arg16[%c0_255, %c195] : memref<8x1280xf32, #tpu.memory_space<vmem>>, vector<8x1024xf32>
    %314 = arith.maximumf %312, %313 : vector<8x1024xf32>
    %c0_256 = arith.constant 0 : index
    %c224 = arith.constant 224 : index
    %315 = vector.load %arg16[%c0_256, %c224] : memref<8x1280xf32, #tpu.memory_space<vmem>>, vector<8x1024xf32>
    %316 = arith.maximumf %314, %315 : vector<8x1024xf32>
    %c0_257 = arith.constant 0 : index
    %c225 = arith.constant 225 : index
    %317 = vector.load %arg16[%c0_257, %c225] : memref<8x1280xf32, #tpu.memory_space<vmem>>, vector<8x1024xf32>
    %318 = arith.maximumf %316, %317 : vector<8x1024xf32>
    %c0_258 = arith.constant 0 : index
    %c226 = arith.constant 226 : index
    %319 = vector.load %arg16[%c0_258, %c226] : memref<8x1280xf32, #tpu.memory_space<vmem>>, vector<8x1024xf32>
    %320 = arith.maximumf %318, %319 : vector<8x1024xf32>
    %c0_259 = arith.constant 0 : index
    %c227 = arith.constant 227 : index
    %321 = vector.load %arg16[%c0_259, %c227] : memref<8x1280xf32, #tpu.memory_space<vmem>>, vector<8x1024xf32>
    %322 = arith.maximumf %320, %321 : vector<8x1024xf32>
    %323 = arith.truncf %322 : vector<8x1024xf32> to vector<8x1024xbf16>
    %cst_260 = arith.constant dense<0.000000e+00> : vector<8x64xf32>
    %324 = tpu.matmul %323, %7, %cst_260 {dimension_numbers = #tpu.dot_dimension_numbers<[1], [0], [0], [1], [0, 0, 1, 1], [], []>} : vector<8x1024xbf16>, vector<1024x64xbf16>, vector<8x64xf32> -> vector<8x64xf32>
    %325 = tpu.concatenate %324, %324, %324, %324, %324, %324, %324, %324 in 1 : vector<8x64xf32>, vector<8x64xf32>, vector<8x64xf32>, vector<8x64xf32>, vector<8x64xf32>, vector<8x64xf32>, vector<8x64xf32>, vector<8x64xf32> -> vector<8x512xf32>
    %326 = arith.mulf %325, %8 : vector<8x512xf32>
    %cst_261 = arith.constant dense<0.000000e+00> : vector<512xf32>
    %327 = vector.multi_reduction <add>, %326, %cst_261 [0] : vector<8x512xf32> to vector<512xf32>
    %328 = vector.shape_cast %327 : vector<512xf32> to vector<1x512xf32>
    %c0_262 = arith.constant 0 : index
    %c0_263 = arith.constant 0 : index
    %329 = vector.load %arg18[%c0_262, %c0_263] : memref<1x512xf32, #tpu.memory_space<vmem>>, vector<1x512xf32>
    tpu.vector_store %arg18[%c0_262, %c0_263], %328 {strides = array<i32>} : memref<1x512xf32, #tpu.memory_space<vmem>>, vector<1x512xf32>,
    %c0_264 = arith.constant 0 : index
    %c0_265 = arith.constant 0 : index
    %330 = vector.load %arg18[%c0_264, %c0_265] : memref<1x512xf32, #tpu.memory_space<vmem>>, vector<1x512xf32>
    %331 = arith.truncf %330 : vector<1x512xf32> to vector<1x512xbf16>
    %c0_266 = arith.constant 0 : index
    %c0_267 = arith.constant 0 : index
    %332 = vector.load %arg11[%c0_266, %c0_267] : memref<512x512xbf16, #tpu.memory_space<vmem>>, vector<512x512xbf16>
    %cst_268 = arith.constant dense<0.000000e+00> : vector<1x512xf32>
    %333 = tpu.matmul %331, %332, %cst_268 {dimension_numbers = #tpu.dot_dimension_numbers<[1], [0], [0], [1], [0, 0, 1, 1], [], []>} : vector<1x512xbf16>, vector<512x512xbf16>, vector<1x512xf32> -> vector<1x512xf32>
    %c0_269 = arith.constant 0 : index
    %c0_270 = arith.constant 0 : index
    %334 = vector.load %arg12[%c0_269, %c0_270] : memref<1x512xf32, #tpu.memory_space<vmem>>, vector<1x512xf32>
    %335 = arith.addf %333, %334 : vector<1x512xf32>
    %cst_271 = arith.constant 0.000000e+00 : f32
    %336 = vector.broadcast %cst_271 : f32 to vector<1x512xf32>
    %337 = arith.maximumf %335, %336 : vector<1x512xf32>
    %338 = arith.truncf %337 : vector<1x512xf32> to vector<1x512xbf16>
    %c0_272 = arith.constant 0 : index
    %c0_273 = arith.constant 0 : index
    %339 = vector.load %arg13[%c0_272, %c0_273] : memref<512x128xbf16, #tpu.memory_space<vmem>>, vector<512x128xbf16>
    %cst_274 = arith.constant dense<0.000000e+00> : vector<1x128xf32>
    %340 = tpu.matmul %338, %339, %cst_274 {dimension_numbers = #tpu.dot_dimension_numbers<[1], [0], [0], [1], [0, 0, 1, 1], [], []>} : vector<1x512xbf16>, vector<512x128xbf16>, vector<1x128xf32> -> vector<1x128xf32>
    %c0_275 = arith.constant 0 : index
    %c0_276 = arith.constant 0 : index
    %341 = vector.load %arg14[%c0_275, %c0_276] : memref<1x128xf32, #tpu.memory_space<vmem>>, vector<1x128xf32>
    %342 = arith.addf %340, %341 : vector<1x128xf32>
    %c0_277 = arith.constant 0 : index
    %c0_278 = arith.constant 0 : index
    %c0_279 = arith.constant 0 : index
    %343 = vector.load %arg15[%c0_277, %c0_278, %c0_279] : memref<1x1x128xf32, #tpu.memory_space<vmem>>, vector<1x1x128xf32>
    %344 = vector.shape_cast %343 : vector<1x1x128xf32> to vector<1x128xf32>
    %345 = vector.shape_cast %342 : vector<1x128xf32> to vector<1x1x128xf32>
    tpu.vector_store %arg15[%c0_277, %c0_278, %c0_279], %345 {strides = array<i32>} : memref<1x1x128xf32, #tpu.memory_space<vmem>>, vector<1x1x128xf32>,
    return
  }
  func.func @transform_0(%arg0: i32) -> (i32, i32, i32) {
    %c0_i32 = arith.constant 0 : i32
    %c0_i32_0 = arith.constant 0 : i32
    %c0_i32_1 = arith.constant 0 : i32
    return %arg0, %c0_i32, %c0_i32_0 : i32, i32, i32
  }
  func.func @transform_1(%arg0: i32) -> (i32, i32) {
    %c0_i32 = arith.constant 0 : i32
    %c0_i32_0 = arith.constant 0 : i32
    %c0_i32_1 = arith.constant 0 : i32
    return %c0_i32, %c0_i32_0 : i32, i32
  }
  func.func @transform_2(%arg0: i32) -> (i32, i32) {
    %c0_i32 = arith.constant 0 : i32
    %c0_i32_0 = arith.constant 0 : i32
    %c0_i32_1 = arith.constant 0 : i32
    return %c0_i32, %c0_i32_0 : i32, i32
  }
  func.func @transform_3(%arg0: i32) -> (i32, i32) {
    %c0_i32 = arith.constant 0 : i32
    %c0_i32_0 = arith.constant 0 : i32
    %c0_i32_1 = arith.constant 0 : i32
    return %c0_i32, %c0_i32_0 : i32, i32
  }
  func.func @transform_4(%arg0: i32) -> (i32, i32) {
    %c0_i32 = arith.constant 0 : i32
    %c0_i32_0 = arith.constant 0 : i32
    %c0_i32_1 = arith.constant 0 : i32
    return %c0_i32, %c0_i32_0 : i32, i32
  }
  func.func @transform_5(%arg0: i32) -> (i32, i32) {
    %c0_i32 = arith.constant 0 : i32
    %c0_i32_0 = arith.constant 0 : i32
    %c0_i32_1 = arith.constant 0 : i32
    return %c0_i32, %c0_i32_0 : i32, i32
  }
  func.func @transform_6(%arg0: i32) -> (i32, i32) {
    %c0_i32 = arith.constant 0 : i32
    %c0_i32_0 = arith.constant 0 : i32
    %c0_i32_1 = arith.constant 0 : i32
    return %c0_i32, %c0_i32_0 : i32, i32
  }
  func.func @transform_7(%arg0: i32) -> (i32, i32) {
    %c0_i32 = arith.constant 0 : i32
    %c0_i32_0 = arith.constant 0 : i32
    %c0_i32_1 = arith.constant 0 : i32
    return %c0_i32, %c0_i32_0 : i32, i32
  }
  func.func @transform_8(%arg0: i32) -> (i32, i32) {
    %c0_i32 = arith.constant 0 : i32
    %c0_i32_0 = arith.constant 0 : i32
    %c0_i32_1 = arith.constant 0 : i32
    return %c0_i32, %c0_i32_0 : i32, i32
  }
  func.func @transform_9(%arg0: i32) -> (i32, i32) {
    %c0_i32 = arith.constant 0 : i32
    %c0_i32_0 = arith.constant 0 : i32
    %c0_i32_1 = arith.constant 0 : i32
    return %c0_i32, %c0_i32_0 : i32, i32
  }
  func.func @transform_10(%arg0: i32) -> (i32, i32) {
    %c0_i32 = arith.constant 0 : i32
    %c0_i32_0 = arith.constant 0 : i32
    %c0_i32_1 = arith.constant 0 : i32
    return %c0_i32, %c0_i32_0 : i32, i32
  }
  func.func @transform_11(%arg0: i32) -> (i32, i32) {
    %c0_i32 = arith.constant 0 : i32
    %c0_i32_0 = arith.constant 0 : i32
    %c0_i32_1 = arith.constant 0 : i32
    return %c0_i32, %c0_i32_0 : i32, i32
  }
  func.func @transform_12(%arg0: i32) -> (i32, i32) {
    %c0_i32 = arith.constant 0 : i32
    %c0_i32_0 = arith.constant 0 : i32
    %c0_i32_1 = arith.constant 0 : i32
    return %c0_i32, %c0_i32_0 : i32, i32
  }
  func.func @transform_13(%arg0: i32) -> (i32, i32) {
    %c0_i32 = arith.constant 0 : i32
    %c0_i32_0 = arith.constant 0 : i32
    %c0_i32_1 = arith.constant 0 : i32
    return %c0_i32, %c0_i32_0 : i32, i32
  }
  func.func @transform_14(%arg0: i32) -> (i32, i32, i32) {
    %c0_i32 = arith.constant 0 : i32
    %c0_i32_0 = arith.constant 0 : i32
    %c0_i32_1 = arith.constant 0 : i32
    return %arg0, %c0_i32, %c0_i32_0 : i32, i32, i32
  }
}

</mosaic_0001>

<llo_original>
// kernel: model_forward.1
$region0: #{model_forward.1}
  #allocation0 [shape = 'u32[]', space=smem, size = 0x4, offset = 0x4, fixed_abs, tag = 'smem constant byte address 0x4 - core index']
  #allocation1 [shape = 'u32[144,128]{1,0:T(1,128)}', space=vmem, size = 0x12000, scoped, tag = 'internal scratch']
  #allocation2 [shape = 'f32[8,1280]{1,0:T(8,128)}', space=vmem, size = 0xa000, scoped, tag = 'scratch operand']
  #allocation3 [shape = 'f32[200,1024]{1,0:T(8,128)}', space=vmem, size = 0xc8000, scoped, tag = 'scratch operand']
  #allocation4 [shape = 'f32[1,512]{1,0:T(1,128)}', space=vmem, size = 0x800, scoped, tag = 'scratch operand']
  %s0 = inlined_call_operand.vmem [shape: f32[2,1,1024], index: 0, kind: input, shape index: {}]
  %s1 = inlined_call_operand.vmem [shape: f32[4,25], index: 1, kind: input, shape index: {}]
  %s2 = inlined_call_operand.vmem [shape: f32[4,1], index: 2, kind: input, shape index: {}]
  %s3 = inlined_call_operand.vmem [shape: bf16[8,100], index: 3, kind: input, shape index: {}]
  %s4 = inlined_call_operand.vmem [shape: f32[8,1], index: 4, kind: input, shape index: {}]
  %s5 = inlined_call_operand.vmem [shape: bf16[8,200], index: 5, kind: input, shape index: {}]
  %s6 = inlined_call_operand.vmem [shape: f32[8,1], index: 6, kind: input, shape index: {}]
  %s7 = inlined_call_operand.vmem [shape: f32[1,1024], index: 7, kind: input, shape index: {}]
  %s8 = inlined_call_operand.vmem [shape: bf16[1024,64], index: 8, kind: input, shape index: {}]
  %s9 = inlined_call_operand.vmem [shape: f32[8,512], index: 9, kind: input, shape index: {}]
  %s10 = inlined_call_operand.hbm [shape: bf16[512,512], index: 10, kind: input, shape index: {}]
  %s11 = inlined_call_operand.vmem [shape: f32[1,512], index: 11, kind: input, shape index: {}]
  %s12 = inlined_call_operand.vmem [shape: bf16[512,128], index: 12, kind: input, shape index: {}]
  %s13 = inlined_call_operand.vmem [shape: f32[1,128], index: 13, kind: input, shape index: {}]
  %s14 = inlined_call_operand.hbm [shape: f32[2,1,128], index: 14, kind: output, shape index: {}]
  %s15 = sld [smem:[#allocation0]]
  $region93: #{model_forward.1} parent=0
    _
  %s17 = ssub.s32 1, %s15
  %s18 = scalar_select 0, %s17, %s15
  $region1: #{model_forward.1} parent=0
    #allocation5 [shape = 'u8[524288]{0}', space=vmem, size = 0x80000, scoped, tag = 'input window, operand 10, single buffered']
    #allocation6 [shape = 's32[2]{0}', space=sflag, size = 0x8, scoped, tag = 'scoped memory for model_forward.1']
    #allocation7 [shape = 's32[2]{0}', space=sflag, size = 0x8, scoped, tag = 'scoped memory for model_forward.1']
    #allocation8 [shape = 'u8[1024]{0}', space=vmem, size = 0x400, scoped, tag = 'output window, operand 0']
    %19 = vsyncpa [#allocation6], 0
    %20 = vsyncpa [#allocation7], 0
    %s21 = scalar_lea.sflag [#allocation7], 1
    %22 = vsyncpa %s21, 0
    loop: start=0, step=1, limit=4
    $region2: #{model_forward.1} parent=1 // loop_pre_header
      _
    $region3: #{model_forward.1} parent=1 // loop_header
      %s24 = sphi 0, %s28
      %p25 = scmp.ge.s32.totalorder %s24, 4
      %s34 = sphi 0, %s36
      %s37 = sphi 0, %s34
      %s38 = sphi 0, %s37
      %s54 = sphi 0, %s38
      %s58 = sphi 0, %s58
      %s60 = sphi 0, %s58
      %s61 = sphi 0, %s60
      %s75 = sphi 0, %s61
      %s79 = sphi 0, %s79
      %s81 = sphi 0, %s79
      %s82 = sphi 0, %s81
      %s96 = sphi 0, %s82
      %s100 = sphi 0, %s100
      %s102 = sphi 0, %s100
      %s103 = sphi 0, %s102
      %s117 = sphi 0, %s103
      %s121 = sphi 0, %s121
      %s123 = sphi 0, %s121
      %s124 = sphi 0, %s123
      %s138 = sphi 0, %s124
      %s142 = sphi 0, %s142
      %s144 = sphi 0, %s142
      %s145 = sphi 0, %s144
      %s159 = sphi 0, %s145
      %s163 = sphi 0, %s163
      %s165 = sphi 0, %s163
      %s166 = sphi 0, %s165
      %s180 = sphi 0, %s166
      %s184 = sphi 0, %s184
      %s186 = sphi 0, %s184
      %s187 = sphi 0, %s186
      %s201 = sphi 0, %s187
      %s205 = sphi 0, %s205
      %s207 = sphi 0, %s205
      %s208 = sphi 0, %s207
      %s222 = sphi 0, %s208
      %s226 = sphi 0, %s226
      %s228 = sphi 0, %s226
      %s229 = sphi 0, %s228
      %s243 = sphi 0, %s229
      %s247 = sphi 0, %s247
      %s249 = sphi 0, %s247
      %s250 = sphi 0, %s249
      %s264 = sphi 0, %s250
      %s268 = sphi 0, %s268
      %s270 = sphi 0, %s268
      %s271 = sphi 0, %s270
      %s285 = sphi 0, %s271
      %s289 = sphi 0, %s289
      %s291 = sphi 0, %s289
      %s292 = sphi 0, %s291
      %s306 = sphi 0, %s292
      %s310 = sphi 0, %s310
      %s312 = sphi 0, %s310
      %s313 = sphi 0, %s312
      %s327 = sphi 0, %s313
      %s333 = sphi 0, %s335
      %s336 = sphi 0, %s333
      %s337 = sphi 0, %s336
      %s353 = sphi 0, %s337
    $region4: #{model_forward.1} parent=1 // loop_header_branch
      %27 = sbr.rel (%p25) target = $region8
    $region5: #{model_forward.1} parent=1 // loop_body
      %s29 = ssub.s32 %s24, 1
      %s30 = ssub.s32 %s24, 2
      %s31 = sadd.s32 %s24, 1
      %s32 = ssub.s32 %s24, %s31
      %p33 = scmp.eq.s32.totalorder %s32, 0
      %s35 = sadd.s32 %s34, 1
      %s36 = scalar_select %p33, %s34, %s35
      %p39 = pneg %p33
      %p40 = scmp.eq.s32.totalorder %s24, 1
      %p41 = por %p39, %p40
      %p42 = scmp.ne.s32.totalorder %s34, %s37
      %p43 = scmp.eq.s32.totalorder %s24, 0
      %p44 = por %p42, %p43
      %p45 = scmp.ne.s32.totalorder %s34, %s37
      %p46 = scmp.eq.s32.totalorder %s29, 1
      %p47 = por %p45, %p46
      %p48 = scmp.ne.s32.totalorder %s37, %s38
      %p49 = scmp.eq.s32.totalorder %s29, 0
      %p50 = por %p48, %p49
      %p51 = scmp.ne.s32.totalorder %s37, %s38
      %p52 = scmp.eq.s32.totalorder %s30, 1
      %p53 = por %p51, %p52
      %p55 = scmp.ne.s32.totalorder %s38, %s54
      %p56 = scmp.eq.s32.totalorder %s30, 0
      %p57 = por %p55, %p56
      %s59 = sadd.s32 %s58, 1
      %p62 = scmp.eq.s32.totalorder %s24, 1
      %p63 = scmp.ne.s32.totalorder %s58, %s60
      %p64 = scmp.eq.s32.totalorder %s24, 0
      %p65 = por %p63, %p64
      %p66 = scmp.ne.s32.totalorder %s58, %s60
      %p67 = scmp.eq.s32.totalorder %s29, 1
      %p68 = por %p66, %p67
      %p69 = scmp.ne.s32.totalorder %s60, %s61
      %p70 = scmp.eq.s32.totalorder %s29, 0
      %p71 = por %p69, %p70
      %p72 = scmp.ne.s32.totalorder %s60, %s61
      %p73 = scmp.eq.s32.totalorder %s30, 1
      %p74 = por %p72, %p73
      %p76 = scmp.ne.s32.totalorder %s61, %s75
      %p77 = scmp.eq.s32.totalorder %s30, 0
      %p78 = por %p76, %p77
      %s80 = sadd.s32 %s79, 1
      %p83 = scmp.eq.s32.totalorder %s24, 1
      %p84 = scmp.ne.s32.totalorder %s79, %s81
      %p85 = scmp.eq.s32.totalorder %s24, 0
      %p86 = por %p84, %p85
      %p87 = scmp.ne.s32.totalorder %s79, %s81
      %p88 = scmp.eq.s32.totalorder %s29, 1
      %p89 = por %p87, %p88
      %p90 = scmp.ne.s32.totalorder %s81, %s82
      %p91 = scmp.eq.s32.totalorder %s29, 0
      %p92 = por %p90, %p91
      %p93 = scmp.ne.s32.totalorder %s81, %s82
      %p94 = scmp.eq.s32.totalorder %s30, 1
      %p95 = por %p93, %p94
      %p97 = scmp.ne.s32.totalorder %s82, %s96
      %p98 = scmp.eq.s32.totalorder %s30, 0
      %p99 = por %p97, %p98
      %s101 = sadd.s32 %s100, 1
      %p104 = scmp.eq.s32.totalorder %s24, 1
      %p105 = scmp.ne.s32.totalorder %s100, %s102
      %p106 = scmp.eq.s32.totalorder %s24, 0
      %p107 = por %p105, %p106
      %p108 = scmp.ne.s32.totalorder %s100, %s102
      %p109 = scmp.eq.s32.totalorder %s29, 1
      %p110 = por %p108, %p109
      %p111 = scmp.ne.s32.totalorder %s102, %s103
      %p112 = scmp.eq.s32.totalorder %s29, 0
      %p113 = por %p111, %p112
      %p114 = scmp.ne.s32.totalorder %s102, %s103
      %p115 = scmp.eq.s32.totalorder %s30, 1
      %p116 = por %p114, %p115
      %p118 = scmp.ne.s32.totalorder %s103, %s117
      %p119 = scmp.eq.s32.totalorder %s30, 0
      %p120 = por %p118, %p119
      %s122 = sadd.s32 %s121, 1
      %p125 = scmp.eq.s32.totalorder %s24, 1
      %p126 = scmp.ne.s32.totalorder %s121, %s123
      %p127 = scmp.eq.s32.totalorder %s24, 0
      %p128 = por %p126, %p127
      %p129 = scmp.ne.s32.totalorder %s121, %s123
      %p130 = scmp.eq.s32.totalorder %s29, 1
      %p131 = por %p129, %p130
      %p132 = scmp.ne.s32.totalorder %s123, %s124
      %p133 = scmp.eq.s32.totalorder %s29, 0
      %p134 = por %p132, %p133
      %p135 = scmp.ne.s32.totalorder %s123, %s124
      %p136 = scmp.eq.s32.totalorder %s30, 1
      %p137 = por %p135, %p136
      %p139 = scmp.ne.s32.totalorder %s124, %s138
      %p140 = scmp.eq.s32.totalorder %s30, 0
      %p141 = por %p139, %p140
      %s143 = sadd.s32 %s142, 1
      %p146 = scmp.eq.s32.totalorder %s24, 1
      %p147 = scmp.ne.s32.totalorder %s142, %s144
      %p148 = scmp.eq.s32.totalorder %s24, 0
      %p149 = por %p147, %p148
      %p150 = scmp.ne.s32.totalorder %s142, %s144
      %p151 = scmp.eq.s32.totalorder %s29, 1
      %p152 = por %p150, %p151
      %p153 = scmp.ne.s32.totalorder %s144, %s145
      %p154 = scmp.eq.s32.totalorder %s29, 0
      %p155 = por %p153, %p154
      %p156 = scmp.ne.s32.totalorder %s144, %s145
      %p157 = scmp.eq.s32.totalorder %s30, 1
      %p158 = por %p156, %p157
      %p160 = scmp.ne.s32.totalorder %s145, %s159
      %p161 = scmp.eq.s32.totalorder %s30, 0
      %p162 = por %p160, %p161
      %s164 = sadd.s32 %s163, 1
      %p167 = scmp.eq.s32.totalorder %s24, 1
      %p168 = scmp.ne.s32.totalorder %s163, %s165
      %p169 = scmp.eq.s32.totalorder %s24, 0
      %p170 = por %p168, %p169
      %p171 = scmp.ne.s32.totalorder %s163, %s165
      %p172 = scmp.eq.s32.totalorder %s29, 1
      %p173 = por %p171, %p172
      %p174 = scmp.ne.s32.totalorder %s165, %s166
      %p175 = scmp.eq.s32.totalorder %s29, 0
      %p176 = por %p174, %p175
      %p177 = scmp.ne.s32.totalorder %s165, %s166
      %p178 = scmp.eq.s32.totalorder %s30, 1
      %p179 = por %p177, %p178
      %p181 = scmp.ne.s32.totalorder %s166, %s180
      %p182 = scmp.eq.s32.totalorder %s30, 0
      %p183 = por %p181, %p182
      %s185 = sadd.s32 %s184, 1
      %p188 = scmp.eq.s32.totalorder %s24, 1
      %p189 = scmp.ne.s32.totalorder %s184, %s186
      %p190 = scmp.eq.s32.totalorder %s24, 0
      %p191 = por %p189, %p190
      %p192 = scmp.ne.s32.totalorder %s184, %s186
      %p193 = scmp.eq.s32.totalorder %s29, 1
      %p194 = por %p192, %p193
      %p195 = scmp.ne.s32.totalorder %s186, %s187
      %p196 = scmp.eq.s32.totalorder %s29, 0
      %p197 = por %p195, %p196
      %p198 = scmp.ne.s32.totalorder %s186, %s187
      %p199 = scmp.eq.s32.totalorder %s30, 1
      %p200 = por %p198, %p199
      %p202 = scmp.ne.s32.totalorder %s187, %s201
      %p203 = scmp.eq.s32.totalorder %s30, 0
      %p204 = por %p202, %p203
      %s206 = sadd.s32 %s205, 1
      %p209 = scmp.eq.s32.totalorder %s24, 1
      %p210 = scmp.ne.s32.totalorder %s205, %s207
      %p211 = scmp.eq.s32.totalorder %s24, 0
      %p212 = por %p210, %p211
      %p213 = scmp.ne.s32.totalorder %s205, %s207
      %p214 = scmp.eq.s32.totalorder %s29, 1
      %p215 = por %p213, %p214
      %p216 = scmp.ne.s32.totalorder %s207, %s208
      %p217 = scmp.eq.s32.totalorder %s29, 0
      %p218 = por %p216, %p217
      %p219 = scmp.ne.s32.totalorder %s207, %s208
      %p220 = scmp.eq.s32.totalorder %s30, 1
      %p221 = por %p219, %p220
      %p223 = scmp.ne.s32.totalorder %s208, %s222
      %p224 = scmp.eq.s32.totalorder %s30, 0
      %p225 = por %p223, %p224
      %s227 = sadd.s32 %s226, 1
      %p230 = scmp.eq.s32.totalorder %s24, 1
      %p231 = scmp.ne.s32.totalorder %s226, %s228
      %p232 = scmp.eq.s32.totalorder %s24, 0
      %p233 = por %p231, %p232
      %p234 = scmp.ne.s32.totalorder %s226, %s228
      %p235 = scmp.eq.s32.totalorder %s29, 1
      %p236 = por %p234, %p235
      %p237 = scmp.ne.s32.totalorder %s228, %s229
      %p238 = scmp.eq.s32.totalorder %s29, 0
      %p239 = por %p237, %p238
      %p240 = scmp.ne.s32.totalorder %s228, %s229
      %p241 = scmp.eq.s32.totalorder %s30, 1
      %p242 = por %p240, %p241
      %p244 = scmp.ne.s32.totalorder %s229, %s243
      %p245 = scmp.eq.s32.totalorder %s30, 0
      %p246 = por %p244, %p245
      %s248 = sadd.s32 %s247, 1
      %p251 = scmp.eq.s32.totalorder %s24, 1
      %p252 = scmp.ne.s32.totalorder %s247, %s249
      %p253 = scmp.eq.s32.totalorder %s24, 0
      %p254 = por %p252, %p253
      %p255 = scmp.ne.s32.totalorder %s247, %s249
      %p256 = scmp.eq.s32.totalorder %s29, 1
      %p257 = por %p255, %p256
      %p258 = scmp.ne.s32.totalorder %s249, %s250
      %p259 = scmp.eq.s32.totalorder %s29, 0
      %p260 = por %p258, %p259
      %p261 = scmp.ne.s32.totalorder %s249, %s250
      %p262 = scmp.eq.s32.totalorder %s30, 1
      %p263 = por %p261, %p262
      %p265 = scmp.ne.s32.totalorder %s250, %s264
      %p266 = scmp.eq.s32.totalorder %s30, 0
      %p267 = por %p265, %p266
      %s269 = sadd.s32 %s268, 1
      %p272 = scmp.eq.s32.totalorder %s24, 1
      %p273 = scmp.ne.s32.totalorder %s268, %s270
      %p274 = scmp.eq.s32.totalorder %s24, 0
      %p275 = por %p273, %p274
      %p276 = scmp.ne.s32.totalorder %s268, %s270
      %p277 = scmp.eq.s32.totalorder %s29, 1
      %p278 = por %p276, %p277
      %p279 = scmp.ne.s32.totalorder %s270, %s271
      %p280 = scmp.eq.s32.totalorder %s29, 0
      %p281 = por %p279, %p280
      %p282 = scmp.ne.s32.totalorder %s270, %s271
      %p283 = scmp.eq.s32.totalorder %s30, 1
      %p284 = por %p282, %p283
      %p286 = scmp.ne.s32.totalorder %s271, %s285
      %p287 = scmp.eq.s32.totalorder %s30, 0
      %p288 = por %p286, %p287
      %s290 = sadd.s32 %s289, 1
      %p293 = scmp.eq.s32.totalorder %s24, 1
      %p294 = scmp.ne.s32.totalorder %s289, %s291
      %p295 = scmp.eq.s32.totalorder %s24, 0
      %p296 = por %p294, %p295
      %p297 = scmp.ne.s32.totalorder %s289, %s291
      %p298 = scmp.eq.s32.totalorder %s29, 1
      %p299 = por %p297, %p298
      %p300 = scmp.ne.s32.totalorder %s291, %s292
      %p301 = scmp.eq.s32.totalorder %s29, 0
      %p302 = por %p300, %p301
      %p303 = scmp.ne.s32.totalorder %s291, %s292
      %p304 = scmp.eq.s32.totalorder %s30, 1
      %p305 = por %p303, %p304
      %p307 = scmp.ne.s32.totalorder %s292, %s306
      %p308 = scmp.eq.s32.totalorder %s30, 0
      %p309 = por %p307, %p308
      %s311 = sadd.s32 %s310, 1
      %p314 = scmp.eq.s32.totalorder %s24, 1
      %p315 = scmp.ne.s32.totalorder %s310, %s312
      %p316 = scmp.eq.s32.totalorder %s24, 0
      %p317 = por %p315, %p316
      %p318 = scmp.ne.s32.totalorder %s310, %s312
      %p319 = scmp.eq.s32.totalorder %s29, 1
      %p320 = por %p318, %p319
      %p321 = scmp.ne.s32.totalorder %s312, %s313
      %p322 = scmp.eq.s32.totalorder %s29, 0
      %p323 = por %p321, %p322
      %p324 = scmp.ne.s32.totalorder %s312, %s313
      %p325 = scmp.eq.s32.totalorder %s30, 1
      %p326 = por %p324, %p325
      %p328 = scmp.ne.s32.totalorder %s313, %s327
      %p329 = scmp.eq.s32.totalorder %s30, 0
      %p330 = por %p328, %p329
      %s331 = ssub.s32 %s24, %s31
      %p332 = scmp.eq.s32.totalorder %s331, 0
      %s334 = sadd.s32 %s333, 1
      %s335 = scalar_select %p332, %s333, %s334
      %p338 = pneg %p332
      %p339 = scmp.eq.s32.totalorder %s24, 1
      %p340 = por %p338, %p339
      %p341 = scmp.ne.s32.totalorder %s333, %s336
      %p342 = scmp.eq.s32.totalorder %s24, 0
      %p343 = por %p341, %p342
      %p344 = scmp.ne.s32.totalorder %s333, %s336
      %p345 = scmp.eq.s32.totalorder %s29, 1
      %p346 = por %p344, %p345
      %p347 = scmp.ne.s32.totalorder %s336, %s337
      %p348 = scmp.eq.s32.totalorder %s29, 0
      %p349 = por %p347, %p348
      %p350 = scmp.ne.s32.totalorder %s336, %s337
      %p351 = scmp.eq.s32.totalorder %s30, 1
      %p352 = por %p350, %p351
      %p354 = scmp.ne.s32.totalorder %s337, %s353
      %p355 = scmp.eq.s32.totalorder %s30, 0
      %p356 = por %p354, %p355
      %p357 = scmp.le.s32.totalorder 1, %s24
      %p358 = scmp.lt.s32.totalorder %s24, 3
      %p359 = pnand %p357, %p358
      %p360 = pneg %p359
      // Predicated region
      $region9: #{model_forward.1} parent=5 // pred_check
        _
      $region10: #{model_forward.1} parent=5 // pred_check_branch
        %362 = sbr.rel (%p359) target = $region12
      $region11: #{model_forward.1} parent=5 // pred_region
        %s363 = ssub.s32 %s24, 1
        // Predicated region
        $region13: #{model_forward.1} parent=11 // pred_check
          %p364 = pneg %p71
        $region14: #{model_forward.1} parent=11 // pred_check_branch
          %366 = sbr.rel (%p364) target = $region16
        $region15: #{model_forward.1} parent=11 // pred_region
          _
        $region16: #{model_forward.1} parent=11 // pred_fallthru
          _
        // Predicated region
        $region17: #{model_forward.1} parent=11 // pred_check
          %p367 = pneg %p92
        $region18: #{model_forward.1} parent=11 // pred_check_branch
          %369 = sbr.rel (%p367) target = $region20
        $region19: #{model_forward.1} parent=11 // pred_region
          _
        $region20: #{model_forward.1} parent=11 // pred_fallthru
          _
        // Predicated region
        $region21: #{model_forward.1} parent=11 // pred_check
          %p370 = pneg %p113
        $region22: #{model_forward.1} parent=11 // pred_check_branch
          %372 = sbr.rel (%p370) target = $region24
        $region23: #{model_forward.1} parent=11 // pred_region
          _
        $region24: #{model_forward.1} parent=11 // pred_fallthru
          _
        // Predicated region
        $region25: #{model_forward.1} parent=11 // pred_check
          %p373 = pneg %p134
        $region26: #{model_forward.1} parent=11 // pred_check_branch
          %375 = sbr.rel (%p373) target = $region28
        $region27: #{model_forward.1} parent=11 // pred_region
          _
        $region28: #{model_forward.1} parent=11 // pred_fallthru
          _
        // Predicated region
        $region29: #{model_forward.1} parent=11 // pred_check
          %p376 = pneg %p155
        $region30: #{model_forward.1} parent=11 // pred_check_branch
          %378 = sbr.rel (%p376) target = $region32
        $region31: #{model_forward.1} parent=11 // pred_region
          _
        $region32: #{model_forward.1} parent=11 // pred_fallthru
          _
        // Predicated region
        $region33: #{model_forward.1} parent=11 // pred_check
          %p379 = pneg %p176
        $region34: #{model_forward.1} parent=11 // pred_check_branch
          %381 = sbr.rel (%p379) target = $region36
        $region35: #{model_forward.1} parent=11 // pred_region
          _
        $region36: #{model_forward.1} parent=11 // pred_fallthru
          _
        // Predicated region
        $region37: #{model_forward.1} parent=11 // pred_check
          %p382 = pneg %p197
        $region38: #{model_forward.1} parent=11 // pred_check_branch
          %384 = sbr.rel (%p382) target = $region40
        $region39: #{model_forward.1} parent=11 // pred_region
          _
        $region40: #{model_forward.1} parent=11 // pred_fallthru
          _
        // Predicated region
        $region41: #{model_forward.1} parent=11 // pred_check
          %p385 = pneg %p218
        $region42: #{model_forward.1} parent=11 // pred_check_branch
          %387 = sbr.rel (%p385) target = $region44
        $region43: #{model_forward.1} parent=11 // pred_region
          _
        $region44: #{model_forward.1} parent=11 // pred_fallthru
          _
        // Predicated region
        $region45: #{model_forward.1} parent=11 // pred_check
          %p388 = pneg %p239
        $region46: #{model_forward.1} parent=11 // pred_check_branch
          %390 = sbr.rel (%p388) target = $region48
        $region47: #{model_forward.1} parent=11 // pred_region
          _
        $region48: #{model_forward.1} parent=11 // pred_fallthru
          _
        // Predicated region
        $region49: #{model_forward.1} parent=11 // pred_check
          %p391 = pneg %p260
        $region50: #{model_forward.1} parent=11 // pred_check_branch
          %393 = sbr.rel (%p391) target = $region52
        $region51: #{model_forward.1} parent=11 // pred_region
          %s395 = ssub.s32 16384, 16384
          %396 = vsyncadd [#allocation6], %s395
          %s397 = sshll.u32 [#allocation5], 4
          %s398 = int_to_ptr.vmem [resolvable:$true] %s397
          %403 = dma.hbm_to_vmem [thread:$0]  %s10, 16384, %s398, [#allocation6], 256, 256, 16
        $region52: #{model_forward.1} parent=11 // pred_fallthru
          _
        // Predicated region
        $region53: #{model_forward.1} parent=11 // pred_check
          %p404 = pneg %p281
        $region54: #{model_forward.1} parent=11 // pred_check_branch
          %406 = sbr.rel (%p404) target = $region56
        $region55: #{model_forward.1} parent=11 // pred_region
          _
        $region56: #{model_forward.1} parent=11 // pred_fallthru
          _
        // Predicated region
        $region57: #{model_forward.1} parent=11 // pred_check
          %p407 = pneg %p302
        $region58: #{model_forward.1} parent=11 // pred_check_branch
          %409 = sbr.rel (%p407) target = $region60
        $region59: #{model_forward.1} parent=11 // pred_region
          _
        $region60: #{model_forward.1} parent=11 // pred_fallthru
          _
        // Predicated region
        $region61: #{model_forward.1} parent=11 // pred_check
          %p410 = pneg %p323
        $region62: #{model_forward.1} parent=11 // pred_check_branch
          %412 = sbr.rel (%p410) target = $region64
        $region63: #{model_forward.1} parent=11 // pred_region
          _
        $region64: #{model_forward.1} parent=11 // pred_fallthru
          _
      $region12: #{model_forward.1} parent=5 // pred_fallthru
        _
      %p413 = scmp.lt.s32.totalorder %s24, 2
      // Predicated region
      $region65: #{model_forward.1} parent=5 // pred_check
        %p414 = pneg %p413
      $region66: #{model_forward.1} parent=5 // pred_check_branch
        %416 = sbr.rel (%p414) target = $region68
      $region67: #{model_forward.1} parent=5 // pred_region
        // Predicated region
        $region69: #{model_forward.1} parent=67 // pred_check
          %p417 = pneg %p44
        $region70: #{model_forward.1} parent=67 // pred_check_branch
          %419 = sbr.rel (%p417) target = $region72
        $region71: #{model_forward.1} parent=67 // pred_region
          %p420 = scmp.lt.s32.totalorder %s24, 1
          %s421 = scalar_select %p420, %s24, 1
          %s422 = smul.addr %s421, 8
          %s423 = scalar_lea.vmem %s0, %s422
        $region72: #{model_forward.1} parent=67 // pred_fallthru
          _
      $region68: #{model_forward.1} parent=5 // pred_fallthru
        _
      %p424 = scmp.le.s32.totalorder 1, %s24
      %p425 = scmp.lt.s32.totalorder %s24, 3
      %p426 = pnand %p424, %p425
      %p427 = pneg %p426
      // Predicated region
      $region73: #{model_forward.1} parent=5 // pred_check
        _
      $region74: #{model_forward.1} parent=5 // pred_check_branch
        %429 = sbr.rel (%p426) target = $region76
      $region75: #{model_forward.1} parent=5 // pred_region
        %s430 = ssub.s32 %s24, 1
        // Predicated region
        $region77: #{model_forward.1} parent=75 // pred_check
          %p431 = pneg %p260
        $region78: #{model_forward.1} parent=75 // pred_check_branch
          %433 = sbr.rel (%p431) target = $region80
        $region79: #{model_forward.1} parent=75 // pred_region
          %434 = dma.done [#allocation6], 16384
        $region80: #{model_forward.1} parent=75 // pred_fallthru
          _
        %p435 = scmp.lt.s32.totalorder %s29, 1
        %s436 = scalar_select %p435, %s29, 1
        %s437 = smul.addr %s436, 8
        %s438 = scalar_lea.vmem %s0, %s437
        %p439 = pneg %p50
        %p440 = pneg %p47
        %p441 = pneg %p71
        %p442 = pneg %p68
        %p443 = pneg %p92
        %p444 = pneg %p89
        %p445 = pneg %p113
        %p446 = pneg %p110
        %p447 = pneg %p134
        %p448 = pneg %p131
        %p449 = pneg %p155
        %p450 = pneg %p152
        %p451 = pneg %p176
        %p452 = pneg %p173
        %p453 = pneg %p197
        %p454 = pneg %p194
        %p455 = pneg %p218
        %p456 = pneg %p215
        %p457 = pneg %p239
        %p458 = pneg %p236
        %p459 = pneg %p260
        %p460 = pneg %p257
        %p461 = pneg %p281
        %p462 = pneg %p278
        %p463 = pneg %p302
        %p464 = pneg %p299
        %p465 = pneg %p323
        %p466 = pneg %p320
        %p467 = pneg %p349
        %p468 = pneg %p346
        %s469 = sand.u32 %s336, 1
        %s470 = scalar_lea.sflag [#allocation7], %s469
        %s471 = sand.u32 %s336, 1
        %s472 = scalar_lea.vmem [#allocation8], %s471
        %p473 = scmp.lt.s32.totalorder %s29, 1
        %s474 = scalar_select %p473, %s29, 1
        %s475 = smul.addr %s474, 8
        %s476 = scalar_lea.vmem %s0, %s475
        %v478 = vld [vmem:[%s7] sm:$0xff]
        %v479 = vld [vmem:[%s1] sm:$0xf]
        %v480 = vld [vmem:[%s2] sm:$0xf]
        %v481 = vld [vmem:[%s3] sm:$0xf]
        %v482 = vld [vmem:[%s4] sm:$0xff]
        %v483 = vld [vmem:[%s5] sm:$0xff]
        %v484 = vld [vmem:[%s6] sm:$0xff]
        %v485 = vld [vmem:[%s8] sm:$0xf]
        %v486 = vld [vmem:[%s8 + $0x4] sm:$0xf]
        %v487 = vld [vmem:[%s8 + $0x8] sm:$0xf]
        %v488 = vld [vmem:[%s8 + $0xc] sm:$0xf]
        %v489 = vld [vmem:[%s8 + $0x10] sm:$0xf]
        %v490 = vld [vmem:[%s8 + $0x14] sm:$0xf]
        %v491 = vld [vmem:[%s8 + $0x18] sm:$0xf]
        %v492 = vld [vmem:[%s8 + $0x1c] sm:$0xf]
        %v493 = vld [vmem:[%s8 + $0x20] sm:$0xf]
        %v494 = vld [vmem:[%s8 + $0x24] sm:$0xf]
        %v495 = vld [vmem:[%s8 + $0x28] sm:$0xf]
        %v496 = vld [vmem:[%s8 + $0x2c] sm:$0xf]
        %v497 = vld [vmem:[%s8 + $0x30] sm:$0xf]
        %v498 = vld [vmem:[%s8 + $0x34] sm:$0xf]
        %v499 = vld [vmem:[%s8 + $0x38] sm:$0xf]
        %v500 = vld [vmem:[%s8 + $0x3c] sm:$0xf]
        %v501 = vld [vmem:[%s8 + $0x40] sm:$0xf]
        %v502 = vld [vmem:[%s8 + $0x44] sm:$0xf]
        %v503 = vld [vmem:[%s8 + $0x48] sm:$0xf]
        %v504 = vld [vmem:[%s8 + $0x4c] sm:$0xf]
        %v505 = vld [vmem:[%s8 + $0x50] sm:$0xf]
        %v506 = vld [vmem:[%s8 + $0x54] sm:$0xf]
        %v507 = vld [vmem:[%s8 + $0x58] sm:$0xf]
        %v508 = vld [vmem:[%s8 + $0x5c] sm:$0xf]
        %v509 = vld [vmem:[%s8 + $0x60] sm:$0xf]
        %v510 = vld [vmem:[%s8 + $0x64] sm:$0xf]
        %v511 = vld [vmem:[%s8 + $0x68] sm:$0xf]
        %v512 = vld [vmem:[%s8 + $0x6c] sm:$0xf]
        %v513 = vld [vmem:[%s8 + $0x70] sm:$0xf]
        %v514 = vld [vmem:[%s8 + $0x74] sm:$0xf]
        %v515 = vld [vmem:[%s8 + $0x78] sm:$0xf]
        %v516 = vld [vmem:[%s8 + $0x7c] sm:$0xf]
        %v517 = vld [vmem:[%s8 + $0x80] sm:$0xf]
        %v518 = vld [vmem:[%s8 + $0x84] sm:$0xf]
        %v519 = vld [vmem:[%s8 + $0x88] sm:$0xf]
        %v520 = vld [vmem:[%s8 + $0x8c] sm:$0xf]
        %v521 = vld [vmem:[%s8 + $0x90] sm:$0xf]
        %v522 = vld [vmem:[%s8 + $0x94] sm:$0xf]
        %v523 = vld [vmem:[%s8 + $0x98] sm:$0xf]
        %v524 = vld [vmem:[%s8 + $0x9c] sm:$0xf]
        %v525 = vld [vmem:[%s8 + $0xa0] sm:$0xf]
        %v526 = vld [vmem:[%s8 + $0xa4] sm:$0xf]
        %v527 = vld [vmem:[%s8 + $0xa8] sm:$0xf]
        %v528 = vld [vmem:[%s8 + $0xac] sm:$0xf]
        %v529 = vld [vmem:[%s8 + $0xb0] sm:$0xf]
        %v530 = vld [vmem:[%s8 + $0xb4] sm:$0xf]
        %v531 = vld [vmem:[%s8 + $0xb8] sm:$0xf]
        %v532 = vld [vmem:[%s8 + $0xbc] sm:$0xf]
        %v533 = vld [vmem:[%s8 + $0xc0] sm:$0xf]
        %v534 = vld [vmem:[%s8 + $0xc4] sm:$0xf]
        %v535 = vld [vmem:[%s8 + $0xc8] sm:$0xf]
        %v536 = vld [vmem:[%s8 + $0xcc] sm:$0xf]
        %v537 = vld [vmem:[%s8 + $0xd0] sm:$0xf]
        %v538 = vld [vmem:[%s8 + $0xd4] sm:$0xf]
        %v539 = vld [vmem:[%s8 + $0xd8] sm:$0xf]
        %v540 = vld [vmem:[%s8 + $0xdc] sm:$0xf]
        %v541 = vld [vmem:[%s8 + $0xe0] sm:$0xf]
        %v542 = vld [vmem:[%s8 + $0xe4] sm:$0xf]
        %v543 = vld [vmem:[%s8 + $0xe8] sm:$0xf]
        %v544 = vld [vmem:[%s8 + $0xec] sm:$0xf]
        %v545 = vld [vmem:[%s8 + $0xf0] sm:$0xf]
        %v546 = vld [vmem:[%s8 + $0xf4] sm:$0xf]
        %v547 = vld [vmem:[%s8 + $0xf8] sm:$0xf]
        %v548 = vld [vmem:[%s8 + $0xfc] sm:$0xf]
        %v549 = vld [vmem:[%s8 + $0x100] sm:$0xf]
        %v550 = vld [vmem:[%s8 + $0x104] sm:$0xf]
        %v551 = vld [vmem:[%s8 + $0x108] sm:$0xf]
        %v552 = vld [vmem:[%s8 + $0x10c] sm:$0xf]
        %v553 = vld [vmem:[%s8 + $0x110] sm:$0xf]
        %v554 = vld [vmem:[%s8 + $0x114] sm:$0xf]
        %v555 = vld [vmem:[%s8 + $0x118] sm:$0xf]
        %v556 = vld [vmem:[%s8 + $0x11c] sm:$0xf]
        %v557 = vld [vmem:[%s8 + $0x120] sm:$0xf]
        %v558 = vld [vmem:[%s8 + $0x124] sm:$0xf]
        %v559 = vld [vmem:[%s8 + $0x128] sm:$0xf]
        %v560 = vld [vmem:[%s8 + $0x12c] sm:$0xf]
        %v561 = vld [vmem:[%s8 + $0x130] sm:$0xf]
        %v562 = vld [vmem:[%s8 + $0x134] sm:$0xf]
        %v563 = vld [vmem:[%s8 + $0x138] sm:$0xf]
        %v564 = vld [vmem:[%s8 + $0x13c] sm:$0xf]
        %v565 = vld [vmem:[%s8 + $0x140] sm:$0xf]
        %v566 = vld [vmem:[%s8 + $0x144] sm:$0xf]
        %v567 = vld [vmem:[%s8 + $0x148] sm:$0xf]
        %v568 = vld [vmem:[%s8 + $0x14c] sm:$0xf]
        %v569 = vld [vmem:[%s8 + $0x150] sm:$0xf]
        %v570 = vld [vmem:[%s8 + $0x154] sm:$0xf]
        %v571 = vld [vmem:[%s8 + $0x158] sm:$0xf]
        %v572 = vld [vmem:[%s8 + $0x15c] sm:$0xf]
        %v573 = vld [vmem:[%s8 + $0x160] sm:$0xf]
        %v574 = vld [vmem:[%s8 + $0x164] sm:$0xf]
        %v575 = vld [vmem:[%s8 + $0x168] sm:$0xf]
        %v576 = vld [vmem:[%s8 + $0x16c] sm:$0xf]
        %v577 = vld [vmem:[%s8 + $0x170] sm:$0xf]
        %v578 = vld [vmem:[%s8 + $0x174] sm:$0xf]
        %v579 = vld [vmem:[%s8 + $0x178] sm:$0xf]
        %v580 = vld [vmem:[%s8 + $0x17c] sm:$0xf]
        %v581 = vld [vmem:[%s8 + $0x180] sm:$0xf]
        %v582 = vld [vmem:[%s8 + $0x184] sm:$0xf]
        %v583 = vld [vmem:[%s8 + $0x188] sm:$0xf]
        %v584 = vld [vmem:[%s8 + $0x18c] sm:$0xf]
        %v585 = vld [vmem:[%s8 + $0x190] sm:$0xf]
        %v586 = vld [vmem:[%s8 + $0x194] sm:$0xf]
        %v587 = vld [vmem:[%s8 + $0x198] sm:$0xf]
        %v588 = vld [vmem:[%s8 + $0x19c] sm:$0xf]
        %v589 = vld [vmem:[%s8 + $0x1a0] sm:$0xf]
        %v590 = vld [vmem:[%s8 + $0x1a4] sm:$0xf]
        %v591 = vld [vmem:[%s8 + $0x1a8] sm:$0xf]
        %v592 = vld [vmem:[%s8 + $0x1ac] sm:$0xf]
        %v593 = vld [vmem:[%s8 + $0x1b0] sm:$0xf]
        %v594 = vld [vmem:[%s8 + $0x1b4] sm:$0xf]
        %v595 = vld [vmem:[%s8 + $0x1b8] sm:$0xf]
        %v596 = vld [vmem:[%s8 + $0x1bc] sm:$0xf]
        %v597 = vld [vmem:[%s8 + $0x1c0] sm:$0xf]
        %v598 = vld [vmem:[%s8 + $0x1c4] sm:$0xf]
        %v599 = vld [vmem:[%s8 + $0x1c8] sm:$0xf]
        %v600 = vld [vmem:[%s8 + $0x1cc] sm:$0xf]
        %v601 = vld [vmem:[%s8 + $0x1d0] sm:$0xf]
        %v602 = vld [vmem:[%s8 + $0x1d4] sm:$0xf]
        %v603 = vld [vmem:[%s8 + $0x1d8] sm:$0xf]
        %v604 = vld [vmem:[%s8 + $0x1dc] sm:$0xf]
        %v605 = vld [vmem:[%s8 + $0x1e0] sm:$0xf]
        %v606 = vld [vmem:[%s8 + $0x1e4] sm:$0xf]
        %v607 = vld [vmem:[%s8 + $0x1e8] sm:$0xf]
        %v608 = vld [vmem:[%s8 + $0x1ec] sm:$0xf]
        %v609 = vld [vmem:[%s8 + $0x1f0] sm:$0xf]
        %v610 = vld [vmem:[%s8 + $0x1f4] sm:$0xf]
        %v611 = vld [vmem:[%s8 + $0x1f8] sm:$0xf]
        %v612 = vld [vmem:[%s8 + $0x1fc] sm:$0xf]
        %v613 = vld [vmem:[%s9] sm:$0xff]
        %v614 = vld [vmem:[%s9 + $0x8] sm:$0xff]
        %v615 = vld [vmem:[%s9 + $0x10] sm:$0xff]
        %v616 = vld [vmem:[%s9 + $0x18] sm:$0xff]
        %617 = vst [vmem:[#allocation2] sm:$0xff] 0.0
        %618 = vst [vmem:[#allocation2 + $0x48] sm:$0xff] 0.0
        %v619 = vld [vmem:[%s476] sm:$0xff]
        %s620 = scalar_lea.vmem [#allocation2], 8
        %621 = vst [vmem:[%s620] ss:$8 sm:$0xf] %v619
        %622 = vst [vmem:[%s620] ss:$8 sm:$0xf0] %v619
        %v623 = vld [vmem:[#allocation2] ss:$8 sm:$0xf]
        %v624 = vld [vmem:[#allocation2] ss:$8 sm:$0xf0]
        %v625 = vor.u32 %v623, %v624
        %s626 = scalar_lea.vmem [#allocation2], 64
        %v627 = vld [vmem:[%s626] ss:$8 sm:$0x1]
        %629 = vset.pattern.permute.xlu0 0
        %630 = vperm.xlu0 %629, %v479
        %v631 = vpop.permute.xlu0 %630
        %v635 = vlaneseq
        %v636 = vshrl.u32 %v635, 7
        %v637 = vsub.s32 0, %v636
        %v638 = vrot.slane %v625, %v637
        %v639 = vlaneseq
        %v640 = vshrl.u32 %v639, 7
        %v641 = vsub.s32 1, %v640
        %v642 = vrot.slane %v625, %v641
        %v643 = vlaneseq
        %v644 = vshrl.u32 %v643, 7
        %v645 = vsub.s32 2, %v644
        %v646 = vrot.slane %v625, %v645
        %v647 = vlaneseq
        %v648 = vshrl.u32 %v647, 7
        %v649 = vsub.s32 3, %v648
        %v650 = vrot.slane %v625, %v649
        %v651 = vlaneseq
        %v652 = vshrl.u32 %v651, 7
        %v653 = vsub.s32 4, %v652
        %v654 = vrot.slane %v625, %v653
        %v655 = vlaneseq
        %v656 = vshrl.u32 %v655, 7
        %v657 = vsub.s32 5, %v656
        %v658 = vrot.slane %v625, %v657
        %v659 = vlaneseq
        %v660 = vshrl.u32 %v659, 7
        %v661 = vsub.s32 6, %v660
        %v662 = vrot.slane %v625, %v661
        %v663 = vlaneseq
        %v664 = vshrl.u32 %v663, 7
        %v665 = vsub.s32 7, %v664
        %v666 = vrot.slane %v625, %v665
        %v667 = vlaneseq
        %v668 = vshrl.u32 %v667, 7
        %v669 = vsub.s32 0, %v668
        %v670 = vrot.slane %v627, %v669
        %v680 = vmul.f32 %v631, %v638
        %v681 = vmul.f32 %v631, %v642
        %v682 = vmul.f32 %v631, %v646
        %v683 = vmul.f32 %v631, %v650
        %v684 = vmul.f32 %v631, %v654
        %v685 = vmul.f32 %v631, %v658
        %v686 = vmul.f32 %v631, %v662
        %v687 = vmul.f32 %v631, %v666
        %v688 = vmul.f32 %v631, %v670
        %689 = vset.pattern.permute.xlu0 1
        %690 = vperm.xlu0 %689, %v479
        %v691 = vpop.permute.xlu0 %690
        %v693 = vmul.f32 %v691, %v638
        %v694 = vmul.f32 %v691, %v642
        %v695 = vmul.f32 %v691, %v646
        %v696 = vmul.f32 %v691, %v650
        %v697 = vmul.f32 %v691, %v654
        %v698 = vmul.f32 %v691, %v658
        %v699 = vmul.f32 %v691, %v662
        %v700 = vmul.f32 %v691, %v666
        %v701 = vmul.f32 %v691, %v670
        %711 = vrot.lane.b32.xlu0 %v693, 127
        %v712 = vpop.permute.xlu0 %711
        %713 = vrot.lane.b32.xlu0 %v694, 127
        %v714 = vpop.permute.xlu0 %713
        %715 = vrot.lane.b32.xlu0 %v695, 127
        %v716 = vpop.permute.xlu0 %715
        %717 = vrot.lane.b32.xlu0 %v696, 127
        %v718 = vpop.permute.xlu0 %717
        %719 = vrot.lane.b32.xlu0 %v697, 127
        %v720 = vpop.permute.xlu0 %719
        %721 = vrot.lane.b32.xlu0 %v698, 127
        %v722 = vpop.permute.xlu0 %721
        %723 = vrot.lane.b32.xlu0 %v699, 127
        %v724 = vpop.permute.xlu0 %723
        %725 = vrot.lane.b32.xlu0 %v700, 127
        %v726 = vpop.permute.xlu0 %725
        %727 = vrot.lane.b32.xlu0 %v701, 127
        %v728 = vpop.permute.xlu0 %727
        %vm729 = vcmask 1039360
        %v730 = vsel %vm729, %v712, %v714
        %v731 = vsel %vm729, %v714, %v716
        %v732 = vsel %vm729, %v716, %v718
        %v733 = vsel %vm729, %v718, %v720
        %v734 = vsel %vm729, %v720, %v722
        %v735 = vsel %vm729, %v722, %v724
        %v736 = vsel %vm729, %v724, %v726
        %v737 = vsel %vm729, %v726, %v728
        %v747 = vadd.f32 %v680, %v730
        %v748 = vadd.f32 %v681, %v731
        %v749 = vadd.f32 %v682, %v732
        %v750 = vadd.f32 %v683, %v733
        %v751 = vadd.f32 %v684, %v734
        %v752 = vadd.f32 %v685, %v735
        %v753 = vadd.f32 %v686, %v736
        %v754 = vadd.f32 %v687, %v737
        %v755 = vadd.f32 %v688, %v728
        %756 = vset.pattern.permute.xlu0 2
        %757 = vperm.xlu0 %756, %v479
        %v758 = vpop.permute.xlu0 %757
        %v760 = vmul.f32 %v758, %v638
        %v761 = vmul.f32 %v758, %v642
        %v762 = vmul.f32 %v758, %v646
        %v763 = vmul.f32 %v758, %v650
        %v764 = vmul.f32 %v758, %v654
        %v765 = vmul.f32 %v758, %v658
        %v766 = vmul.f32 %v758, %v662
        %v767 = vmul.f32 %v758, %v666
        %v768 = vmul.f32 %v758, %v670
        %778 = vrot.lane.b32.xlu0 %v760, 126
        %v779 = vpop.permute.xlu0 %778
        %780 = vrot.lane.b32.xlu0 %v761, 126
        %v781 = vpop.permute.xlu0 %780
        %782 = vrot.lane.b32.xlu0 %v762, 126
        %v783 = vpop.permute.xlu0 %782
        %784 = vrot.lane.b32.xlu0 %v763, 126
        %v785 = vpop.permute.xlu0 %784
        %786 = vrot.lane.b32.xlu0 %v764, 126
        %v787 = vpop.permute.xlu0 %786
        %788 = vrot.lane.b32.xlu0 %v765, 126
        %v789 = vpop.permute.xlu0 %788
        %790 = vrot.lane.b32.xlu0 %v766, 126
        %v791 = vpop.permute.xlu0 %790
        %792 = vrot.lane.b32.xlu0 %v767, 126
        %v793 = vpop.permute.xlu0 %792
        %794 = vrot.lane.b32.xlu0 %v768, 126
        %v795 = vpop.permute.xlu0 %794
        %vm796 = vcmask 1031168
        %v797 = vsel %vm796, %v779, %v781
        %v798 = vsel %vm796, %v781, %v783
        %v799 = vsel %vm796, %v783, %v785
        %v800 = vsel %vm796, %v785, %v787
        %v801 = vsel %vm796, %v787, %v789
        %v802 = vsel %vm796, %v789, %v791
        %v803 = vsel %vm796, %v791, %v793
        %v804 = vsel %vm796, %v793, %v795
        %v814 = vadd.f32 %v747, %v797
        %v815 = vadd.f32 %v748, %v798
        %v816 = vadd.f32 %v749, %v799
        %v817 = vadd.f32 %v750, %v800
        %v818 = vadd.f32 %v751, %v801
        %v819 = vadd.f32 %v752, %v802
        %v820 = vadd.f32 %v753, %v803
        %v821 = vadd.f32 %v754, %v804
        %v822 = vadd.f32 %v755, %v795
        %823 = vset.pattern.permute.xlu0 3
        %824 = vperm.xlu0 %823, %v479
        %v825 = vpop.permute.xlu0 %824
        %v827 = vmul.f32 %v825, %v638
        %v828 = vmul.f32 %v825, %v642
        %v829 = vmul.f32 %v825, %v646
        %v830 = vmul.f32 %v825, %v650
        %v831 = vmul.f32 %v825, %v654
        %v832 = vmul.f32 %v825, %v658
        %v833 = vmul.f32 %v825, %v662
        %v834 = vmul.f32 %v825, %v666
        %v835 = vmul.f32 %v825, %v670
        %845 = vrot.lane.b32.xlu0 %v827, 125
        %v846 = vpop.permute.xlu0 %845
        %847 = vrot.lane.b32.xlu0 %v828, 125
        %v848 = vpop.permute.xlu0 %847
        %849 = vrot.lane.b32.xlu0 %v829, 125
        %v850 = vpop.permute.xlu0 %849
        %851 = vrot.lane.b32.xlu0 %v830, 125
        %v852 = vpop.permute.xlu0 %851
        %853 = vrot.lane.b32.xlu0 %v831, 125
        %v854 = vpop.permute.xlu0 %853
        %855 = vrot.lane.b32.xlu0 %v832, 125
        %v856 = vpop.permute.xlu0 %855
        %857 = vrot.lane.b32.xlu0 %v833, 125
        %v858 = vpop.permute.xlu0 %857
        %859 = vrot.lane.b32.xlu0 %v834, 125
        %v860 = vpop.permute.xlu0 %859
        %861 = vrot.lane.b32.xlu0 %v835, 125
        %v862 = vpop.permute.xlu0 %861
        %vm863 = vcmask 1022976
        %v864 = vsel %vm863, %v846, %v848
        %v865 = vsel %vm863, %v848, %v850
        %v866 = vsel %vm863, %v850, %v852
        %v867 = vsel %vm863, %v852, %v854
        %v868 = vsel %vm863, %v854, %v856
        %v869 = vsel %vm863, %v856, %v858
        %v870 = vsel %vm863, %v858, %v860
        %v871 = vsel %vm863, %v860, %v862
        %v881 = vadd.f32 %v814, %v864
        %v882 = vadd.f32 %v815, %v865
        %v883 = vadd.f32 %v816, %v866
        %v884 = vadd.f32 %v817, %v867
        %v885 = vadd.f32 %v818, %v868
        %v886 = vadd.f32 %v819, %v869
        %v887 = vadd.f32 %v820, %v870
        %v888 = vadd.f32 %v821, %v871
        %v889 = vadd.f32 %v822, %v862
        %890 = vset.pattern.permute.xlu0 4
        %891 = vperm.xlu0 %890, %v479
        %v892 = vpop.permute.xlu0 %891
        %v894 = vmul.f32 %v892, %v638
        %v895 = vmul.f32 %v892, %v642
        %v896 = vmul.f32 %v892, %v646
        %v897 = vmul.f32 %v892, %v650
        %v898 = vmul.f32 %v892, %v654
        %v899 = vmul.f32 %v892, %v658
        %v900 = vmul.f32 %v892, %v662
        %v901 = vmul.f32 %v892, %v666
        %v902 = vmul.f32 %v892, %v670
        %912 = vrot.lane.b32.xlu0 %v894, 124
        %v913 = vpop.permute.xlu0 %912
        %914 = vrot.lane.b32.xlu0 %v895, 124
        %v915 = vpop.permute.xlu0 %914
        %916 = vrot.lane.b32.xlu0 %v896, 124
        %v917 = vpop.permute.xlu0 %916
        %918 = vrot.lane.b32.xlu0 %v897, 124
        %v919 = vpop.permute.xlu0 %918
        %920 = vrot.lane.b32.xlu0 %v898, 124
        %v921 = vpop.permute.xlu0 %920
        %922 = vrot.lane.b32.xlu0 %v899, 124
        %v923 = vpop.permute.xlu0 %922
        %924 = vrot.lane.b32.xlu0 %v900, 124
        %v925 = vpop.permute.xlu0 %924
        %926 = vrot.lane.b32.xlu0 %v901, 124
        %v927 = vpop.permute.xlu0 %926
        %928 = vrot.lane.b32.xlu0 %v902, 124
        %v929 = vpop.permute.xlu0 %928
        %vm930 = vcmask 1014784
        %v931 = vsel %vm930, %v913, %v915
        %v932 = vsel %vm930, %v915, %v917
        %v933 = vsel %vm930, %v917, %v919
        %v934 = vsel %vm930, %v919, %v921
        %v935 = vsel %vm930, %v921, %v923
        %v936 = vsel %vm930, %v923, %v925
        %v937 = vsel %vm930, %v925, %v927
        %v938 = vsel %vm930, %v927, %v929
        %v948 = vadd.f32 %v881, %v931
        %v949 = vadd.f32 %v882, %v932
        %v950 = vadd.f32 %v883, %v933
        %v951 = vadd.f32 %v884, %v934
        %v952 = vadd.f32 %v885, %v935
        %v953 = vadd.f32 %v886, %v936
        %v954 = vadd.f32 %v887, %v937
        %v955 = vadd.f32 %v888, %v938
        %v956 = vadd.f32 %v889, %v929
        %957 = vset.pattern.permute.xlu0 5
        %958 = vperm.xlu0 %957, %v479
        %v959 = vpop.permute.xlu0 %958
        %v961 = vmul.f32 %v959, %v638
        %v962 = vmul.f32 %v959, %v642
        %v963 = vmul.f32 %v959, %v646
        %v964 = vmul.f32 %v959, %v650
        %v965 = vmul.f32 %v959, %v654
        %v966 = vmul.f32 %v959, %v658
        %v967 = vmul.f32 %v959, %v662
        %v968 = vmul.f32 %v959, %v666
        %v969 = vmul.f32 %v959, %v670
        %979 = vrot.lane.b32.xlu0 %v961, 96
        %v980 = vpop.permute.xlu0 %979
        %981 = vrot.lane.b32.xlu0 %v962, 96
        %v982 = vpop.permute.xlu0 %981
        %983 = vrot.lane.b32.xlu0 %v963, 96
        %v984 = vpop.permute.xlu0 %983
        %985 = vrot.lane.b32.xlu0 %v964, 96
        %v986 = vpop.permute.xlu0 %985
        %987 = vrot.lane.b32.xlu0 %v965, 96
        %v988 = vpop.permute.xlu0 %987
        %989 = vrot.lane.b32.xlu0 %v966, 96
        %v990 = vpop.permute.xlu0 %989
        %991 = vrot.lane.b32.xlu0 %v967, 96
        %v992 = vpop.permute.xlu0 %991
        %993 = vrot.lane.b32.xlu0 %v968, 96
        %v994 = vpop.permute.xlu0 %993
        %995 = vrot.lane.b32.xlu0 %v969, 96
        %v996 = vpop.permute.xlu0 %995
        %vm997 = vcmask 785408
        %v998 = vsel %vm997, %v980, %v982
        %v999 = vsel %vm997, %v982, %v984
        %v1000 = vsel %vm997, %v984, %v986
        %v1001 = vsel %vm997, %v986, %v988
        %v1002 = vsel %vm997, %v988, %v990
        %v1003 = vsel %vm997, %v990, %v992
        %v1004 = vsel %vm997, %v992, %v994
        %v1005 = vsel %vm997, %v994, %v996
        %v1015 = vadd.f32 %v948, %v998
        %v1016 = vadd.f32 %v949, %v999
        %v1017 = vadd.f32 %v950, %v1000
        %v1018 = vadd.f32 %v951, %v1001
        %v1019 = vadd.f32 %v952, %v1002
        %v1020 = vadd.f32 %v953, %v1003
        %v1021 = vadd.f32 %v954, %v1004
        %v1022 = vadd.f32 %v955, %v1005
        %v1023 = vadd.f32 %v956, %v996
        %1024 = vset.pattern.permute.xlu0 6
        %1025 = vperm.xlu0 %1024, %v479
        %v1026 = vpop.permute.xlu0 %1025
        %v1028 = vmul.f32 %v1026, %v638
        %v1029 = vmul.f32 %v1026, %v642
        %v1030 = vmul.f32 %v1026, %v646
        %v1031 = vmul.f32 %v1026, %v650
        %v1032 = vmul.f32 %v1026, %v654
        %v1033 = vmul.f32 %v1026, %v658
        %v1034 = vmul.f32 %v1026, %v662
        %v1035 = vmul.f32 %v1026, %v666
        %v1036 = vmul.f32 %v1026, %v670
        %1046 = vrot.lane.b32.xlu0 %v1028, 95
        %v1047 = vpop.permute.xlu0 %1046
        %1048 = vrot.lane.b32.xlu0 %v1029, 95
        %v1049 = vpop.permute.xlu0 %1048
        %1050 = vrot.lane.b32.xlu0 %v1030, 95
        %v1051 = vpop.permute.xlu0 %1050
        %1052 = vrot.lane.b32.xlu0 %v1031, 95
        %v1053 = vpop.permute.xlu0 %1052
        %1054 = vrot.lane.b32.xlu0 %v1032, 95
        %v1055 = vpop.permute.xlu0 %1054
        %1056 = vrot.lane.b32.xlu0 %v1033, 95
        %v1057 = vpop.permute.xlu0 %1056
        %1058 = vrot.lane.b32.xlu0 %v1034, 95
        %v1059 = vpop.permute.xlu0 %1058
        %1060 = vrot.lane.b32.xlu0 %v1035, 95
        %v1061 = vpop.permute.xlu0 %1060
        %1062 = vrot.lane.b32.xlu0 %v1036, 95
        %v1063 = vpop.permute.xlu0 %1062
        %vm1064 = vcmask 777216
        %v1065 = vsel %vm1064, %v1047, %v1049
        %v1066 = vsel %vm1064, %v1049, %v1051
        %v1067 = vsel %vm1064, %v1051, %v1053
        %v1068 = vsel %vm1064, %v1053, %v1055
        %v1069 = vsel %vm1064, %v1055, %v1057
        %v1070 = vsel %vm1064, %v1057, %v1059
        %v1071 = vsel %vm1064, %v1059, %v1061
        %v1072 = vsel %vm1064, %v1061, %v1063
        %v1082 = vadd.f32 %v1015, %v1065
        %v1083 = vadd.f32 %v1016, %v1066
        %v1084 = vadd.f32 %v1017, %v1067
        %v1085 = vadd.f32 %v1018, %v1068
        %v1086 = vadd.f32 %v1019, %v1069
        %v1087 = vadd.f32 %v1020, %v1070
        %v1088 = vadd.f32 %v1021, %v1071
        %v1089 = vadd.f32 %v1022, %v1072
        %v1090 = vadd.f32 %v1023, %v1063
        %1091 = vset.pattern.permute.xlu0 7
        %1092 = vperm.xlu0 %1091, %v479
        %v1093 = vpop.permute.xlu0 %1092
        %v1095 = vmul.f32 %v1093, %v638
        %v1096 = vmul.f32 %v1093, %v642
        %v1097 = vmul.f32 %v1093, %v646
        %v1098 = vmul.f32 %v1093, %v650
        %v1099 = vmul.f32 %v1093, %v654
        %v1100 = vmul.f32 %v1093, %v658
        %v1101 = vmul.f32 %v1093, %v662
        %v1102 = vmul.f32 %v1093, %v666
        %v1103 = vmul.f32 %v1093, %v670
        %1113 = vrot.lane.b32.xlu0 %v1095, 94
        %v1114 = vpop.permute.xlu0 %1113
        %1115 = vrot.lane.b32.xlu0 %v1096, 94
        %v1116 = vpop.permute.xlu0 %1115
        %1117 = vrot.lane.b32.xlu0 %v1097, 94
        %v1118 = vpop.permute.xlu0 %1117
        %1119 = vrot.lane.b32.xlu0 %v1098, 94
        %v1120 = vpop.permute.xlu0 %1119
        %1121 = vrot.lane.b32.xlu0 %v1099, 94
        %v1122 = vpop.permute.xlu0 %1121
        %1123 = vrot.lane.b32.xlu0 %v1100, 94
        %v1124 = vpop.permute.xlu0 %1123
        %1125 = vrot.lane.b32.xlu0 %v1101, 94
        %v1126 = vpop.permute.xlu0 %1125
        %1127 = vrot.lane.b32.xlu0 %v1102, 94
        %v1128 = vpop.permute.xlu0 %1127
        %1129 = vrot.lane.b32.xlu0 %v1103, 94
        %v1130 = vpop.permute.xlu0 %1129
        %vm1131 = vcmask 769024
        %v1132 = vsel %vm1131, %v1114, %v1116
        %v1133 = vsel %vm1131, %v1116, %v1118
        %v1134 = vsel %vm1131, %v1118, %v1120
        %v1135 = vsel %vm1131, %v1120, %v1122
        %v1136 = vsel %vm1131, %v1122, %v1124
        %v1137 = vsel %vm1131, %v1124, %v1126
        %v1138 = vsel %vm1131, %v1126, %v1128
        %v1139 = vsel %vm1131, %v1128, %v1130
        %v1149 = vadd.f32 %v1082, %v1132
        %v1150 = vadd.f32 %v1083, %v1133
        %v1151 = vadd.f32 %v1084, %v1134
        %v1152 = vadd.f32 %v1085, %v1135
        %v1153 = vadd.f32 %v1086, %v1136
        %v1154 = vadd.f32 %v1087, %v1137
        %v1155 = vadd.f32 %v1088, %v1138
        %v1156 = vadd.f32 %v1089, %v1139
        %v1157 = vadd.f32 %v1090, %v1130
        %1158 = vset.pattern.permute.xlu0 8
        %1159 = vperm.xlu0 %1158, %v479
        %v1160 = vpop.permute.xlu0 %1159
        %v1162 = vmul.f32 %v1160, %v638
        %v1163 = vmul.f32 %v1160, %v642
        %v1164 = vmul.f32 %v1160, %v646
        %v1165 = vmul.f32 %v1160, %v650
        %v1166 = vmul.f32 %v1160, %v654
        %v1167 = vmul.f32 %v1160, %v658
        %v1168 = vmul.f32 %v1160, %v662
        %v1169 = vmul.f32 %v1160, %v666
        %v1170 = vmul.f32 %v1160, %v670
        %1180 = vrot.lane.b32.xlu0 %v1162, 93
        %v1181 = vpop.permute.xlu0 %1180
        %1182 = vrot.lane.b32.xlu0 %v1163, 93
        %v1183 = vpop.permute.xlu0 %1182
        %1184 = vrot.lane.b32.xlu0 %v1164, 93
        %v1185 = vpop.permute.xlu0 %1184
        %1186 = vrot.lane.b32.xlu0 %v1165, 93
        %v1187 = vpop.permute.xlu0 %1186
        %1188 = vrot.lane.b32.xlu0 %v1166, 93
        %v1189 = vpop.permute.xlu0 %1188
        %1190 = vrot.lane.b32.xlu0 %v1167, 93
        %v1191 = vpop.permute.xlu0 %1190
        %1192 = vrot.lane.b32.xlu0 %v1168, 93
        %v1193 = vpop.permute.xlu0 %1192
        %1194 = vrot.lane.b32.xlu0 %v1169, 93
        %v1195 = vpop.permute.xlu0 %1194
        %1196 = vrot.lane.b32.xlu0 %v1170, 93
        %v1197 = vpop.permute.xlu0 %1196
        %vm1198 = vcmask 760832
        %v1199 = vsel %vm1198, %v1181, %v1183
        %v1200 = vsel %vm1198, %v1183, %v1185
        %v1201 = vsel %vm1198, %v1185, %v1187
        %v1202 = vsel %vm1198, %v1187, %v1189
        %v1203 = vsel %vm1198, %v1189, %v1191
        %v1204 = vsel %vm1198, %v1191, %v1193
        %v1205 = vsel %vm1198, %v1193, %v1195
        %v1206 = vsel %vm1198, %v1195, %v1197
        %v1216 = vadd.f32 %v1149, %v1199
        %v1217 = vadd.f32 %v1150, %v1200
        %v1218 = vadd.f32 %v1151, %v1201
        %v1219 = vadd.f32 %v1152, %v1202
        %v1220 = vadd.f32 %v1153, %v1203
        %v1221 = vadd.f32 %v1154, %v1204
        %v1222 = vadd.f32 %v1155, %v1205
        %v1223 = vadd.f32 %v1156, %v1206
        %v1224 = vadd.f32 %v1157, %v1197
        %1225 = vset.pattern.permute.xlu0 9
        %1226 = vperm.xlu0 %1225, %v479
        %v1227 = vpop.permute.xlu0 %1226
        %v1229 = vmul.f32 %v1227, %v638
        %v1230 = vmul.f32 %v1227, %v642
        %v1231 = vmul.f32 %v1227, %v646
        %v1232 = vmul.f32 %v1227, %v650
        %v1233 = vmul.f32 %v1227, %v654
        %v1234 = vmul.f32 %v1227, %v658
        %v1235 = vmul.f32 %v1227, %v662
        %v1236 = vmul.f32 %v1227, %v666
        %v1237 = vmul.f32 %v1227, %v670
        %1247 = vrot.lane.b32.xlu0 %v1229, 92
        %v1248 = vpop.permute.xlu0 %1247
        %1249 = vrot.lane.b32.xlu0 %v1230, 92
        %v1250 = vpop.permute.xlu0 %1249
        %1251 = vrot.lane.b32.xlu0 %v1231, 92
        %v1252 = vpop.permute.xlu0 %1251
        %1253 = vrot.lane.b32.xlu0 %v1232, 92
        %v1254 = vpop.permute.xlu0 %1253
        %1255 = vrot.lane.b32.xlu0 %v1233, 92
        %v1256 = vpop.permute.xlu0 %1255
        %1257 = vrot.lane.b32.xlu0 %v1234, 92
        %v1258 = vpop.permute.xlu0 %1257
        %1259 = vrot.lane.b32.xlu0 %v1235, 92
        %v1260 = vpop.permute.xlu0 %1259
        %1261 = vrot.lane.b32.xlu0 %v1236, 92
        %v1262 = vpop.permute.xlu0 %1261
        %1263 = vrot.lane.b32.xlu0 %v1237, 92
        %v1264 = vpop.permute.xlu0 %1263
        %vm1265 = vcmask 752640
        %v1266 = vsel %vm1265, %v1248, %v1250
        %v1267 = vsel %vm1265, %v1250, %v1252
        %v1268 = vsel %vm1265, %v1252, %v1254
        %v1269 = vsel %vm1265, %v1254, %v1256
        %v1270 = vsel %vm1265, %v1256, %v1258
        %v1271 = vsel %vm1265, %v1258, %v1260
        %v1272 = vsel %vm1265, %v1260, %v1262
        %v1273 = vsel %vm1265, %v1262, %v1264
        %v1283 = vadd.f32 %v1216, %v1266
        %v1284 = vadd.f32 %v1217, %v1267
        %v1285 = vadd.f32 %v1218, %v1268
        %v1286 = vadd.f32 %v1219, %v1269
        %v1287 = vadd.f32 %v1220, %v1270
        %v1288 = vadd.f32 %v1221, %v1271
        %v1289 = vadd.f32 %v1222, %v1272
        %v1290 = vadd.f32 %v1223, %v1273
        %v1291 = vadd.f32 %v1224, %v1264
        %1292 = vset.pattern.permute.xlu0 10
        %1293 = vperm.xlu0 %1292, %v479
        %v1294 = vpop.permute.xlu0 %1293
        %v1296 = vmul.f32 %v1294, %v638
        %v1297 = vmul.f32 %v1294, %v642
        %v1298 = vmul.f32 %v1294, %v646
        %v1299 = vmul.f32 %v1294, %v650
        %v1300 = vmul.f32 %v1294, %v654
        %v1301 = vmul.f32 %v1294, %v658
        %v1302 = vmul.f32 %v1294, %v662
        %v1303 = vmul.f32 %v1294, %v666
        %v1304 = vmul.f32 %v1294, %v670
        %1314 = vrot.lane.b32.xlu0 %v1296, 64
        %v1315 = vpop.permute.xlu0 %1314
        %1316 = vrot.lane.b32.xlu0 %v1297, 64
        %v1317 = vpop.permute.xlu0 %1316
        %1318 = vrot.lane.b32.xlu0 %v1298, 64
        %v1319 = vpop.permute.xlu0 %1318
        %1320 = vrot.lane.b32.xlu0 %v1299, 64
        %v1321 = vpop.permute.xlu0 %1320
        %1322 = vrot.lane.b32.xlu0 %v1300, 64
        %v1323 = vpop.permute.xlu0 %1322
        %1324 = vrot.lane.b32.xlu0 %v1301, 64
        %v1325 = vpop.permute.xlu0 %1324
        %1326 = vrot.lane.b32.xlu0 %v1302, 64
        %v1327 = vpop.permute.xlu0 %1326
        %1328 = vrot.lane.b32.xlu0 %v1303, 64
        %v1329 = vpop.permute.xlu0 %1328
        %1330 = vrot.lane.b32.xlu0 %v1304, 64
        %v1331 = vpop.permute.xlu0 %1330
        %vm1332 = vcmask 523264
        %v1333 = vsel %vm1332, %v1315, %v1317
        %v1334 = vsel %vm1332, %v1317, %v1319
        %v1335 = vsel %vm1332, %v1319, %v1321
        %v1336 = vsel %vm1332, %v1321, %v1323
        %v1337 = vsel %vm1332, %v1323, %v1325
        %v1338 = vsel %vm1332, %v1325, %v1327
        %v1339 = vsel %vm1332, %v1327, %v1329
        %v1340 = vsel %vm1332, %v1329, %v1331
        %v1350 = vadd.f32 %v1283, %v1333
        %v1351 = vadd.f32 %v1284, %v1334
        %v1352 = vadd.f32 %v1285, %v1335
        %v1353 = vadd.f32 %v1286, %v1336
        %v1354 = vadd.f32 %v1287, %v1337
        %v1355 = vadd.f32 %v1288, %v1338
        %v1356 = vadd.f32 %v1289, %v1339
        %v1357 = vadd.f32 %v1290, %v1340
        %v1358 = vadd.f32 %v1291, %v1331
        %1359 = vset.pattern.permute.xlu0 11
        %1360 = vperm.xlu0 %1359, %v479
        %v1361 = vpop.permute.xlu0 %1360
        %v1363 = vmul.f32 %v1361, %v638
        %v1364 = vmul.f32 %v1361, %v642
        %v1365 = vmul.f32 %v1361, %v646
        %v1366 = vmul.f32 %v1361, %v650
        %v1367 = vmul.f32 %v1361, %v654
        %v1368 = vmul.f32 %v1361, %v658
        %v1369 = vmul.f32 %v1361, %v662
        %v1370 = vmul.f32 %v1361, %v666
        %v1371 = vmul.f32 %v1361, %v670
        %1381 = vrot.lane.b32.xlu0 %v1363, 63
        %v1382 = vpop.permute.xlu0 %1381
        %1383 = vrot.lane.b32.xlu0 %v1364, 63
        %v1384 = vpop.permute.xlu0 %1383
        %1385 = vrot.lane.b32.xlu0 %v1365, 63
        %v1386 = vpop.permute.xlu0 %1385
        %1387 = vrot.lane.b32.xlu0 %v1366, 63
        %v1388 = vpop.permute.xlu0 %1387
        %1389 = vrot.lane.b32.xlu0 %v1367, 63
        %v1390 = vpop.permute.xlu0 %1389
        %1391 = vrot.lane.b32.xlu0 %v1368, 63
        %v1392 = vpop.permute.xlu0 %1391
        %1393 = vrot.lane.b32.xlu0 %v1369, 63
        %v1394 = vpop.permute.xlu0 %1393
        %1395 = vrot.lane.b32.xlu0 %v1370, 63
        %v1396 = vpop.permute.xlu0 %1395
        %1397 = vrot.lane.b32.xlu0 %v1371, 63
        %v1398 = vpop.permute.xlu0 %1397
        %vm1399 = vcmask 515072
        %v1400 = vsel %vm1399, %v1382, %v1384
        %v1401 = vsel %vm1399, %v1384, %v1386
        %v1402 = vsel %vm1399, %v1386, %v1388
        %v1403 = vsel %vm1399, %v1388, %v1390
        %v1404 = vsel %vm1399, %v1390, %v1392
        %v1405 = vsel %vm1399, %v1392, %v1394
        %v1406 = vsel %vm1399, %v1394, %v1396
        %v1407 = vsel %vm1399, %v1396, %v1398
        %v1417 = vadd.f32 %v1350, %v1400
        %v1418 = vadd.f32 %v1351, %v1401
        %v1419 = vadd.f32 %v1352, %v1402
        %v1420 = vadd.f32 %v1353, %v1403
        %v1421 = vadd.f32 %v1354, %v1404
        %v1422 = vadd.f32 %v1355, %v1405
        %v1423 = vadd.f32 %v1356, %v1406
        %v1424 = vadd.f32 %v1357, %v1407
        %v1425 = vadd.f32 %v1358, %v1398
        %v1426 = vld [vmem:[%s620] ss:$8 sm:$0xf]
        %v1427 = vld [vmem:[%s620] ss:$8 sm:$0xf0]
        %v1428 = vor.u32 %v1426, %v1427
        %1429 = vset.pattern.permute.xlu0 12
        %1430 = vperm.xlu0 %1429, %v479
        %v1431 = vpop.permute.xlu0 %1430
        %v1434 = vlaneseq
        %v1435 = vshrl.u32 %v1434, 7
        %v1436 = vsub.s32 0, %v1435
        %v1437 = vrot.slane %v1428, %v1436
        %v1438 = vlaneseq
        %v1439 = vshrl.u32 %v1438, 7
        %v1440 = vsub.s32 1, %v1439
        %v1441 = vrot.slane %v1428, %v1440
        %v1442 = vlaneseq
        %v1443 = vshrl.u32 %v1442, 7
        %v1444 = vsub.s32 2, %v1443
        %v1445 = vrot.slane %v1428, %v1444
        %v1446 = vlaneseq
        %v1447 = vshrl.u32 %v1446, 7
        %v1448 = vsub.s32 3, %v1447
        %v1449 = vrot.slane %v1428, %v1448
        %v1450 = vlaneseq
        %v1451 = vshrl.u32 %v1450, 7
        %v1452 = vsub.s32 4, %v1451
        %v1453 = vrot.slane %v1428, %v1452
        %v1454 = vlaneseq
        %v1455 = vshrl.u32 %v1454, 7
        %v1456 = vsub.s32 5, %v1455
        %v1457 = vrot.slane %v1428, %v1456
        %v1458 = vlaneseq
        %v1459 = vshrl.u32 %v1458, 7
        %v1460 = vsub.s32 6, %v1459
        %v1461 = vrot.slane %v1428, %v1460
        %v1462 = vlaneseq
        %v1463 = vshrl.u32 %v1462, 7
        %v1464 = vsub.s32 7, %v1463
        %v1465 = vrot.slane %v1428, %v1464
        %v1474 = vmul.f32 %v1431, %v1437
        %v1475 = vmul.f32 %v1431, %v1441
        %v1476 = vmul.f32 %v1431, %v1445
        %v1477 = vmul.f32 %v1431, %v1449
        %v1478 = vmul.f32 %v1431, %v1453
        %v1479 = vmul.f32 %v1431, %v1457
        %v1480 = vmul.f32 %v1431, %v1461
        %v1481 = vmul.f32 %v1431, %v1465
        %1490 = vrot.lane.b32.xlu0 %v1474, 62
        %v1491 = vpop.permute.xlu0 %1490
        %1492 = vrot.lane.b32.xlu0 %v1475, 62
        %v1493 = vpop.permute.xlu0 %1492
        %1494 = vrot.lane.b32.xlu0 %v1476, 62
        %v1495 = vpop.permute.xlu0 %1494
        %1496 = vrot.lane.b32.xlu0 %v1477, 62
        %v1497 = vpop.permute.xlu0 %1496
        %1498 = vrot.lane.b32.xlu0 %v1478, 62
        %v1499 = vpop.permute.xlu0 %1498
        %1500 = vrot.lane.b32.xlu0 %v1479, 62
        %v1501 = vpop.permute.xlu0 %1500
        %1502 = vrot.lane.b32.xlu0 %v1480, 62
        %v1503 = vpop.permute.xlu0 %1502
        %1504 = vrot.lane.b32.xlu0 %v1481, 62
        %v1505 = vpop.permute.xlu0 %1504
        %vm1506 = vcmask 506880
        %v1507 = vsel %vm1506, %v1491, %v1493
        %v1508 = vsel %vm1506, %v1493, %v1495
        %v1509 = vsel %vm1506, %v1495, %v1497
        %v1510 = vsel %vm1506, %v1497, %v1499
        %v1511 = vsel %vm1506, %v1499, %v1501
        %v1512 = vsel %vm1506, %v1501, %v1503
        %v1513 = vsel %vm1506, %v1503, %v1505
        %v1523 = vadd.f32 %v1417, %v1491
        %v1524 = vadd.f32 %v1418, %v1507
        %v1525 = vadd.f32 %v1419, %v1508
        %v1526 = vadd.f32 %v1420, %v1509
        %v1527 = vadd.f32 %v1421, %v1510
        %v1528 = vadd.f32 %v1422, %v1511
        %v1529 = vadd.f32 %v1423, %v1512
        %v1530 = vadd.f32 %v1424, %v1513
        %v1531 = vadd.f32 %v1425, %v1505
        %s1532 = scalar_lea.vmem [#allocation2], 8
        %v1533 = vld [vmem:[%s1532] ss:$8 sm:$0xf]
        %v1534 = vld [vmem:[%s1532] ss:$8 sm:$0xf0]
        %v1535 = vor.u32 %v1533, %v1534
        %s1536 = scalar_lea.vmem [#allocation2], 72
        %v1537 = vld [vmem:[%s1536] ss:$8 sm:$0x1]
        %1538 = vset.pattern.permute.xlu0 13
        %1539 = vperm.xlu0 %1538, %v479
        %v1540 = vpop.permute.xlu0 %1539
        %v1544 = vlaneseq
        %v1545 = vshrl.u32 %v1544, 7
        %v1546 = vsub.s32 0, %v1545
        %v1547 = vrot.slane %v1535, %v1546
        %v1548 = vlaneseq
        %v1549 = vshrl.u32 %v1548, 7
        %v1550 = vsub.s32 1, %v1549
        %v1551 = vrot.slane %v1535, %v1550
        %v1552 = vlaneseq
        %v1553 = vshrl.u32 %v1552, 7
        %v1554 = vsub.s32 2, %v1553
        %v1555 = vrot.slane %v1535, %v1554
        %v1556 = vlaneseq
        %v1557 = vshrl.u32 %v1556, 7
        %v1558 = vsub.s32 3, %v1557
        %v1559 = vrot.slane %v1535, %v1558
        %v1560 = vlaneseq
        %v1561 = vshrl.u32 %v1560, 7
        %v1562 = vsub.s32 4, %v1561
        %v1563 = vrot.slane %v1535, %v1562
        %v1564 = vlaneseq
        %v1565 = vshrl.u32 %v1564, 7
        %v1566 = vsub.s32 5, %v1565
        %v1567 = vrot.slane %v1535, %v1566
        %v1568 = vlaneseq
        %v1569 = vshrl.u32 %v1568, 7
        %v1570 = vsub.s32 6, %v1569
        %v1571 = vrot.slane %v1535, %v1570
        %v1572 = vlaneseq
        %v1573 = vshrl.u32 %v1572, 7
        %v1574 = vsub.s32 7, %v1573
        %v1575 = vrot.slane %v1535, %v1574
        %v1576 = vlaneseq
        %v1577 = vshrl.u32 %v1576, 7
        %v1578 = vsub.s32 0, %v1577
        %v1579 = vrot.slane %v1537, %v1578
        %v1589 = vmul.f32 %v1540, %v1547
        %v1590 = vmul.f32 %v1540, %v1551
        %v1591 = vmul.f32 %v1540, %v1555
        %v1592 = vmul.f32 %v1540, %v1559
        %v1593 = vmul.f32 %v1540, %v1563
        %v1594 = vmul.f32 %v1540, %v1567
        %v1595 = vmul.f32 %v1540, %v1571
        %v1596 = vmul.f32 %v1540, %v1575
        %v1597 = vmul.f32 %v1540, %v1579
        %1607 = vrot.lane.b32.xlu0 %v1589, 61
        %v1608 = vpop.permute.xlu0 %1607
        %1609 = vrot.lane.b32.xlu0 %v1590, 61
        %v1610 = vpop.permute.xlu0 %1609
        %1611 = vrot.lane.b32.xlu0 %v1591, 61
        %v1612 = vpop.permute.xlu0 %1611
        %1613 = vrot.lane.b32.xlu0 %v1592, 61
        %v1614 = vpop.permute.xlu0 %1613
        %1615 = vrot.lane.b32.xlu0 %v1593, 61
        %v1616 = vpop.permute.xlu0 %1615
        %1617 = vrot.lane.b32.xlu0 %v1594, 61
        %v1618 = vpop.permute.xlu0 %1617
        %1619 = vrot.lane.b32.xlu0 %v1595, 61
        %v1620 = vpop.permute.xlu0 %1619
        %1621 = vrot.lane.b32.xlu0 %v1596, 61
        %v1622 = vpop.permute.xlu0 %1621
        %1623 = vrot.lane.b32.xlu0 %v1597, 61
        %v1624 = vpop.permute.xlu0 %1623
        %vm1625 = vcmask 498688
        %v1626 = vsel %vm1625, %v1608, %v1610
        %v1627 = vsel %vm1625, %v1610, %v1612
        %v1628 = vsel %vm1625, %v1612, %v1614
        %v1629 = vsel %vm1625, %v1614, %v1616
        %v1630 = vsel %vm1625, %v1616, %v1618
        %v1631 = vsel %vm1625, %v1618, %v1620
        %v1632 = vsel %vm1625, %v1620, %v1622
        %v1633 = vsel %vm1625, %v1622, %v1624
        %v1643 = vadd.f32 %v1523, %v1608
        %v1644 = vadd.f32 %v1524, %v1626
        %v1645 = vadd.f32 %v1525, %v1627
        %v1646 = vadd.f32 %v1526, %v1628
        %v1647 = vadd.f32 %v1527, %v1629
        %v1648 = vadd.f32 %v1528, %v1630
        %v1649 = vadd.f32 %v1529, %v1631
        %v1650 = vadd.f32 %v1530, %v1632
        %v1651 = vadd.f32 %v1531, %v1633
        %1652 = vset.pattern.permute.xlu0 14
        %1653 = vperm.xlu0 %1652, %v479
        %v1654 = vpop.permute.xlu0 %1653
        %v1656 = vmul.f32 %v1654, %v1547
        %v1657 = vmul.f32 %v1654, %v1551
        %v1658 = vmul.f32 %v1654, %v1555
        %v1659 = vmul.f32 %v1654, %v1559
        %v1660 = vmul.f32 %v1654, %v1563
        %v1661 = vmul.f32 %v1654, %v1567
        %v1662 = vmul.f32 %v1654, %v1571
        %v1663 = vmul.f32 %v1654, %v1575
        %v1664 = vmul.f32 %v1654, %v1579
        %1674 = vrot.lane.b32.xlu0 %v1656, 60
        %v1675 = vpop.permute.xlu0 %1674
        %1676 = vrot.lane.b32.xlu0 %v1657, 60
        %v1677 = vpop.permute.xlu0 %1676
        %1678 = vrot.lane.b32.xlu0 %v1658, 60
        %v1679 = vpop.permute.xlu0 %1678
        %1680 = vrot.lane.b32.xlu0 %v1659, 60
        %v1681 = vpop.permute.xlu0 %1680
        %1682 = vrot.lane.b32.xlu0 %v1660, 60
        %v1683 = vpop.permute.xlu0 %1682
        %1684 = vrot.lane.b32.xlu0 %v1661, 60
        %v1685 = vpop.permute.xlu0 %1684
        %1686 = vrot.lane.b32.xlu0 %v1662, 60
        %v1687 = vpop.permute.xlu0 %1686
        %1688 = vrot.lane.b32.xlu0 %v1663, 60
        %v1689 = vpop.permute.xlu0 %1688
        %1690 = vrot.lane.b32.xlu0 %v1664, 60
        %v1691 = vpop.permute.xlu0 %1690
        %vm1692 = vcmask 490496
        %v1693 = vsel %vm1692, %v1675, %v1677
        %v1694 = vsel %vm1692, %v1677, %v1679
        %v1695 = vsel %vm1692, %v1679, %v1681
        %v1696 = vsel %vm1692, %v1681, %v1683
        %v1697 = vsel %vm1692, %v1683, %v1685
        %v1698 = vsel %vm1692, %v1685, %v1687
        %v1699 = vsel %vm1692, %v1687, %v1689
        %v1700 = vsel %vm1692, %v1689, %v1691
        %v1710 = vadd.f32 %v1643, %v1675
        %v1711 = vadd.f32 %v1644, %v1693
        %v1712 = vadd.f32 %v1645, %v1694
        %v1713 = vadd.f32 %v1646, %v1695
        %v1714 = vadd.f32 %v1647, %v1696
        %v1715 = vadd.f32 %v1648, %v1697
        %v1716 = vadd.f32 %v1649, %v1698
        %v1717 = vadd.f32 %v1650, %v1699
        %v1718 = vadd.f32 %v1651, %v1700
        %1719 = vset.pattern.permute.xlu0 15
        %1720 = vperm.xlu0 %1719, %v479
        %v1721 = vpop.permute.xlu0 %1720
        %v1723 = vmul.f32 %v1721, %v1547
        %v1724 = vmul.f32 %v1721, %v1551
        %v1725 = vmul.f32 %v1721, %v1555
        %v1726 = vmul.f32 %v1721, %v1559
        %v1727 = vmul.f32 %v1721, %v1563
        %v1728 = vmul.f32 %v1721, %v1567
        %v1729 = vmul.f32 %v1721, %v1571
        %v1730 = vmul.f32 %v1721, %v1575
        %v1731 = vmul.f32 %v1721, %v1579
        %1741 = vrot.lane.b32.xlu0 %v1723, 32
        %v1742 = vpop.permute.xlu0 %1741
        %1743 = vrot.lane.b32.xlu0 %v1724, 32
        %v1744 = vpop.permute.xlu0 %1743
        %1745 = vrot.lane.b32.xlu0 %v1725, 32
        %v1746 = vpop.permute.xlu0 %1745
        %1747 = vrot.lane.b32.xlu0 %v1726, 32
        %v1748 = vpop.permute.xlu0 %1747
        %1749 = vrot.lane.b32.xlu0 %v1727, 32
        %v1750 = vpop.permute.xlu0 %1749
        %1751 = vrot.lane.b32.xlu0 %v1728, 32
        %v1752 = vpop.permute.xlu0 %1751
        %1753 = vrot.lane.b32.xlu0 %v1729, 32
        %v1754 = vpop.permute.xlu0 %1753
        %1755 = vrot.lane.b32.xlu0 %v1730, 32
        %v1756 = vpop.permute.xlu0 %1755
        %1757 = vrot.lane.b32.xlu0 %v1731, 32
        %v1758 = vpop.permute.xlu0 %1757
        %vm1759 = vcmask 261120
        %v1760 = vsel %vm1759, %v1742, %v1744
        %v1761 = vsel %vm1759, %v1744, %v1746
        %v1762 = vsel %vm1759, %v1746, %v1748
        %v1763 = vsel %vm1759, %v1748, %v1750
        %v1764 = vsel %vm1759, %v1750, %v1752
        %v1765 = vsel %vm1759, %v1752, %v1754
        %v1766 = vsel %vm1759, %v1754, %v1756
        %v1767 = vsel %vm1759, %v1756, %v1758
        %v1777 = vadd.f32 %v1710, %v1742
        %v1778 = vadd.f32 %v1711, %v1760
        %v1779 = vadd.f32 %v1712, %v1761
        %v1780 = vadd.f32 %v1713, %v1762
        %v1781 = vadd.f32 %v1714, %v1763
        %v1782 = vadd.f32 %v1715, %v1764
        %v1783 = vadd.f32 %v1716, %v1765
        %v1784 = vadd.f32 %v1717, %v1766
        %v1785 = vadd.f32 %v1718, %v1767
        %1786 = vset.pattern.permute.xlu0 16
        %1787 = vperm.xlu0 %1786, %v479
        %v1788 = vpop.permute.xlu0 %1787
        %v1790 = vmul.f32 %v1788, %v1547
        %v1791 = vmul.f32 %v1788, %v1551
        %v1792 = vmul.f32 %v1788, %v1555
        %v1793 = vmul.f32 %v1788, %v1559
        %v1794 = vmul.f32 %v1788, %v1563
        %v1795 = vmul.f32 %v1788, %v1567
        %v1796 = vmul.f32 %v1788, %v1571
        %v1797 = vmul.f32 %v1788, %v1575
        %v1798 = vmul.f32 %v1788, %v1579
        %1808 = vrot.lane.b32.xlu0 %v1790, 31
        %v1809 = vpop.permute.xlu0 %1808
        %1810 = vrot.lane.b32.xlu0 %v1791, 31
        %v1811 = vpop.permute.xlu0 %1810
        %1812 = vrot.lane.b32.xlu0 %v1792, 31
        %v1813 = vpop.permute.xlu0 %1812
        %1814 = vrot.lane.b32.xlu0 %v1793, 31
        %v1815 = vpop.permute.xlu0 %1814
        %1816 = vrot.lane.b32.xlu0 %v1794, 31
        %v1817 = vpop.permute.xlu0 %1816
        %1818 = vrot.lane.b32.xlu0 %v1795, 31
        %v1819 = vpop.permute.xlu0 %1818
        %1820 = vrot.lane.b32.xlu0 %v1796, 31
        %v1821 = vpop.permute.xlu0 %1820
        %1822 = vrot.lane.b32.xlu0 %v1797, 31
        %v1823 = vpop.permute.xlu0 %1822
        %1824 = vrot.lane.b32.xlu0 %v1798, 31
        %v1825 = vpop.permute.xlu0 %1824
        %vm1826 = vcmask 252928
        %v1827 = vsel %vm1826, %v1809, %v1811
        %v1828 = vsel %vm1826, %v1811, %v1813
        %v1829 = vsel %vm1826, %v1813, %v1815
        %v1830 = vsel %vm1826, %v1815, %v1817
        %v1831 = vsel %vm1826, %v1817, %v1819
        %v1832 = vsel %vm1826, %v1819, %v1821
        %v1833 = vsel %vm1826, %v1821, %v1823
        %v1834 = vsel %vm1826, %v1823, %v1825
        %v1844 = vadd.f32 %v1777, %v1809
        %v1845 = vadd.f32 %v1778, %v1827
        %v1846 = vadd.f32 %v1779, %v1828
        %v1847 = vadd.f32 %v1780, %v1829
        %v1848 = vadd.f32 %v1781, %v1830
        %v1849 = vadd.f32 %v1782, %v1831
        %v1850 = vadd.f32 %v1783, %v1832
        %v1851 = vadd.f32 %v1784, %v1833
        %v1852 = vadd.f32 %v1785, %v1834
        %1853 = vset.pattern.permute.xlu0 17
        %1854 = vperm.xlu0 %1853, %v479
        %v1855 = vpop.permute.xlu0 %1854
        %v1857 = vmul.f32 %v1855, %v1547
        %v1858 = vmul.f32 %v1855, %v1551
        %v1859 = vmul.f32 %v1855, %v1555
        %v1860 = vmul.f32 %v1855, %v1559
        %v1861 = vmul.f32 %v1855, %v1563
        %v1862 = vmul.f32 %v1855, %v1567
        %v1863 = vmul.f32 %v1855, %v1571
        %v1864 = vmul.f32 %v1855, %v1575
        %v1865 = vmul.f32 %v1855, %v1579
        %1875 = vrot.lane.b32.xlu0 %v1857, 30
        %v1876 = vpop.permute.xlu0 %1875
        %1877 = vrot.lane.b32.xlu0 %v1858, 30
        %v1878 = vpop.permute.xlu0 %1877
        %1879 = vrot.lane.b32.xlu0 %v1859, 30
        %v1880 = vpop.permute.xlu0 %1879
        %1881 = vrot.lane.b32.xlu0 %v1860, 30
        %v1882 = vpop.permute.xlu0 %1881
        %1883 = vrot.lane.b32.xlu0 %v1861, 30
        %v1884 = vpop.permute.xlu0 %1883
        %1885 = vrot.lane.b32.xlu0 %v1862, 30
        %v1886 = vpop.permute.xlu0 %1885
        %1887 = vrot.lane.b32.xlu0 %v1863, 30
        %v1888 = vpop.permute.xlu0 %1887
        %1889 = vrot.lane.b32.xlu0 %v1864, 30
        %v1890 = vpop.permute.xlu0 %1889
        %1891 = vrot.lane.b32.xlu0 %v1865, 30
        %v1892 = vpop.permute.xlu0 %1891
        %vm1893 = vcmask 244736
        %v1894 = vsel %vm1893, %v1876, %v1878
        %v1895 = vsel %vm1893, %v1878, %v1880
        %v1896 = vsel %vm1893, %v1880, %v1882
        %v1897 = vsel %vm1893, %v1882, %v1884
        %v1898 = vsel %vm1893, %v1884, %v1886
        %v1899 = vsel %vm1893, %v1886, %v1888
        %v1900 = vsel %vm1893, %v1888, %v1890
        %v1901 = vsel %vm1893, %v1890, %v1892
        %v1911 = vadd.f32 %v1844, %v1876
        %v1912 = vadd.f32 %v1845, %v1894
        %v1913 = vadd.f32 %v1846, %v1895
        %v1914 = vadd.f32 %v1847, %v1896
        %v1915 = vadd.f32 %v1848, %v1897
        %v1916 = vadd.f32 %v1849, %v1898
        %v1917 = vadd.f32 %v1850, %v1899
        %v1918 = vadd.f32 %v1851, %v1900
        %v1919 = vadd.f32 %v1852, %v1901
        %1920 = vset.pattern.permute.xlu0 18
        %1921 = vperm.xlu0 %1920, %v479
        %v1922 = vpop.permute.xlu0 %1921
        %v1924 = vmul.f32 %v1922, %v1547
        %v1925 = vmul.f32 %v1922, %v1551
        %v1926 = vmul.f32 %v1922, %v1555
        %v1927 = vmul.f32 %v1922, %v1559
        %v1928 = vmul.f32 %v1922, %v1563
        %v1929 = vmul.f32 %v1922, %v1567
        %v1930 = vmul.f32 %v1922, %v1571
        %v1931 = vmul.f32 %v1922, %v1575
        %v1932 = vmul.f32 %v1922, %v1579
        %1942 = vrot.lane.b32.xlu0 %v1924, 29
        %v1943 = vpop.permute.xlu0 %1942
        %1944 = vrot.lane.b32.xlu0 %v1925, 29
        %v1945 = vpop.permute.xlu0 %1944
        %1946 = vrot.lane.b32.xlu0 %v1926, 29
        %v1947 = vpop.permute.xlu0 %1946
        %1948 = vrot.lane.b32.xlu0 %v1927, 29
        %v1949 = vpop.permute.xlu0 %1948
        %1950 = vrot.lane.b32.xlu0 %v1928, 29
        %v1951 = vpop.permute.xlu0 %1950
        %1952 = vrot.lane.b32.xlu0 %v1929, 29
        %v1953 = vpop.permute.xlu0 %1952
        %1954 = vrot.lane.b32.xlu0 %v1930, 29
        %v1955 = vpop.permute.xlu0 %1954
        %1956 = vrot.lane.b32.xlu0 %v1931, 29
        %v1957 = vpop.permute.xlu0 %1956
        %1958 = vrot.lane.b32.xlu0 %v1932, 29
        %v1959 = vpop.permute.xlu0 %1958
        %vm1960 = vcmask 236544
        %v1961 = vsel %vm1960, %v1943, %v1945
        %v1962 = vsel %vm1960, %v1945, %v1947
        %v1963 = vsel %vm1960, %v1947, %v1949
        %v1964 = vsel %vm1960, %v1949, %v1951
        %v1965 = vsel %vm1960, %v1951, %v1953
        %v1966 = vsel %vm1960, %v1953, %v1955
        %v1967 = vsel %vm1960, %v1955, %v1957
        %v1968 = vsel %vm1960, %v1957, %v1959
        %v1978 = vadd.f32 %v1911, %v1943
        %v1979 = vadd.f32 %v1912, %v1961
        %v1980 = vadd.f32 %v1913, %v1962
        %v1981 = vadd.f32 %v1914, %v1963
        %v1982 = vadd.f32 %v1915, %v1964
        %v1983 = vadd.f32 %v1916, %v1965
        %v1984 = vadd.f32 %v1917, %v1966
        %v1985 = vadd.f32 %v1918, %v1967
        %v1986 = vadd.f32 %v1919, %v1968
        %1987 = vset.pattern.permute.xlu0 19
        %1988 = vperm.xlu0 %1987, %v479
        %v1989 = vpop.permute.xlu0 %1988
        %v1991 = vmul.f32 %v1989, %v1547
        %v1992 = vmul.f32 %v1989, %v1551
        %v1993 = vmul.f32 %v1989, %v1555
        %v1994 = vmul.f32 %v1989, %v1559
        %v1995 = vmul.f32 %v1989, %v1563
        %v1996 = vmul.f32 %v1989, %v1567
        %v1997 = vmul.f32 %v1989, %v1571
        %v1998 = vmul.f32 %v1989, %v1575
        %v1999 = vmul.f32 %v1989, %v1579
        %2009 = vrot.lane.b32.xlu0 %v1991, 28
        %v2010 = vpop.permute.xlu0 %2009
        %2011 = vrot.lane.b32.xlu0 %v1992, 28
        %v2012 = vpop.permute.xlu0 %2011
        %2013 = vrot.lane.b32.xlu0 %v1993, 28
        %v2014 = vpop.permute.xlu0 %2013
        %2015 = vrot.lane.b32.xlu0 %v1994, 28
        %v2016 = vpop.permute.xlu0 %2015
        %2017 = vrot.lane.b32.xlu0 %v1995, 28
        %v2018 = vpop.permute.xlu0 %2017
        %2019 = vrot.lane.b32.xlu0 %v1996, 28
        %v2020 = vpop.permute.xlu0 %2019
        %2021 = vrot.lane.b32.xlu0 %v1997, 28
        %v2022 = vpop.permute.xlu0 %2021
        %2023 = vrot.lane.b32.xlu0 %v1998, 28
        %v2024 = vpop.permute.xlu0 %2023
        %2025 = vrot.lane.b32.xlu0 %v1999, 28
        %v2026 = vpop.permute.xlu0 %2025
        %vm2027 = vcmask 228352
        %v2028 = vsel %vm2027, %v2010, %v2012
        %v2029 = vsel %vm2027, %v2012, %v2014
        %v2030 = vsel %vm2027, %v2014, %v2016
        %v2031 = vsel %vm2027, %v2016, %v2018
        %v2032 = vsel %vm2027, %v2018, %v2020
        %v2033 = vsel %vm2027, %v2020, %v2022
        %v2034 = vsel %vm2027, %v2022, %v2024
        %v2035 = vsel %vm2027, %v2024, %v2026
        %v2045 = vadd.f32 %v1978, %v2010
        %v2046 = vadd.f32 %v1979, %v2028
        %v2047 = vadd.f32 %v1980, %v2029
        %v2048 = vadd.f32 %v1981, %v2030
        %v2049 = vadd.f32 %v1982, %v2031
        %v2050 = vadd.f32 %v1983, %v2032
        %v2051 = vadd.f32 %v1984, %v2033
        %v2052 = vadd.f32 %v1985, %v2034
        %v2053 = vadd.f32 %v1986, %v2035
        %2054 = vset.pattern.permute.xlu0 20
        %2055 = vperm.xlu0 %2054, %v479
        %v2056 = vpop.permute.xlu0 %2055
        %v2058 = vmul.f32 %v2056, %v1547
        %v2059 = vmul.f32 %v2056, %v1551
        %v2060 = vmul.f32 %v2056, %v1555
        %v2061 = vmul.f32 %v2056, %v1559
        %v2062 = vmul.f32 %v2056, %v1563
        %v2063 = vmul.f32 %v2056, %v1567
        %v2064 = vmul.f32 %v2056, %v1571
        %v2065 = vmul.f32 %v2056, %v1575
        %v2066 = vmul.f32 %v2056, %v1579
        %v2067 = vadd.f32 %v2045, %v2058
        %v2068 = vadd.f32 %v2046, %v2059
        %v2069 = vadd.f32 %v2047, %v2060
        %v2070 = vadd.f32 %v2048, %v2061
        %v2071 = vadd.f32 %v2049, %v2062
        %v2072 = vadd.f32 %v2050, %v2063
        %v2073 = vadd.f32 %v2051, %v2064
        %v2074 = vadd.f32 %v2052, %v2065
        %v2075 = vadd.f32 %v2053, %v2066
        %2076 = vset.pattern.permute.xlu0 21
        %2077 = vperm.xlu0 %2076, %v479
        %v2078 = vpop.permute.xlu0 %2077
        %v2080 = vmul.f32 %v2078, %v1547
        %v2081 = vmul.f32 %v2078, %v1551
        %v2082 = vmul.f32 %v2078, %v1555
        %v2083 = vmul.f32 %v2078, %v1559
        %v2084 = vmul.f32 %v2078, %v1563
        %v2085 = vmul.f32 %v2078, %v1567
        %v2086 = vmul.f32 %v2078, %v1571
        %v2087 = vmul.f32 %v2078, %v1575
        %v2088 = vmul.f32 %v2078, %v1579
        %2098 = vrot.lane.b32.xlu0 %v2080, 127
        %v2099 = vpop.permute.xlu0 %2098
        %2100 = vrot.lane.b32.xlu0 %v2081, 127
        %v2101 = vpop.permute.xlu0 %2100
        %2102 = vrot.lane.b32.xlu0 %v2082, 127
        %v2103 = vpop.permute.xlu0 %2102
        %2104 = vrot.lane.b32.xlu0 %v2083, 127
        %v2105 = vpop.permute.xlu0 %2104
        %2106 = vrot.lane.b32.xlu0 %v2084, 127
        %v2107 = vpop.permute.xlu0 %2106
        %2108 = vrot.lane.b32.xlu0 %v2085, 127
        %v2109 = vpop.permute.xlu0 %2108
        %2110 = vrot.lane.b32.xlu0 %v2086, 127
        %v2111 = vpop.permute.xlu0 %2110
        %2112 = vrot.lane.b32.xlu0 %v2087, 127
        %v2113 = vpop.permute.xlu0 %2112
        %2114 = vrot.lane.b32.xlu0 %v2088, 127
        %v2115 = vpop.permute.xlu0 %2114
        %v2116 = vsel %vm729, %v2099, %v2101
        %v2117 = vsel %vm729, %v2101, %v2103
        %v2118 = vsel %vm729, %v2103, %v2105
        %v2119 = vsel %vm729, %v2105, %v2107
        %v2120 = vsel %vm729, %v2107, %v2109
        %v2121 = vsel %vm729, %v2109, %v2111
        %v2122 = vsel %vm729, %v2111, %v2113
        %v2123 = vsel %vm729, %v2113, %v2115
        %v2133 = vadd.f32 %v2067, %v2116
        %v2134 = vadd.f32 %v2068, %v2117
        %v2135 = vadd.f32 %v2069, %v2118
        %v2136 = vadd.f32 %v2070, %v2119
        %v2137 = vadd.f32 %v2071, %v2120
        %v2138 = vadd.f32 %v2072, %v2121
        %v2139 = vadd.f32 %v2073, %v2122
        %v2140 = vadd.f32 %v2074, %v2123
        %v2141 = vadd.f32 %v2075, %v2115
        %2142 = vset.pattern.permute.xlu0 22
        %2143 = vperm.xlu0 %2142, %v479
        %v2144 = vpop.permute.xlu0 %2143
        %v2146 = vmul.f32 %v2144, %v1547
        %v2147 = vmul.f32 %v2144, %v1551
        %v2148 = vmul.f32 %v2144, %v1555
        %v2149 = vmul.f32 %v2144, %v1559
        %v2150 = vmul.f32 %v2144, %v1563
        %v2151 = vmul.f32 %v2144, %v1567
        %v2152 = vmul.f32 %v2144, %v1571
        %v2153 = vmul.f32 %v2144, %v1575
        %v2154 = vmul.f32 %v2144, %v1579
        %2164 = vrot.lane.b32.xlu0 %v2146, 126
        %v2165 = vpop.permute.xlu0 %2164
        %2166 = vrot.lane.b32.xlu0 %v2147, 126
        %v2167 = vpop.permute.xlu0 %2166
        %2168 = vrot.lane.b32.xlu0 %v2148, 126
        %v2169 = vpop.permute.xlu0 %2168
        %2170 = vrot.lane.b32.xlu0 %v2149, 126
        %v2171 = vpop.permute.xlu0 %2170
        %2172 = vrot.lane.b32.xlu0 %v2150, 126
        %v2173 = vpop.permute.xlu0 %2172
        %2174 = vrot.lane.b32.xlu0 %v2151, 126
        %v2175 = vpop.permute.xlu0 %2174
        %2176 = vrot.lane.b32.xlu0 %v2152, 126
        %v2177 = vpop.permute.xlu0 %2176
        %2178 = vrot.lane.b32.xlu0 %v2153, 126
        %v2179 = vpop.permute.xlu0 %2178
        %2180 = vrot.lane.b32.xlu0 %v2154, 126
        %v2181 = vpop.permute.xlu0 %2180
        %v2182 = vsel %vm796, %v2165, %v2167
        %v2183 = vsel %vm796, %v2167, %v2169
        %v2184 = vsel %vm796, %v2169, %v2171
        %v2185 = vsel %vm796, %v2171, %v2173
        %v2186 = vsel %vm796, %v2173, %v2175
        %v2187 = vsel %vm796, %v2175, %v2177
        %v2188 = vsel %vm796, %v2177, %v2179
        %v2189 = vsel %vm796, %v2179, %v2181
        %v2199 = vadd.f32 %v2133, %v2182
        %v2200 = vadd.f32 %v2134, %v2183
        %v2201 = vadd.f32 %v2135, %v2184
        %v2202 = vadd.f32 %v2136, %v2185
        %v2203 = vadd.f32 %v2137, %v2186
        %v2204 = vadd.f32 %v2138, %v2187
        %v2205 = vadd.f32 %v2139, %v2188
        %v2206 = vadd.f32 %v2140, %v2189
        %v2207 = vadd.f32 %v2141, %v2181
        %2208 = vset.pattern.permute.xlu0 23
        %2209 = vperm.xlu0 %2208, %v479
        %v2210 = vpop.permute.xlu0 %2209
        %v2212 = vmul.f32 %v2210, %v1547
        %v2213 = vmul.f32 %v2210, %v1551
        %v2214 = vmul.f32 %v2210, %v1555
        %v2215 = vmul.f32 %v2210, %v1559
        %v2216 = vmul.f32 %v2210, %v1563
        %v2217 = vmul.f32 %v2210, %v1567
        %v2218 = vmul.f32 %v2210, %v1571
        %v2219 = vmul.f32 %v2210, %v1575
        %v2220 = vmul.f32 %v2210, %v1579
        %2230 = vrot.lane.b32.xlu0 %v2212, 125
        %v2231 = vpop.permute.xlu0 %2230
        %2232 = vrot.lane.b32.xlu0 %v2213, 125
        %v2233 = vpop.permute.xlu0 %2232
        %2234 = vrot.lane.b32.xlu0 %v2214, 125
        %v2235 = vpop.permute.xlu0 %2234
        %2236 = vrot.lane.b32.xlu0 %v2215, 125
        %v2237 = vpop.permute.xlu0 %2236
        %2238 = vrot.lane.b32.xlu0 %v2216, 125
        %v2239 = vpop.permute.xlu0 %2238
        %2240 = vrot.lane.b32.xlu0 %v2217, 125
        %v2241 = vpop.permute.xlu0 %2240
        %2242 = vrot.lane.b32.xlu0 %v2218, 125
        %v2243 = vpop.permute.xlu0 %2242
        %2244 = vrot.lane.b32.xlu0 %v2219, 125
        %v2245 = vpop.permute.xlu0 %2244
        %2246 = vrot.lane.b32.xlu0 %v2220, 125
        %v2247 = vpop.permute.xlu0 %2246
        %v2248 = vsel %vm863, %v2231, %v2233
        %v2249 = vsel %vm863, %v2233, %v2235
        %v2250 = vsel %vm863, %v2235, %v2237
        %v2251 = vsel %vm863, %v2237, %v2239
        %v2252 = vsel %vm863, %v2239, %v2241
        %v2253 = vsel %vm863, %v2241, %v2243
        %v2254 = vsel %vm863, %v2243, %v2245
        %v2255 = vsel %vm863, %v2245, %v2247
        %v2265 = vadd.f32 %v2199, %v2248
        %v2266 = vadd.f32 %v2200, %v2249
        %v2267 = vadd.f32 %v2201, %v2250
        %v2268 = vadd.f32 %v2202, %v2251
        %v2269 = vadd.f32 %v2203, %v2252
        %v2270 = vadd.f32 %v2204, %v2253
        %v2271 = vadd.f32 %v2205, %v2254
        %v2272 = vadd.f32 %v2206, %v2255
        %v2273 = vadd.f32 %v2207, %v2247
        %2274 = vset.pattern.permute.xlu0 24
        %2275 = vperm.xlu0 %2274, %v479
        %v2276 = vpop.permute.xlu0 %2275
        %v2278 = vmul.f32 %v2276, %v1547
        %v2279 = vmul.f32 %v2276, %v1551
        %v2280 = vmul.f32 %v2276, %v1555
        %v2281 = vmul.f32 %v2276, %v1559
        %v2282 = vmul.f32 %v2276, %v1563
        %v2283 = vmul.f32 %v2276, %v1567
        %v2284 = vmul.f32 %v2276, %v1571
        %v2285 = vmul.f32 %v2276, %v1575
        %v2286 = vmul.f32 %v2276, %v1579
        %2296 = vrot.lane.b32.xlu0 %v2278, 124
        %v2297 = vpop.permute.xlu0 %2296
        %2298 = vrot.lane.b32.xlu0 %v2279, 124
        %v2299 = vpop.permute.xlu0 %2298
        %2300 = vrot.lane.b32.xlu0 %v2280, 124
        %v2301 = vpop.permute.xlu0 %2300
        %2302 = vrot.lane.b32.xlu0 %v2281, 124
        %v2303 = vpop.permute.xlu0 %2302
        %2304 = vrot.lane.b32.xlu0 %v2282, 124
        %v2305 = vpop.permute.xlu0 %2304
        %2306 = vrot.lane.b32.xlu0 %v2283, 124
        %v2307 = vpop.permute.xlu0 %2306
        %2308 = vrot.lane.b32.xlu0 %v2284, 124
        %v2309 = vpop.permute.xlu0 %2308
        %2310 = vrot.lane.b32.xlu0 %v2285, 124
        %v2311 = vpop.permute.xlu0 %2310
        %2312 = vrot.lane.b32.xlu0 %v2286, 124
        %v2313 = vpop.permute.xlu0 %2312
        %v2314 = vsel %vm930, %v2297, %v2299
        %v2315 = vsel %vm930, %v2299, %v2301
        %v2316 = vsel %vm930, %v2301, %v2303
        %v2317 = vsel %vm930, %v2303, %v2305
        %v2318 = vsel %vm930, %v2305, %v2307
        %v2319 = vsel %vm930, %v2307, %v2309
        %v2320 = vsel %vm930, %v2309, %v2311
        %v2321 = vsel %vm930, %v2311, %v2313
        %v2331 = vadd.f32 %v2265, %v2314
        %v2332 = vadd.f32 %v2266, %v2315
        %v2333 = vadd.f32 %v2267, %v2316
        %v2334 = vadd.f32 %v2268, %v2317
        %v2335 = vadd.f32 %v2269, %v2318
        %v2336 = vadd.f32 %v2270, %v2319
        %v2337 = vadd.f32 %v2271, %v2320
        %v2338 = vadd.f32 %v2272, %v2321
        %v2339 = vadd.f32 %v2273, %v2313
        %2341 = vset.pattern.permute.xlu0 0
        %2342 = vperm.xlu0 %2341, %v480
        %v2343 = vpop.permute.xlu0 %2342
        %v2345 = vadd.f32 %v2331, %v2343
        %v2346 = vadd.f32 %v2332, %v2343
        %v2347 = vadd.f32 %v2333, %v2343
        %v2348 = vadd.f32 %v2334, %v2343
        %v2349 = vadd.f32 %v2335, %v2343
        %v2350 = vadd.f32 %v2336, %v2343
        %v2351 = vadd.f32 %v2337, %v2343
        %v2352 = vadd.f32 %v2338, %v2343
        %v2353 = vadd.f32 %v2339, %v2343
        %v2354 = vmax.f32 %v2345, 0.0
        %v2355 = vmax.f32 %v2346, 0.0
        %v2356 = vmax.f32 %v2347, 0.0
        %v2357 = vmax.f32 %v2348, 0.0
        %v2358 = vmax.f32 %v2349, 0.0
        %v2359 = vmax.f32 %v2350, 0.0
        %v2360 = vmax.f32 %v2351, 0.0
        %v2361 = vmax.f32 %v2352, 0.0
        %v2362 = vmax.f32 %v2353, 0.0
        %v2364 = vlaneseq
        %v2365 = vshrl.u32 %v2364, 7
        %v2366 = vsub.s32 0, %v2365
        %v2367 = vrot.slane %v478, %v2366
        %v2368 = vlaneseq
        %v2369 = vshrl.u32 %v2368, 7
        %v2370 = vsub.s32 1, %v2369
        %v2371 = vrot.slane %v478, %v2370
        %v2372 = vlaneseq
        %v2373 = vshrl.u32 %v2372, 7
        %v2374 = vsub.s32 2, %v2373
        %v2375 = vrot.slane %v478, %v2374
        %v2376 = vlaneseq
        %v2377 = vshrl.u32 %v2376, 7
        %v2378 = vsub.s32 3, %v2377
        %v2379 = vrot.slane %v478, %v2378
        %v2380 = vlaneseq
        %v2381 = vshrl.u32 %v2380, 7
        %v2382 = vsub.s32 4, %v2381
        %v2383 = vrot.slane %v478, %v2382
        %v2384 = vlaneseq
        %v2385 = vshrl.u32 %v2384, 7
        %v2386 = vsub.s32 5, %v2385
        %v2387 = vrot.slane %v478, %v2386
        %v2388 = vlaneseq
        %v2389 = vshrl.u32 %v2388, 7
        %v2390 = vsub.s32 6, %v2389
        %v2391 = vrot.slane %v478, %v2390
        %v2392 = vlaneseq
        %v2393 = vshrl.u32 %v2392, 7
        %v2394 = vsub.s32 7, %v2393
        %v2395 = vrot.slane %v478, %v2394
        %2396 = vrot.lane.b32.xlu0 %v2367, 62
        %v2397 = vpop.permute.xlu0 %2396
        %2398 = vrot.lane.b32.xlu0 %v2371, 62
        %v2399 = vpop.permute.xlu0 %2398
        %2400 = vrot.lane.b32.xlu0 %v2375, 62
        %v2401 = vpop.permute.xlu0 %2400
        %2402 = vrot.lane.b32.xlu0 %v2379, 62
        %v2403 = vpop.permute.xlu0 %2402
        %2404 = vrot.lane.b32.xlu0 %v2383, 62
        %v2405 = vpop.permute.xlu0 %2404
        %2406 = vrot.lane.b32.xlu0 %v2387, 62
        %v2407 = vpop.permute.xlu0 %2406
        %2408 = vrot.lane.b32.xlu0 %v2391, 62
        %v2409 = vpop.permute.xlu0 %2408
        %2410 = vrot.lane.b32.xlu0 %v2395, 62
        %v2411 = vpop.permute.xlu0 %2410
        %v2412 = vsel %vm1506, %v2397, %v2399
        %v2413 = vsel %vm1506, %v2399, %v2401
        %v2414 = vsel %vm1506, %v2401, %v2403
        %v2415 = vsel %vm1506, %v2403, %v2405
        %v2416 = vsel %vm1506, %v2405, %v2407
        %v2417 = vsel %vm1506, %v2407, %v2409
        %v2418 = vsel %vm1506, %v2409, %v2411
        %v2428 = vmul.f32 %v2354, %v2397
        %v2429 = vmul.f32 %v2355, %v2412
        %v2430 = vmul.f32 %v2356, %v2413
        %v2431 = vmul.f32 %v2357, %v2414
        %v2432 = vmul.f32 %v2358, %v2415
        %v2433 = vmul.f32 %v2359, %v2416
        %v2434 = vmul.f32 %v2360, %v2417
        %v2435 = vmul.f32 %v2361, %v2418
        %v2436 = vmul.f32 %v2362, %v2411
        %2446 = vrot.lane.b32.xlu0 %v2428, 66
        %v2447 = vpop.permute.xlu0 %2446
        %2448 = vrot.lane.b32.xlu0 %v2429, 66
        %v2449 = vpop.permute.xlu0 %2448
        %2450 = vrot.lane.b32.xlu0 %v2430, 66
        %v2451 = vpop.permute.xlu0 %2450
        %2452 = vrot.lane.b32.xlu0 %v2431, 66
        %v2453 = vpop.permute.xlu0 %2452
        %2454 = vrot.lane.b32.xlu0 %v2432, 66
        %v2455 = vpop.permute.xlu0 %2454
        %2456 = vrot.lane.b32.xlu0 %v2433, 66
        %v2457 = vpop.permute.xlu0 %2456
        %2458 = vrot.lane.b32.xlu0 %v2434, 66
        %v2459 = vpop.permute.xlu0 %2458
        %2460 = vrot.lane.b32.xlu0 %v2435, 66
        %v2461 = vpop.permute.xlu0 %2460
        %2462 = vrot.lane.b32.xlu0 %v2436, 66
        %v2463 = vpop.permute.xlu0 %2462
        %vm2464 = vcmask 539648
        %v2465 = vsel %vm2464, %v2447, %v2449
        %v2466 = vsel %vm2464, %v2449, %v2451
        %v2467 = vsel %vm2464, %v2451, %v2453
        %v2468 = vsel %vm2464, %v2453, %v2455
        %v2469 = vsel %vm2464, %v2455, %v2457
        %v2470 = vsel %vm2464, %v2457, %v2459
        %v2471 = vsel %vm2464, %v2459, %v2461
        %v2472 = vsel %vm2464, %v2461, %v2463
        %2481 = vst [vmem:[#allocation2 + $0x8] sm:$0xf] %v2465
        %2482 = vst [vmem:[#allocation2 + $0x10] sm:$0xf] %v2466
        %2483 = vst [vmem:[#allocation2 + $0x18] sm:$0xf] %v2467
        %2484 = vst [vmem:[#allocation2 + $0x20] sm:$0xf] %v2468
        %2485 = vst [vmem:[#allocation2 + $0x28] sm:$0xf] %v2469
        %2486 = vst [vmem:[#allocation2 + $0x30] sm:$0xf] %v2470
        %2487 = vst [vmem:[#allocation2 + $0x38] sm:$0xf] %v2471
        %2488 = vst [vmem:[#allocation2 + $0x40] sm:$0xf] %v2472
        %v2489 = vld [vmem:[#allocation2] sm:$0xf]
        %v2490 = vld [vmem:[#allocation2 + $0x8] sm:$0xf]
        %v2491 = vld [vmem:[#allocation2 + $0x10] sm:$0xf]
        %v2492 = vld [vmem:[#allocation2 + $0x18] sm:$0xf]
        %v2493 = vld [vmem:[#allocation2 + $0x20] sm:$0xf]
        %v2494 = vld [vmem:[#allocation2 + $0x28] sm:$0xf]
        %v2495 = vld [vmem:[#allocation2 + $0x30] sm:$0xf]
        %v2496 = vld [vmem:[#allocation2 + $0x38] sm:$0xf]
        %v2497 = vld [vmem:[#allocation2 + $0x40] sm:$0xf]
        %2507 = vrot.lane.b32.xlu0 %v2489, 66
        %v2508 = vpop.permute.xlu0 %2507
        %2509 = vrot.lane.b32.xlu0 %v2490, 66
        %v2510 = vpop.permute.xlu0 %2509
        %2511 = vrot.lane.b32.xlu0 %v2491, 66
        %v2512 = vpop.permute.xlu0 %2511
        %2513 = vrot.lane.b32.xlu0 %v2492, 66
        %v2514 = vpop.permute.xlu0 %2513
        %2515 = vrot.lane.b32.xlu0 %v2493, 66
        %v2516 = vpop.permute.xlu0 %2515
        %2517 = vrot.lane.b32.xlu0 %v2494, 66
        %v2518 = vpop.permute.xlu0 %2517
        %2519 = vrot.lane.b32.xlu0 %v2495, 66
        %v2520 = vpop.permute.xlu0 %2519
        %2521 = vrot.lane.b32.xlu0 %v2496, 66
        %v2522 = vpop.permute.xlu0 %2521
        %2523 = vrot.lane.b32.xlu0 %v2497, 66
        %v2524 = vpop.permute.xlu0 %2523
        %v2525 = vsel %vm2464, %v2508, %v2510
        %v2526 = vsel %vm2464, %v2510, %v2512
        %v2527 = vsel %vm2464, %v2512, %v2514
        %v2528 = vsel %vm2464, %v2514, %v2516
        %v2529 = vsel %vm2464, %v2516, %v2518
        %v2530 = vsel %vm2464, %v2518, %v2520
        %v2531 = vsel %vm2464, %v2520, %v2522
        %v2532 = vsel %vm2464, %v2522, %v2524
        %2541 = vst [vmem:[#allocation3] sm:$0xf] %v2525
        %2542 = vst [vmem:[#allocation3 + $0x8] sm:$0xf] %v2526
        %2543 = vst [vmem:[#allocation3 + $0x10] sm:$0xf] %v2527
        %2544 = vst [vmem:[#allocation3 + $0x18] sm:$0xf] %v2528
        %2545 = vst [vmem:[#allocation3 + $0x20] sm:$0xf] %v2529
        %2546 = vst [vmem:[#allocation3 + $0x28] sm:$0xf] %v2530
        %2547 = vst [vmem:[#allocation3 + $0x30] sm:$0xf] %v2531
        %2548 = vst [vmem:[#allocation3 + $0x38] sm:$0xf] %v2532
        %v2549 = vld [vmem:[#allocation2] sm:$0xf]
        %v2550 = vld [vmem:[#allocation2 + $0x8] sm:$0xf]
        %v2551 = vld [vmem:[#allocation2 + $0x10] sm:$0xf]
        %v2552 = vld [vmem:[#allocation2 + $0x18] sm:$0xf]
        %v2553 = vld [vmem:[#allocation2 + $0x20] sm:$0xf]
        %v2554 = vld [vmem:[#allocation2 + $0x28] sm:$0xf]
        %v2555 = vld [vmem:[#allocation2 + $0x30] sm:$0xf]
        %v2556 = vld [vmem:[#allocation2 + $0x38] sm:$0xf]
        %v2557 = vld [vmem:[#allocation2 + $0x40] sm:$0xf]
        %v2567 = vrot.slane %v2549, 4
        %v2568 = vrot.slane %v2550, 4
        %v2569 = vrot.slane %v2551, 4
        %v2570 = vrot.slane %v2552, 4
        %v2571 = vrot.slane %v2553, 4
        %v2572 = vrot.slane %v2554, 4
        %v2573 = vrot.slane %v2555, 4
        %v2574 = vrot.slane %v2556, 4
        %v2575 = vrot.slane %v2557, 4
        %2576 = vrot.lane.b32.xlu0 %v2567, 65
        %v2577 = vpop.permute.xlu0 %2576
        %2578 = vrot.lane.b32.xlu0 %v2568, 65
        %v2579 = vpop.permute.xlu0 %2578
        %2580 = vrot.lane.b32.xlu0 %v2569, 65
        %v2581 = vpop.permute.xlu0 %2580
        %2582 = vrot.lane.b32.xlu0 %v2570, 65
        %v2583 = vpop.permute.xlu0 %2582
        %2584 = vrot.lane.b32.xlu0 %v2571, 65
        %v2585 = vpop.permute.xlu0 %2584
        %2586 = vrot.lane.b32.xlu0 %v2572, 65
        %v2587 = vpop.permute.xlu0 %2586
        %2588 = vrot.lane.b32.xlu0 %v2573, 65
        %v2589 = vpop.permute.xlu0 %2588
        %2590 = vrot.lane.b32.xlu0 %v2574, 65
        %v2591 = vpop.permute.xlu0 %2590
        %2592 = vrot.lane.b32.xlu0 %v2575, 65
        %v2593 = vpop.permute.xlu0 %2592
        %vm2594 = vcmask 531456
        %v2595 = vsel %vm2594, %v2577, %v2579
        %v2596 = vsel %vm2594, %v2579, %v2581
        %v2597 = vsel %vm2594, %v2581, %v2583
        %v2598 = vsel %vm2594, %v2583, %v2585
        %v2599 = vsel %vm2594, %v2585, %v2587
        %v2600 = vsel %vm2594, %v2587, %v2589
        %v2601 = vsel %vm2594, %v2589, %v2591
        %v2602 = vsel %vm2594, %v2591, %v2593
        %2611 = vst [vmem:[#allocation3] sm:$0xf0] %v2595
        %2612 = vst [vmem:[#allocation3 + $0x8] sm:$0xf0] %v2596
        %2613 = vst [vmem:[#allocation3 + $0x10] sm:$0xf0] %v2597
        %2614 = vst [vmem:[#allocation3 + $0x18] sm:$0xf0] %v2598
        %2615 = vst [vmem:[#allocation3 + $0x20] sm:$0xf0] %v2599
        %2616 = vst [vmem:[#allocation3 + $0x28] sm:$0xf0] %v2600
        %2617 = vst [vmem:[#allocation3 + $0x30] sm:$0xf0] %v2601
        %2618 = vst [vmem:[#allocation3 + $0x38] sm:$0xf0] %v2602
        %v2619 = vld [vmem:[#allocation2] sm:$0xf]
        %v2620 = vld [vmem:[#allocation2 + $0x8] sm:$0xf]
        %v2621 = vld [vmem:[#allocation2 + $0x10] sm:$0xf]
        %v2622 = vld [vmem:[#allocation2 + $0x18] sm:$0xf]
        %v2623 = vld [vmem:[#allocation2 + $0x20] sm:$0xf]
        %v2624 = vld [vmem:[#allocation2 + $0x28] sm:$0xf]
        %v2625 = vld [vmem:[#allocation2 + $0x30] sm:$0xf]
        %v2626 = vld [vmem:[#allocation2 + $0x38] sm:$0xf]
        %v2627 = vld [vmem:[#allocation2 + $0x40] sm:$0xf]
        %2637 = vrot.lane.b32.xlu0 %v2619, 64
        %v2638 = vpop.permute.xlu0 %2637
        %2639 = vrot.lane.b32.xlu0 %v2620, 64
        %v2640 = vpop.permute.xlu0 %2639
        %2641 = vrot.lane.b32.xlu0 %v2621, 64
        %v2642 = vpop.permute.xlu0 %2641
        %2643 = vrot.lane.b32.xlu0 %v2622, 64
        %v2644 = vpop.permute.xlu0 %2643
        %2645 = vrot.lane.b32.xlu0 %v2623, 64
        %v2646 = vpop.permute.xlu0 %2645
        %2647 = vrot.lane.b32.xlu0 %v2624, 64
        %v2648 = vpop.permute.xlu0 %2647
        %2649 = vrot.lane.b32.xlu0 %v2625, 64
        %v2650 = vpop.permute.xlu0 %2649
        %2651 = vrot.lane.b32.xlu0 %v2626, 64
        %v2652 = vpop.permute.xlu0 %2651
        %2653 = vrot.lane.b32.xlu0 %v2627, 64
        %v2654 = vpop.permute.xlu0 %2653
        %v2655 = vsel %vm1332, %v2638, %v2640
        %v2656 = vsel %vm1332, %v2640, %v2642
        %v2657 = vsel %vm1332, %v2642, %v2644
        %v2658 = vsel %vm1332, %v2644, %v2646
        %v2659 = vsel %vm1332, %v2646, %v2648
        %v2660 = vsel %vm1332, %v2648, %v2650
        %v2661 = vsel %vm1332, %v2650, %v2652
        %v2662 = vsel %vm1332, %v2652, %v2654
        %2671 = vst [vmem:[#allocation3 + $0x40] sm:$0xf] %v2655
        %2672 = vst [vmem:[#allocation3 + $0x48] sm:$0xf] %v2656
        %2673 = vst [vmem:[#allocation3 + $0x50] sm:$0xf] %v2657
        %2674 = vst [vmem:[#allocation3 + $0x58] sm:$0xf] %v2658
        %2675 = vst [vmem:[#allocation3 + $0x60] sm:$0xf] %v2659
        %2676 = vst [vmem:[#allocation3 + $0x68] sm:$0xf] %v2660
        %2677 = vst [vmem:[#allocation3 + $0x70] sm:$0xf] %v2661
        %2678 = vst [vmem:[#allocation3 + $0x78] sm:$0xf] %v2662
        %v2679 = vld [vmem:[#allocation2] sm:$0xf]
        %v2680 = vld [vmem:[#allocation2 + $0x8] sm:$0xf]
        %v2681 = vld [vmem:[#allocation2 + $0x10] sm:$0xf]
        %v2682 = vld [vmem:[#allocation2 + $0x18] sm:$0xf]
        %v2683 = vld [vmem:[#allocation2 + $0x20] sm:$0xf]
        %v2684 = vld [vmem:[#allocation2 + $0x28] sm:$0xf]
        %v2685 = vld [vmem:[#allocation2 + $0x30] sm:$0xf]
        %v2686 = vld [vmem:[#allocation2 + $0x38] sm:$0xf]
        %v2687 = vld [vmem:[#allocation2 + $0x40] sm:$0xf]
        %v2697 = vrot.slane %v2679, 4
        %v2698 = vrot.slane %v2680, 4
        %v2699 = vrot.slane %v2681, 4
        %v2700 = vrot.slane %v2682, 4
        %v2701 = vrot.slane %v2683, 4
        %v2702 = vrot.slane %v2684, 4
        %v2703 = vrot.slane %v2685, 4
        %v2704 = vrot.slane %v2686, 4
        %v2705 = vrot.slane %v2687, 4
        %2706 = vrot.lane.b32.xlu0 %v2697, 63
        %v2707 = vpop.permute.xlu0 %2706
        %2708 = vrot.lane.b32.xlu0 %v2698, 63
        %v2709 = vpop.permute.xlu0 %2708
        %2710 = vrot.lane.b32.xlu0 %v2699, 63
        %v2711 = vpop.permute.xlu0 %2710
        %2712 = vrot.lane.b32.xlu0 %v2700, 63
        %v2713 = vpop.permute.xlu0 %2712
        %2714 = vrot.lane.b32.xlu0 %v2701, 63
        %v2715 = vpop.permute.xlu0 %2714
        %2716 = vrot.lane.b32.xlu0 %v2702, 63
        %v2717 = vpop.permute.xlu0 %2716
        %2718 = vrot.lane.b32.xlu0 %v2703, 63
        %v2719 = vpop.permute.xlu0 %2718
        %2720 = vrot.lane.b32.xlu0 %v2704, 63
        %v2721 = vpop.permute.xlu0 %2720
        %2722 = vrot.lane.b32.xlu0 %v2705, 63
        %v2723 = vpop.permute.xlu0 %2722
        %v2724 = vsel %vm1399, %v2707, %v2709
        %v2725 = vsel %vm1399, %v2709, %v2711
        %v2726 = vsel %vm1399, %v2711, %v2713
        %v2727 = vsel %vm1399, %v2713, %v2715
        %v2728 = vsel %vm1399, %v2715, %v2717
        %v2729 = vsel %vm1399, %v2717, %v2719
        %v2730 = vsel %vm1399, %v2719, %v2721
        %v2731 = vsel %vm1399, %v2721, %v2723
        %2740 = vst [vmem:[#allocation3 + $0x40] sm:$0xf0] %v2724
        %2741 = vst [vmem:[#allocation3 + $0x48] sm:$0xf0] %v2725
        %2742 = vst [vmem:[#allocation3 + $0x50] sm:$0xf0] %v2726
        %2743 = vst [vmem:[#allocation3 + $0x58] sm:$0xf0] %v2727
        %2744 = vst [vmem:[#allocation3 + $0x60] sm:$0xf0] %v2728
        %2745 = vst [vmem:[#allocation3 + $0x68] sm:$0xf0] %v2729
        %2746 = vst [vmem:[#allocation3 + $0x70] sm:$0xf0] %v2730
        %2747 = vst [vmem:[#allocation3 + $0x78] sm:$0xf0] %v2731
        %v2748 = vld [vmem:[#allocation2] sm:$0xf]
        %v2749 = vld [vmem:[#allocation2 + $0x8] sm:$0xf]
        %v2750 = vld [vmem:[#allocation2 + $0x10] sm:$0xf]
        %v2751 = vld [vmem:[#allocation2 + $0x18] sm:$0xf]
        %v2752 = vld [vmem:[#allocation2 + $0x20] sm:$0xf]
        %v2753 = vld [vmem:[#allocation2 + $0x28] sm:$0xf]
        %v2754 = vld [vmem:[#allocation2 + $0x30] sm:$0xf]
        %v2755 = vld [vmem:[#allocation2 + $0x38] sm:$0xf]
        %v2756 = vld [vmem:[#allocation2 + $0x40] sm:$0xf]
        %2766 = vrot.lane.b32.xlu0 %v2748, 62
        %v2767 = vpop.permute.xlu0 %2766
        %2768 = vrot.lane.b32.xlu0 %v2749, 62
        %v2769 = vpop.permute.xlu0 %2768
        %2770 = vrot.lane.b32.xlu0 %v2750, 62
        %v2771 = vpop.permute.xlu0 %2770
        %2772 = vrot.lane.b32.xlu0 %v2751, 62
        %v2773 = vpop.permute.xlu0 %2772
        %2774 = vrot.lane.b32.xlu0 %v2752, 62
        %v2775 = vpop.permute.xlu0 %2774
        %2776 = vrot.lane.b32.xlu0 %v2753, 62
        %v2777 = vpop.permute.xlu0 %2776
        %2778 = vrot.lane.b32.xlu0 %v2754, 62
        %v2779 = vpop.permute.xlu0 %2778
        %2780 = vrot.lane.b32.xlu0 %v2755, 62
        %v2781 = vpop.permute.xlu0 %2780
        %2782 = vrot.lane.b32.xlu0 %v2756, 62
        %v2783 = vpop.permute.xlu0 %2782
        %v2784 = vsel %vm1506, %v2767, %v2769
        %v2785 = vsel %vm1506, %v2769, %v2771
        %v2786 = vsel %vm1506, %v2771, %v2773
        %v2787 = vsel %vm1506, %v2773, %v2775
        %v2788 = vsel %vm1506, %v2775, %v2777
        %v2789 = vsel %vm1506, %v2777, %v2779
        %v2790 = vsel %vm1506, %v2779, %v2781
        %v2791 = vsel %vm1506, %v2781, %v2783
        %2800 = vst [vmem:[#allocation3 + $0x80] sm:$0xf] %v2784
        %2801 = vst [vmem:[#allocation3 + $0x88] sm:$0xf] %v2785
        %2802 = vst [vmem:[#allocation3 + $0x90] sm:$0xf] %v2786
        %2803 = vst [vmem:[#allocation3 + $0x98] sm:$0xf] %v2787
        %2804 = vst [vmem:[#allocation3 + $0xa0] sm:$0xf] %v2788
        %2805 = vst [vmem:[#allocation3 + $0xa8] sm:$0xf] %v2789
        %2806 = vst [vmem:[#allocation3 + $0xb0] sm:$0xf] %v2790
        %2807 = vst [vmem:[#allocation3 + $0xb8] sm:$0xf] %v2791
        %v2808 = vld [vmem:[#allocation2] sm:$0xf]
        %v2809 = vld [vmem:[#allocation2 + $0x8] sm:$0xf]
        %v2810 = vld [vmem:[#allocation2 + $0x10] sm:$0xf]
        %v2811 = vld [vmem:[#allocation2 + $0x18] sm:$0xf]
        %v2812 = vld [vmem:[#allocation2 + $0x20] sm:$0xf]
        %v2813 = vld [vmem:[#allocation2 + $0x28] sm:$0xf]
        %v2814 = vld [vmem:[#allocation2 + $0x30] sm:$0xf]
        %v2815 = vld [vmem:[#allocation2 + $0x38] sm:$0xf]
        %v2816 = vld [vmem:[#allocation2 + $0x40] sm:$0xf]
        %v2826 = vrot.slane %v2808, 4
        %v2827 = vrot.slane %v2809, 4
        %v2828 = vrot.slane %v2810, 4
        %v2829 = vrot.slane %v2811, 4
        %v2830 = vrot.slane %v2812, 4
        %v2831 = vrot.slane %v2813, 4
        %v2832 = vrot.slane %v2814, 4
        %v2833 = vrot.slane %v2815, 4
        %v2834 = vrot.slane %v2816, 4
        %2835 = vrot.lane.b32.xlu0 %v2826, 34
        %v2836 = vpop.permute.xlu0 %2835
        %2837 = vrot.lane.b32.xlu0 %v2827, 34
        %v2838 = vpop.permute.xlu0 %2837
        %2839 = vrot.lane.b32.xlu0 %v2828, 34
        %v2840 = vpop.permute.xlu0 %2839
        %2841 = vrot.lane.b32.xlu0 %v2829, 34
        %v2842 = vpop.permute.xlu0 %2841
        %2843 = vrot.lane.b32.xlu0 %v2830, 34
        %v2844 = vpop.permute.xlu0 %2843
        %2845 = vrot.lane.b32.xlu0 %v2831, 34
        %v2846 = vpop.permute.xlu0 %2845
        %2847 = vrot.lane.b32.xlu0 %v2832, 34
        %v2848 = vpop.permute.xlu0 %2847
        %2849 = vrot.lane.b32.xlu0 %v2833, 34
        %v2850 = vpop.permute.xlu0 %2849
        %2851 = vrot.lane.b32.xlu0 %v2834, 34
        %v2852 = vpop.permute.xlu0 %2851
        %vm2853 = vcmask 277504
        %v2854 = vsel %vm2853, %v2836, %v2838
        %v2855 = vsel %vm2853, %v2838, %v2840
        %v2856 = vsel %vm2853, %v2840, %v2842
        %v2857 = vsel %vm2853, %v2842, %v2844
        %v2858 = vsel %vm2853, %v2844, %v2846
        %v2859 = vsel %vm2853, %v2846, %v2848
        %v2860 = vsel %vm2853, %v2848, %v2850
        %v2861 = vsel %vm2853, %v2850, %v2852
        %2870 = vst [vmem:[#allocation3 + $0x80] sm:$0xf0] %v2854
        %2871 = vst [vmem:[#allocation3 + $0x88] sm:$0xf0] %v2855
        %2872 = vst [vmem:[#allocation3 + $0x90] sm:$0xf0] %v2856
        %2873 = vst [vmem:[#allocation3 + $0x98] sm:$0xf0] %v2857
        %2874 = vst [vmem:[#allocation3 + $0xa0] sm:$0xf0] %v2858
        %2875 = vst [vmem:[#allocation3 + $0xa8] sm:$0xf0] %v2859
        %2876 = vst [vmem:[#allocation3 + $0xb0] sm:$0xf0] %v2860
        %2877 = vst [vmem:[#allocation3 + $0xb8] sm:$0xf0] %v2861
        %v2878 = vld [vmem:[#allocation2] sm:$0xf]
        %v2879 = vld [vmem:[#allocation2 + $0x8] sm:$0xf]
        %v2880 = vld [vmem:[#allocation2 + $0x10] sm:$0xf]
        %v2881 = vld [vmem:[#allocation2 + $0x18] sm:$0xf]
        %v2882 = vld [vmem:[#allocation2 + $0x20] sm:$0xf]
        %v2883 = vld [vmem:[#allocation2 + $0x28] sm:$0xf]
        %v2884 = vld [vmem:[#allocation2 + $0x30] sm:$0xf]
        %v2885 = vld [vmem:[#allocation2 + $0x38] sm:$0xf]
        %v2886 = vld [vmem:[#allocation2 + $0x40] sm:$0xf]
        %2896 = vrot.lane.b32.xlu0 %v2878, 33
        %v2897 = vpop.permute.xlu0 %2896
        %2898 = vrot.lane.b32.xlu0 %v2879, 33
        %v2899 = vpop.permute.xlu0 %2898
        %2900 = vrot.lane.b32.xlu0 %v2880, 33
        %v2901 = vpop.permute.xlu0 %2900
        %2902 = vrot.lane.b32.xlu0 %v2881, 33
        %v2903 = vpop.permute.xlu0 %2902
        %2904 = vrot.lane.b32.xlu0 %v2882, 33
        %v2905 = vpop.permute.xlu0 %2904
        %2906 = vrot.lane.b32.xlu0 %v2883, 33
        %v2907 = vpop.permute.xlu0 %2906
        %2908 = vrot.lane.b32.xlu0 %v2884, 33
        %v2909 = vpop.permute.xlu0 %2908
        %2910 = vrot.lane.b32.xlu0 %v2885, 33
        %v2911 = vpop.permute.xlu0 %2910
        %2912 = vrot.lane.b32.xlu0 %v2886, 33
        %v2913 = vpop.permute.xlu0 %2912
        %vm2914 = vcmask 269312
        %v2915 = vsel %vm2914, %v2897, %v2899
        %v2916 = vsel %vm2914, %v2899, %v2901
        %v2917 = vsel %vm2914, %v2901, %v2903
        %v2918 = vsel %vm2914, %v2903, %v2905
        %v2919 = vsel %vm2914, %v2905, %v2907
        %v2920 = vsel %vm2914, %v2907, %v2909
        %v2921 = vsel %vm2914, %v2909, %v2911
        %v2922 = vsel %vm2914, %v2911, %v2913
        %2931 = vst [vmem:[#allocation3 + $0xc0] sm:$0xf] %v2915
        %2932 = vst [vmem:[#allocation3 + $0xc8] sm:$0xf] %v2916
        %2933 = vst [vmem:[#allocation3 + $0xd0] sm:$0xf] %v2917
        %2934 = vst [vmem:[#allocation3 + $0xd8] sm:$0xf] %v2918
        %2935 = vst [vmem:[#allocation3 + $0xe0] sm:$0xf] %v2919
        %2936 = vst [vmem:[#allocation3 + $0xe8] sm:$0xf] %v2920
        %2937 = vst [vmem:[#allocation3 + $0xf0] sm:$0xf] %v2921
        %2938 = vst [vmem:[#allocation3 + $0xf8] sm:$0xf] %v2922
        %v2939 = vld [vmem:[#allocation2] sm:$0xf]
        %v2940 = vld [vmem:[#allocation2 + $0x8] sm:$0xf]
        %v2941 = vld [vmem:[#allocation2 + $0x10] sm:$0xf]
        %v2942 = vld [vmem:[#allocation2 + $0x18] sm:$0xf]
        %v2943 = vld [vmem:[#allocation2 + $0x20] sm:$0xf]
        %v2944 = vld [vmem:[#allocation2 + $0x28] sm:$0xf]
        %v2945 = vld [vmem:[#allocation2 + $0x30] sm:$0xf]
        %v2946 = vld [vmem:[#allocation2 + $0x38] sm:$0xf]
        %v2947 = vld [vmem:[#allocation2 + $0x40] sm:$0xf]
        %v2957 = vrot.slane %v2939, 4
        %v2958 = vrot.slane %v2940, 4
        %v2959 = vrot.slane %v2941, 4
        %v2960 = vrot.slane %v2942, 4
        %v2961 = vrot.slane %v2943, 4
        %v2962 = vrot.slane %v2944, 4
        %v2963 = vrot.slane %v2945, 4
        %v2964 = vrot.slane %v2946, 4
        %v2965 = vrot.slane %v2947, 4
        %2966 = vrot.lane.b32.xlu0 %v2957, 32
        %v2967 = vpop.permute.xlu0 %2966
        %2968 = vrot.lane.b32.xlu0 %v2958, 32
        %v2969 = vpop.permute.xlu0 %2968
        %2970 = vrot.lane.b32.xlu0 %v2959, 32
        %v2971 = vpop.permute.xlu0 %2970
        %2972 = vrot.lane.b32.xlu0 %v2960, 32
        %v2973 = vpop.permute.xlu0 %2972
        %2974 = vrot.lane.b32.xlu0 %v2961, 32
        %v2975 = vpop.permute.xlu0 %2974
        %2976 = vrot.lane.b32.xlu0 %v2962, 32
        %v2977 = vpop.permute.xlu0 %2976
        %2978 = vrot.lane.b32.xlu0 %v2963, 32
        %v2979 = vpop.permute.xlu0 %2978
        %2980 = vrot.lane.b32.xlu0 %v2964, 32
        %v2981 = vpop.permute.xlu0 %2980
        %2982 = vrot.lane.b32.xlu0 %v2965, 32
        %v2983 = vpop.permute.xlu0 %2982
        %v2984 = vsel %vm1759, %v2967, %v2969
        %v2985 = vsel %vm1759, %v2969, %v2971
        %v2986 = vsel %vm1759, %v2971, %v2973
        %v2987 = vsel %vm1759, %v2973, %v2975
        %v2988 = vsel %vm1759, %v2975, %v2977
        %v2989 = vsel %vm1759, %v2977, %v2979
        %v2990 = vsel %vm1759, %v2979, %v2981
        %v2991 = vsel %vm1759, %v2981, %v2983
        %3000 = vst [vmem:[#allocation3 + $0xc0] sm:$0xf0] %v2984
        %3001 = vst [vmem:[#allocation3 + $0xc8] sm:$0xf0] %v2985
        %3002 = vst [vmem:[#allocation3 + $0xd0] sm:$0xf0] %v2986
        %3003 = vst [vmem:[#allocation3 + $0xd8] sm:$0xf0] %v2987
        %3004 = vst [vmem:[#allocation3 + $0xe0] sm:$0xf0] %v2988
        %3005 = vst [vmem:[#allocation3 + $0xe8] sm:$0xf0] %v2989
        %3006 = vst [vmem:[#allocation3 + $0xf0] sm:$0xf0] %v2990
        %3007 = vst [vmem:[#allocation3 + $0xf8] sm:$0xf0] %v2991
        %v3008 = vld [vmem:[#allocation2] sm:$0xf]
        %v3009 = vld [vmem:[#allocation2 + $0x8] sm:$0xf]
        %v3010 = vld [vmem:[#allocation2 + $0x10] sm:$0xf]
        %v3011 = vld [vmem:[#allocation2 + $0x18] sm:$0xf]
        %v3012 = vld [vmem:[#allocation2 + $0x20] sm:$0xf]
        %v3013 = vld [vmem:[#allocation2 + $0x28] sm:$0xf]
        %v3014 = vld [vmem:[#allocation2 + $0x30] sm:$0xf]
        %v3015 = vld [vmem:[#allocation2 + $0x38] sm:$0xf]
        %v3016 = vld [vmem:[#allocation2 + $0x40] sm:$0xf]
        %3026 = vrot.lane.b32.xlu0 %v3008, 31
        %v3027 = vpop.permute.xlu0 %3026
        %3028 = vrot.lane.b32.xlu0 %v3009, 31
        %v3029 = vpop.permute.xlu0 %3028
        %3030 = vrot.lane.b32.xlu0 %v3010, 31
        %v3031 = vpop.permute.xlu0 %3030
        %3032 = vrot.lane.b32.xlu0 %v3011, 31
        %v3033 = vpop.permute.xlu0 %3032
        %3034 = vrot.lane.b32.xlu0 %v3012, 31
        %v3035 = vpop.permute.xlu0 %3034
        %3036 = vrot.lane.b32.xlu0 %v3013, 31
        %v3037 = vpop.permute.xlu0 %3036
        %3038 = vrot.lane.b32.xlu0 %v3014, 31
        %v3039 = vpop.permute.xlu0 %3038
        %3040 = vrot.lane.b32.xlu0 %v3015, 31
        %v3041 = vpop.permute.xlu0 %3040
        %3042 = vrot.lane.b32.xlu0 %v3016, 31
        %v3043 = vpop.permute.xlu0 %3042
        %v3044 = vsel %vm1826, %v3027, %v3029
        %v3045 = vsel %vm1826, %v3029, %v3031
        %v3046 = vsel %vm1826, %v3031, %v3033
        %v3047 = vsel %vm1826, %v3033, %v3035
        %v3048 = vsel %vm1826, %v3035, %v3037
        %v3049 = vsel %vm1826, %v3037, %v3039
        %v3050 = vsel %vm1826, %v3039, %v3041
        %v3051 = vsel %vm1826, %v3041, %v3043
        %3060 = vst [vmem:[#allocation3 + $0x100] sm:$0xf] %v3044
        %3061 = vst [vmem:[#allocation3 + $0x108] sm:$0xf] %v3045
        %3062 = vst [vmem:[#allocation3 + $0x110] sm:$0xf] %v3046
        %3063 = vst [vmem:[#allocation3 + $0x118] sm:$0xf] %v3047
        %3064 = vst [vmem:[#allocation3 + $0x120] sm:$0xf] %v3048
        %3065 = vst [vmem:[#allocation3 + $0x128] sm:$0xf] %v3049
        %3066 = vst [vmem:[#allocation3 + $0x130] sm:$0xf] %v3050
        %3067 = vst [vmem:[#allocation3 + $0x138] sm:$0xf] %v3051
        %v3068 = vld [vmem:[#allocation2] sm:$0xf]
        %v3069 = vld [vmem:[#allocation2 + $0x8] sm:$0xf]
        %v3070 = vld [vmem:[#allocation2 + $0x10] sm:$0xf]
        %v3071 = vld [vmem:[#allocation2 + $0x18] sm:$0xf]
        %v3072 = vld [vmem:[#allocation2 + $0x20] sm:$0xf]
        %v3073 = vld [vmem:[#allocation2 + $0x28] sm:$0xf]
        %v3074 = vld [vmem:[#allocation2 + $0x30] sm:$0xf]
        %v3075 = vld [vmem:[#allocation2 + $0x38] sm:$0xf]
        %v3076 = vld [vmem:[#allocation2 + $0x40] sm:$0xf]
        %v3086 = vrot.slane %v3068, 4
        %v3087 = vrot.slane %v3069, 4
        %v3088 = vrot.slane %v3070, 4
        %v3089 = vrot.slane %v3071, 4
        %v3090 = vrot.slane %v3072, 4
        %v3091 = vrot.slane %v3073, 4
        %v3092 = vrot.slane %v3074, 4
        %v3093 = vrot.slane %v3075, 4
        %v3094 = vrot.slane %v3076, 4
        %3095 = vrot.lane.b32.xlu0 %v3086, 30
        %v3096 = vpop.permute.xlu0 %3095
        %3097 = vrot.lane.b32.xlu0 %v3087, 30
        %v3098 = vpop.permute.xlu0 %3097
        %3099 = vrot.lane.b32.xlu0 %v3088, 30
        %v3100 = vpop.permute.xlu0 %3099
        %3101 = vrot.lane.b32.xlu0 %v3089, 30
        %v3102 = vpop.permute.xlu0 %3101
        %3103 = vrot.lane.b32.xlu0 %v3090, 30
        %v3104 = vpop.permute.xlu0 %3103
        %3105 = vrot.lane.b32.xlu0 %v3091, 30
        %v3106 = vpop.permute.xlu0 %3105
        %3107 = vrot.lane.b32.xlu0 %v3092, 30
        %v3108 = vpop.permute.xlu0 %3107
        %3109 = vrot.lane.b32.xlu0 %v3093, 30
        %v3110 = vpop.permute.xlu0 %3109
        %3111 = vrot.lane.b32.xlu0 %v3094, 30
        %v3112 = vpop.permute.xlu0 %3111
        %v3113 = vsel %vm1893, %v3096, %v3098
        %v3114 = vsel %vm1893, %v3098, %v3100
        %v3115 = vsel %vm1893, %v3100, %v3102
        %v3116 = vsel %vm1893, %v3102, %v3104
        %v3117 = vsel %vm1893, %v3104, %v3106
        %v3118 = vsel %vm1893, %v3106, %v3108
        %v3119 = vsel %vm1893, %v3108, %v3110
        %v3120 = vsel %vm1893, %v3110, %v3112
        %3129 = vst [vmem:[#allocation3 + $0x100] sm:$0xf0] %v3113
        %3130 = vst [vmem:[#allocation3 + $0x108] sm:$0xf0] %v3114
        %3131 = vst [vmem:[#allocation3 + $0x110] sm:$0xf0] %v3115
        %3132 = vst [vmem:[#allocation3 + $0x118] sm:$0xf0] %v3116
        %3133 = vst [vmem:[#allocation3 + $0x120] sm:$0xf0] %v3117
        %3134 = vst [vmem:[#allocation3 + $0x128] sm:$0xf0] %v3118
        %3135 = vst [vmem:[#allocation3 + $0x130] sm:$0xf0] %v3119
        %3136 = vst [vmem:[#allocation3 + $0x138] sm:$0xf0] %v3120
        %v3137 = vld [vmem:[#allocation2] sm:$0xf]
        %v3138 = vld [vmem:[#allocation2 + $0x8] sm:$0xf]
        %v3139 = vld [vmem:[#allocation2 + $0x10] sm:$0xf]
        %v3140 = vld [vmem:[#allocation2 + $0x18] sm:$0xf]
        %v3141 = vld [vmem:[#allocation2 + $0x20] sm:$0xf]
        %v3142 = vld [vmem:[#allocation2 + $0x28] sm:$0xf]
        %v3143 = vld [vmem:[#allocation2 + $0x30] sm:$0xf]
        %v3144 = vld [vmem:[#allocation2 + $0x38] sm:$0xf]
        %v3145 = vld [vmem:[#allocation2 + $0x40] sm:$0xf]
        %3155 = vrot.lane.b32.xlu0 %v3137, 2
        %v3156 = vpop.permute.xlu0 %3155
        %3157 = vrot.lane.b32.xlu0 %v3138, 2
        %v3158 = vpop.permute.xlu0 %3157
        %3159 = vrot.lane.b32.xlu0 %v3139, 2
        %v3160 = vpop.permute.xlu0 %3159
        %3161 = vrot.lane.b32.xlu0 %v3140, 2
        %v3162 = vpop.permute.xlu0 %3161
        %3163 = vrot.lane.b32.xlu0 %v3141, 2
        %v3164 = vpop.permute.xlu0 %3163
        %3165 = vrot.lane.b32.xlu0 %v3142, 2
        %v3166 = vpop.permute.xlu0 %3165
        %3167 = vrot.lane.b32.xlu0 %v3143, 2
        %v3168 = vpop.permute.xlu0 %3167
        %3169 = vrot.lane.b32.xlu0 %v3144, 2
        %v3170 = vpop.permute.xlu0 %3169
        %3171 = vrot.lane.b32.xlu0 %v3145, 2
        %v3172 = vpop.permute.xlu0 %3171
        %vm3173 = vcmask 15360
        %v3174 = vsel %vm3173, %v3156, %v3158
        %v3175 = vsel %vm3173, %v3158, %v3160
        %v3176 = vsel %vm3173, %v3160, %v3162
        %v3177 = vsel %vm3173, %v3162, %v3164
        %v3178 = vsel %vm3173, %v3164, %v3166
        %v3179 = vsel %vm3173, %v3166, %v3168
        %v3180 = vsel %vm3173, %v3168, %v3170
        %v3181 = vsel %vm3173, %v3170, %v3172
        %3190 = vst [vmem:[#allocation3 + $0x140] sm:$0xf] %v3174
        %3191 = vst [vmem:[#allocation3 + $0x148] sm:$0xf] %v3175
        %3192 = vst [vmem:[#allocation3 + $0x150] sm:$0xf] %v3176
        %3193 = vst [vmem:[#allocation3 + $0x158] sm:$0xf] %v3177
        %3194 = vst [vmem:[#allocation3 + $0x160] sm:$0xf] %v3178
        %3195 = vst [vmem:[#allocation3 + $0x168] sm:$0xf] %v3179
        %3196 = vst [vmem:[#allocation3 + $0x170] sm:$0xf] %v3180
        %3197 = vst [vmem:[#allocation3 + $0x178] sm:$0xf] %v3181
        %v3198 = vld [vmem:[#allocation2] sm:$0xf]
        %v3199 = vld [vmem:[#allocation2 + $0x8] sm:$0xf]
        %v3200 = vld [vmem:[#allocation2 + $0x10] sm:$0xf]
        %v3201 = vld [vmem:[#allocation2 + $0x18] sm:$0xf]
        %v3202 = vld [vmem:[#allocation2 + $0x20] sm:$0xf]
        %v3203 = vld [vmem:[#allocation2 + $0x28] sm:$0xf]
        %v3204 = vld [vmem:[#allocation2 + $0x30] sm:$0xf]
        %v3205 = vld [vmem:[#allocation2 + $0x38] sm:$0xf]
        %v3206 = vld [vmem:[#allocation2 + $0x40] sm:$0xf]
        %v3216 = vrot.slane %v3198, 4
        %v3217 = vrot.slane %v3199, 4
        %v3218 = vrot.slane %v3200, 4
        %v3219 = vrot.slane %v3201, 4
        %v3220 = vrot.slane %v3202, 4
        %v3221 = vrot.slane %v3203, 4
        %v3222 = vrot.slane %v3204, 4
        %v3223 = vrot.slane %v3205, 4
        %v3224 = vrot.slane %v3206, 4
        %3225 = vrot.lane.b32.xlu0 %v3216, 1
        %v3226 = vpop.permute.xlu0 %3225
        %3227 = vrot.lane.b32.xlu0 %v3217, 1
        %v3228 = vpop.permute.xlu0 %3227
        %3229 = vrot.lane.b32.xlu0 %v3218, 1
        %v3230 = vpop.permute.xlu0 %3229
        %3231 = vrot.lane.b32.xlu0 %v3219, 1
        %v3232 = vpop.permute.xlu0 %3231
        %3233 = vrot.lane.b32.xlu0 %v3220, 1
        %v3234 = vpop.permute.xlu0 %3233
        %3235 = vrot.lane.b32.xlu0 %v3221, 1
        %v3236 = vpop.permute.xlu0 %3235
        %3237 = vrot.lane.b32.xlu0 %v3222, 1
        %v3238 = vpop.permute.xlu0 %3237
        %3239 = vrot.lane.b32.xlu0 %v3223, 1
        %v3240 = vpop.permute.xlu0 %3239
        %3241 = vrot.lane.b32.xlu0 %v3224, 1
        %v3242 = vpop.permute.xlu0 %3241
        %vm3243 = vcmask 7168
        %v3244 = vsel %vm3243, %v3226, %v3228
        %v3245 = vsel %vm3243, %v3228, %v3230
        %v3246 = vsel %vm3243, %v3230, %v3232
        %v3247 = vsel %vm3243, %v3232, %v3234
        %v3248 = vsel %vm3243, %v3234, %v3236
        %v3249 = vsel %vm3243, %v3236, %v3238
        %v3250 = vsel %vm3243, %v3238, %v3240
        %v3251 = vsel %vm3243, %v3240, %v3242
        %3260 = vst [vmem:[#allocation3 + $0x140] sm:$0xf0] %v3244
        %3261 = vst [vmem:[#allocation3 + $0x148] sm:$0xf0] %v3245
        %3262 = vst [vmem:[#allocation3 + $0x150] sm:$0xf0] %v3246
        %3263 = vst [vmem:[#allocation3 + $0x158] sm:$0xf0] %v3247
        %3264 = vst [vmem:[#allocation3 + $0x160] sm:$0xf0] %v3248
        %3265 = vst [vmem:[#allocation3 + $0x168] sm:$0xf0] %v3249
        %3266 = vst [vmem:[#allocation3 + $0x170] sm:$0xf0] %v3250
        %3267 = vst [vmem:[#allocation3 + $0x178] sm:$0xf0] %v3251
        %v3268 = vld [vmem:[#allocation2 + $0x8] sm:$0xf]
        %v3269 = vld [vmem:[#allocation2 + $0x10] sm:$0xf]
        %v3270 = vld [vmem:[#allocation2 + $0x18] sm:$0xf]
        %v3271 = vld [vmem:[#allocation2 + $0x20] sm:$0xf]
        %v3272 = vld [vmem:[#allocation2 + $0x28] sm:$0xf]
        %v3273 = vld [vmem:[#allocation2 + $0x30] sm:$0xf]
        %v3274 = vld [vmem:[#allocation2 + $0x38] sm:$0xf]
        %v3275 = vld [vmem:[#allocation2 + $0x40] sm:$0xf]
        %3276 = vst [vmem:[#allocation3 + $0x180] sm:$0xf] %v3268
        %3277 = vst [vmem:[#allocation3 + $0x188] sm:$0xf] %v3269
        %3278 = vst [vmem:[#allocation3 + $0x190] sm:$0xf] %v3270
        %3279 = vst [vmem:[#allocation3 + $0x198] sm:$0xf] %v3271
        %3280 = vst [vmem:[#allocation3 + $0x1a0] sm:$0xf] %v3272
        %3281 = vst [vmem:[#allocation3 + $0x1a8] sm:$0xf] %v3273
        %3282 = vst [vmem:[#allocation3 + $0x1b0] sm:$0xf] %v3274
        %3283 = vst [vmem:[#allocation3 + $0x1b8] sm:$0xf] %v3275
        %v3284 = vld [vmem:[#allocation2 + $0x8] sm:$0xf]
        %v3285 = vld [vmem:[#allocation2 + $0x10] sm:$0xf]
        %v3286 = vld [vmem:[#allocation2 + $0x18] sm:$0xf]
        %v3287 = vld [vmem:[#allocation2 + $0x20] sm:$0xf]
        %v3288 = vld [vmem:[#allocation2 + $0x28] sm:$0xf]
        %v3289 = vld [vmem:[#allocation2 + $0x30] sm:$0xf]
        %v3290 = vld [vmem:[#allocation2 + $0x38] sm:$0xf]
        %v3291 = vld [vmem:[#allocation2 + $0x40] sm:$0xf]
        %v3292 = vld [vmem:[#allocation2 + $0x48] sm:$0xf]
        %v3302 = vrot.slane %v3284, 4
        %v3303 = vrot.slane %v3285, 4
        %v3304 = vrot.slane %v3286, 4
        %v3305 = vrot.slane %v3287, 4
        %v3306 = vrot.slane %v3288, 4
        %v3307 = vrot.slane %v3289, 4
        %v3308 = vrot.slane %v3290, 4
        %v3309 = vrot.slane %v3291, 4
        %v3310 = vrot.slane %v3292, 4
        %3311 = vrot.lane.b32.xlu0 %v3302, 127
        %v3312 = vpop.permute.xlu0 %3311
        %3313 = vrot.lane.b32.xlu0 %v3303, 127
        %v3314 = vpop.permute.xlu0 %3313
        %3315 = vrot.lane.b32.xlu0 %v3304, 127
        %v3316 = vpop.permute.xlu0 %3315
        %3317 = vrot.lane.b32.xlu0 %v3305, 127
        %v3318 = vpop.permute.xlu0 %3317
        %3319 = vrot.lane.b32.xlu0 %v3306, 127
        %v3320 = vpop.permute.xlu0 %3319
        %3321 = vrot.lane.b32.xlu0 %v3307, 127
        %v3322 = vpop.permute.xlu0 %3321
        %3323 = vrot.lane.b32.xlu0 %v3308, 127
        %v3324 = vpop.permute.xlu0 %3323
        %3325 = vrot.lane.b32.xlu0 %v3309, 127
        %v3326 = vpop.permute.xlu0 %3325
        %3327 = vrot.lane.b32.xlu0 %v3310, 127
        %v3328 = vpop.permute.xlu0 %3327
        %v3329 = vsel %vm729, %v3312, %v3314
        %v3330 = vsel %vm729, %v3314, %v3316
        %v3331 = vsel %vm729, %v3316, %v3318
        %v3332 = vsel %vm729, %v3318, %v3320
        %v3333 = vsel %vm729, %v3320, %v3322
        %v3334 = vsel %vm729, %v3322, %v3324
        %v3335 = vsel %vm729, %v3324, %v3326
        %v3336 = vsel %vm729, %v3326, %v3328
        %3345 = vst [vmem:[#allocation3 + $0x180] sm:$0xf0] %v3329
        %3346 = vst [vmem:[#allocation3 + $0x188] sm:$0xf0] %v3330
        %3347 = vst [vmem:[#allocation3 + $0x190] sm:$0xf0] %v3331
        %3348 = vst [vmem:[#allocation3 + $0x198] sm:$0xf0] %v3332
        %3349 = vst [vmem:[#allocation3 + $0x1a0] sm:$0xf0] %v3333
        %3350 = vst [vmem:[#allocation3 + $0x1a8] sm:$0xf0] %v3334
        %3351 = vst [vmem:[#allocation3 + $0x1b0] sm:$0xf0] %v3335
        %3352 = vst [vmem:[#allocation3 + $0x1b8] sm:$0xf0] %v3336
        %v3353 = vld [vmem:[#allocation2 + $0x8] sm:$0xf]
        %v3354 = vld [vmem:[#allocation2 + $0x10] sm:$0xf]
        %v3355 = vld [vmem:[#allocation2 + $0x18] sm:$0xf]
        %v3356 = vld [vmem:[#allocation2 + $0x20] sm:$0xf]
        %v3357 = vld [vmem:[#allocation2 + $0x28] sm:$0xf]
        %v3358 = vld [vmem:[#allocation2 + $0x30] sm:$0xf]
        %v3359 = vld [vmem:[#allocation2 + $0x38] sm:$0xf]
        %v3360 = vld [vmem:[#allocation2 + $0x40] sm:$0xf]
        %v3361 = vld [vmem:[#allocation2 + $0x48] sm:$0xf]
        %3371 = vrot.lane.b32.xlu0 %v3353, 126
        %v3372 = vpop.permute.xlu0 %3371
        %3373 = vrot.lane.b32.xlu0 %v3354, 126
        %v3374 = vpop.permute.xlu0 %3373
        %3375 = vrot.lane.b32.xlu0 %v3355, 126
        %v3376 = vpop.permute.xlu0 %3375
        %3377 = vrot.lane.b32.xlu0 %v3356, 126
        %v3378 = vpop.permute.xlu0 %3377
        %3379 = vrot.lane.b32.xlu0 %v3357, 126
        %v3380 = vpop.permute.xlu0 %3379
        %3381 = vrot.lane.b32.xlu0 %v3358, 126
        %v3382 = vpop.permute.xlu0 %3381
        %3383 = vrot.lane.b32.xlu0 %v3359, 126
        %v3384 = vpop.permute.xlu0 %3383
        %3385 = vrot.lane.b32.xlu0 %v3360, 126
        %v3386 = vpop.permute.xlu0 %3385
        %3387 = vrot.lane.b32.xlu0 %v3361, 126
        %v3388 = vpop.permute.xlu0 %3387
        %v3389 = vsel %vm796, %v3372, %v3374
        %v3390 = vsel %vm796, %v3374, %v3376
        %v3391 = vsel %vm796, %v3376, %v3378
        %v3392 = vsel %vm796, %v3378, %v3380
        %v3393 = vsel %vm796, %v3380, %v3382
        %v3394 = vsel %vm796, %v3382, %v3384
        %v3395 = vsel %vm796, %v3384, %v3386
        %v3396 = vsel %vm796, %v3386, %v3388
        %3405 = vst [vmem:[#allocation3 + $0x1c0] sm:$0xf] %v3389
        %3406 = vst [vmem:[#allocation3 + $0x1c8] sm:$0xf] %v3390
        %3407 = vst [vmem:[#allocation3 + $0x1d0] sm:$0xf] %v3391
        %3408 = vst [vmem:[#allocation3 + $0x1d8] sm:$0xf] %v3392
        %3409 = vst [vmem:[#allocation3 + $0x1e0] sm:$0xf] %v3393
        %3410 = vst [vmem:[#allocation3 + $0x1e8] sm:$0xf] %v3394
        %3411 = vst [vmem:[#allocation3 + $0x1f0] sm:$0xf] %v3395
        %3412 = vst [vmem:[#allocation3 + $0x1f8] sm:$0xf] %v3396
        %v3413 = vld [vmem:[#allocation2 + $0x8] sm:$0xf]
        %v3414 = vld [vmem:[#allocation2 + $0x10] sm:$0xf]
        %v3415 = vld [vmem:[#allocation2 + $0x18] sm:$0xf]
        %v3416 = vld [vmem:[#allocation2 + $0x20] sm:$0xf]
        %v3417 = vld [vmem:[#allocation2 + $0x28] sm:$0xf]
        %v3418 = vld [vmem:[#allocation2 + $0x30] sm:$0xf]
        %v3419 = vld [vmem:[#allocation2 + $0x38] sm:$0xf]
        %v3420 = vld [vmem:[#allocation2 + $0x40] sm:$0xf]
        %v3421 = vld [vmem:[#allocation2 + $0x48] sm:$0xf]
        %v3431 = vrot.slane %v3413, 4
        %v3432 = vrot.slane %v3414, 4
        %v3433 = vrot.slane %v3415, 4
        %v3434 = vrot.slane %v3416, 4
        %v3435 = vrot.slane %v3417, 4
        %v3436 = vrot.slane %v3418, 4
        %v3437 = vrot.slane %v3419, 4
        %v3438 = vrot.slane %v3420, 4
        %v3439 = vrot.slane %v3421, 4
        %3440 = vrot.lane.b32.xlu0 %v3431, 98
        %v3441 = vpop.permute.xlu0 %3440
        %3442 = vrot.lane.b32.xlu0 %v3432, 98
        %v3443 = vpop.permute.xlu0 %3442
        %3444 = vrot.lane.b32.xlu0 %v3433, 98
        %v3445 = vpop.permute.xlu0 %3444
        %3446 = vrot.lane.b32.xlu0 %v3434, 98
        %v3447 = vpop.permute.xlu0 %3446
        %3448 = vrot.lane.b32.xlu0 %v3435, 98
        %v3449 = vpop.permute.xlu0 %3448
        %3450 = vrot.lane.b32.xlu0 %v3436, 98
        %v3451 = vpop.permute.xlu0 %3450
        %3452 = vrot.lane.b32.xlu0 %v3437, 98
        %v3453 = vpop.permute.xlu0 %3452
        %3454 = vrot.lane.b32.xlu0 %v3438, 98
        %v3455 = vpop.permute.xlu0 %3454
        %3456 = vrot.lane.b32.xlu0 %v3439, 98
        %v3457 = vpop.permute.xlu0 %3456
        %vm3458 = vcmask 801792
        %v3459 = vsel %vm3458, %v3441, %v3443
        %v3460 = vsel %vm3458, %v3443, %v3445
        %v3461 = vsel %vm3458, %v3445, %v3447
        %v3462 = vsel %vm3458, %v3447, %v3449
        %v3463 = vsel %vm3458, %v3449, %v3451
        %v3464 = vsel %vm3458, %v3451, %v3453
        %v3465 = vsel %vm3458, %v3453, %v3455
        %v3466 = vsel %vm3458, %v3455, %v3457
        %3475 = vst [vmem:[#allocation3 + $0x1c0] sm:$0xf0] %v3459
        %3476 = vst [vmem:[#allocation3 + $0x1c8] sm:$0xf0] %v3460
        %3477 = vst [vmem:[#allocation3 + $0x1d0] sm:$0xf0] %v3461
        %3478 = vst [vmem:[#allocation3 + $0x1d8] sm:$0xf0] %v3462
        %3479 = vst [vmem:[#allocation3 + $0x1e0] sm:$0xf0] %v3463
        %3480 = vst [vmem:[#allocation3 + $0x1e8] sm:$0xf0] %v3464
        %3481 = vst [vmem:[#allocation3 + $0x1f0] sm:$0xf0] %v3465
        %3482 = vst [vmem:[#allocation3 + $0x1f8] sm:$0xf0] %v3466
        %v3483 = vld [vmem:[#allocation2 + $0x8] sm:$0xf]
        %v3484 = vld [vmem:[#allocation2 + $0x10] sm:$0xf]
        %v3485 = vld [vmem:[#allocation2 + $0x18] sm:$0xf]
        %v3486 = vld [vmem:[#allocation2 + $0x20] sm:$0xf]
        %v3487 = vld [vmem:[#allocation2 + $0x28] sm:$0xf]
        %v3488 = vld [vmem:[#allocation2 + $0x30] sm:$0xf]
        %v3489 = vld [vmem:[#allocation2 + $0x38] sm:$0xf]
        %v3490 = vld [vmem:[#allocation2 + $0x40] sm:$0xf]
        %v3491 = vld [vmem:[#allocation2 + $0x48] sm:$0xf]
        %3501 = vrot.lane.b32.xlu0 %v3483, 97
        %v3502 = vpop.permute.xlu0 %3501
        %3503 = vrot.lane.b32.xlu0 %v3484, 97
        %v3504 = vpop.permute.xlu0 %3503
        %3505 = vrot.lane.b32.xlu0 %v3485, 97
        %v3506 = vpop.permute.xlu0 %3505
        %3507 = vrot.lane.b32.xlu0 %v3486, 97
        %v3508 = vpop.permute.xlu0 %3507
        %3509 = vrot.lane.b32.xlu0 %v3487, 97
        %v3510 = vpop.permute.xlu0 %3509
        %3511 = vrot.lane.b32.xlu0 %v3488, 97
        %v3512 = vpop.permute.xlu0 %3511
        %3513 = vrot.lane.b32.xlu0 %v3489, 97
        %v3514 = vpop.permute.xlu0 %3513
        %3515 = vrot.lane.b32.xlu0 %v3490, 97
        %v3516 = vpop.permute.xlu0 %3515
        %3517 = vrot.lane.b32.xlu0 %v3491, 97
        %v3518 = vpop.permute.xlu0 %3517
        %vm3519 = vcmask 793600
        %v3520 = vsel %vm3519, %v3502, %v3504
        %v3521 = vsel %vm3519, %v3504, %v3506
        %v3522 = vsel %vm3519, %v3506, %v3508
        %v3523 = vsel %vm3519, %v3508, %v3510
        %v3524 = vsel %vm3519, %v3510, %v3512
        %v3525 = vsel %vm3519, %v3512, %v3514
        %v3526 = vsel %vm3519, %v3514, %v3516
        %v3527 = vsel %vm3519, %v3516, %v3518
        %3536 = vst [vmem:[#allocation3 + $0x200] sm:$0xf] %v3520
        %3537 = vst [vmem:[#allocation3 + $0x208] sm:$0xf] %v3521
        %3538 = vst [vmem:[#allocation3 + $0x210] sm:$0xf] %v3522
        %3539 = vst [vmem:[#allocation3 + $0x218] sm:$0xf] %v3523
        %3540 = vst [vmem:[#allocation3 + $0x220] sm:$0xf] %v3524
        %3541 = vst [vmem:[#allocation3 + $0x228] sm:$0xf] %v3525
        %3542 = vst [vmem:[#allocation3 + $0x230] sm:$0xf] %v3526
        %3543 = vst [vmem:[#allocation3 + $0x238] sm:$0xf] %v3527
        %v3544 = vld [vmem:[#allocation2 + $0x8] sm:$0xf]
        %v3545 = vld [vmem:[#allocation2 + $0x10] sm:$0xf]
        %v3546 = vld [vmem:[#allocation2 + $0x18] sm:$0xf]
        %v3547 = vld [vmem:[#allocation2 + $0x20] sm:$0xf]
        %v3548 = vld [vmem:[#allocation2 + $0x28] sm:$0xf]
        %v3549 = vld [vmem:[#allocation2 + $0x30] sm:$0xf]
        %v3550 = vld [vmem:[#allocation2 + $0x38] sm:$0xf]
        %v3551 = vld [vmem:[#allocation2 + $0x40] sm:$0xf]
        %v3552 = vld [vmem:[#allocation2 + $0x48] sm:$0xf]
        %v3562 = vrot.slane %v3544, 4
        %v3563 = vrot.slane %v3545, 4
        %v3564 = vrot.slane %v3546, 4
        %v3565 = vrot.slane %v3547, 4
        %v3566 = vrot.slane %v3548, 4
        %v3567 = vrot.slane %v3549, 4
        %v3568 = vrot.slane %v3550, 4
        %v3569 = vrot.slane %v3551, 4
        %v3570 = vrot.slane %v3552, 4
        %3571 = vrot.lane.b32.xlu0 %v3562, 96
        %v3572 = vpop.permute.xlu0 %3571
        %3573 = vrot.lane.b32.xlu0 %v3563, 96
        %v3574 = vpop.permute.xlu0 %3573
        %3575 = vrot.lane.b32.xlu0 %v3564, 96
        %v3576 = vpop.permute.xlu0 %3575
        %3577 = vrot.lane.b32.xlu0 %v3565, 96
        %v3578 = vpop.permute.xlu0 %3577
        %3579 = vrot.lane.b32.xlu0 %v3566, 96
        %v3580 = vpop.permute.xlu0 %3579
        %3581 = vrot.lane.b32.xlu0 %v3567, 96
        %v3582 = vpop.permute.xlu0 %3581
        %3583 = vrot.lane.b32.xlu0 %v3568, 96
        %v3584 = vpop.permute.xlu0 %3583
        %3585 = vrot.lane.b32.xlu0 %v3569, 96
        %v3586 = vpop.permute.xlu0 %3585
        %3587 = vrot.lane.b32.xlu0 %v3570, 96
        %v3588 = vpop.permute.xlu0 %3587
        %v3589 = vsel %vm997, %v3572, %v3574
        %v3590 = vsel %vm997, %v3574, %v3576
        %v3591 = vsel %vm997, %v3576, %v3578
        %v3592 = vsel %vm997, %v3578, %v3580
        %v3593 = vsel %vm997, %v3580, %v3582
        %v3594 = vsel %vm997, %v3582, %v3584
        %v3595 = vsel %vm997, %v3584, %v3586
        %v3596 = vsel %vm997, %v3586, %v3588
        %3605 = vst [vmem:[#allocation3 + $0x200] sm:$0xf0] %v3589
        %3606 = vst [vmem:[#allocation3 + $0x208] sm:$0xf0] %v3590
        %3607 = vst [vmem:[#allocation3 + $0x210] sm:$0xf0] %v3591
        %3608 = vst [vmem:[#allocation3 + $0x218] sm:$0xf0] %v3592
        %3609 = vst [vmem:[#allocation3 + $0x220] sm:$0xf0] %v3593
        %3610 = vst [vmem:[#allocation3 + $0x228] sm:$0xf0] %v3594
        %3611 = vst [vmem:[#allocation3 + $0x230] sm:$0xf0] %v3595
        %3612 = vst [vmem:[#allocation3 + $0x238] sm:$0xf0] %v3596
        %v3613 = vld [vmem:[#allocation2 + $0x8] sm:$0xf]
        %v3614 = vld [vmem:[#allocation2 + $0x10] sm:$0xf]
        %v3615 = vld [vmem:[#allocation2 + $0x18] sm:$0xf]
        %v3616 = vld [vmem:[#allocation2 + $0x20] sm:$0xf]
        %v3617 = vld [vmem:[#allocation2 + $0x28] sm:$0xf]
        %v3618 = vld [vmem:[#allocation2 + $0x30] sm:$0xf]
        %v3619 = vld [vmem:[#allocation2 + $0x38] sm:$0xf]
        %v3620 = vld [vmem:[#allocation2 + $0x40] sm:$0xf]
        %v3621 = vld [vmem:[#allocation2 + $0x48] sm:$0xf]
        %3631 = vrot.lane.b32.xlu0 %v3613, 95
        %v3632 = vpop.permute.xlu0 %3631
        %3633 = vrot.lane.b32.xlu0 %v3614, 95
        %v3634 = vpop.permute.xlu0 %3633
        %3635 = vrot.lane.b32.xlu0 %v3615, 95
        %v3636 = vpop.permute.xlu0 %3635
        %3637 = vrot.lane.b32.xlu0 %v3616, 95
        %v3638 = vpop.permute.xlu0 %3637
        %3639 = vrot.lane.b32.xlu0 %v3617, 95
        %v3640 = vpop.permute.xlu0 %3639
        %3641 = vrot.lane.b32.xlu0 %v3618, 95
        %v3642 = vpop.permute.xlu0 %3641
        %3643 = vrot.lane.b32.xlu0 %v3619, 95
        %v3644 = vpop.permute.xlu0 %3643
        %3645 = vrot.lane.b32.xlu0 %v3620, 95
        %v3646 = vpop.permute.xlu0 %3645
        %3647 = vrot.lane.b32.xlu0 %v3621, 95
        %v3648 = vpop.permute.xlu0 %3647
        %v3649 = vsel %vm1064, %v3632, %v3634
        %v3650 = vsel %vm1064, %v3634, %v3636
        %v3651 = vsel %vm1064, %v3636, %v3638
        %v3652 = vsel %vm1064, %v3638, %v3640
        %v3653 = vsel %vm1064, %v3640, %v3642
        %v3654 = vsel %vm1064, %v3642, %v3644
        %v3655 = vsel %vm1064, %v3644, %v3646
        %v3656 = vsel %vm1064, %v3646, %v3648
        %3665 = vst [vmem:[#allocation3 + $0x240] sm:$0xf] %v3649
        %3666 = vst [vmem:[#allocation3 + $0x248] sm:$0xf] %v3650
        %3667 = vst [vmem:[#allocation3 + $0x250] sm:$0xf] %v3651
        %3668 = vst [vmem:[#allocation3 + $0x258] sm:$0xf] %v3652
        %3669 = vst [vmem:[#allocation3 + $0x260] sm:$0xf] %v3653
        %3670 = vst [vmem:[#allocation3 + $0x268] sm:$0xf] %v3654
        %3671 = vst [vmem:[#allocation3 + $0x270] sm:$0xf] %v3655
        %3672 = vst [vmem:[#allocation3 + $0x278] sm:$0xf] %v3656
        %v3673 = vld [vmem:[#allocation2 + $0x8] sm:$0xf]
        %v3674 = vld [vmem:[#allocation2 + $0x10] sm:$0xf]
        %v3675 = vld [vmem:[#allocation2 + $0x18] sm:$0xf]
        %v3676 = vld [vmem:[#allocation2 + $0x20] sm:$0xf]
        %v3677 = vld [vmem:[#allocation2 + $0x28] sm:$0xf]
        %v3678 = vld [vmem:[#allocation2 + $0x30] sm:$0xf]
        %v3679 = vld [vmem:[#allocation2 + $0x38] sm:$0xf]
        %v3680 = vld [vmem:[#allocation2 + $0x40] sm:$0xf]
        %v3681 = vld [vmem:[#allocation2 + $0x48] sm:$0xf]
        %v3691 = vrot.slane %v3673, 4
        %v3692 = vrot.slane %v3674, 4
        %v3693 = vrot.slane %v3675, 4
        %v3694 = vrot.slane %v3676, 4
        %v3695 = vrot.slane %v3677, 4
        %v3696 = vrot.slane %v3678, 4
        %v3697 = vrot.slane %v3679, 4
        %v3698 = vrot.slane %v3680, 4
        %v3699 = vrot.slane %v3681, 4
        %3700 = vrot.lane.b32.xlu0 %v3691, 94
        %v3701 = vpop.permute.xlu0 %3700
        %3702 = vrot.lane.b32.xlu0 %v3692, 94
        %v3703 = vpop.permute.xlu0 %3702
        %3704 = vrot.lane.b32.xlu0 %v3693, 94
        %v3705 = vpop.permute.xlu0 %3704
        %3706 = vrot.lane.b32.xlu0 %v3694, 94
        %v3707 = vpop.permute.xlu0 %3706
        %3708 = vrot.lane.b32.xlu0 %v3695, 94
        %v3709 = vpop.permute.xlu0 %3708
        %3710 = vrot.lane.b32.xlu0 %v3696, 94
        %v3711 = vpop.permute.xlu0 %3710
        %3712 = vrot.lane.b32.xlu0 %v3697, 94
        %v3713 = vpop.permute.xlu0 %3712
        %3714 = vrot.lane.b32.xlu0 %v3698, 94
        %v3715 = vpop.permute.xlu0 %3714
        %3716 = vrot.lane.b32.xlu0 %v3699, 94
        %v3717 = vpop.permute.xlu0 %3716
        %v3718 = vsel %vm1131, %v3701, %v3703
        %v3719 = vsel %vm1131, %v3703, %v3705
        %v3720 = vsel %vm1131, %v3705, %v3707
        %v3721 = vsel %vm1131, %v3707, %v3709
        %v3722 = vsel %vm1131, %v3709, %v3711
        %v3723 = vsel %vm1131, %v3711, %v3713
        %v3724 = vsel %vm1131, %v3713, %v3715
        %v3725 = vsel %vm1131, %v3715, %v3717
        %3734 = vst [vmem:[#allocation3 + $0x240] sm:$0xf0] %v3718
        %3735 = vst [vmem:[#allocation3 + $0x248] sm:$0xf0] %v3719
        %3736 = vst [vmem:[#allocation3 + $0x250] sm:$0xf0] %v3720
        %3737 = vst [vmem:[#allocation3 + $0x258] sm:$0xf0] %v3721
        %3738 = vst [vmem:[#allocation3 + $0x260] sm:$0xf0] %v3722
        %3739 = vst [vmem:[#allocation3 + $0x268] sm:$0xf0] %v3723
        %3740 = vst [vmem:[#allocation3 + $0x270] sm:$0xf0] %v3724
        %3741 = vst [vmem:[#allocation3 + $0x278] sm:$0xf0] %v3725
        %v3742 = vld [vmem:[#allocation2 + $0x8] sm:$0xf]
        %v3743 = vld [vmem:[#allocation2 + $0x10] sm:$0xf]
        %v3744 = vld [vmem:[#allocation2 + $0x18] sm:$0xf]
        %v3745 = vld [vmem:[#allocation2 + $0x20] sm:$0xf]
        %v3746 = vld [vmem:[#allocation2 + $0x28] sm:$0xf]
        %v3747 = vld [vmem:[#allocation2 + $0x30] sm:$0xf]
        %v3748 = vld [vmem:[#allocation2 + $0x38] sm:$0xf]
        %v3749 = vld [vmem:[#allocation2 + $0x40] sm:$0xf]
        %v3750 = vld [vmem:[#allocation2 + $0x48] sm:$0xf]
        %3760 = vrot.lane.b32.xlu0 %v3742, 66
        %v3761 = vpop.permute.xlu0 %3760
        %3762 = vrot.lane.b32.xlu0 %v3743, 66
        %v3763 = vpop.permute.xlu0 %3762
        %3764 = vrot.lane.b32.xlu0 %v3744, 66
        %v3765 = vpop.permute.xlu0 %3764
        %3766 = vrot.lane.b32.xlu0 %v3745, 66
        %v3767 = vpop.permute.xlu0 %3766
        %3768 = vrot.lane.b32.xlu0 %v3746, 66
        %v3769 = vpop.permute.xlu0 %3768
        %3770 = vrot.lane.b32.xlu0 %v3747, 66
        %v3771 = vpop.permute.xlu0 %3770
        %3772 = vrot.lane.b32.xlu0 %v3748, 66
        %v3773 = vpop.permute.xlu0 %3772
        %3774 = vrot.lane.b32.xlu0 %v3749, 66
        %v3775 = vpop.permute.xlu0 %3774
        %3776 = vrot.lane.b32.xlu0 %v3750, 66
        %v3777 = vpop.permute.xlu0 %3776
        %v3778 = vsel %vm2464, %v3761, %v3763
        %v3779 = vsel %vm2464, %v3763, %v3765
        %v3780 = vsel %vm2464, %v3765, %v3767
        %v3781 = vsel %vm2464, %v3767, %v3769
        %v3782 = vsel %vm2464, %v3769, %v3771
        %v3783 = vsel %vm2464, %v3771, %v3773
        %v3784 = vsel %vm2464, %v3773, %v3775
        %v3785 = vsel %vm2464, %v3775, %v3777
        %3794 = vst [vmem:[#allocation3 + $0x280] sm:$0xf] %v3778
        %3795 = vst [vmem:[#allocation3 + $0x288] sm:$0xf] %v3779
        %3796 = vst [vmem:[#allocation3 + $0x290] sm:$0xf] %v3780
        %3797 = vst [vmem:[#allocation3 + $0x298] sm:$0xf] %v3781
        %3798 = vst [vmem:[#allocation3 + $0x2a0] sm:$0xf] %v3782
        %3799 = vst [vmem:[#allocation3 + $0x2a8] sm:$0xf] %v3783
        %3800 = vst [vmem:[#allocation3 + $0x2b0] sm:$0xf] %v3784
        %3801 = vst [vmem:[#allocation3 + $0x2b8] sm:$0xf] %v3785
        %v3802 = vld [vmem:[#allocation2 + $0x8] sm:$0xf]
        %v3803 = vld [vmem:[#allocation2 + $0x10] sm:$0xf]
        %v3804 = vld [vmem:[#allocation2 + $0x18] sm:$0xf]
        %v3805 = vld [vmem:[#allocation2 + $0x20] sm:$0xf]
        %v3806 = vld [vmem:[#allocation2 + $0x28] sm:$0xf]
        %v3807 = vld [vmem:[#allocation2 + $0x30] sm:$0xf]
        %v3808 = vld [vmem:[#allocation2 + $0x38] sm:$0xf]
        %v3809 = vld [vmem:[#allocation2 + $0x40] sm:$0xf]
        %v3810 = vld [vmem:[#allocation2 + $0x48] sm:$0xf]
        %v3820 = vrot.slane %v3802, 4
        %v3821 = vrot.slane %v3803, 4
        %v3822 = vrot.slane %v3804, 4
        %v3823 = vrot.slane %v3805, 4
        %v3824 = vrot.slane %v3806, 4
        %v3825 = vrot.slane %v3807, 4
        %v3826 = vrot.slane %v3808, 4
        %v3827 = vrot.slane %v3809, 4
        %v3828 = vrot.slane %v3810, 4
        %3829 = vrot.lane.b32.xlu0 %v3820, 65
        %v3830 = vpop.permute.xlu0 %3829
        %3831 = vrot.lane.b32.xlu0 %v3821, 65
        %v3832 = vpop.permute.xlu0 %3831
        %3833 = vrot.lane.b32.xlu0 %v3822, 65
        %v3834 = vpop.permute.xlu0 %3833
        %3835 = vrot.lane.b32.xlu0 %v3823, 65
        %v3836 = vpop.permute.xlu0 %3835
        %3837 = vrot.lane.b32.xlu0 %v3824, 65
        %v3838 = vpop.permute.xlu0 %3837
        %3839 = vrot.lane.b32.xlu0 %v3825, 65
        %v3840 = vpop.permute.xlu0 %3839
        %3841 = vrot.lane.b32.xlu0 %v3826, 65
        %v3842 = vpop.permute.xlu0 %3841
        %3843 = vrot.lane.b32.xlu0 %v3827, 65
        %v3844 = vpop.permute.xlu0 %3843
        %3845 = vrot.lane.b32.xlu0 %v3828, 65
        %v3846 = vpop.permute.xlu0 %3845
        %v3847 = vsel %vm2594, %v3830, %v3832
        %v3848 = vsel %vm2594, %v3832, %v3834
        %v3849 = vsel %vm2594, %v3834, %v3836
        %v3850 = vsel %vm2594, %v3836, %v3838
        %v3851 = vsel %vm2594, %v3838, %v3840
        %v3852 = vsel %vm2594, %v3840, %v3842
        %v3853 = vsel %vm2594, %v3842, %v3844
        %v3854 = vsel %vm2594, %v3844, %v3846
        %3863 = vst [vmem:[#allocation3 + $0x280] sm:$0xf0] %v3847
        %3864 = vst [vmem:[#allocation3 + $0x288] sm:$0xf0] %v3848
        %3865 = vst [vmem:[#allocation3 + $0x290] sm:$0xf0] %v3849
        %3866 = vst [vmem:[#allocation3 + $0x298] sm:$0xf0] %v3850
        %3867 = vst [vmem:[#allocation3 + $0x2a0] sm:$0xf0] %v3851
        %3868 = vst [vmem:[#allocation3 + $0x2a8] sm:$0xf0] %v3852
        %3869 = vst [vmem:[#allocation3 + $0x2b0] sm:$0xf0] %v3853
        %3870 = vst [vmem:[#allocation3 + $0x2b8] sm:$0xf0] %v3854
        %v3871 = vld [vmem:[#allocation2 + $0x8] sm:$0xf]
        %v3872 = vld [vmem:[#allocation2 + $0x10] sm:$0xf]
        %v3873 = vld [vmem:[#allocation2 + $0x18] sm:$0xf]
        %v3874 = vld [vmem:[#allocation2 + $0x20] sm:$0xf]
        %v3875 = vld [vmem:[#allocation2 + $0x28] sm:$0xf]
        %v3876 = vld [vmem:[#allocation2 + $0x30] sm:$0xf]
        %v3877 = vld [vmem:[#allocation2 + $0x38] sm:$0xf]
        %v3878 = vld [vmem:[#allocation2 + $0x40] sm:$0xf]
        %v3879 = vld [vmem:[#allocation2 + $0x48] sm:$0xf]
        %3889 = vrot.lane.b32.xlu0 %v3871, 64
        %v3890 = vpop.permute.xlu0 %3889
        %3891 = vrot.lane.b32.xlu0 %v3872, 64
        %v3892 = vpop.permute.xlu0 %3891
        %3893 = vrot.lane.b32.xlu0 %v3873, 64
        %v3894 = vpop.permute.xlu0 %3893
        %3895 = vrot.lane.b32.xlu0 %v3874, 64
        %v3896 = vpop.permute.xlu0 %3895
        %3897 = vrot.lane.b32.xlu0 %v3875, 64
        %v3898 = vpop.permute.xlu0 %3897
        %3899 = vrot.lane.b32.xlu0 %v3876, 64
        %v3900 = vpop.permute.xlu0 %3899
        %3901 = vrot.lane.b32.xlu0 %v3877, 64
        %v3902 = vpop.permute.xlu0 %3901
        %3903 = vrot.lane.b32.xlu0 %v3878, 64
        %v3904 = vpop.permute.xlu0 %3903
        %3905 = vrot.lane.b32.xlu0 %v3879, 64
        %v3906 = vpop.permute.xlu0 %3905
        %v3907 = vsel %vm1332, %v3890, %v3892
        %v3908 = vsel %vm1332, %v3892, %v3894
        %v3909 = vsel %vm1332, %v3894, %v3896
        %v3910 = vsel %vm1332, %v3896, %v3898
        %v3911 = vsel %vm1332, %v3898, %v3900
        %v3912 = vsel %vm1332, %v3900, %v3902
        %v3913 = vsel %vm1332, %v3902, %v3904
        %v3914 = vsel %vm1332, %v3904, %v3906
        %3923 = vst [vmem:[#allocation3 + $0x2c0] sm:$0xf] %v3907
        %3924 = vst [vmem:[#allocation3 + $0x2c8] sm:$0xf] %v3908
        %3925 = vst [vmem:[#allocation3 + $0x2d0] sm:$0xf] %v3909
        %3926 = vst [vmem:[#allocation3 + $0x2d8] sm:$0xf] %v3910
        %3927 = vst [vmem:[#allocation3 + $0x2e0] sm:$0xf] %v3911
        %3928 = vst [vmem:[#allocation3 + $0x2e8] sm:$0xf] %v3912
        %3929 = vst [vmem:[#allocation3 + $0x2f0] sm:$0xf] %v3913
        %3930 = vst [vmem:[#allocation3 + $0x2f8] sm:$0xf] %v3914
        %v3931 = vld [vmem:[#allocation2 + $0x8] sm:$0xf]
        %v3932 = vld [vmem:[#allocation2 + $0x10] sm:$0xf]
        %v3933 = vld [vmem:[#allocation2 + $0x18] sm:$0xf]
        %v3934 = vld [vmem:[#allocation2 + $0x20] sm:$0xf]
        %v3935 = vld [vmem:[#allocation2 + $0x28] sm:$0xf]
        %v3936 = vld [vmem:[#allocation2 + $0x30] sm:$0xf]
        %v3937 = vld [vmem:[#allocation2 + $0x38] sm:$0xf]
        %v3938 = vld [vmem:[#allocation2 + $0x40] sm:$0xf]
        %v3939 = vld [vmem:[#allocation2 + $0x48] sm:$0xf]
        %v3949 = vrot.slane %v3931, 4
        %v3950 = vrot.slane %v3932, 4
        %v3951 = vrot.slane %v3933, 4
        %v3952 = vrot.slane %v3934, 4
        %v3953 = vrot.slane %v3935, 4
        %v3954 = vrot.slane %v3936, 4
        %v3955 = vrot.slane %v3937, 4
        %v3956 = vrot.slane %v3938, 4
        %v3957 = vrot.slane %v3939, 4
        %3958 = vrot.lane.b32.xlu0 %v3949, 63
        %v3959 = vpop.permute.xlu0 %3958
        %3960 = vrot.lane.b32.xlu0 %v3950, 63
        %v3961 = vpop.permute.xlu0 %3960
        %3962 = vrot.lane.b32.xlu0 %v3951, 63
        %v3963 = vpop.permute.xlu0 %3962
        %3964 = vrot.lane.b32.xlu0 %v3952, 63
        %v3965 = vpop.permute.xlu0 %3964
        %3966 = vrot.lane.b32.xlu0 %v3953, 63
        %v3967 = vpop.permute.xlu0 %3966
        %3968 = vrot.lane.b32.xlu0 %v3954, 63
        %v3969 = vpop.permute.xlu0 %3968
        %3970 = vrot.lane.b32.xlu0 %v3955, 63
        %v3971 = vpop.permute.xlu0 %3970
        %3972 = vrot.lane.b32.xlu0 %v3956, 63
        %v3973 = vpop.permute.xlu0 %3972
        %3974 = vrot.lane.b32.xlu0 %v3957, 63
        %v3975 = vpop.permute.xlu0 %3974
        %v3976 = vsel %vm1399, %v3959, %v3961
        %v3977 = vsel %vm1399, %v3961, %v3963
        %v3978 = vsel %vm1399, %v3963, %v3965
        %v3979 = vsel %vm1399, %v3965, %v3967
        %v3980 = vsel %vm1399, %v3967, %v3969
        %v3981 = vsel %vm1399, %v3969, %v3971
        %v3982 = vsel %vm1399, %v3971, %v3973
        %v3983 = vsel %vm1399, %v3973, %v3975
        %3992 = vst [vmem:[#allocation3 + $0x2c0] sm:$0xf0] %v3976
        %3993 = vst [vmem:[#allocation3 + $0x2c8] sm:$0xf0] %v3977
        %3994 = vst [vmem:[#allocation3 + $0x2d0] sm:$0xf0] %v3978
        %3995 = vst [vmem:[#allocation3 + $0x2d8] sm:$0xf0] %v3979
        %3996 = vst [vmem:[#allocation3 + $0x2e0] sm:$0xf0] %v3980
        %3997 = vst [vmem:[#allocation3 + $0x2e8] sm:$0xf0] %v3981
        %3998 = vst [vmem:[#allocation3 + $0x2f0] sm:$0xf0] %v3982
        %3999 = vst [vmem:[#allocation3 + $0x2f8] sm:$0xf0] %v3983
        %v4000 = vld [vmem:[#allocation2 + $0x8] sm:$0xf]
        %v4001 = vld [vmem:[#allocation2 + $0x10] sm:$0xf]
        %v4002 = vld [vmem:[#allocation2 + $0x18] sm:$0xf]
        %v4003 = vld [vmem:[#allocation2 + $0x20] sm:$0xf]
        %v4004 = vld [vmem:[#allocation2 + $0x28] sm:$0xf]
        %v4005 = vld [vmem:[#allocation2 + $0x30] sm:$0xf]
        %v4006 = vld [vmem:[#allocation2 + $0x38] sm:$0xf]
        %v4007 = vld [vmem:[#allocation2 + $0x40] sm:$0xf]
        %v4008 = vld [vmem:[#allocation2 + $0x48] sm:$0xf]
        %4018 = vrot.lane.b32.xlu0 %v4000, 62
        %v4019 = vpop.permute.xlu0 %4018
        %4020 = vrot.lane.b32.xlu0 %v4001, 62
        %v4021 = vpop.permute.xlu0 %4020
        %4022 = vrot.lane.b32.xlu0 %v4002, 62
        %v4023 = vpop.permute.xlu0 %4022
        %4024 = vrot.lane.b32.xlu0 %v4003, 62
        %v4025 = vpop.permute.xlu0 %4024
        %4026 = vrot.lane.b32.xlu0 %v4004, 62
        %v4027 = vpop.permute.xlu0 %4026
        %4028 = vrot.lane.b32.xlu0 %v4005, 62
        %v4029 = vpop.permute.xlu0 %4028
        %4030 = vrot.lane.b32.xlu0 %v4006, 62
        %v4031 = vpop.permute.xlu0 %4030
        %4032 = vrot.lane.b32.xlu0 %v4007, 62
        %v4033 = vpop.permute.xlu0 %4032
        %4034 = vrot.lane.b32.xlu0 %v4008, 62
        %v4035 = vpop.permute.xlu0 %4034
        %v4036 = vsel %vm1506, %v4019, %v4021
        %v4037 = vsel %vm1506, %v4021, %v4023
        %v4038 = vsel %vm1506, %v4023, %v4025
        %v4039 = vsel %vm1506, %v4025, %v4027
        %v4040 = vsel %vm1506, %v4027, %v4029
        %v4041 = vsel %vm1506, %v4029, %v4031
        %v4042 = vsel %vm1506, %v4031, %v4033
        %v4043 = vsel %vm1506, %v4033, %v4035
        %4052 = vst [vmem:[#allocation3 + $0x300] sm:$0xf] %v4036
        %4053 = vst [vmem:[#allocation3 + $0x308] sm:$0xf] %v4037
        %4054 = vst [vmem:[#allocation3 + $0x310] sm:$0xf] %v4038
        %4055 = vst [vmem:[#allocation3 + $0x318] sm:$0xf] %v4039
        %4056 = vst [vmem:[#allocation3 + $0x320] sm:$0xf] %v4040
        %4057 = vst [vmem:[#allocation3 + $0x328] sm:$0xf] %v4041
        %4058 = vst [vmem:[#allocation3 + $0x330] sm:$0xf] %v4042
        %4059 = vst [vmem:[#allocation3 + $0x338] sm:$0xf] %v4043
        %v4060 = vld [vmem:[#allocation3] sm:$0xff]
        %v4061 = vld [vmem:[#allocation3 + $0x8] sm:$0xff]
        %v4062 = vld [vmem:[#allocation3 + $0x10] sm:$0xff]
        %v4063 = vld [vmem:[#allocation3 + $0x18] sm:$0xff]
        %v4064 = vld [vmem:[#allocation3 + $0x20] sm:$0xff]
        %v4065 = vld [vmem:[#allocation3 + $0x28] sm:$0xff]
        %v4066 = vld [vmem:[#allocation3 + $0x30] sm:$0xff]
        %v4067 = vld [vmem:[#allocation3 + $0x38] sm:$0xff]
        %v4068 = vld [vmem:[#allocation3 + $0x40] sm:$0xff]
        %v4069 = vld [vmem:[#allocation3 + $0x48] sm:$0xff]
        %v4070 = vld [vmem:[#allocation3 + $0x50] sm:$0xff]
        %v4071 = vld [vmem:[#allocation3 + $0x58] sm:$0xff]
        %v4072 = vld [vmem:[#allocation3 + $0x60] sm:$0xff]
        %v4073 = vld [vmem:[#allocation3 + $0x68] sm:$0xff]
        %v4074 = vld [vmem:[#allocation3 + $0x70] sm:$0xff]
        %v4075 = vld [vmem:[#allocation3 + $0x78] sm:$0xff]
        %v4076 = vld [vmem:[#allocation3 + $0x80] sm:$0xff]
        %v4077 = vld [vmem:[#allocation3 + $0x88] sm:$0xff]
        %v4078 = vld [vmem:[#allocation3 + $0x90] sm:$0xff]
        %v4079 = vld [vmem:[#allocation3 + $0x98] sm:$0xff]
        %v4080 = vld [vmem:[#allocation3 + $0xa0] sm:$0xff]
        %v4081 = vld [vmem:[#allocation3 + $0xa8] sm:$0xff]
        %v4082 = vld [vmem:[#allocation3 + $0xb0] sm:$0xff]
        %v4083 = vld [vmem:[#allocation3 + $0xb8] sm:$0xff]
        %v4084 = vld [vmem:[#allocation3 + $0xc0] sm:$0xff]
        %v4085 = vld [vmem:[#allocation3 + $0xc8] sm:$0xff]
        %v4086 = vld [vmem:[#allocation3 + $0xd0] sm:$0xff]
        %v4087 = vld [vmem:[#allocation3 + $0xd8] sm:$0xff]
        %v4088 = vld [vmem:[#allocation3 + $0xe0] sm:$0xff]
        %v4089 = vld [vmem:[#allocation3 + $0xe8] sm:$0xff]
        %v4090 = vld [vmem:[#allocation3 + $0xf0] sm:$0xff]
        %v4091 = vld [vmem:[#allocation3 + $0xf8] sm:$0xff]
        %v4092 = vld [vmem:[#allocation3 + $0x100] sm:$0xff]
        %v4093 = vld [vmem:[#allocation3 + $0x108] sm:$0xff]
        %v4094 = vld [vmem:[#allocation3 + $0x110] sm:$0xff]
        %v4095 = vld [vmem:[#allocation3 + $0x118] sm:$0xff]
        %v4096 = vld [vmem:[#allocation3 + $0x120] sm:$0xff]
        %v4097 = vld [vmem:[#allocation3 + $0x128] sm:$0xff]
        %v4098 = vld [vmem:[#allocation3 + $0x130] sm:$0xff]
        %v4099 = vld [vmem:[#allocation3 + $0x138] sm:$0xff]
        %v4100 = vld [vmem:[#allocation3 + $0x140] sm:$0xff]
        %v4101 = vld [vmem:[#allocation3 + $0x148] sm:$0xff]
        %v4102 = vld [vmem:[#allocation3 + $0x150] sm:$0xff]
        %v4103 = vld [vmem:[#allocation3 + $0x158] sm:$0xff]
        %v4104 = vld [vmem:[#allocation3 + $0x160] sm:$0xff]
        %v4105 = vld [vmem:[#allocation3 + $0x168] sm:$0xff]
        %v4106 = vld [vmem:[#allocation3 + $0x170] sm:$0xff]
        %v4107 = vld [vmem:[#allocation3 + $0x178] sm:$0xff]
        %v4108 = vld [vmem:[#allocation3 + $0x180] sm:$0xff]
        %v4109 = vld [vmem:[#allocation3 + $0x188] sm:$0xff]
        %v4110 = vld [vmem:[#allocation3 + $0x190] sm:$0xff]
        %v4111 = vld [vmem:[#allocation3 + $0x198] sm:$0xff]
        %v4112 = vld [vmem:[#allocation3 + $0x1a0] sm:$0xff]
        %v4113 = vld [vmem:[#allocation3 + $0x1a8] sm:$0xff]
        %v4114 = vld [vmem:[#allocation3 + $0x1b0] sm:$0xff]
        %v4115 = vld [vmem:[#allocation3 + $0x1b8] sm:$0xff]
        %v4116 = vld [vmem:[#allocation3 + $0x1c0] sm:$0xff]
        %v4117 = vld [vmem:[#allocation3 + $0x1c8] sm:$0xff]
        %v4118 = vld [vmem:[#allocation3 + $0x1d0] sm:$0xff]
        %v4119 = vld [vmem:[#allocation3 + $0x1d8] sm:$0xff]
        %v4120 = vld [vmem:[#allocation3 + $0x1e0] sm:$0xff]
        %v4121 = vld [vmem:[#allocation3 + $0x1e8] sm:$0xff]
        %v4122 = vld [vmem:[#allocation3 + $0x1f0] sm:$0xff]
        %v4123 = vld [vmem:[#allocation3 + $0x1f8] sm:$0xff]
        %v4124 = vld [vmem:[#allocation3 + $0x200] sm:$0xff]
        %v4125 = vld [vmem:[#allocation3 + $0x208] sm:$0xff]
        %v4126 = vld [vmem:[#allocation3 + $0x210] sm:$0xff]
        %v4127 = vld [vmem:[#allocation3 + $0x218] sm:$0xff]
        %v4128 = vld [vmem:[#allocation3 + $0x220] sm:$0xff]
        %v4129 = vld [vmem:[#allocation3 + $0x228] sm:$0xff]
        %v4130 = vld [vmem:[#allocation3 + $0x230] sm:$0xff]
        %v4131 = vld [vmem:[#allocation3 + $0x238] sm:$0xff]
        %v4132 = vld [vmem:[#allocation3 + $0x240] sm:$0xff]
        %v4133 = vld [vmem:[#allocation3 + $0x248] sm:$0xff]
        %v4134 = vld [vmem:[#allocation3 + $0x250] sm:$0xff]
        %v4135 = vld [vmem:[#allocation3 + $0x258] sm:$0xff]
        %v4136 = vld [vmem:[#allocation3 + $0x260] sm:$0xff]
        %v4137 = vld [vmem:[#allocation3 + $0x268] sm:$0xff]
        %v4138 = vld [vmem:[#allocation3 + $0x270] sm:$0xff]
        %v4139 = vld [vmem:[#allocation3 + $0x278] sm:$0xff]
        %v4140 = vld [vmem:[#allocation3 + $0x280] sm:$0xff]
        %v4141 = vld [vmem:[#allocation3 + $0x288] sm:$0xff]
        %v4142 = vld [vmem:[#allocation3 + $0x290] sm:$0xff]
        %v4143 = vld [vmem:[#allocation3 + $0x298] sm:$0xff]
        %v4144 = vld [vmem:[#allocation3 + $0x2a0] sm:$0xff]
        %v4145 = vld [vmem:[#allocation3 + $0x2a8] sm:$0xff]
        %v4146 = vld [vmem:[#allocation3 + $0x2b0] sm:$0xff]
        %v4147 = vld [vmem:[#allocation3 + $0x2b8] sm:$0xff]
        %v4148 = vld [vmem:[#allocation3 + $0x2c0] sm:$0xff]
        %v4149 = vld [vmem:[#allocation3 + $0x2c8] sm:$0xff]
        %v4150 = vld [vmem:[#allocation3 + $0x2d0] sm:$0xff]
        %v4151 = vld [vmem:[#allocation3 + $0x2d8] sm:$0xff]
        %v4152 = vld [vmem:[#allocation3 + $0x2e0] sm:$0xff]
        %v4153 = vld [vmem:[#allocation3 + $0x2e8] sm:$0xff]
        %v4154 = vld [vmem:[#allocation3 + $0x2f0] sm:$0xff]
        %v4155 = vld [vmem:[#allocation3 + $0x2f8] sm:$0xff]
        %v4156 = vld [vmem:[#allocation3 + $0x300] sm:$0xf]
        %v4157 = vld [vmem:[#allocation3 + $0x308] sm:$0xf]
        %v4158 = vld [vmem:[#allocation3 + $0x310] sm:$0xf]
        %v4159 = vld [vmem:[#allocation3 + $0x318] sm:$0xf]
        %v4160 = vld [vmem:[#allocation3 + $0x320] sm:$0xf]
        %v4161 = vld [vmem:[#allocation3 + $0x328] sm:$0xf]
        %v4162 = vld [vmem:[#allocation3 + $0x330] sm:$0xf]
        %v4163 = vld [vmem:[#allocation3 + $0x338] sm:$0xf]
        %v4164 = vpack.c.bf16 %v4068, %v4060
        %v4165 = vpack.c.bf16 %v4069, %v4061
        %v4166 = vpack.c.bf16 %v4070, %v4062
        %v4167 = vpack.c.bf16 %v4071, %v4063
        %v4168 = vpack.c.bf16 %v4072, %v4064
        %v4169 = vpack.c.bf16 %v4073, %v4065
        %v4170 = vpack.c.bf16 %v4074, %v4066
        %v4171 = vpack.c.bf16 %v4075, %v4067
        %v4172 = vpack.c.bf16 %v4084, %v4076
        %v4173 = vpack.c.bf16 %v4085, %v4077
        %v4174 = vpack.c.bf16 %v4086, %v4078
        %v4175 = vpack.c.bf16 %v4087, %v4079
        %v4176 = vpack.c.bf16 %v4088, %v4080
        %v4177 = vpack.c.bf16 %v4089, %v4081
        %v4178 = vpack.c.bf16 %v4090, %v4082
        %v4179 = vpack.c.bf16 %v4091, %v4083
        %v4180 = vpack.c.bf16 %v4100, %v4092
        %v4181 = vpack.c.bf16 %v4101, %v4093
        %v4182 = vpack.c.bf16 %v4102, %v4094
        %v4183 = vpack.c.bf16 %v4103, %v4095
        %v4184 = vpack.c.bf16 %v4104, %v4096
        %v4185 = vpack.c.bf16 %v4105, %v4097
        %v4186 = vpack.c.bf16 %v4106, %v4098
        %v4187 = vpack.c.bf16 %v4107, %v4099
        %v4188 = vpack.c.bf16 %v4116, %v4108
        %v4189 = vpack.c.bf16 %v4117, %v4109
        %v4190 = vpack.c.bf16 %v4118, %v4110
        %v4191 = vpack.c.bf16 %v4119, %v4111
        %v4192 = vpack.c.bf16 %v4120, %v4112
        %v4193 = vpack.c.bf16 %v4121, %v4113
        %v4194 = vpack.c.bf16 %v4122, %v4114
        %v4195 = vpack.c.bf16 %v4123, %v4115
        %v4196 = vpack.c.bf16 %v4132, %v4124
        %v4197 = vpack.c.bf16 %v4133, %v4125
        %v4198 = vpack.c.bf16 %v4134, %v4126
        %v4199 = vpack.c.bf16 %v4135, %v4127
        %v4200 = vpack.c.bf16 %v4136, %v4128
        %v4201 = vpack.c.bf16 %v4137, %v4129
        %v4202 = vpack.c.bf16 %v4138, %v4130
        %v4203 = vpack.c.bf16 %v4139, %v4131
        %v4204 = vpack.c.bf16 %v4148, %v4140
        %v4205 = vpack.c.bf16 %v4149, %v4141
        %v4206 = vpack.c.bf16 %v4150, %v4142
        %v4207 = vpack.c.bf16 %v4151, %v4143
        %v4208 = vpack.c.bf16 %v4152, %v4144
        %v4209 = vpack.c.bf16 %v4153, %v4145
        %v4210 = vpack.c.bf16 %v4154, %v4146
        %v4211 = vpack.c.bf16 %v4155, %v4147
        %v4212 = vpack.c.bf16 %v4156, %v4156
        %v4213 = vpack.c.bf16 %v4157, %v4157
        %v4214 = vpack.c.bf16 %v4158, %v4158
        %v4215 = vpack.c.bf16 %v4159, %v4159
        %v4216 = vpack.c.bf16 %v4160, %v4160
        %v4217 = vpack.c.bf16 %v4161, %v4161
        %v4218 = vpack.c.bf16 %v4162, %v4162
        %v4219 = vpack.c.bf16 %v4163, %v4163
        %4221 = vset.pattern.permute.xlu0 0
        %4222 = vperm.xlu0 %4221, %v482
        %v4223 = vpop.permute.xlu0 %4222
        %vm4225 = vcmask 818176
        %v4227 = vsel %vm4225, %v481, 0
        %vm4229 = vcmask 1041408
        %v4231 = vsel %vm4229, %v4212, 0
        %v4234 = vsel %vm4229, %v4213, 0
        %v4237 = vsel %vm4229, %v4214, 0
        %v4240 = vsel %vm4229, %v4215, 0
        %v4243 = vsel %vm4229, %v4216, 0
        %v4246 = vsel %vm4229, %v4217, 0
        %v4249 = vsel %vm4229, %v4218, 0
        %v4252 = vsel %vm4229, %v4219, 0
        %4254 = vmatprep.subr.bf16.mxu0 %v4165
        %4255 = vmatpush1.bf16.msra.mxu0 %v4164
        %4256 = vmatprep.subr.bf16.mxu0 %v4173
        %4257 = vmatpush1.bf16.msra.mxu0 %v4172
        %4258 = vmatprep.subr.bf16.mxu0 %v4181
        %4259 = vmatpush1.bf16.msra.mxu0 %v4180
        %4260 = vmatprep.subr.bf16.mxu0 %v4189
        %4261 = vmatpush1.bf16.msra.mxu0 %v4188
        %4262 = vmatprep.subr.bf16.mxu0 %v4197
        %4263 = vmatpush1.bf16.msra.mxu0 %v4196
        %4264 = vmatprep.subr.bf16.mxu0 %v4205
        %4265 = vmatpush1.bf16.msra.mxu0 %v4204
        %4266 = vmatprep.subr.bf16.mxu0 %v4234
        %4267 = vmatpush1.bf16.msra.mxu0 %v4231
        %4268 = vmatprep.subr.bf16.mxu0 0
        %4269 = vmatpush1.bf16.msra.mxu0 0
        %4270 = vmatprep.subr.bf16.mxu0 0
        %4271 = vmatpush1.bf16.msra.mxu0 0
        %4272 = vmatprep.subr.bf16.mxu0 0
        %4273 = vmatpush1.bf16.msra.mxu0 0
        %4274 = vmatprep.subr.bf16.mxu0 0
        %4275 = vmatpush1.bf16.msra.mxu0 0
        %4276 = vmatprep.subr.bf16.mxu0 0
        %4277 = vmatpush1.bf16.msra.mxu0 0
        %4278 = vmatprep.subr.bf16.mxu0 0
        %4279 = vmatpush1.bf16.msra.mxu0 0
        %4280 = vmatprep.subr.bf16.mxu0 0
        %4281 = vmatpush1.bf16.msra.mxu0 0
        %4282 = vmatprep.subr.bf16.mxu0 0
        %4283 = vmatpush1.bf16.msra.mxu0 0
        %4284 = vmatprep.subr.bf16.mxu0 0
        %4285 = vmatpush1.bf16.msra.mxu0 0
        %4286 = vmatprep.mubr.bf16.mxu0 0
        %4287 = vmatmul.mubr.bf16.gmra.mrb[0].mxu0 %v4227
        %v4288 = vpop.f32.mrb[0].mxu0
        %v4289 = vadd.f32 %v4223, %v4288
        %v4290 = vpop.f32.mrb[0].mxu0
        %v4291 = vadd.f32 %v4223, %v4290
        %v4292 = vpop.f32.mrb[0].mxu0
        %v4293 = vpop.f32.mrb[0].mxu0
        %4294 = vdwg.mxu0
        %4295 = vmatprep.subr.bf16.mxu0 %v4167
        %4296 = vmatpush1.bf16.msra.mxu0 %v4166
        %4297 = vmatprep.subr.bf16.mxu0 %v4175
        %4298 = vmatpush1.bf16.msra.mxu0 %v4174
        %4299 = vmatprep.subr.bf16.mxu0 %v4183
        %4300 = vmatpush1.bf16.msra.mxu0 %v4182
        %4301 = vmatprep.subr.bf16.mxu0 %v4191
        %4302 = vmatpush1.bf16.msra.mxu0 %v4190
        %4303 = vmatprep.subr.bf16.mxu0 %v4199
        %4304 = vmatpush1.bf16.msra.mxu0 %v4198
        %4305 = vmatprep.subr.bf16.mxu0 %v4207
        %4306 = vmatpush1.bf16.msra.mxu0 %v4206
        %4307 = vmatprep.subr.bf16.mxu0 %v4240
        %4308 = vmatpush1.bf16.msra.mxu0 %v4237
        %4309 = vmatprep.subr.bf16.mxu0 0
        %4310 = vmatpush1.bf16.msra.mxu0 0
        %4311 = vmatprep.subr.bf16.mxu0 0
        %4312 = vmatpush1.bf16.msra.mxu0 0
        %4313 = vmatprep.subr.bf16.mxu0 0
        %4314 = vmatpush1.bf16.msra.mxu0 0
        %4315 = vmatprep.subr.bf16.mxu0 0
        %4316 = vmatpush1.bf16.msra.mxu0 0
        %4317 = vmatprep.subr.bf16.mxu0 0
        %4318 = vmatpush1.bf16.msra.mxu0 0
        %4319 = vmatprep.subr.bf16.mxu0 0
        %4320 = vmatpush1.bf16.msra.mxu0 0
        %4321 = vmatprep.subr.bf16.mxu0 0
        %4322 = vmatpush1.bf16.msra.mxu0 0
        %4323 = vmatprep.subr.bf16.mxu0 0
        %4324 = vmatpush1.bf16.msra.mxu0 0
        %4325 = vmatprep.subr.bf16.mxu0 0
        %4326 = vmatpush1.bf16.msra.mxu0 0
        %4327 = vmatprep.mubr.bf16.mxu0 0
        %4328 = vmatmul.mubr.bf16.gmra.mrb[0].mxu0 %v4227
        %v4329 = vpop.f32.mrb[0].mxu0
        %v4330 = vadd.f32 %v4223, %v4329
        %v4331 = vpop.f32.mrb[0].mxu0
        %v4332 = vadd.f32 %v4223, %v4331
        %v4333 = vpop.f32.mrb[0].mxu0
        %v4334 = vpop.f32.mrb[0].mxu0
        %4335 = vdwg.mxu0
        %4336 = vmatprep.subr.bf16.mxu0 %v4169
        %4337 = vmatpush1.bf16.msra.mxu0 %v4168
        %4338 = vmatprep.subr.bf16.mxu0 %v4177
        %4339 = vmatpush1.bf16.msra.mxu0 %v4176
        %4340 = vmatprep.subr.bf16.mxu0 %v4185
        %4341 = vmatpush1.bf16.msra.mxu0 %v4184
        %4342 = vmatprep.subr.bf16.mxu0 %v4193
        %4343 = vmatpush1.bf16.msra.mxu0 %v4192
        %4344 = vmatprep.subr.bf16.mxu0 %v4201
        %4345 = vmatpush1.bf16.msra.mxu0 %v4200
        %4346 = vmatprep.subr.bf16.mxu0 %v4209
        %4347 = vmatpush1.bf16.msra.mxu0 %v4208
        %4348 = vmatprep.subr.bf16.mxu0 %v4246
        %4349 = vmatpush1.bf16.msra.mxu0 %v4243
        %4350 = vmatprep.subr.bf16.mxu0 0
        %4351 = vmatpush1.bf16.msra.mxu0 0
        %4352 = vmatprep.subr.bf16.mxu0 0
        %4353 = vmatpush1.bf16.msra.mxu0 0
        %4354 = vmatprep.subr.bf16.mxu0 0
        %4355 = vmatpush1.bf16.msra.mxu0 0
        %4356 = vmatprep.subr.bf16.mxu0 0
        %4357 = vmatpush1.bf16.msra.mxu0 0
        %4358 = vmatprep.subr.bf16.mxu0 0
        %4359 = vmatpush1.bf16.msra.mxu0 0
        %4360 = vmatprep.subr.bf16.mxu0 0
        %4361 = vmatpush1.bf16.msra.mxu0 0
        %4362 = vmatprep.subr.bf16.mxu0 0
        %4363 = vmatpush1.bf16.msra.mxu0 0
        %4364 = vmatprep.subr.bf16.mxu0 0
        %4365 = vmatpush1.bf16.msra.mxu0 0
        %4366 = vmatprep.subr.bf16.mxu0 0
        %4367 = vmatpush1.bf16.msra.mxu0 0
        %4368 = vmatprep.mubr.bf16.mxu0 0
        %4369 = vmatmul.mubr.bf16.gmra.mrb[0].mxu0 %v4227
        %v4370 = vpop.f32.mrb[0].mxu0
        %v4371 = vadd.f32 %v4223, %v4370
        %v4372 = vpop.f32.mrb[0].mxu0
        %v4373 = vadd.f32 %v4223, %v4372
        %v4374 = vpop.f32.mrb[0].mxu0
        %v4375 = vpop.f32.mrb[0].mxu0
        %4376 = vdwg.mxu0
        %4377 = vmatprep.subr.bf16.mxu0 %v4171
        %4378 = vmatpush1.bf16.msra.mxu0 %v4170
        %4379 = vmatprep.subr.bf16.mxu0 %v4179
        %4380 = vmatpush1.bf16.msra.mxu0 %v4178
        %4381 = vmatprep.subr.bf16.mxu0 %v4187
        %4382 = vmatpush1.bf16.msra.mxu0 %v4186
        %4383 = vmatprep.subr.bf16.mxu0 %v4195
        %4384 = vmatpush1.bf16.msra.mxu0 %v4194
        %4385 = vmatprep.subr.bf16.mxu0 %v4203
        %4386 = vmatpush1.bf16.msra.mxu0 %v4202
        %4387 = vmatprep.subr.bf16.mxu0 %v4211
        %4388 = vmatpush1.bf16.msra.mxu0 %v4210
        %4389 = vmatprep.subr.bf16.mxu0 %v4252
        %4390 = vmatpush1.bf16.msra.mxu0 %v4249
        %4391 = vmatprep.subr.bf16.mxu0 0
        %4392 = vmatpush1.bf16.msra.mxu0 0
        %4393 = vmatprep.subr.bf16.mxu0 0
        %4394 = vmatpush1.bf16.msra.mxu0 0
        %4395 = vmatprep.subr.bf16.mxu0 0
        %4396 = vmatpush1.bf16.msra.mxu0 0
        %4397 = vmatprep.subr.bf16.mxu0 0
        %4398 = vmatpush1.bf16.msra.mxu0 0
        %4399 = vmatprep.subr.bf16.mxu0 0
        %4400 = vmatpush1.bf16.msra.mxu0 0
        %4401 = vmatprep.subr.bf16.mxu0 0
        %4402 = vmatpush1.bf16.msra.mxu0 0
        %4403 = vmatprep.subr.bf16.mxu0 0
        %4404 = vmatpush1.bf16.msra.mxu0 0
        %4405 = vmatprep.subr.bf16.mxu0 0
        %4406 = vmatpush1.bf16.msra.mxu0 0
        %4407 = vmatprep.subr.bf16.mxu0 0
        %4408 = vmatpush1.bf16.msra.mxu0 0
        %4409 = vmatprep.mubr.bf16.mxu0 0
        %4410 = vmatmul.mubr.bf16.gmra.mrb[0].mxu0 %v4227
        %v4411 = vpop.f32.mrb[0].mxu0
        %v4412 = vadd.f32 %v4223, %v4411
        %v4413 = vpop.f32.mrb[0].mxu0
        %v4414 = vadd.f32 %v4223, %v4413
        %v4415 = vpop.f32.mrb[0].mxu0
        %v4416 = vpop.f32.mrb[0].mxu0
        %4417 = vdwg.mxu0
        %v4418 = vmax.f32 %v4289, 0.0
        %v4419 = vmax.f32 %v4291, 0.0
        %v4420 = vmax.f32 %v4330, 0.0
        %v4421 = vmax.f32 %v4332, 0.0
        %v4422 = vmax.f32 %v4371, 0.0
        %v4423 = vmax.f32 %v4373, 0.0
        %v4424 = vmax.f32 %v4412, 0.0
        %v4425 = vmax.f32 %v4414, 0.0
        %v4434 = vmul.f32 %v4418, %v2367
        %v4435 = vmul.f32 %v4419, %v2371
        %v4436 = vmul.f32 %v4420, %v2375
        %v4437 = vmul.f32 %v4421, %v2379
        %v4438 = vmul.f32 %v4422, %v2383
        %v4439 = vmul.f32 %v4423, %v2387
        %v4440 = vmul.f32 %v4424, %v2391
        %v4441 = vmul.f32 %v4425, %v2395
        %4442 = vst [vmem:[#allocation2 + $0x8] sm:$0xff] %v4434
        %4443 = vst [vmem:[#allocation2 + $0x10] sm:$0xff] %v4435
        %4444 = vst [vmem:[#allocation2 + $0x18] sm:$0xff] %v4436
        %4445 = vst [vmem:[#allocation2 + $0x20] sm:$0xff] %v4437
        %4446 = vst [vmem:[#allocation2 + $0x28] sm:$0xff] %v4438
        %4447 = vst [vmem:[#allocation2 + $0x30] sm:$0xff] %v4439
        %4448 = vst [vmem:[#allocation2 + $0x38] sm:$0xff] %v4440
        %4449 = vst [vmem:[#allocation2 + $0x40] sm:$0xff] %v4441
        %v4450 = vld [vmem:[#allocation2] sm:$0xff]
        %v4451 = vld [vmem:[#allocation2 + $0x8] sm:$0xff]
        %v4452 = vld [vmem:[#allocation2 + $0x10] sm:$0xff]
        %v4453 = vld [vmem:[#allocation2 + $0x18] sm:$0xff]
        %v4454 = vld [vmem:[#allocation2 + $0x20] sm:$0xff]
        %v4455 = vld [vmem:[#allocation2 + $0x28] sm:$0xff]
        %v4456 = vld [vmem:[#allocation2 + $0x30] sm:$0xff]
        %v4457 = vld [vmem:[#allocation2 + $0x38] sm:$0xff]
        %v4458 = vld [vmem:[#allocation2 + $0x40] sm:$0xff]
        %4468 = vrot.lane.b32.xlu0 %v4450, 66
        %v4469 = vpop.permute.xlu0 %4468
        %4470 = vrot.lane.b32.xlu0 %v4451, 66
        %v4471 = vpop.permute.xlu0 %4470
        %4472 = vrot.lane.b32.xlu0 %v4452, 66
        %v4473 = vpop.permute.xlu0 %4472
        %4474 = vrot.lane.b32.xlu0 %v4453, 66
        %v4475 = vpop.permute.xlu0 %4474
        %4476 = vrot.lane.b32.xlu0 %v4454, 66
        %v4477 = vpop.permute.xlu0 %4476
        %4478 = vrot.lane.b32.xlu0 %v4455, 66
        %v4479 = vpop.permute.xlu0 %4478
        %4480 = vrot.lane.b32.xlu0 %v4456, 66
        %v4481 = vpop.permute.xlu0 %4480
        %4482 = vrot.lane.b32.xlu0 %v4457, 66
        %v4483 = vpop.permute.xlu0 %4482
        %4484 = vrot.lane.b32.xlu0 %v4458, 66
        %v4485 = vpop.permute.xlu0 %4484
        %v4486 = vsel %vm2464, %v4469, %v4471
        %v4487 = vsel %vm2464, %v4471, %v4473
        %v4488 = vsel %vm2464, %v4473, %v4475
        %v4489 = vsel %vm2464, %v4475, %v4477
        %v4490 = vsel %vm2464, %v4477, %v4479
        %v4491 = vsel %vm2464, %v4479, %v4481
        %v4492 = vsel %vm2464, %v4481, %v4483
        %v4493 = vsel %vm2464, %v4483, %v4485
        %4502 = vst [vmem:[#allocation3] sm:$0xff] %v4486
        %4503 = vst [vmem:[#allocation3 + $0x8] sm:$0xff] %v4487
        %4504 = vst [vmem:[#allocation3 + $0x10] sm:$0xff] %v4488
        %4505 = vst [vmem:[#allocation3 + $0x18] sm:$0xff] %v4489
        %4506 = vst [vmem:[#allocation3 + $0x20] sm:$0xff] %v4490
        %4507 = vst [vmem:[#allocation3 + $0x28] sm:$0xff] %v4491
        %4508 = vst [vmem:[#allocation3 + $0x30] sm:$0xff] %v4492
        %4509 = vst [vmem:[#allocation3 + $0x38] sm:$0xff] %v4493
        %v4510 = vld [vmem:[#allocation2] sm:$0xff]
        %v4511 = vld [vmem:[#allocation2 + $0x8] sm:$0xff]
        %v4512 = vld [vmem:[#allocation2 + $0x10] sm:$0xff]
        %v4513 = vld [vmem:[#allocation2 + $0x18] sm:$0xff]
        %v4514 = vld [vmem:[#allocation2 + $0x20] sm:$0xff]
        %v4515 = vld [vmem:[#allocation2 + $0x28] sm:$0xff]
        %v4516 = vld [vmem:[#allocation2 + $0x30] sm:$0xff]
        %v4517 = vld [vmem:[#allocation2 + $0x38] sm:$0xff]
        %v4518 = vld [vmem:[#allocation2 + $0x40] sm:$0xff]
        %4528 = vrot.lane.b32.xlu0 %v4510, 65
        %v4529 = vpop.permute.xlu0 %4528
        %4530 = vrot.lane.b32.xlu0 %v4511, 65
        %v4531 = vpop.permute.xlu0 %4530
        %4532 = vrot.lane.b32.xlu0 %v4512, 65
        %v4533 = vpop.permute.xlu0 %4532
        %4534 = vrot.lane.b32.xlu0 %v4513, 65
        %v4535 = vpop.permute.xlu0 %4534
        %4536 = vrot.lane.b32.xlu0 %v4514, 65
        %v4537 = vpop.permute.xlu0 %4536
        %4538 = vrot.lane.b32.xlu0 %v4515, 65
        %v4539 = vpop.permute.xlu0 %4538
        %4540 = vrot.lane.b32.xlu0 %v4516, 65
        %v4541 = vpop.permute.xlu0 %4540
        %4542 = vrot.lane.b32.xlu0 %v4517, 65
        %v4543 = vpop.permute.xlu0 %4542
        %4544 = vrot.lane.b32.xlu0 %v4518, 65
        %v4545 = vpop.permute.xlu0 %4544
        %v4546 = vsel %vm2594, %v4529, %v4531
        %v4547 = vsel %vm2594, %v4531, %v4533
        %v4548 = vsel %vm2594, %v4533, %v4535
        %v4549 = vsel %vm2594, %v4535, %v4537
        %v4550 = vsel %vm2594, %v4537, %v4539
        %v4551 = vsel %vm2594, %v4539, %v4541
        %v4552 = vsel %vm2594, %v4541, %v4543
        %v4553 = vsel %vm2594, %v4543, %v4545
        %4562 = vst [vmem:[#allocation3 + $0x40] sm:$0xff] %v4546
        %4563 = vst [vmem:[#allocation3 + $0x48] sm:$0xff] %v4547
        %4564 = vst [vmem:[#allocation3 + $0x50] sm:$0xff] %v4548
        %4565 = vst [vmem:[#allocation3 + $0x58] sm:$0xff] %v4549
        %4566 = vst [vmem:[#allocation3 + $0x60] sm:$0xff] %v4550
        %4567 = vst [vmem:[#allocation3 + $0x68] sm:$0xff] %v4551
        %4568 = vst [vmem:[#allocation3 + $0x70] sm:$0xff] %v4552
        %4569 = vst [vmem:[#allocation3 + $0x78] sm:$0xff] %v4553
        %v4570 = vld [vmem:[#allocation2] sm:$0xff]
        %v4571 = vld [vmem:[#allocation2 + $0x8] sm:$0xff]
        %v4572 = vld [vmem:[#allocation2 + $0x10] sm:$0xff]
        %v4573 = vld [vmem:[#allocation2 + $0x18] sm:$0xff]
        %v4574 = vld [vmem:[#allocation2 + $0x20] sm:$0xff]
        %v4575 = vld [vmem:[#allocation2 + $0x28] sm:$0xff]
        %v4576 = vld [vmem:[#allocation2 + $0x30] sm:$0xff]
        %v4577 = vld [vmem:[#allocation2 + $0x38] sm:$0xff]
        %v4578 = vld [vmem:[#allocation2 + $0x40] sm:$0xff]
        %4588 = vrot.lane.b32.xlu0 %v4570, 64
        %v4589 = vpop.permute.xlu0 %4588
        %4590 = vrot.lane.b32.xlu0 %v4571, 64
        %v4591 = vpop.permute.xlu0 %4590
        %4592 = vrot.lane.b32.xlu0 %v4572, 64
        %v4593 = vpop.permute.xlu0 %4592
        %4594 = vrot.lane.b32.xlu0 %v4573, 64
        %v4595 = vpop.permute.xlu0 %4594
        %4596 = vrot.lane.b32.xlu0 %v4574, 64
        %v4597 = vpop.permute.xlu0 %4596
        %4598 = vrot.lane.b32.xlu0 %v4575, 64
        %v4599 = vpop.permute.xlu0 %4598
        %4600 = vrot.lane.b32.xlu0 %v4576, 64
        %v4601 = vpop.permute.xlu0 %4600
        %4602 = vrot.lane.b32.xlu0 %v4577, 64
        %v4603 = vpop.permute.xlu0 %4602
        %4604 = vrot.lane.b32.xlu0 %v4578, 64
        %v4605 = vpop.permute.xlu0 %4604
        %v4606 = vsel %vm1332, %v4589, %v4591
        %v4607 = vsel %vm1332, %v4591, %v4593
        %v4608 = vsel %vm1332, %v4593, %v4595
        %v4609 = vsel %vm1332, %v4595, %v4597
        %v4610 = vsel %vm1332, %v4597, %v4599
        %v4611 = vsel %vm1332, %v4599, %v4601
        %v4612 = vsel %vm1332, %v4601, %v4603
        %v4613 = vsel %vm1332, %v4603, %v4605
        %4622 = vst [vmem:[#allocation3 + $0x80] sm:$0xff] %v4606
        %4623 = vst [vmem:[#allocation3 + $0x88] sm:$0xff] %v4607
        %4624 = vst [vmem:[#allocation3 + $0x90] sm:$0xff] %v4608
        %4625 = vst [vmem:[#allocation3 + $0x98] sm:$0xff] %v4609
        %4626 = vst [vmem:[#allocation3 + $0xa0] sm:$0xff] %v4610
        %4627 = vst [vmem:[#allocation3 + $0xa8] sm:$0xff] %v4611
        %4628 = vst [vmem:[#allocation3 + $0xb0] sm:$0xff] %v4612
        %4629 = vst [vmem:[#allocation3 + $0xb8] sm:$0xff] %v4613
        %v4630 = vld [vmem:[#allocation2] sm:$0xff]
        %v4631 = vld [vmem:[#allocation2 + $0x8] sm:$0xff]
        %v4632 = vld [vmem:[#allocation2 + $0x10] sm:$0xff]
        %v4633 = vld [vmem:[#allocation2 + $0x18] sm:$0xff]
        %v4634 = vld [vmem:[#allocation2 + $0x20] sm:$0xff]
        %v4635 = vld [vmem:[#allocation2 + $0x28] sm:$0xff]
        %v4636 = vld [vmem:[#allocation2 + $0x30] sm:$0xff]
        %v4637 = vld [vmem:[#allocation2 + $0x38] sm:$0xff]
        %v4638 = vld [vmem:[#allocation2 + $0x40] sm:$0xff]
        %4648 = vrot.lane.b32.xlu0 %v4630, 63
        %v4649 = vpop.permute.xlu0 %4648
        %4650 = vrot.lane.b32.xlu0 %v4631, 63
        %v4651 = vpop.permute.xlu0 %4650
        %4652 = vrot.lane.b32.xlu0 %v4632, 63
        %v4653 = vpop.permute.xlu0 %4652
        %4654 = vrot.lane.b32.xlu0 %v4633, 63
        %v4655 = vpop.permute.xlu0 %4654
        %4656 = vrot.lane.b32.xlu0 %v4634, 63
        %v4657 = vpop.permute.xlu0 %4656
        %4658 = vrot.lane.b32.xlu0 %v4635, 63
        %v4659 = vpop.permute.xlu0 %4658
        %4660 = vrot.lane.b32.xlu0 %v4636, 63
        %v4661 = vpop.permute.xlu0 %4660
        %4662 = vrot.lane.b32.xlu0 %v4637, 63
        %v4663 = vpop.permute.xlu0 %4662
        %4664 = vrot.lane.b32.xlu0 %v4638, 63
        %v4665 = vpop.permute.xlu0 %4664
        %v4666 = vsel %vm1399, %v4649, %v4651
        %v4667 = vsel %vm1399, %v4651, %v4653
        %v4668 = vsel %vm1399, %v4653, %v4655
        %v4669 = vsel %vm1399, %v4655, %v4657
        %v4670 = vsel %vm1399, %v4657, %v4659
        %v4671 = vsel %vm1399, %v4659, %v4661
        %v4672 = vsel %vm1399, %v4661, %v4663
        %v4673 = vsel %vm1399, %v4663, %v4665
        %4682 = vst [vmem:[#allocation3 + $0xc0] sm:$0xff] %v4666
        %4683 = vst [vmem:[#allocation3 + $0xc8] sm:$0xff] %v4667
        %4684 = vst [vmem:[#allocation3 + $0xd0] sm:$0xff] %v4668
        %4685 = vst [vmem:[#allocation3 + $0xd8] sm:$0xff] %v4669
        %4686 = vst [vmem:[#allocation3 + $0xe0] sm:$0xff] %v4670
        %4687 = vst [vmem:[#allocation3 + $0xe8] sm:$0xff] %v4671
        %4688 = vst [vmem:[#allocation3 + $0xf0] sm:$0xff] %v4672
        %4689 = vst [vmem:[#allocation3 + $0xf8] sm:$0xff] %v4673
        %v4690 = vld [vmem:[#allocation2] sm:$0xff]
        %v4691 = vld [vmem:[#allocation2 + $0x8] sm:$0xff]
        %v4692 = vld [vmem:[#allocation2 + $0x10] sm:$0xff]
        %v4693 = vld [vmem:[#allocation2 + $0x18] sm:$0xff]
        %v4694 = vld [vmem:[#allocation2 + $0x20] sm:$0xff]
        %v4695 = vld [vmem:[#allocation2 + $0x28] sm:$0xff]
        %v4696 = vld [vmem:[#allocation2 + $0x30] sm:$0xff]
        %v4697 = vld [vmem:[#allocation2 + $0x38] sm:$0xff]
        %v4698 = vld [vmem:[#allocation2 + $0x40] sm:$0xff]
        %4708 = vrot.lane.b32.xlu0 %v4690, 62
        %v4709 = vpop.permute.xlu0 %4708
        %4710 = vrot.lane.b32.xlu0 %v4691, 62
        %v4711 = vpop.permute.xlu0 %4710
        %4712 = vrot.lane.b32.xlu0 %v4692, 62
        %v4713 = vpop.permute.xlu0 %4712
        %4714 = vrot.lane.b32.xlu0 %v4693, 62
        %v4715 = vpop.permute.xlu0 %4714
        %4716 = vrot.lane.b32.xlu0 %v4694, 62
        %v4717 = vpop.permute.xlu0 %4716
        %4718 = vrot.lane.b32.xlu0 %v4695, 62
        %v4719 = vpop.permute.xlu0 %4718
        %4720 = vrot.lane.b32.xlu0 %v4696, 62
        %v4721 = vpop.permute.xlu0 %4720
        %4722 = vrot.lane.b32.xlu0 %v4697, 62
        %v4723 = vpop.permute.xlu0 %4722
        %4724 = vrot.lane.b32.xlu0 %v4698, 62
        %v4725 = vpop.permute.xlu0 %4724
        %v4726 = vsel %vm1506, %v4709, %v4711
        %v4727 = vsel %vm1506, %v4711, %v4713
        %v4728 = vsel %vm1506, %v4713, %v4715
        %v4729 = vsel %vm1506, %v4715, %v4717
        %v4730 = vsel %vm1506, %v4717, %v4719
        %v4731 = vsel %vm1506, %v4719, %v4721
        %v4732 = vsel %vm1506, %v4721, %v4723
        %v4733 = vsel %vm1506, %v4723, %v4725
        %4742 = vst [vmem:[#allocation3 + $0x100] sm:$0xff] %v4726
        %4743 = vst [vmem:[#allocation3 + $0x108] sm:$0xff] %v4727
        %4744 = vst [vmem:[#allocation3 + $0x110] sm:$0xff] %v4728
        %4745 = vst [vmem:[#allocation3 + $0x118] sm:$0xff] %v4729
        %4746 = vst [vmem:[#allocation3 + $0x120] sm:$0xff] %v4730
        %4747 = vst [vmem:[#allocation3 + $0x128] sm:$0xff] %v4731
        %4748 = vst [vmem:[#allocation3 + $0x130] sm:$0xff] %v4732
        %4749 = vst [vmem:[#allocation3 + $0x138] sm:$0xff] %v4733
        %v4750 = vld [vmem:[#allocation2] sm:$0xff]
        %v4751 = vld [vmem:[#allocation2 + $0x8] sm:$0xff]
        %v4752 = vld [vmem:[#allocation2 + $0x10] sm:$0xff]
        %v4753 = vld [vmem:[#allocation2 + $0x18] sm:$0xff]
        %v4754 = vld [vmem:[#allocation2 + $0x20] sm:$0xff]
        %v4755 = vld [vmem:[#allocation2 + $0x28] sm:$0xff]
        %v4756 = vld [vmem:[#allocation2 + $0x30] sm:$0xff]
        %v4757 = vld [vmem:[#allocation2 + $0x38] sm:$0xff]
        %v4758 = vld [vmem:[#allocation2 + $0x40] sm:$0xff]
        %4768 = vrot.lane.b32.xlu0 %v4750, 34
        %v4769 = vpop.permute.xlu0 %4768
        %4770 = vrot.lane.b32.xlu0 %v4751, 34
        %v4771 = vpop.permute.xlu0 %4770
        %4772 = vrot.lane.b32.xlu0 %v4752, 34
        %v4773 = vpop.permute.xlu0 %4772
        %4774 = vrot.lane.b32.xlu0 %v4753, 34
        %v4775 = vpop.permute.xlu0 %4774
        %4776 = vrot.lane.b32.xlu0 %v4754, 34
        %v4777 = vpop.permute.xlu0 %4776
        %4778 = vrot.lane.b32.xlu0 %v4755, 34
        %v4779 = vpop.permute.xlu0 %4778
        %4780 = vrot.lane.b32.xlu0 %v4756, 34
        %v4781 = vpop.permute.xlu0 %4780
        %4782 = vrot.lane.b32.xlu0 %v4757, 34
        %v4783 = vpop.permute.xlu0 %4782
        %4784 = vrot.lane.b32.xlu0 %v4758, 34
        %v4785 = vpop.permute.xlu0 %4784
        %v4786 = vsel %vm2853, %v4769, %v4771
        %v4787 = vsel %vm2853, %v4771, %v4773
        %v4788 = vsel %vm2853, %v4773, %v4775
        %v4789 = vsel %vm2853, %v4775, %v4777
        %v4790 = vsel %vm2853, %v4777, %v4779
        %v4791 = vsel %vm2853, %v4779, %v4781
        %v4792 = vsel %vm2853, %v4781, %v4783
        %v4793 = vsel %vm2853, %v4783, %v4785
        %4802 = vst [vmem:[#allocation3 + $0x140] sm:$0xff] %v4786
        %4803 = vst [vmem:[#allocation3 + $0x148] sm:$0xff] %v4787
        %4804 = vst [vmem:[#allocation3 + $0x150] sm:$0xff] %v4788
        %4805 = vst [vmem:[#allocation3 + $0x158] sm:$0xff] %v4789
        %4806 = vst [vmem:[#allocation3 + $0x160] sm:$0xff] %v4790
        %4807 = vst [vmem:[#allocation3 + $0x168] sm:$0xff] %v4791
        %4808 = vst [vmem:[#allocation3 + $0x170] sm:$0xff] %v4792
        %4809 = vst [vmem:[#allocation3 + $0x178] sm:$0xff] %v4793
        %v4810 = vld [vmem:[#allocation2] sm:$0xff]
        %v4811 = vld [vmem:[#allocation2 + $0x8] sm:$0xff]
        %v4812 = vld [vmem:[#allocation2 + $0x10] sm:$0xff]
        %v4813 = vld [vmem:[#allocation2 + $0x18] sm:$0xff]
        %v4814 = vld [vmem:[#allocation2 + $0x20] sm:$0xff]
        %v4815 = vld [vmem:[#allocation2 + $0x28] sm:$0xff]
        %v4816 = vld [vmem:[#allocation2 + $0x30] sm:$0xff]
        %v4817 = vld [vmem:[#allocation2 + $0x38] sm:$0xff]
        %v4818 = vld [vmem:[#allocation2 + $0x40] sm:$0xff]
        %4828 = vrot.lane.b32.xlu0 %v4810, 33
        %v4829 = vpop.permute.xlu0 %4828
        %4830 = vrot.lane.b32.xlu0 %v4811, 33
        %v4831 = vpop.permute.xlu0 %4830
        %4832 = vrot.lane.b32.xlu0 %v4812, 33
        %v4833 = vpop.permute.xlu0 %4832
        %4834 = vrot.lane.b32.xlu0 %v4813, 33
        %v4835 = vpop.permute.xlu0 %4834
        %4836 = vrot.lane.b32.xlu0 %v4814, 33
        %v4837 = vpop.permute.xlu0 %4836
        %4838 = vrot.lane.b32.xlu0 %v4815, 33
        %v4839 = vpop.permute.xlu0 %4838
        %4840 = vrot.lane.b32.xlu0 %v4816, 33
        %v4841 = vpop.permute.xlu0 %4840
        %4842 = vrot.lane.b32.xlu0 %v4817, 33
        %v4843 = vpop.permute.xlu0 %4842
        %4844 = vrot.lane.b32.xlu0 %v4818, 33
        %v4845 = vpop.permute.xlu0 %4844
        %v4846 = vsel %vm2914, %v4829, %v4831
        %v4847 = vsel %vm2914, %v4831, %v4833
        %v4848 = vsel %vm2914, %v4833, %v4835
        %v4849 = vsel %vm2914, %v4835, %v4837
        %v4850 = vsel %vm2914, %v4837, %v4839
        %v4851 = vsel %vm2914, %v4839, %v4841
        %v4852 = vsel %vm2914, %v4841, %v4843
        %v4853 = vsel %vm2914, %v4843, %v4845
        %4862 = vst [vmem:[#allocation3 + $0x180] sm:$0xff] %v4846
        %4863 = vst [vmem:[#allocation3 + $0x188] sm:$0xff] %v4847
        %4864 = vst [vmem:[#allocation3 + $0x190] sm:$0xff] %v4848
        %4865 = vst [vmem:[#allocation3 + $0x198] sm:$0xff] %v4849
        %4866 = vst [vmem:[#allocation3 + $0x1a0] sm:$0xff] %v4850
        %4867 = vst [vmem:[#allocation3 + $0x1a8] sm:$0xff] %v4851
        %4868 = vst [vmem:[#allocation3 + $0x1b0] sm:$0xff] %v4852
        %4869 = vst [vmem:[#allocation3 + $0x1b8] sm:$0xff] %v4853
        %v4870 = vld [vmem:[#allocation2] sm:$0xff]
        %v4871 = vld [vmem:[#allocation2 + $0x8] sm:$0xff]
        %v4872 = vld [vmem:[#allocation2 + $0x10] sm:$0xff]
        %v4873 = vld [vmem:[#allocation2 + $0x18] sm:$0xff]
        %v4874 = vld [vmem:[#allocation2 + $0x20] sm:$0xff]
        %v4875 = vld [vmem:[#allocation2 + $0x28] sm:$0xff]
        %v4876 = vld [vmem:[#allocation2 + $0x30] sm:$0xff]
        %v4877 = vld [vmem:[#allocation2 + $0x38] sm:$0xff]
        %v4878 = vld [vmem:[#allocation2 + $0x40] sm:$0xff]
        %4888 = vrot.lane.b32.xlu0 %v4870, 32
        %v4889 = vpop.permute.xlu0 %4888
        %4890 = vrot.lane.b32.xlu0 %v4871, 32
        %v4891 = vpop.permute.xlu0 %4890
        %4892 = vrot.lane.b32.xlu0 %v4872, 32
        %v4893 = vpop.permute.xlu0 %4892
        %4894 = vrot.lane.b32.xlu0 %v4873, 32
        %v4895 = vpop.permute.xlu0 %4894
        %4896 = vrot.lane.b32.xlu0 %v4874, 32
        %v4897 = vpop.permute.xlu0 %4896
        %4898 = vrot.lane.b32.xlu0 %v4875, 32
        %v4899 = vpop.permute.xlu0 %4898
        %4900 = vrot.lane.b32.xlu0 %v4876, 32
        %v4901 = vpop.permute.xlu0 %4900
        %4902 = vrot.lane.b32.xlu0 %v4877, 32
        %v4903 = vpop.permute.xlu0 %4902
        %4904 = vrot.lane.b32.xlu0 %v4878, 32
        %v4905 = vpop.permute.xlu0 %4904
        %v4906 = vsel %vm1759, %v4889, %v4891
        %v4907 = vsel %vm1759, %v4891, %v4893
        %v4908 = vsel %vm1759, %v4893, %v4895
        %v4909 = vsel %vm1759, %v4895, %v4897
        %v4910 = vsel %vm1759, %v4897, %v4899
        %v4911 = vsel %vm1759, %v4899, %v4901
        %v4912 = vsel %vm1759, %v4901, %v4903
        %v4913 = vsel %vm1759, %v4903, %v4905
        %4922 = vst [vmem:[#allocation3 + $0x1c0] sm:$0xff] %v4906
        %4923 = vst [vmem:[#allocation3 + $0x1c8] sm:$0xff] %v4907
        %4924 = vst [vmem:[#allocation3 + $0x1d0] sm:$0xff] %v4908
        %4925 = vst [vmem:[#allocation3 + $0x1d8] sm:$0xff] %v4909
        %4926 = vst [vmem:[#allocation3 + $0x1e0] sm:$0xff] %v4910
        %4927 = vst [vmem:[#allocation3 + $0x1e8] sm:$0xff] %v4911
        %4928 = vst [vmem:[#allocation3 + $0x1f0] sm:$0xff] %v4912
        %4929 = vst [vmem:[#allocation3 + $0x1f8] sm:$0xff] %v4913
        %v4930 = vld [vmem:[#allocation2] sm:$0xff]
        %v4931 = vld [vmem:[#allocation2 + $0x8] sm:$0xff]
        %v4932 = vld [vmem:[#allocation2 + $0x10] sm:$0xff]
        %v4933 = vld [vmem:[#allocation2 + $0x18] sm:$0xff]
        %v4934 = vld [vmem:[#allocation2 + $0x20] sm:$0xff]
        %v4935 = vld [vmem:[#allocation2 + $0x28] sm:$0xff]
        %v4936 = vld [vmem:[#allocation2 + $0x30] sm:$0xff]
        %v4937 = vld [vmem:[#allocation2 + $0x38] sm:$0xff]
        %v4938 = vld [vmem:[#allocation2 + $0x40] sm:$0xff]
        %4948 = vrot.lane.b32.xlu0 %v4930, 31
        %v4949 = vpop.permute.xlu0 %4948
        %4950 = vrot.lane.b32.xlu0 %v4931, 31
        %v4951 = vpop.permute.xlu0 %4950
        %4952 = vrot.lane.b32.xlu0 %v4932, 31
        %v4953 = vpop.permute.xlu0 %4952
        %4954 = vrot.lane.b32.xlu0 %v4933, 31
        %v4955 = vpop.permute.xlu0 %4954
        %4956 = vrot.lane.b32.xlu0 %v4934, 31
        %v4957 = vpop.permute.xlu0 %4956
        %4958 = vrot.lane.b32.xlu0 %v4935, 31
        %v4959 = vpop.permute.xlu0 %4958
        %4960 = vrot.lane.b32.xlu0 %v4936, 31
        %v4961 = vpop.permute.xlu0 %4960
        %4962 = vrot.lane.b32.xlu0 %v4937, 31
        %v4963 = vpop.permute.xlu0 %4962
        %4964 = vrot.lane.b32.xlu0 %v4938, 31
        %v4965 = vpop.permute.xlu0 %4964
        %v4966 = vsel %vm1826, %v4949, %v4951
        %v4967 = vsel %vm1826, %v4951, %v4953
        %v4968 = vsel %vm1826, %v4953, %v4955
        %v4969 = vsel %vm1826, %v4955, %v4957
        %v4970 = vsel %vm1826, %v4957, %v4959
        %v4971 = vsel %vm1826, %v4959, %v4961
        %v4972 = vsel %vm1826, %v4961, %v4963
        %v4973 = vsel %vm1826, %v4963, %v4965
        %4982 = vst [vmem:[#allocation3 + $0x200] sm:$0xff] %v4966
        %4983 = vst [vmem:[#allocation3 + $0x208] sm:$0xff] %v4967
        %4984 = vst [vmem:[#allocation3 + $0x210] sm:$0xff] %v4968
        %4985 = vst [vmem:[#allocation3 + $0x218] sm:$0xff] %v4969
        %4986 = vst [vmem:[#allocation3 + $0x220] sm:$0xff] %v4970
        %4987 = vst [vmem:[#allocation3 + $0x228] sm:$0xff] %v4971
        %4988 = vst [vmem:[#allocation3 + $0x230] sm:$0xff] %v4972
        %4989 = vst [vmem:[#allocation3 + $0x238] sm:$0xff] %v4973
        %v4990 = vld [vmem:[#allocation2] sm:$0xff]
        %v4991 = vld [vmem:[#allocation2 + $0x8] sm:$0xff]
        %v4992 = vld [vmem:[#allocation2 + $0x10] sm:$0xff]
        %v4993 = vld [vmem:[#allocation2 + $0x18] sm:$0xff]
        %v4994 = vld [vmem:[#allocation2 + $0x20] sm:$0xff]
        %v4995 = vld [vmem:[#allocation2 + $0x28] sm:$0xff]
        %v4996 = vld [vmem:[#allocation2 + $0x30] sm:$0xff]
        %v4997 = vld [vmem:[#allocation2 + $0x38] sm:$0xff]
        %v4998 = vld [vmem:[#allocation2 + $0x40] sm:$0xff]
        %5008 = vrot.lane.b32.xlu0 %v4990, 30
        %v5009 = vpop.permute.xlu0 %5008
        %5010 = vrot.lane.b32.xlu0 %v4991, 30
        %v5011 = vpop.permute.xlu0 %5010
        %5012 = vrot.lane.b32.xlu0 %v4992, 30
        %v5013 = vpop.permute.xlu0 %5012
        %5014 = vrot.lane.b32.xlu0 %v4993, 30
        %v5015 = vpop.permute.xlu0 %5014
        %5016 = vrot.lane.b32.xlu0 %v4994, 30
        %v5017 = vpop.permute.xlu0 %5016
        %5018 = vrot.lane.b32.xlu0 %v4995, 30
        %v5019 = vpop.permute.xlu0 %5018
        %5020 = vrot.lane.b32.xlu0 %v4996, 30
        %v5021 = vpop.permute.xlu0 %5020
        %5022 = vrot.lane.b32.xlu0 %v4997, 30
        %v5023 = vpop.permute.xlu0 %5022
        %5024 = vrot.lane.b32.xlu0 %v4998, 30
        %v5025 = vpop.permute.xlu0 %5024
        %v5026 = vsel %vm1893, %v5009, %v5011
        %v5027 = vsel %vm1893, %v5011, %v5013
        %v5028 = vsel %vm1893, %v5013, %v5015
        %v5029 = vsel %vm1893, %v5015, %v5017
        %v5030 = vsel %vm1893, %v5017, %v5019
        %v5031 = vsel %vm1893, %v5019, %v5021
        %v5032 = vsel %vm1893, %v5021, %v5023
        %v5033 = vsel %vm1893, %v5023, %v5025
        %5042 = vst [vmem:[#allocation3 + $0x240] sm:$0xff] %v5026
        %5043 = vst [vmem:[#allocation3 + $0x248] sm:$0xff] %v5027
        %5044 = vst [vmem:[#allocation3 + $0x250] sm:$0xff] %v5028
        %5045 = vst [vmem:[#allocation3 + $0x258] sm:$0xff] %v5029
        %5046 = vst [vmem:[#allocation3 + $0x260] sm:$0xff] %v5030
        %5047 = vst [vmem:[#allocation3 + $0x268] sm:$0xff] %v5031
        %5048 = vst [vmem:[#allocation3 + $0x270] sm:$0xff] %v5032
        %5049 = vst [vmem:[#allocation3 + $0x278] sm:$0xff] %v5033
        %v5050 = vld [vmem:[#allocation2] sm:$0xff]
        %v5051 = vld [vmem:[#allocation2 + $0x8] sm:$0xff]
        %v5052 = vld [vmem:[#allocation2 + $0x10] sm:$0xff]
        %v5053 = vld [vmem:[#allocation2 + $0x18] sm:$0xff]
        %v5054 = vld [vmem:[#allocation2 + $0x20] sm:$0xff]
        %v5055 = vld [vmem:[#allocation2 + $0x28] sm:$0xff]
        %v5056 = vld [vmem:[#allocation2 + $0x30] sm:$0xff]
        %v5057 = vld [vmem:[#allocation2 + $0x38] sm:$0xff]
        %v5058 = vld [vmem:[#allocation2 + $0x40] sm:$0xff]
        %5068 = vrot.lane.b32.xlu0 %v5050, 2
        %v5069 = vpop.permute.xlu0 %5068
        %5070 = vrot.lane.b32.xlu0 %v5051, 2
        %v5071 = vpop.permute.xlu0 %5070
        %5072 = vrot.lane.b32.xlu0 %v5052, 2
        %v5073 = vpop.permute.xlu0 %5072
        %5074 = vrot.lane.b32.xlu0 %v5053, 2
        %v5075 = vpop.permute.xlu0 %5074
        %5076 = vrot.lane.b32.xlu0 %v5054, 2
        %v5077 = vpop.permute.xlu0 %5076
        %5078 = vrot.lane.b32.xlu0 %v5055, 2
        %v5079 = vpop.permute.xlu0 %5078
        %5080 = vrot.lane.b32.xlu0 %v5056, 2
        %v5081 = vpop.permute.xlu0 %5080
        %5082 = vrot.lane.b32.xlu0 %v5057, 2
        %v5083 = vpop.permute.xlu0 %5082
        %5084 = vrot.lane.b32.xlu0 %v5058, 2
        %v5085 = vpop.permute.xlu0 %5084
        %v5086 = vsel %vm3173, %v5069, %v5071
        %v5087 = vsel %vm3173, %v5071, %v5073
        %v5088 = vsel %vm3173, %v5073, %v5075
        %v5089 = vsel %vm3173, %v5075, %v5077
        %v5090 = vsel %vm3173, %v5077, %v5079
        %v5091 = vsel %vm3173, %v5079, %v5081
        %v5092 = vsel %vm3173, %v5081, %v5083
        %v5093 = vsel %vm3173, %v5083, %v5085
        %5102 = vst [vmem:[#allocation3 + $0x280] sm:$0xff] %v5086
        %5103 = vst [vmem:[#allocation3 + $0x288] sm:$0xff] %v5087
        %5104 = vst [vmem:[#allocation3 + $0x290] sm:$0xff] %v5088
        %5105 = vst [vmem:[#allocation3 + $0x298] sm:$0xff] %v5089
        %5106 = vst [vmem:[#allocation3 + $0x2a0] sm:$0xff] %v5090
        %5107 = vst [vmem:[#allocation3 + $0x2a8] sm:$0xff] %v5091
        %5108 = vst [vmem:[#allocation3 + $0x2b0] sm:$0xff] %v5092
        %5109 = vst [vmem:[#allocation3 + $0x2b8] sm:$0xff] %v5093
        %v5110 = vld [vmem:[#allocation2] sm:$0xff]
        %v5111 = vld [vmem:[#allocation2 + $0x8] sm:$0xff]
        %v5112 = vld [vmem:[#allocation2 + $0x10] sm:$0xff]
        %v5113 = vld [vmem:[#allocation2 + $0x18] sm:$0xff]
        %v5114 = vld [vmem:[#allocation2 + $0x20] sm:$0xff]
        %v5115 = vld [vmem:[#allocation2 + $0x28] sm:$0xff]
        %v5116 = vld [vmem:[#allocation2 + $0x30] sm:$0xff]
        %v5117 = vld [vmem:[#allocation2 + $0x38] sm:$0xff]
        %v5118 = vld [vmem:[#allocation2 + $0x40] sm:$0xff]
        %5128 = vrot.lane.b32.xlu0 %v5110, 1
        %v5129 = vpop.permute.xlu0 %5128
        %5130 = vrot.lane.b32.xlu0 %v5111, 1
        %v5131 = vpop.permute.xlu0 %5130
        %5132 = vrot.lane.b32.xlu0 %v5112, 1
        %v5133 = vpop.permute.xlu0 %5132
        %5134 = vrot.lane.b32.xlu0 %v5113, 1
        %v5135 = vpop.permute.xlu0 %5134
        %5136 = vrot.lane.b32.xlu0 %v5114, 1
        %v5137 = vpop.permute.xlu0 %5136
        %5138 = vrot.lane.b32.xlu0 %v5115, 1
        %v5139 = vpop.permute.xlu0 %5138
        %5140 = vrot.lane.b32.xlu0 %v5116, 1
        %v5141 = vpop.permute.xlu0 %5140
        %5142 = vrot.lane.b32.xlu0 %v5117, 1
        %v5143 = vpop.permute.xlu0 %5142
        %5144 = vrot.lane.b32.xlu0 %v5118, 1
        %v5145 = vpop.permute.xlu0 %5144
        %v5146 = vsel %vm3243, %v5129, %v5131
        %v5147 = vsel %vm3243, %v5131, %v5133
        %v5148 = vsel %vm3243, %v5133, %v5135
        %v5149 = vsel %vm3243, %v5135, %v5137
        %v5150 = vsel %vm3243, %v5137, %v5139
        %v5151 = vsel %vm3243, %v5139, %v5141
        %v5152 = vsel %vm3243, %v5141, %v5143
        %v5153 = vsel %vm3243, %v5143, %v5145
        %5162 = vst [vmem:[#allocation3 + $0x2c0] sm:$0xff] %v5146
        %5163 = vst [vmem:[#allocation3 + $0x2c8] sm:$0xff] %v5147
        %5164 = vst [vmem:[#allocation3 + $0x2d0] sm:$0xff] %v5148
        %5165 = vst [vmem:[#allocation3 + $0x2d8] sm:$0xff] %v5149
        %5166 = vst [vmem:[#allocation3 + $0x2e0] sm:$0xff] %v5150
        %5167 = vst [vmem:[#allocation3 + $0x2e8] sm:$0xff] %v5151
        %5168 = vst [vmem:[#allocation3 + $0x2f0] sm:$0xff] %v5152
        %5169 = vst [vmem:[#allocation3 + $0x2f8] sm:$0xff] %v5153
        %v5170 = vld [vmem:[#allocation2 + $0x8] sm:$0xff]
        %v5171 = vld [vmem:[#allocation2 + $0x10] sm:$0xff]
        %v5172 = vld [vmem:[#allocation2 + $0x18] sm:$0xff]
        %v5173 = vld [vmem:[#allocation2 + $0x20] sm:$0xff]
        %v5174 = vld [vmem:[#allocation2 + $0x28] sm:$0xff]
        %v5175 = vld [vmem:[#allocation2 + $0x30] sm:$0xff]
        %v5176 = vld [vmem:[#allocation2 + $0x38] sm:$0xff]
        %v5177 = vld [vmem:[#allocation2 + $0x40] sm:$0xff]
        %5178 = vst [vmem:[#allocation3 + $0x300] sm:$0xff] %v5170
        %5179 = vst [vmem:[#allocation3 + $0x308] sm:$0xff] %v5171
        %5180 = vst [vmem:[#allocation3 + $0x310] sm:$0xff] %v5172
        %5181 = vst [vmem:[#allocation3 + $0x318] sm:$0xff] %v5173
        %5182 = vst [vmem:[#allocation3 + $0x320] sm:$0xff] %v5174
        %5183 = vst [vmem:[#allocation3 + $0x328] sm:$0xff] %v5175
        %5184 = vst [vmem:[#allocation3 + $0x330] sm:$0xff] %v5176
        %5185 = vst [vmem:[#allocation3 + $0x338] sm:$0xff] %v5177
        %v5186 = vld [vmem:[#allocation2 + $0x8] sm:$0xff]
        %v5187 = vld [vmem:[#allocation2 + $0x10] sm:$0xff]
        %v5188 = vld [vmem:[#allocation2 + $0x18] sm:$0xff]
        %v5189 = vld [vmem:[#allocation2 + $0x20] sm:$0xff]
        %v5190 = vld [vmem:[#allocation2 + $0x28] sm:$0xff]
        %v5191 = vld [vmem:[#allocation2 + $0x30] sm:$0xff]
        %v5192 = vld [vmem:[#allocation2 + $0x38] sm:$0xff]
        %v5193 = vld [vmem:[#allocation2 + $0x40] sm:$0xff]
        %v5194 = vld [vmem:[#allocation2 + $0x48] sm:$0xff]
        %5204 = vrot.lane.b32.xlu0 %v5186, 127
        %v5205 = vpop.permute.xlu0 %5204
        %5206 = vrot.lane.b32.xlu0 %v5187, 127
        %v5207 = vpop.permute.xlu0 %5206
        %5208 = vrot.lane.b32.xlu0 %v5188, 127
        %v5209 = vpop.permute.xlu0 %5208
        %5210 = vrot.lane.b32.xlu0 %v5189, 127
        %v5211 = vpop.permute.xlu0 %5210
        %5212 = vrot.lane.b32.xlu0 %v5190, 127
        %v5213 = vpop.permute.xlu0 %5212
        %5214 = vrot.lane.b32.xlu0 %v5191, 127
        %v5215 = vpop.permute.xlu0 %5214
        %5216 = vrot.lane.b32.xlu0 %v5192, 127
        %v5217 = vpop.permute.xlu0 %5216
        %5218 = vrot.lane.b32.xlu0 %v5193, 127
        %v5219 = vpop.permute.xlu0 %5218
        %5220 = vrot.lane.b32.xlu0 %v5194, 127
        %v5221 = vpop.permute.xlu0 %5220
        %v5222 = vsel %vm729, %v5205, %v5207
        %v5223 = vsel %vm729, %v5207, %v5209
        %v5224 = vsel %vm729, %v5209, %v5211
        %v5225 = vsel %vm729, %v5211, %v5213
        %v5226 = vsel %vm729, %v5213, %v5215
        %v5227 = vsel %vm729, %v5215, %v5217
        %v5228 = vsel %vm729, %v5217, %v5219
        %v5229 = vsel %vm729, %v5219, %v5221
        %5238 = vst [vmem:[#allocation3 + $0x340] sm:$0xff] %v5222
        %5239 = vst [vmem:[#allocation3 + $0x348] sm:$0xff] %v5223
        %5240 = vst [vmem:[#allocation3 + $0x350] sm:$0xff] %v5224
        %5241 = vst [vmem:[#allocation3 + $0x358] sm:$0xff] %v5225
        %5242 = vst [vmem:[#allocation3 + $0x360] sm:$0xff] %v5226
        %5243 = vst [vmem:[#allocation3 + $0x368] sm:$0xff] %v5227
        %5244 = vst [vmem:[#allocation3 + $0x370] sm:$0xff] %v5228
        %5245 = vst [vmem:[#allocation3 + $0x378] sm:$0xff] %v5229
        %v5246 = vld [vmem:[#allocation2 + $0x8] sm:$0xff]
        %v5247 = vld [vmem:[#allocation2 + $0x10] sm:$0xff]
        %v5248 = vld [vmem:[#allocation2 + $0x18] sm:$0xff]
        %v5249 = vld [vmem:[#allocation2 + $0x20] sm:$0xff]
        %v5250 = vld [vmem:[#allocation2 + $0x28] sm:$0xff]
        %v5251 = vld [vmem:[#allocation2 + $0x30] sm:$0xff]
        %v5252 = vld [vmem:[#allocation2 + $0x38] sm:$0xff]
        %v5253 = vld [vmem:[#allocation2 + $0x40] sm:$0xff]
        %v5254 = vld [vmem:[#allocation2 + $0x48] sm:$0xff]
        %5264 = vrot.lane.b32.xlu0 %v5246, 126
        %v5265 = vpop.permute.xlu0 %5264
        %5266 = vrot.lane.b32.xlu0 %v5247, 126
        %v5267 = vpop.permute.xlu0 %5266
        %5268 = vrot.lane.b32.xlu0 %v5248, 126
        %v5269 = vpop.permute.xlu0 %5268
        %5270 = vrot.lane.b32.xlu0 %v5249, 126
        %v5271 = vpop.permute.xlu0 %5270
        %5272 = vrot.lane.b32.xlu0 %v5250, 126
        %v5273 = vpop.permute.xlu0 %5272
        %5274 = vrot.lane.b32.xlu0 %v5251, 126
        %v5275 = vpop.permute.xlu0 %5274
        %5276 = vrot.lane.b32.xlu0 %v5252, 126
        %v5277 = vpop.permute.xlu0 %5276
        %5278 = vrot.lane.b32.xlu0 %v5253, 126
        %v5279 = vpop.permute.xlu0 %5278
        %5280 = vrot.lane.b32.xlu0 %v5254, 126
        %v5281 = vpop.permute.xlu0 %5280
        %v5282 = vsel %vm796, %v5265, %v5267
        %v5283 = vsel %vm796, %v5267, %v5269
        %v5284 = vsel %vm796, %v5269, %v5271
        %v5285 = vsel %vm796, %v5271, %v5273
        %v5286 = vsel %vm796, %v5273, %v5275
        %v5287 = vsel %vm796, %v5275, %v5277
        %v5288 = vsel %vm796, %v5277, %v5279
        %v5289 = vsel %vm796, %v5279, %v5281
        %5298 = vst [vmem:[#allocation3 + $0x380] sm:$0xff] %v5282
        %5299 = vst [vmem:[#allocation3 + $0x388] sm:$0xff] %v5283
        %5300 = vst [vmem:[#allocation3 + $0x390] sm:$0xff] %v5284
        %5301 = vst [vmem:[#allocation3 + $0x398] sm:$0xff] %v5285
        %5302 = vst [vmem:[#allocation3 + $0x3a0] sm:$0xff] %v5286
        %5303 = vst [vmem:[#allocation3 + $0x3a8] sm:$0xff] %v5287
        %5304 = vst [vmem:[#allocation3 + $0x3b0] sm:$0xff] %v5288
        %5305 = vst [vmem:[#allocation3 + $0x3b8] sm:$0xff] %v5289
        %v5306 = vld [vmem:[#allocation2 + $0x8] sm:$0xff]
        %v5307 = vld [vmem:[#allocation2 + $0x10] sm:$0xff]
        %v5308 = vld [vmem:[#allocation2 + $0x18] sm:$0xff]
        %v5309 = vld [vmem:[#allocation2 + $0x20] sm:$0xff]
        %v5310 = vld [vmem:[#allocation2 + $0x28] sm:$0xff]
        %v5311 = vld [vmem:[#allocation2 + $0x30] sm:$0xff]
        %v5312 = vld [vmem:[#allocation2 + $0x38] sm:$0xff]
        %v5313 = vld [vmem:[#allocation2 + $0x40] sm:$0xff]
        %v5314 = vld [vmem:[#allocation2 + $0x48] sm:$0xff]
        %5324 = vrot.lane.b32.xlu0 %v5306, 98
        %v5325 = vpop.permute.xlu0 %5324
        %5326 = vrot.lane.b32.xlu0 %v5307, 98
        %v5327 = vpop.permute.xlu0 %5326
        %5328 = vrot.lane.b32.xlu0 %v5308, 98
        %v5329 = vpop.permute.xlu0 %5328
        %5330 = vrot.lane.b32.xlu0 %v5309, 98
        %v5331 = vpop.permute.xlu0 %5330
        %5332 = vrot.lane.b32.xlu0 %v5310, 98
        %v5333 = vpop.permute.xlu0 %5332
        %5334 = vrot.lane.b32.xlu0 %v5311, 98
        %v5335 = vpop.permute.xlu0 %5334
        %5336 = vrot.lane.b32.xlu0 %v5312, 98
        %v5337 = vpop.permute.xlu0 %5336
        %5338 = vrot.lane.b32.xlu0 %v5313, 98
        %v5339 = vpop.permute.xlu0 %5338
        %5340 = vrot.lane.b32.xlu0 %v5314, 98
        %v5341 = vpop.permute.xlu0 %5340
        %v5342 = vsel %vm3458, %v5325, %v5327
        %v5343 = vsel %vm3458, %v5327, %v5329
        %v5344 = vsel %vm3458, %v5329, %v5331
        %v5345 = vsel %vm3458, %v5331, %v5333
        %v5346 = vsel %vm3458, %v5333, %v5335
        %v5347 = vsel %vm3458, %v5335, %v5337
        %v5348 = vsel %vm3458, %v5337, %v5339
        %v5349 = vsel %vm3458, %v5339, %v5341
        %5358 = vst [vmem:[#allocation3 + $0x3c0] sm:$0xff] %v5342
        %5359 = vst [vmem:[#allocation3 + $0x3c8] sm:$0xff] %v5343
        %5360 = vst [vmem:[#allocation3 + $0x3d0] sm:$0xff] %v5344
        %5361 = vst [vmem:[#allocation3 + $0x3d8] sm:$0xff] %v5345
        %5362 = vst [vmem:[#allocation3 + $0x3e0] sm:$0xff] %v5346
        %5363 = vst [vmem:[#allocation3 + $0x3e8] sm:$0xff] %v5347
        %5364 = vst [vmem:[#allocation3 + $0x3f0] sm:$0xff] %v5348
        %5365 = vst [vmem:[#allocation3 + $0x3f8] sm:$0xff] %v5349
        %v5366 = vld [vmem:[#allocation2 + $0x8] sm:$0xff]
        %v5367 = vld [vmem:[#allocation2 + $0x10] sm:$0xff]
        %v5368 = vld [vmem:[#allocation2 + $0x18] sm:$0xff]
        %v5369 = vld [vmem:[#allocation2 + $0x20] sm:$0xff]
        %v5370 = vld [vmem:[#allocation2 + $0x28] sm:$0xff]
        %v5371 = vld [vmem:[#allocation2 + $0x30] sm:$0xff]
        %v5372 = vld [vmem:[#allocation2 + $0x38] sm:$0xff]
        %v5373 = vld [vmem:[#allocation2 + $0x40] sm:$0xff]
        %v5374 = vld [vmem:[#allocation2 + $0x48] sm:$0xff]
        %5384 = vrot.lane.b32.xlu0 %v5366, 97
        %v5385 = vpop.permute.xlu0 %5384
        %5386 = vrot.lane.b32.xlu0 %v5367, 97
        %v5387 = vpop.permute.xlu0 %5386
        %5388 = vrot.lane.b32.xlu0 %v5368, 97
        %v5389 = vpop.permute.xlu0 %5388
        %5390 = vrot.lane.b32.xlu0 %v5369, 97
        %v5391 = vpop.permute.xlu0 %5390
        %5392 = vrot.lane.b32.xlu0 %v5370, 97
        %v5393 = vpop.permute.xlu0 %5392
        %5394 = vrot.lane.b32.xlu0 %v5371, 97
        %v5395 = vpop.permute.xlu0 %5394
        %5396 = vrot.lane.b32.xlu0 %v5372, 97
        %v5397 = vpop.permute.xlu0 %5396
        %5398 = vrot.lane.b32.xlu0 %v5373, 97
        %v5399 = vpop.permute.xlu0 %5398
        %5400 = vrot.lane.b32.xlu0 %v5374, 97
        %v5401 = vpop.permute.xlu0 %5400
        %v5402 = vsel %vm3519, %v5385, %v5387
        %v5403 = vsel %vm3519, %v5387, %v5389
        %v5404 = vsel %vm3519, %v5389, %v5391
        %v5405 = vsel %vm3519, %v5391, %v5393
        %v5406 = vsel %vm3519, %v5393, %v5395
        %v5407 = vsel %vm3519, %v5395, %v5397
        %v5408 = vsel %vm3519, %v5397, %v5399
        %v5409 = vsel %vm3519, %v5399, %v5401
        %5418 = vst [vmem:[#allocation3 + $0x400] sm:$0xff] %v5402
        %5419 = vst [vmem:[#allocation3 + $0x408] sm:$0xff] %v5403
        %5420 = vst [vmem:[#allocation3 + $0x410] sm:$0xff] %v5404
        %5421 = vst [vmem:[#allocation3 + $0x418] sm:$0xff] %v5405
        %5422 = vst [vmem:[#allocation3 + $0x420] sm:$0xff] %v5406
        %5423 = vst [vmem:[#allocation3 + $0x428] sm:$0xff] %v5407
        %5424 = vst [vmem:[#allocation3 + $0x430] sm:$0xff] %v5408
        %5425 = vst [vmem:[#allocation3 + $0x438] sm:$0xff] %v5409
        %v5426 = vld [vmem:[#allocation2 + $0x8] sm:$0xff]
        %v5427 = vld [vmem:[#allocation2 + $0x10] sm:$0xff]
        %v5428 = vld [vmem:[#allocation2 + $0x18] sm:$0xff]
        %v5429 = vld [vmem:[#allocation2 + $0x20] sm:$0xff]
        %v5430 = vld [vmem:[#allocation2 + $0x28] sm:$0xff]
        %v5431 = vld [vmem:[#allocation2 + $0x30] sm:$0xff]
        %v5432 = vld [vmem:[#allocation2 + $0x38] sm:$0xff]
        %v5433 = vld [vmem:[#allocation2 + $0x40] sm:$0xff]
        %v5434 = vld [vmem:[#allocation2 + $0x48] sm:$0xff]
        %5444 = vrot.lane.b32.xlu0 %v5426, 96
        %v5445 = vpop.permute.xlu0 %5444
        %5446 = vrot.lane.b32.xlu0 %v5427, 96
        %v5447 = vpop.permute.xlu0 %5446
        %5448 = vrot.lane.b32.xlu0 %v5428, 96
        %v5449 = vpop.permute.xlu0 %5448
        %5450 = vrot.lane.b32.xlu0 %v5429, 96
        %v5451 = vpop.permute.xlu0 %5450
        %5452 = vrot.lane.b32.xlu0 %v5430, 96
        %v5453 = vpop.permute.xlu0 %5452
        %5454 = vrot.lane.b32.xlu0 %v5431, 96
        %v5455 = vpop.permute.xlu0 %5454
        %5456 = vrot.lane.b32.xlu0 %v5432, 96
        %v5457 = vpop.permute.xlu0 %5456
        %5458 = vrot.lane.b32.xlu0 %v5433, 96
        %v5459 = vpop.permute.xlu0 %5458
        %5460 = vrot.lane.b32.xlu0 %v5434, 96
        %v5461 = vpop.permute.xlu0 %5460
        %v5462 = vsel %vm997, %v5445, %v5447
        %v5463 = vsel %vm997, %v5447, %v5449
        %v5464 = vsel %vm997, %v5449, %v5451
        %v5465 = vsel %vm997, %v5451, %v5453
        %v5466 = vsel %vm997, %v5453, %v5455
        %v5467 = vsel %vm997, %v5455, %v5457
        %v5468 = vsel %vm997, %v5457, %v5459
        %v5469 = vsel %vm997, %v5459, %v5461
        %5478 = vst [vmem:[#allocation3 + $0x440] sm:$0xff] %v5462
        %5479 = vst [vmem:[#allocation3 + $0x448] sm:$0xff] %v5463
        %5480 = vst [vmem:[#allocation3 + $0x450] sm:$0xff] %v5464
        %5481 = vst [vmem:[#allocation3 + $0x458] sm:$0xff] %v5465
        %5482 = vst [vmem:[#allocation3 + $0x460] sm:$0xff] %v5466
        %5483 = vst [vmem:[#allocation3 + $0x468] sm:$0xff] %v5467
        %5484 = vst [vmem:[#allocation3 + $0x470] sm:$0xff] %v5468
        %5485 = vst [vmem:[#allocation3 + $0x478] sm:$0xff] %v5469
        %v5486 = vld [vmem:[#allocation2 + $0x8] sm:$0xff]
        %v5487 = vld [vmem:[#allocation2 + $0x10] sm:$0xff]
        %v5488 = vld [vmem:[#allocation2 + $0x18] sm:$0xff]
        %v5489 = vld [vmem:[#allocation2 + $0x20] sm:$0xff]
        %v5490 = vld [vmem:[#allocation2 + $0x28] sm:$0xff]
        %v5491 = vld [vmem:[#allocation2 + $0x30] sm:$0xff]
        %v5492 = vld [vmem:[#allocation2 + $0x38] sm:$0xff]
        %v5493 = vld [vmem:[#allocation2 + $0x40] sm:$0xff]
        %v5494 = vld [vmem:[#allocation2 + $0x48] sm:$0xff]
        %5504 = vrot.lane.b32.xlu0 %v5486, 95
        %v5505 = vpop.permute.xlu0 %5504
        %5506 = vrot.lane.b32.xlu0 %v5487, 95
        %v5507 = vpop.permute.xlu0 %5506
        %5508 = vrot.lane.b32.xlu0 %v5488, 95
        %v5509 = vpop.permute.xlu0 %5508
        %5510 = vrot.lane.b32.xlu0 %v5489, 95
        %v5511 = vpop.permute.xlu0 %5510
        %5512 = vrot.lane.b32.xlu0 %v5490, 95
        %v5513 = vpop.permute.xlu0 %5512
        %5514 = vrot.lane.b32.xlu0 %v5491, 95
        %v5515 = vpop.permute.xlu0 %5514
        %5516 = vrot.lane.b32.xlu0 %v5492, 95
        %v5517 = vpop.permute.xlu0 %5516
        %5518 = vrot.lane.b32.xlu0 %v5493, 95
        %v5519 = vpop.permute.xlu0 %5518
        %5520 = vrot.lane.b32.xlu0 %v5494, 95
        %v5521 = vpop.permute.xlu0 %5520
        %v5522 = vsel %vm1064, %v5505, %v5507
        %v5523 = vsel %vm1064, %v5507, %v5509
        %v5524 = vsel %vm1064, %v5509, %v5511
        %v5525 = vsel %vm1064, %v5511, %v5513
        %v5526 = vsel %vm1064, %v5513, %v5515
        %v5527 = vsel %vm1064, %v5515, %v5517
        %v5528 = vsel %vm1064, %v5517, %v5519
        %v5529 = vsel %vm1064, %v5519, %v5521
        %5538 = vst [vmem:[#allocation3 + $0x480] sm:$0xff] %v5522
        %5539 = vst [vmem:[#allocation3 + $0x488] sm:$0xff] %v5523
        %5540 = vst [vmem:[#allocation3 + $0x490] sm:$0xff] %v5524
        %5541 = vst [vmem:[#allocation3 + $0x498] sm:$0xff] %v5525
        %5542 = vst [vmem:[#allocation3 + $0x4a0] sm:$0xff] %v5526
        %5543 = vst [vmem:[#allocation3 + $0x4a8] sm:$0xff] %v5527
        %5544 = vst [vmem:[#allocation3 + $0x4b0] sm:$0xff] %v5528
        %5545 = vst [vmem:[#allocation3 + $0x4b8] sm:$0xff] %v5529
        %v5546 = vld [vmem:[#allocation2 + $0x8] sm:$0xff]
        %v5547 = vld [vmem:[#allocation2 + $0x10] sm:$0xff]
        %v5548 = vld [vmem:[#allocation2 + $0x18] sm:$0xff]
        %v5549 = vld [vmem:[#allocation2 + $0x20] sm:$0xff]
        %v5550 = vld [vmem:[#allocation2 + $0x28] sm:$0xff]
        %v5551 = vld [vmem:[#allocation2 + $0x30] sm:$0xff]
        %v5552 = vld [vmem:[#allocation2 + $0x38] sm:$0xff]
        %v5553 = vld [vmem:[#allocation2 + $0x40] sm:$0xff]
        %v5554 = vld [vmem:[#allocation2 + $0x48] sm:$0xff]
        %5564 = vrot.lane.b32.xlu0 %v5546, 94
        %v5565 = vpop.permute.xlu0 %5564
        %5566 = vrot.lane.b32.xlu0 %v5547, 94
        %v5567 = vpop.permute.xlu0 %5566
        %5568 = vrot.lane.b32.xlu0 %v5548, 94
        %v5569 = vpop.permute.xlu0 %5568
        %5570 = vrot.lane.b32.xlu0 %v5549, 94
        %v5571 = vpop.permute.xlu0 %5570
        %5572 = vrot.lane.b32.xlu0 %v5550, 94
        %v5573 = vpop.permute.xlu0 %5572
        %5574 = vrot.lane.b32.xlu0 %v5551, 94
        %v5575 = vpop.permute.xlu0 %5574
        %5576 = vrot.lane.b32.xlu0 %v5552, 94
        %v5577 = vpop.permute.xlu0 %5576
        %5578 = vrot.lane.b32.xlu0 %v5553, 94
        %v5579 = vpop.permute.xlu0 %5578
        %5580 = vrot.lane.b32.xlu0 %v5554, 94
        %v5581 = vpop.permute.xlu0 %5580
        %v5582 = vsel %vm1131, %v5565, %v5567
        %v5583 = vsel %vm1131, %v5567, %v5569
        %v5584 = vsel %vm1131, %v5569, %v5571
        %v5585 = vsel %vm1131, %v5571, %v5573
        %v5586 = vsel %vm1131, %v5573, %v5575
        %v5587 = vsel %vm1131, %v5575, %v5577
        %v5588 = vsel %vm1131, %v5577, %v5579
        %v5589 = vsel %vm1131, %v5579, %v5581
        %5598 = vst [vmem:[#allocation3 + $0x4c0] sm:$0xff] %v5582
        %5599 = vst [vmem:[#allocation3 + $0x4c8] sm:$0xff] %v5583
        %5600 = vst [vmem:[#allocation3 + $0x4d0] sm:$0xff] %v5584
        %5601 = vst [vmem:[#allocation3 + $0x4d8] sm:$0xff] %v5585
        %5602 = vst [vmem:[#allocation3 + $0x4e0] sm:$0xff] %v5586
        %5603 = vst [vmem:[#allocation3 + $0x4e8] sm:$0xff] %v5587
        %5604 = vst [vmem:[#allocation3 + $0x4f0] sm:$0xff] %v5588
        %5605 = vst [vmem:[#allocation3 + $0x4f8] sm:$0xff] %v5589
        %v5606 = vld [vmem:[#allocation2 + $0x8] sm:$0xff]
        %v5607 = vld [vmem:[#allocation2 + $0x10] sm:$0xff]
        %v5608 = vld [vmem:[#allocation2 + $0x18] sm:$0xff]
        %v5609 = vld [vmem:[#allocation2 + $0x20] sm:$0xff]
        %v5610 = vld [vmem:[#allocation2 + $0x28] sm:$0xff]
        %v5611 = vld [vmem:[#allocation2 + $0x30] sm:$0xff]
        %v5612 = vld [vmem:[#allocation2 + $0x38] sm:$0xff]
        %v5613 = vld [vmem:[#allocation2 + $0x40] sm:$0xff]
        %v5614 = vld [vmem:[#allocation2 + $0x48] sm:$0xff]
        %5624 = vrot.lane.b32.xlu0 %v5606, 66
        %v5625 = vpop.permute.xlu0 %5624
        %5626 = vrot.lane.b32.xlu0 %v5607, 66
        %v5627 = vpop.permute.xlu0 %5626
        %5628 = vrot.lane.b32.xlu0 %v5608, 66
        %v5629 = vpop.permute.xlu0 %5628
        %5630 = vrot.lane.b32.xlu0 %v5609, 66
        %v5631 = vpop.permute.xlu0 %5630
        %5632 = vrot.lane.b32.xlu0 %v5610, 66
        %v5633 = vpop.permute.xlu0 %5632
        %5634 = vrot.lane.b32.xlu0 %v5611, 66
        %v5635 = vpop.permute.xlu0 %5634
        %5636 = vrot.lane.b32.xlu0 %v5612, 66
        %v5637 = vpop.permute.xlu0 %5636
        %5638 = vrot.lane.b32.xlu0 %v5613, 66
        %v5639 = vpop.permute.xlu0 %5638
        %5640 = vrot.lane.b32.xlu0 %v5614, 66
        %v5641 = vpop.permute.xlu0 %5640
        %v5642 = vsel %vm2464, %v5625, %v5627
        %v5643 = vsel %vm2464, %v5627, %v5629
        %v5644 = vsel %vm2464, %v5629, %v5631
        %v5645 = vsel %vm2464, %v5631, %v5633
        %v5646 = vsel %vm2464, %v5633, %v5635
        %v5647 = vsel %vm2464, %v5635, %v5637
        %v5648 = vsel %vm2464, %v5637, %v5639
        %v5649 = vsel %vm2464, %v5639, %v5641
        %5658 = vst [vmem:[#allocation3 + $0x500] sm:$0xff] %v5642
        %5659 = vst [vmem:[#allocation3 + $0x508] sm:$0xff] %v5643
        %5660 = vst [vmem:[#allocation3 + $0x510] sm:$0xff] %v5644
        %5661 = vst [vmem:[#allocation3 + $0x518] sm:$0xff] %v5645
        %5662 = vst [vmem:[#allocation3 + $0x520] sm:$0xff] %v5646
        %5663 = vst [vmem:[#allocation3 + $0x528] sm:$0xff] %v5647
        %5664 = vst [vmem:[#allocation3 + $0x530] sm:$0xff] %v5648
        %5665 = vst [vmem:[#allocation3 + $0x538] sm:$0xff] %v5649
        %v5666 = vld [vmem:[#allocation2 + $0x8] sm:$0xff]
        %v5667 = vld [vmem:[#allocation2 + $0x10] sm:$0xff]
        %v5668 = vld [vmem:[#allocation2 + $0x18] sm:$0xff]
        %v5669 = vld [vmem:[#allocation2 + $0x20] sm:$0xff]
        %v5670 = vld [vmem:[#allocation2 + $0x28] sm:$0xff]
        %v5671 = vld [vmem:[#allocation2 + $0x30] sm:$0xff]
        %v5672 = vld [vmem:[#allocation2 + $0x38] sm:$0xff]
        %v5673 = vld [vmem:[#allocation2 + $0x40] sm:$0xff]
        %v5674 = vld [vmem:[#allocation2 + $0x48] sm:$0xff]
        %5684 = vrot.lane.b32.xlu0 %v5666, 65
        %v5685 = vpop.permute.xlu0 %5684
        %5686 = vrot.lane.b32.xlu0 %v5667, 65
        %v5687 = vpop.permute.xlu0 %5686
        %5688 = vrot.lane.b32.xlu0 %v5668, 65
        %v5689 = vpop.permute.xlu0 %5688
        %5690 = vrot.lane.b32.xlu0 %v5669, 65
        %v5691 = vpop.permute.xlu0 %5690
        %5692 = vrot.lane.b32.xlu0 %v5670, 65
        %v5693 = vpop.permute.xlu0 %5692
        %5694 = vrot.lane.b32.xlu0 %v5671, 65
        %v5695 = vpop.permute.xlu0 %5694
        %5696 = vrot.lane.b32.xlu0 %v5672, 65
        %v5697 = vpop.permute.xlu0 %5696
        %5698 = vrot.lane.b32.xlu0 %v5673, 65
        %v5699 = vpop.permute.xlu0 %5698
        %5700 = vrot.lane.b32.xlu0 %v5674, 65
        %v5701 = vpop.permute.xlu0 %5700
        %v5702 = vsel %vm2594, %v5685, %v5687
        %v5703 = vsel %vm2594, %v5687, %v5689
        %v5704 = vsel %vm2594, %v5689, %v5691
        %v5705 = vsel %vm2594, %v5691, %v5693
        %v5706 = vsel %vm2594, %v5693, %v5695
        %v5707 = vsel %vm2594, %v5695, %v5697
        %v5708 = vsel %vm2594, %v5697, %v5699
        %v5709 = vsel %vm2594, %v5699, %v5701
        %5718 = vst [vmem:[#allocation3 + $0x540] sm:$0xff] %v5702
        %5719 = vst [vmem:[#allocation3 + $0x548] sm:$0xff] %v5703
        %5720 = vst [vmem:[#allocation3 + $0x550] sm:$0xff] %v5704
        %5721 = vst [vmem:[#allocation3 + $0x558] sm:$0xff] %v5705
        %5722 = vst [vmem:[#allocation3 + $0x560] sm:$0xff] %v5706
        %5723 = vst [vmem:[#allocation3 + $0x568] sm:$0xff] %v5707
        %5724 = vst [vmem:[#allocation3 + $0x570] sm:$0xff] %v5708
        %5725 = vst [vmem:[#allocation3 + $0x578] sm:$0xff] %v5709
        %v5726 = vld [vmem:[#allocation2 + $0x8] sm:$0xff]
        %v5727 = vld [vmem:[#allocation2 + $0x10] sm:$0xff]
        %v5728 = vld [vmem:[#allocation2 + $0x18] sm:$0xff]
        %v5729 = vld [vmem:[#allocation2 + $0x20] sm:$0xff]
        %v5730 = vld [vmem:[#allocation2 + $0x28] sm:$0xff]
        %v5731 = vld [vmem:[#allocation2 + $0x30] sm:$0xff]
        %v5732 = vld [vmem:[#allocation2 + $0x38] sm:$0xff]
        %v5733 = vld [vmem:[#allocation2 + $0x40] sm:$0xff]
        %v5734 = vld [vmem:[#allocation2 + $0x48] sm:$0xff]
        %5744 = vrot.lane.b32.xlu0 %v5726, 64
        %v5745 = vpop.permute.xlu0 %5744
        %5746 = vrot.lane.b32.xlu0 %v5727, 64
        %v5747 = vpop.permute.xlu0 %5746
        %5748 = vrot.lane.b32.xlu0 %v5728, 64
        %v5749 = vpop.permute.xlu0 %5748
        %5750 = vrot.lane.b32.xlu0 %v5729, 64
        %v5751 = vpop.permute.xlu0 %5750
        %5752 = vrot.lane.b32.xlu0 %v5730, 64
        %v5753 = vpop.permute.xlu0 %5752
        %5754 = vrot.lane.b32.xlu0 %v5731, 64
        %v5755 = vpop.permute.xlu0 %5754
        %5756 = vrot.lane.b32.xlu0 %v5732, 64
        %v5757 = vpop.permute.xlu0 %5756
        %5758 = vrot.lane.b32.xlu0 %v5733, 64
        %v5759 = vpop.permute.xlu0 %5758
        %5760 = vrot.lane.b32.xlu0 %v5734, 64
        %v5761 = vpop.permute.xlu0 %5760
        %v5762 = vsel %vm1332, %v5745, %v5747
        %v5763 = vsel %vm1332, %v5747, %v5749
        %v5764 = vsel %vm1332, %v5749, %v5751
        %v5765 = vsel %vm1332, %v5751, %v5753
        %v5766 = vsel %vm1332, %v5753, %v5755
        %v5767 = vsel %vm1332, %v5755, %v5757
        %v5768 = vsel %vm1332, %v5757, %v5759
        %v5769 = vsel %vm1332, %v5759, %v5761
        %5778 = vst [vmem:[#allocation3 + $0x580] sm:$0xff] %v5762
        %5779 = vst [vmem:[#allocation3 + $0x588] sm:$0xff] %v5763
        %5780 = vst [vmem:[#allocation3 + $0x590] sm:$0xff] %v5764
        %5781 = vst [vmem:[#allocation3 + $0x598] sm:$0xff] %v5765
        %5782 = vst [vmem:[#allocation3 + $0x5a0] sm:$0xff] %v5766
        %5783 = vst [vmem:[#allocation3 + $0x5a8] sm:$0xff] %v5767
        %5784 = vst [vmem:[#allocation3 + $0x5b0] sm:$0xff] %v5768
        %5785 = vst [vmem:[#allocation3 + $0x5b8] sm:$0xff] %v5769
        %v5786 = vld [vmem:[#allocation2 + $0x8] sm:$0xff]
        %v5787 = vld [vmem:[#allocation2 + $0x10] sm:$0xff]
        %v5788 = vld [vmem:[#allocation2 + $0x18] sm:$0xff]
        %v5789 = vld [vmem:[#allocation2 + $0x20] sm:$0xff]
        %v5790 = vld [vmem:[#allocation2 + $0x28] sm:$0xff]
        %v5791 = vld [vmem:[#allocation2 + $0x30] sm:$0xff]
        %v5792 = vld [vmem:[#allocation2 + $0x38] sm:$0xff]
        %v5793 = vld [vmem:[#allocation2 + $0x40] sm:$0xff]
        %v5794 = vld [vmem:[#allocation2 + $0x48] sm:$0xff]
        %5804 = vrot.lane.b32.xlu0 %v5786, 63
        %v5805 = vpop.permute.xlu0 %5804
        %5806 = vrot.lane.b32.xlu0 %v5787, 63
        %v5807 = vpop.permute.xlu0 %5806
        %5808 = vrot.lane.b32.xlu0 %v5788, 63
        %v5809 = vpop.permute.xlu0 %5808
        %5810 = vrot.lane.b32.xlu0 %v5789, 63
        %v5811 = vpop.permute.xlu0 %5810
        %5812 = vrot.lane.b32.xlu0 %v5790, 63
        %v5813 = vpop.permute.xlu0 %5812
        %5814 = vrot.lane.b32.xlu0 %v5791, 63
        %v5815 = vpop.permute.xlu0 %5814
        %5816 = vrot.lane.b32.xlu0 %v5792, 63
        %v5817 = vpop.permute.xlu0 %5816
        %5818 = vrot.lane.b32.xlu0 %v5793, 63
        %v5819 = vpop.permute.xlu0 %5818
        %5820 = vrot.lane.b32.xlu0 %v5794, 63
        %v5821 = vpop.permute.xlu0 %5820
        %v5822 = vsel %vm1399, %v5805, %v5807
        %v5823 = vsel %vm1399, %v5807, %v5809
        %v5824 = vsel %vm1399, %v5809, %v5811
        %v5825 = vsel %vm1399, %v5811, %v5813
        %v5826 = vsel %vm1399, %v5813, %v5815
        %v5827 = vsel %vm1399, %v5815, %v5817
        %v5828 = vsel %vm1399, %v5817, %v5819
        %v5829 = vsel %vm1399, %v5819, %v5821
        %5838 = vst [vmem:[#allocation3 + $0x5c0] sm:$0xff] %v5822
        %5839 = vst [vmem:[#allocation3 + $0x5c8] sm:$0xff] %v5823
        %5840 = vst [vmem:[#allocation3 + $0x5d0] sm:$0xff] %v5824
        %5841 = vst [vmem:[#allocation3 + $0x5d8] sm:$0xff] %v5825
        %5842 = vst [vmem:[#allocation3 + $0x5e0] sm:$0xff] %v5826
        %5843 = vst [vmem:[#allocation3 + $0x5e8] sm:$0xff] %v5827
        %5844 = vst [vmem:[#allocation3 + $0x5f0] sm:$0xff] %v5828
        %5845 = vst [vmem:[#allocation3 + $0x5f8] sm:$0xff] %v5829
        %v5846 = vld [vmem:[#allocation2 + $0x8] sm:$0xff]
        %v5847 = vld [vmem:[#allocation2 + $0x10] sm:$0xff]
        %v5848 = vld [vmem:[#allocation2 + $0x18] sm:$0xff]
        %v5849 = vld [vmem:[#allocation2 + $0x20] sm:$0xff]
        %v5850 = vld [vmem:[#allocation2 + $0x28] sm:$0xff]
        %v5851 = vld [vmem:[#allocation2 + $0x30] sm:$0xff]
        %v5852 = vld [vmem:[#allocation2 + $0x38] sm:$0xff]
        %v5853 = vld [vmem:[#allocation2 + $0x40] sm:$0xff]
        %v5854 = vld [vmem:[#allocation2 + $0x48] sm:$0xff]
        %5864 = vrot.lane.b32.xlu0 %v5846, 62
        %v5865 = vpop.permute.xlu0 %5864
        %5866 = vrot.lane.b32.xlu0 %v5847, 62
        %v5867 = vpop.permute.xlu0 %5866
        %5868 = vrot.lane.b32.xlu0 %v5848, 62
        %v5869 = vpop.permute.xlu0 %5868
        %5870 = vrot.lane.b32.xlu0 %v5849, 62
        %v5871 = vpop.permute.xlu0 %5870
        %5872 = vrot.lane.b32.xlu0 %v5850, 62
        %v5873 = vpop.permute.xlu0 %5872
        %5874 = vrot.lane.b32.xlu0 %v5851, 62
        %v5875 = vpop.permute.xlu0 %5874
        %5876 = vrot.lane.b32.xlu0 %v5852, 62
        %v5877 = vpop.permute.xlu0 %5876
        %5878 = vrot.lane.b32.xlu0 %v5853, 62
        %v5879 = vpop.permute.xlu0 %5878
        %5880 = vrot.lane.b32.xlu0 %v5854, 62
        %v5881 = vpop.permute.xlu0 %5880
        %v5882 = vsel %vm1506, %v5865, %v5867
        %v5883 = vsel %vm1506, %v5867, %v5869
        %v5884 = vsel %vm1506, %v5869, %v5871
        %v5885 = vsel %vm1506, %v5871, %v5873
        %v5886 = vsel %vm1506, %v5873, %v5875
        %v5887 = vsel %vm1506, %v5875, %v5877
        %v5888 = vsel %vm1506, %v5877, %v5879
        %v5889 = vsel %vm1506, %v5879, %v5881
        %5898 = vst [vmem:[#allocation3 + $0x600] sm:$0xff] %v5882
        %5899 = vst [vmem:[#allocation3 + $0x608] sm:$0xff] %v5883
        %5900 = vst [vmem:[#allocation3 + $0x610] sm:$0xff] %v5884
        %5901 = vst [vmem:[#allocation3 + $0x618] sm:$0xff] %v5885
        %5902 = vst [vmem:[#allocation3 + $0x620] sm:$0xff] %v5886
        %5903 = vst [vmem:[#allocation3 + $0x628] sm:$0xff] %v5887
        %5904 = vst [vmem:[#allocation3 + $0x630] sm:$0xff] %v5888
        %5905 = vst [vmem:[#allocation3 + $0x638] sm:$0xff] %v5889
        %v5906 = vld [vmem:[#allocation3] sm:$0xff]
        %v5907 = vld [vmem:[#allocation3 + $0x8] sm:$0xff]
        %v5908 = vld [vmem:[#allocation3 + $0x10] sm:$0xff]
        %v5909 = vld [vmem:[#allocation3 + $0x18] sm:$0xff]
        %v5910 = vld [vmem:[#allocation3 + $0x20] sm:$0xff]
        %v5911 = vld [vmem:[#allocation3 + $0x28] sm:$0xff]
        %v5912 = vld [vmem:[#allocation3 + $0x30] sm:$0xff]
        %v5913 = vld [vmem:[#allocation3 + $0x38] sm:$0xff]
        %v5914 = vld [vmem:[#allocation3 + $0x40] sm:$0xff]
        %v5915 = vld [vmem:[#allocation3 + $0x48] sm:$0xff]
        %v5916 = vld [vmem:[#allocation3 + $0x50] sm:$0xff]
        %v5917 = vld [vmem:[#allocation3 + $0x58] sm:$0xff]
        %v5918 = vld [vmem:[#allocation3 + $0x60] sm:$0xff]
        %v5919 = vld [vmem:[#allocation3 + $0x68] sm:$0xff]
        %v5920 = vld [vmem:[#allocation3 + $0x70] sm:$0xff]
        %v5921 = vld [vmem:[#allocation3 + $0x78] sm:$0xff]
        %v5922 = vld [vmem:[#allocation3 + $0x80] sm:$0xff]
        %v5923 = vld [vmem:[#allocation3 + $0x88] sm:$0xff]
        %v5924 = vld [vmem:[#allocation3 + $0x90] sm:$0xff]
        %v5925 = vld [vmem:[#allocation3 + $0x98] sm:$0xff]
        %v5926 = vld [vmem:[#allocation3 + $0xa0] sm:$0xff]
        %v5927 = vld [vmem:[#allocation3 + $0xa8] sm:$0xff]
        %v5928 = vld [vmem:[#allocation3 + $0xb0] sm:$0xff]
        %v5929 = vld [vmem:[#allocation3 + $0xb8] sm:$0xff]
        %v5930 = vld [vmem:[#allocation3 + $0xc0] sm:$0xff]
        %v5931 = vld [vmem:[#allocation3 + $0xc8] sm:$0xff]
        %v5932 = vld [vmem:[#allocation3 + $0xd0] sm:$0xff]
        %v5933 = vld [vmem:[#allocation3 + $0xd8] sm:$0xff]
        %v5934 = vld [vmem:[#allocation3 + $0xe0] sm:$0xff]
        %v5935 = vld [vmem:[#allocation3 + $0xe8] sm:$0xff]
        %v5936 = vld [vmem:[#allocation3 + $0xf0] sm:$0xff]
        %v5937 = vld [vmem:[#allocation3 + $0xf8] sm:$0xff]
        %v5938 = vld [vmem:[#allocation3 + $0x100] sm:$0xff]
        %v5939 = vld [vmem:[#allocation3 + $0x108] sm:$0xff]
        %v5940 = vld [vmem:[#allocation3 + $0x110] sm:$0xff]
        %v5941 = vld [vmem:[#allocation3 + $0x118] sm:$0xff]
        %v5942 = vld [vmem:[#allocation3 + $0x120] sm:$0xff]
        %v5943 = vld [vmem:[#allocation3 + $0x128] sm:$0xff]
        %v5944 = vld [vmem:[#allocation3 + $0x130] sm:$0xff]
        %v5945 = vld [vmem:[#allocation3 + $0x138] sm:$0xff]
        %v5946 = vld [vmem:[#allocation3 + $0x140] sm:$0xff]
        %v5947 = vld [vmem:[#allocation3 + $0x148] sm:$0xff]
        %v5948 = vld [vmem:[#allocation3 + $0x150] sm:$0xff]
        %v5949 = vld [vmem:[#allocation3 + $0x158] sm:$0xff]
        %v5950 = vld [vmem:[#allocation3 + $0x160] sm:$0xff]
        %v5951 = vld [vmem:[#allocation3 + $0x168] sm:$0xff]
        %v5952 = vld [vmem:[#allocation3 + $0x170] sm:$0xff]
        %v5953 = vld [vmem:[#allocation3 + $0x178] sm:$0xff]
        %v5954 = vld [vmem:[#allocation3 + $0x180] sm:$0xff]
        %v5955 = vld [vmem:[#allocation3 + $0x188] sm:$0xff]
        %v5956 = vld [vmem:[#allocation3 + $0x190] sm:$0xff]
        %v5957 = vld [vmem:[#allocation3 + $0x198] sm:$0xff]
        %v5958 = vld [vmem:[#allocation3 + $0x1a0] sm:$0xff]
        %v5959 = vld [vmem:[#allocation3 + $0x1a8] sm:$0xff]
        %v5960 = vld [vmem:[#allocation3 + $0x1b0] sm:$0xff]
        %v5961 = vld [vmem:[#allocation3 + $0x1b8] sm:$0xff]
        %v5962 = vld [vmem:[#allocation3 + $0x1c0] sm:$0xff]
        %v5963 = vld [vmem:[#allocation3 + $0x1c8] sm:$0xff]
        %v5964 = vld [vmem:[#allocation3 + $0x1d0] sm:$0xff]
        %v5965 = vld [vmem:[#allocation3 + $0x1d8] sm:$0xff]
        %v5966 = vld [vmem:[#allocation3 + $0x1e0] sm:$0xff]
        %v5967 = vld [vmem:[#allocation3 + $0x1e8] sm:$0xff]
        %v5968 = vld [vmem:[#allocation3 + $0x1f0] sm:$0xff]
        %v5969 = vld [vmem:[#allocation3 + $0x1f8] sm:$0xff]
        %v5970 = vld [vmem:[#allocation3 + $0x200] sm:$0xff]
        %v5971 = vld [vmem:[#allocation3 + $0x208] sm:$0xff]
        %v5972 = vld [vmem:[#allocation3 + $0x210] sm:$0xff]
        %v5973 = vld [vmem:[#allocation3 + $0x218] sm:$0xff]
        %v5974 = vld [vmem:[#allocation3 + $0x220] sm:$0xff]
        %v5975 = vld [vmem:[#allocation3 + $0x228] sm:$0xff]
        %v5976 = vld [vmem:[#allocation3 + $0x230] sm:$0xff]
        %v5977 = vld [vmem:[#allocation3 + $0x238] sm:$0xff]
        %v5978 = vld [vmem:[#allocation3 + $0x240] sm:$0xff]
        %v5979 = vld [vmem:[#allocation3 + $0x248] sm:$0xff]
        %v5980 = vld [vmem:[#allocation3 + $0x250] sm:$0xff]
        %v5981 = vld [vmem:[#allocation3 + $0x258] sm:$0xff]
        %v5982 = vld [vmem:[#allocation3 + $0x260] sm:$0xff]
        %v5983 = vld [vmem:[#allocation3 + $0x268] sm:$0xff]
        %v5984 = vld [vmem:[#allocation3 + $0x270] sm:$0xff]
        %v5985 = vld [vmem:[#allocation3 + $0x278] sm:$0xff]
        %v5986 = vld [vmem:[#allocation3 + $0x280] sm:$0xff]
        %v5987 = vld [vmem:[#allocation3 + $0x288] sm:$0xff]
        %v5988 = vld [vmem:[#allocation3 + $0x290] sm:$0xff]
        %v5989 = vld [vmem:[#allocation3 + $0x298] sm:$0xff]
        %v5990 = vld [vmem:[#allocation3 + $0x2a0] sm:$0xff]
        %v5991 = vld [vmem:[#allocation3 + $0x2a8] sm:$0xff]
        %v5992 = vld [vmem:[#allocation3 + $0x2b0] sm:$0xff]
        %v5993 = vld [vmem:[#allocation3 + $0x2b8] sm:$0xff]
        %v5994 = vld [vmem:[#allocation3 + $0x2c0] sm:$0xff]
        %v5995 = vld [vmem:[#allocation3 + $0x2c8] sm:$0xff]
        %v5996 = vld [vmem:[#allocation3 + $0x2d0] sm:$0xff]
        %v5997 = vld [vmem:[#allocation3 + $0x2d8] sm:$0xff]
        %v5998 = vld [vmem:[#allocation3 + $0x2e0] sm:$0xff]
        %v5999 = vld [vmem:[#allocation3 + $0x2e8] sm:$0xff]
        %v6000 = vld [vmem:[#allocation3 + $0x2f0] sm:$0xff]
        %v6001 = vld [vmem:[#allocation3 + $0x2f8] sm:$0xff]
        %v6002 = vld [vmem:[#allocation3 + $0x300] sm:$0xff]
        %v6003 = vld [vmem:[#allocation3 + $0x308] sm:$0xff]
        %v6004 = vld [vmem:[#allocation3 + $0x310] sm:$0xff]
        %v6005 = vld [vmem:[#allocation3 + $0x318] sm:$0xff]
        %v6006 = vld [vmem:[#allocation3 + $0x320] sm:$0xff]
        %v6007 = vld [vmem:[#allocation3 + $0x328] sm:$0xff]
        %v6008 = vld [vmem:[#allocation3 + $0x330] sm:$0xff]
        %v6009 = vld [vmem:[#allocation3 + $0x338] sm:$0xff]
        %v6010 = vld [vmem:[#allocation3 + $0x340] sm:$0xff]
        %v6011 = vld [vmem:[#allocation3 + $0x348] sm:$0xff]
        %v6012 = vld [vmem:[#allocation3 + $0x350] sm:$0xff]
        %v6013 = vld [vmem:[#allocation3 + $0x358] sm:$0xff]
        %v6014 = vld [vmem:[#allocation3 + $0x360] sm:$0xff]
        %v6015 = vld [vmem:[#allocation3 + $0x368] sm:$0xff]
        %v6016 = vld [vmem:[#allocation3 + $0x370] sm:$0xff]
        %v6017 = vld [vmem:[#allocation3 + $0x378] sm:$0xff]
        %v6018 = vld [vmem:[#allocation3 + $0x380] sm:$0xff]
        %v6019 = vld [vmem:[#allocation3 + $0x388] sm:$0xff]
        %v6020 = vld [vmem:[#allocation3 + $0x390] sm:$0xff]
        %v6021 = vld [vmem:[#allocation3 + $0x398] sm:$0xff]
        %v6022 = vld [vmem:[#allocation3 + $0x3a0] sm:$0xff]
        %v6023 = vld [vmem:[#allocation3 + $0x3a8] sm:$0xff]
        %v6024 = vld [vmem:[#allocation3 + $0x3b0] sm:$0xff]
        %v6025 = vld [vmem:[#allocation3 + $0x3b8] sm:$0xff]
        %v6026 = vld [vmem:[#allocation3 + $0x3c0] sm:$0xff]
        %v6027 = vld [vmem:[#allocation3 + $0x3c8] sm:$0xff]
        %v6028 = vld [vmem:[#allocation3 + $0x3d0] sm:$0xff]
        %v6029 = vld [vmem:[#allocation3 + $0x3d8] sm:$0xff]
        %v6030 = vld [vmem:[#allocation3 + $0x3e0] sm:$0xff]
        %v6031 = vld [vmem:[#allocation3 + $0x3e8] sm:$0xff]
        %v6032 = vld [vmem:[#allocation3 + $0x3f0] sm:$0xff]
        %v6033 = vld [vmem:[#allocation3 + $0x3f8] sm:$0xff]
        %v6034 = vld [vmem:[#allocation3 + $0x400] sm:$0xff]
        %v6035 = vld [vmem:[#allocation3 + $0x408] sm:$0xff]
        %v6036 = vld [vmem:[#allocation3 + $0x410] sm:$0xff]
        %v6037 = vld [vmem:[#allocation3 + $0x418] sm:$0xff]
        %v6038 = vld [vmem:[#allocation3 + $0x420] sm:$0xff]
        %v6039 = vld [vmem:[#allocation3 + $0x428] sm:$0xff]
        %v6040 = vld [vmem:[#allocation3 + $0x430] sm:$0xff]
        %v6041 = vld [vmem:[#allocation3 + $0x438] sm:$0xff]
        %v6042 = vld [vmem:[#allocation3 + $0x440] sm:$0xff]
        %v6043 = vld [vmem:[#allocation3 + $0x448] sm:$0xff]
        %v6044 = vld [vmem:[#allocation3 + $0x450] sm:$0xff]
        %v6045 = vld [vmem:[#allocation3 + $0x458] sm:$0xff]
        %v6046 = vld [vmem:[#allocation3 + $0x460] sm:$0xff]
        %v6047 = vld [vmem:[#allocation3 + $0x468] sm:$0xff]
        %v6048 = vld [vmem:[#allocation3 + $0x470] sm:$0xff]
        %v6049 = vld [vmem:[#allocation3 + $0x478] sm:$0xff]
        %v6050 = vld [vmem:[#allocation3 + $0x480] sm:$0xff]
        %v6051 = vld [vmem:[#allocation3 + $0x488] sm:$0xff]
        %v6052 = vld [vmem:[#allocation3 + $0x490] sm:$0xff]
        %v6053 = vld [vmem:[#allocation3 + $0x498] sm:$0xff]
        %v6054 = vld [vmem:[#allocation3 + $0x4a0] sm:$0xff]
        %v6055 = vld [vmem:[#allocation3 + $0x4a8] sm:$0xff]
        %v6056 = vld [vmem:[#allocation3 + $0x4b0] sm:$0xff]
        %v6057 = vld [vmem:[#allocation3 + $0x4b8] sm:$0xff]
        %v6058 = vld [vmem:[#allocation3 + $0x4c0] sm:$0xff]
        %v6059 = vld [vmem:[#allocation3 + $0x4c8] sm:$0xff]
        %v6060 = vld [vmem:[#allocation3 + $0x4d0] sm:$0xff]
        %v6061 = vld [vmem:[#allocation3 + $0x4d8] sm:$0xff]
        %v6062 = vld [vmem:[#allocation3 + $0x4e0] sm:$0xff]
        %v6063 = vld [vmem:[#allocation3 + $0x4e8] sm:$0xff]
        %v6064 = vld [vmem:[#allocation3 + $0x4f0] sm:$0xff]
        %v6065 = vld [vmem:[#allocation3 + $0x4f8] sm:$0xff]
        %v6066 = vld [vmem:[#allocation3 + $0x500] sm:$0xff]
        %v6067 = vld [vmem:[#allocation3 + $0x508] sm:$0xff]
        %v6068 = vld [vmem:[#allocation3 + $0x510] sm:$0xff]
        %v6069 = vld [vmem:[#allocation3 + $0x518] sm:$0xff]
        %v6070 = vld [vmem:[#allocation3 + $0x520] sm:$0xff]
        %v6071 = vld [vmem:[#allocation3 + $0x528] sm:$0xff]
        %v6072 = vld [vmem:[#allocation3 + $0x530] sm:$0xff]
        %v6073 = vld [vmem:[#allocation3 + $0x538] sm:$0xff]
        %v6074 = vld [vmem:[#allocation3 + $0x540] sm:$0xff]
        %v6075 = vld [vmem:[#allocation3 + $0x548] sm:$0xff]
        %v6076 = vld [vmem:[#allocation3 + $0x550] sm:$0xff]
        %v6077 = vld [vmem:[#allocation3 + $0x558] sm:$0xff]
        %v6078 = vld [vmem:[#allocation3 + $0x560] sm:$0xff]
        %v6079 = vld [vmem:[#allocation3 + $0x568] sm:$0xff]
        %v6080 = vld [vmem:[#allocation3 + $0x570] sm:$0xff]
        %v6081 = vld [vmem:[#allocation3 + $0x578] sm:$0xff]
        %v6082 = vld [vmem:[#allocation3 + $0x580] sm:$0xff]
        %v6083 = vld [vmem:[#allocation3 + $0x588] sm:$0xff]
        %v6084 = vld [vmem:[#allocation3 + $0x590] sm:$0xff]
        %v6085 = vld [vmem:[#allocation3 + $0x598] sm:$0xff]
        %v6086 = vld [vmem:[#allocation3 + $0x5a0] sm:$0xff]
        %v6087 = vld [vmem:[#allocation3 + $0x5a8] sm:$0xff]
        %v6088 = vld [vmem:[#allocation3 + $0x5b0] sm:$0xff]
        %v6089 = vld [vmem:[#allocation3 + $0x5b8] sm:$0xff]
        %v6090 = vld [vmem:[#allocation3 + $0x5c0] sm:$0xff]
        %v6091 = vld [vmem:[#allocation3 + $0x5c8] sm:$0xff]
        %v6092 = vld [vmem:[#allocation3 + $0x5d0] sm:$0xff]
        %v6093 = vld [vmem:[#allocation3 + $0x5d8] sm:$0xff]
        %v6094 = vld [vmem:[#allocation3 + $0x5e0] sm:$0xff]
        %v6095 = vld [vmem:[#allocation3 + $0x5e8] sm:$0xff]
        %v6096 = vld [vmem:[#allocation3 + $0x5f0] sm:$0xff]
        %v6097 = vld [vmem:[#allocation3 + $0x5f8] sm:$0xff]
        %v6098 = vld [vmem:[#allocation3 + $0x600] sm:$0xff]
        %v6099 = vld [vmem:[#allocation3 + $0x608] sm:$0xff]
        %v6100 = vld [vmem:[#allocation3 + $0x610] sm:$0xff]
        %v6101 = vld [vmem:[#allocation3 + $0x618] sm:$0xff]
        %v6102 = vld [vmem:[#allocation3 + $0x620] sm:$0xff]
        %v6103 = vld [vmem:[#allocation3 + $0x628] sm:$0xff]
        %v6104 = vld [vmem:[#allocation3 + $0x630] sm:$0xff]
        %v6105 = vld [vmem:[#allocation3 + $0x638] sm:$0xff]
        %v6106 = vpack.c.bf16 %v5914, %v5906
        %v6107 = vpack.c.bf16 %v5915, %v5907
        %v6108 = vpack.c.bf16 %v5916, %v5908
        %v6109 = vpack.c.bf16 %v5917, %v5909
        %v6110 = vpack.c.bf16 %v5918, %v5910
        %v6111 = vpack.c.bf16 %v5919, %v5911
        %v6112 = vpack.c.bf16 %v5920, %v5912
        %v6113 = vpack.c.bf16 %v5921, %v5913
        %v6114 = vpack.c.bf16 %v5930, %v5922
        %v6115 = vpack.c.bf16 %v5931, %v5923
        %v6116 = vpack.c.bf16 %v5932, %v5924
        %v6117 = vpack.c.bf16 %v5933, %v5925
        %v6118 = vpack.c.bf16 %v5934, %v5926
        %v6119 = vpack.c.bf16 %v5935, %v5927
        %v6120 = vpack.c.bf16 %v5936, %v5928
        %v6121 = vpack.c.bf16 %v5937, %v5929
        %v6122 = vpack.c.bf16 %v5946, %v5938
        %v6123 = vpack.c.bf16 %v5947, %v5939
        %v6124 = vpack.c.bf16 %v5948, %v5940
        %v6125 = vpack.c.bf16 %v5949, %v5941
        %v6126 = vpack.c.bf16 %v5950, %v5942
        %v6127 = vpack.c.bf16 %v5951, %v5943
        %v6128 = vpack.c.bf16 %v5952, %v5944
        %v6129 = vpack.c.bf16 %v5953, %v5945
        %v6130 = vpack.c.bf16 %v5962, %v5954
        %v6131 = vpack.c.bf16 %v5963, %v5955
        %v6132 = vpack.c.bf16 %v5964, %v5956
        %v6133 = vpack.c.bf16 %v5965, %v5957
        %v6134 = vpack.c.bf16 %v5966, %v5958
        %v6135 = vpack.c.bf16 %v5967, %v5959
        %v6136 = vpack.c.bf16 %v5968, %v5960
        %v6137 = vpack.c.bf16 %v5969, %v5961
        %v6138 = vpack.c.bf16 %v5978, %v5970
        %v6139 = vpack.c.bf16 %v5979, %v5971
        %v6140 = vpack.c.bf16 %v5980, %v5972
        %v6141 = vpack.c.bf16 %v5981, %v5973
        %v6142 = vpack.c.bf16 %v5982, %v5974
        %v6143 = vpack.c.bf16 %v5983, %v5975
        %v6144 = vpack.c.bf16 %v5984, %v5976
        %v6145 = vpack.c.bf16 %v5985, %v5977
        %v6146 = vpack.c.bf16 %v5994, %v5986
        %v6147 = vpack.c.bf16 %v5995, %v5987
        %v6148 = vpack.c.bf16 %v5996, %v5988
        %v6149 = vpack.c.bf16 %v5997, %v5989
        %v6150 = vpack.c.bf16 %v5998, %v5990
        %v6151 = vpack.c.bf16 %v5999, %v5991
        %v6152 = vpack.c.bf16 %v6000, %v5992
        %v6153 = vpack.c.bf16 %v6001, %v5993
        %v6154 = vpack.c.bf16 %v6010, %v6002
        %v6155 = vpack.c.bf16 %v6011, %v6003
        %v6156 = vpack.c.bf16 %v6012, %v6004
        %v6157 = vpack.c.bf16 %v6013, %v6005
        %v6158 = vpack.c.bf16 %v6014, %v6006
        %v6159 = vpack.c.bf16 %v6015, %v6007
        %v6160 = vpack.c.bf16 %v6016, %v6008
        %v6161 = vpack.c.bf16 %v6017, %v6009
        %v6162 = vpack.c.bf16 %v6026, %v6018
        %v6163 = vpack.c.bf16 %v6027, %v6019
        %v6164 = vpack.c.bf16 %v6028, %v6020
        %v6165 = vpack.c.bf16 %v6029, %v6021
        %v6166 = vpack.c.bf16 %v6030, %v6022
        %v6167 = vpack.c.bf16 %v6031, %v6023
        %v6168 = vpack.c.bf16 %v6032, %v6024
        %v6169 = vpack.c.bf16 %v6033, %v6025
        %v6170 = vpack.c.bf16 %v6042, %v6034
        %v6171 = vpack.c.bf16 %v6043, %v6035
        %v6172 = vpack.c.bf16 %v6044, %v6036
        %v6173 = vpack.c.bf16 %v6045, %v6037
        %v6174 = vpack.c.bf16 %v6046, %v6038
        %v6175 = vpack.c.bf16 %v6047, %v6039
        %v6176 = vpack.c.bf16 %v6048, %v6040
        %v6177 = vpack.c.bf16 %v6049, %v6041
        %v6178 = vpack.c.bf16 %v6058, %v6050
        %v6179 = vpack.c.bf16 %v6059, %v6051
        %v6180 = vpack.c.bf16 %v6060, %v6052
        %v6181 = vpack.c.bf16 %v6061, %v6053
        %v6182 = vpack.c.bf16 %v6062, %v6054
        %v6183 = vpack.c.bf16 %v6063, %v6055
        %v6184 = vpack.c.bf16 %v6064, %v6056
        %v6185 = vpack.c.bf16 %v6065, %v6057
        %v6186 = vpack.c.bf16 %v6074, %v6066
        %v6187 = vpack.c.bf16 %v6075, %v6067
        %v6188 = vpack.c.bf16 %v6076, %v6068
        %v6189 = vpack.c.bf16 %v6077, %v6069
        %v6190 = vpack.c.bf16 %v6078, %v6070
        %v6191 = vpack.c.bf16 %v6079, %v6071
        %v6192 = vpack.c.bf16 %v6080, %v6072
        %v6193 = vpack.c.bf16 %v6081, %v6073
        %v6194 = vpack.c.bf16 %v6090, %v6082
        %v6195 = vpack.c.bf16 %v6091, %v6083
        %v6196 = vpack.c.bf16 %v6092, %v6084
        %v6197 = vpack.c.bf16 %v6093, %v6085
        %v6198 = vpack.c.bf16 %v6094, %v6086
        %v6199 = vpack.c.bf16 %v6095, %v6087
        %v6200 = vpack.c.bf16 %v6096, %v6088
        %v6201 = vpack.c.bf16 %v6097, %v6089
        %v6202 = vpack.c.bf16 %v6098, %v6098
        %v6203 = vpack.c.bf16 %v6099, %v6099
        %v6204 = vpack.c.bf16 %v6100, %v6100
        %v6205 = vpack.c.bf16 %v6101, %v6101
        %v6206 = vpack.c.bf16 %v6102, %v6102
        %v6207 = vpack.c.bf16 %v6103, %v6103
        %v6208 = vpack.c.bf16 %v6104, %v6104
        %v6209 = vpack.c.bf16 %v6105, %v6105
        %6211 = vset.pattern.permute.xlu0 0
        %6212 = vperm.xlu0 %6211, %v484
        %v6213 = vpop.permute.xlu0 %6212
        %v6216 = vunpack.c.l.b16 %v483
        %v6217 = vunpack.c.h.b16 %v483
        %v6218 = vpack.c.b16 %v6216, %v6216
        %v6219 = vpack.c.b16 %v6217, %v6217
        %vm6221 = vcmask 588800
        %v6223 = vsel %vm6221, %v6219, 0
        %vm6225 = vcmask 1043456
        %v6227 = vsel %vm6225, %v6202, 0
        %v6230 = vsel %vm6225, %v6203, 0
        %v6233 = vsel %vm6225, %v6204, 0
        %v6236 = vsel %vm6225, %v6205, 0
        %v6239 = vsel %vm6225, %v6206, 0
        %v6242 = vsel %vm6225, %v6207, 0
        %v6245 = vsel %vm6225, %v6208, 0
        %v6248 = vsel %vm6225, %v6209, 0
        %6250 = vmatprep.subr.bf16.mxu0 %v6107
        %6251 = vmatpush1.bf16.msra.mxu0 %v6106
        %6252 = vmatprep.subr.bf16.mxu0 %v6115
        %6253 = vmatpush1.bf16.msra.mxu0 %v6114
        %6254 = vmatprep.subr.bf16.mxu0 %v6123
        %6255 = vmatpush1.bf16.msra.mxu0 %v6122
        %6256 = vmatprep.subr.bf16.mxu0 %v6131
        %6257 = vmatpush1.bf16.msra.mxu0 %v6130
        %6258 = vmatprep.subr.bf16.mxu0 %v6139
        %6259 = vmatpush1.bf16.msra.mxu0 %v6138
        %6260 = vmatprep.subr.bf16.mxu0 %v6147
        %6261 = vmatpush1.bf16.msra.mxu0 %v6146
        %6262 = vmatprep.subr.bf16.mxu0 %v6155
        %6263 = vmatpush1.bf16.msra.mxu0 %v6154
        %6264 = vmatprep.subr.bf16.mxu0 %v6163
        %6265 = vmatpush1.bf16.msra.mxu0 %v6162
        %6266 = vmatprep.subr.bf16.mxu0 %v6171
        %6267 = vmatpush1.bf16.msra.mxu0 %v6170
        %6268 = vmatprep.subr.bf16.mxu0 %v6179
        %6269 = vmatpush1.bf16.msra.mxu0 %v6178
        %6270 = vmatprep.subr.bf16.mxu0 %v6187
        %6271 = vmatpush1.bf16.msra.mxu0 %v6186
        %6272 = vmatprep.subr.bf16.mxu0 %v6195
        %6273 = vmatpush1.bf16.msra.mxu0 %v6194
        %6274 = vmatprep.subr.bf16.mxu0 %v6230
        %6275 = vmatpush1.bf16.msra.mxu0 %v6227
        %6276 = vmatprep.subr.bf16.mxu0 0
        %6277 = vmatpush1.bf16.msra.mxu0 0
        %6278 = vmatprep.subr.bf16.mxu0 0
        %6279 = vmatpush1.bf16.msra.mxu0 0
        %6280 = vmatprep.subr.bf16.mxu0 0
        %6281 = vmatpush1.bf16.msra.mxu0 0
        %6282 = vmatprep.mubr.bf16.mxu0 %v6223
        %6283 = vmatmul.mubr.bf16.gmra.mrb[0].mxu0 %v6218
        %v6284 = vpop.f32.mrb[0].mxu0
        %v6285 = vadd.f32 %v6213, %v6284
        %v6286 = vpop.f32.mrb[0].mxu0
        %v6287 = vadd.f32 %v6213, %v6286
        %v6288 = vpop.f32.mrb[0].mxu0
        %v6289 = vpop.f32.mrb[0].mxu0
        %6290 = vdwg.mxu0
        %6291 = vmatprep.subr.bf16.mxu0 %v6109
        %6292 = vmatpush1.bf16.msra.mxu0 %v6108
        %6293 = vmatprep.subr.bf16.mxu0 %v6117
        %6294 = vmatpush1.bf16.msra.mxu0 %v6116
        %6295 = vmatprep.subr.bf16.mxu0 %v6125
        %6296 = vmatpush1.bf16.msra.mxu0 %v6124
        %6297 = vmatprep.subr.bf16.mxu0 %v6133
        %6298 = vmatpush1.bf16.msra.mxu0 %v6132
        %6299 = vmatprep.subr.bf16.mxu0 %v6141
        %6300 = vmatpush1.bf16.msra.mxu0 %v6140
        %6301 = vmatprep.subr.bf16.mxu0 %v6149
        %6302 = vmatpush1.bf16.msra.mxu0 %v6148
        %6303 = vmatprep.subr.bf16.mxu0 %v6157
        %6304 = vmatpush1.bf16.msra.mxu0 %v6156
        %6305 = vmatprep.subr.bf16.mxu0 %v6165
        %6306 = vmatpush1.bf16.msra.mxu0 %v6164
        %6307 = vmatprep.subr.bf16.mxu0 %v6173
        %6308 = vmatpush1.bf16.msra.mxu0 %v6172
        %6309 = vmatprep.subr.bf16.mxu0 %v6181
        %6310 = vmatpush1.bf16.msra.mxu0 %v6180
        %6311 = vmatprep.subr.bf16.mxu0 %v6189
        %6312 = vmatpush1.bf16.msra.mxu0 %v6188
        %6313 = vmatprep.subr.bf16.mxu0 %v6197
        %6314 = vmatpush1.bf16.msra.mxu0 %v6196
        %6315 = vmatprep.subr.bf16.mxu0 %v6236
        %6316 = vmatpush1.bf16.msra.mxu0 %v6233
        %6317 = vmatprep.subr.bf16.mxu0 0
        %6318 = vmatpush1.bf16.msra.mxu0 0
        %6319 = vmatprep.subr.bf16.mxu0 0
        %6320 = vmatpush1.bf16.msra.mxu0 0
        %6321 = vmatprep.subr.bf16.mxu0 0
        %6322 = vmatpush1.bf16.msra.mxu0 0
        %6323 = vmatprep.mubr.bf16.mxu0 %v6223
        %6324 = vmatmul.mubr.bf16.gmra.mrb[0].mxu0 %v6218
        %v6325 = vpop.f32.mrb[0].mxu0
        %v6326 = vadd.f32 %v6213, %v6325
        %v6327 = vpop.f32.mrb[0].mxu0
        %v6328 = vadd.f32 %v6213, %v6327
        %v6329 = vpop.f32.mrb[0].mxu0
        %v6330 = vpop.f32.mrb[0].mxu0
        %6331 = vdwg.mxu0
        %6332 = vmatprep.subr.bf16.mxu0 %v6111
        %6333 = vmatpush1.bf16.msra.mxu0 %v6110
        %6334 = vmatprep.subr.bf16.mxu0 %v6119
        %6335 = vmatpush1.bf16.msra.mxu0 %v6118
        %6336 = vmatprep.subr.bf16.mxu0 %v6127
        %6337 = vmatpush1.bf16.msra.mxu0 %v6126
        %6338 = vmatprep.subr.bf16.mxu0 %v6135
        %6339 = vmatpush1.bf16.msra.mxu0 %v6134
        %6340 = vmatprep.subr.bf16.mxu0 %v6143
        %6341 = vmatpush1.bf16.msra.mxu0 %v6142
        %6342 = vmatprep.subr.bf16.mxu0 %v6151
        %6343 = vmatpush1.bf16.msra.mxu0 %v6150
        %6344 = vmatprep.subr.bf16.mxu0 %v6159
        %6345 = vmatpush1.bf16.msra.mxu0 %v6158
        %6346 = vmatprep.subr.bf16.mxu0 %v6167
        %6347 = vmatpush1.bf16.msra.mxu0 %v6166
        %6348 = vmatprep.subr.bf16.mxu0 %v6175
        %6349 = vmatpush1.bf16.msra.mxu0 %v6174
        %6350 = vmatprep.subr.bf16.mxu0 %v6183
        %6351 = vmatpush1.bf16.msra.mxu0 %v6182
        %6352 = vmatprep.subr.bf16.mxu0 %v6191
        %6353 = vmatpush1.bf16.msra.mxu0 %v6190
        %6354 = vmatprep.subr.bf16.mxu0 %v6199
        %6355 = vmatpush1.bf16.msra.mxu0 %v6198
        %6356 = vmatprep.subr.bf16.mxu0 %v6242
        %6357 = vmatpush1.bf16.msra.mxu0 %v6239
        %6358 = vmatprep.subr.bf16.mxu0 0
        %6359 = vmatpush1.bf16.msra.mxu0 0
        %6360 = vmatprep.subr.bf16.mxu0 0
        %6361 = vmatpush1.bf16.msra.mxu0 0
        %6362 = vmatprep.subr.bf16.mxu0 0
        %6363 = vmatpush1.bf16.msra.mxu0 0
        %6364 = vmatprep.mubr.bf16.mxu0 %v6223
        %6365 = vmatmul.mubr.bf16.gmra.mrb[0].mxu0 %v6218
        %v6366 = vpop.f32.mrb[0].mxu0
        %v6367 = vadd.f32 %v6213, %v6366
        %v6368 = vpop.f32.mrb[0].mxu0
        %v6369 = vadd.f32 %v6213, %v6368
        %v6370 = vpop.f32.mrb[0].mxu0
        %v6371 = vpop.f32.mrb[0].mxu0
        %6372 = vdwg.mxu0
        %6373 = vmatprep.subr.bf16.mxu0 %v6113
        %6374 = vmatpush1.bf16.msra.mxu0 %v6112
        %6375 = vmatprep.subr.bf16.mxu0 %v6121
        %6376 = vmatpush1.bf16.msra.mxu0 %v6120
        %6377 = vmatprep.subr.bf16.mxu0 %v6129
        %6378 = vmatpush1.bf16.msra.mxu0 %v6128
        %6379 = vmatprep.subr.bf16.mxu0 %v6137
        %6380 = vmatpush1.bf16.msra.mxu0 %v6136
        %6381 = vmatprep.subr.bf16.mxu0 %v6145
        %6382 = vmatpush1.bf16.msra.mxu0 %v6144
        %6383 = vmatprep.subr.bf16.mxu0 %v6153
        %6384 = vmatpush1.bf16.msra.mxu0 %v6152
        %6385 = vmatprep.subr.bf16.mxu0 %v6161
        %6386 = vmatpush1.bf16.msra.mxu0 %v6160
        %6387 = vmatprep.subr.bf16.mxu0 %v6169
        %6388 = vmatpush1.bf16.msra.mxu0 %v6168
        %6389 = vmatprep.subr.bf16.mxu0 %v6177
        %6390 = vmatpush1.bf16.msra.mxu0 %v6176
        %6391 = vmatprep.subr.bf16.mxu0 %v6185
        %6392 = vmatpush1.bf16.msra.mxu0 %v6184
        %6393 = vmatprep.subr.bf16.mxu0 %v6193
        %6394 = vmatpush1.bf16.msra.mxu0 %v6192
        %6395 = vmatprep.subr.bf16.mxu0 %v6201
        %6396 = vmatpush1.bf16.msra.mxu0 %v6200
        %6397 = vmatprep.subr.bf16.mxu0 %v6248
        %6398 = vmatpush1.bf16.msra.mxu0 %v6245
        %6399 = vmatprep.subr.bf16.mxu0 0
        %6400 = vmatpush1.bf16.msra.mxu0 0
        %6401 = vmatprep.subr.bf16.mxu0 0
        %6402 = vmatpush1.bf16.msra.mxu0 0
        %6403 = vmatprep.subr.bf16.mxu0 0
        %6404 = vmatpush1.bf16.msra.mxu0 0
        %6405 = vmatprep.mubr.bf16.mxu0 %v6223
        %6406 = vmatmul.mubr.bf16.gmra.mrb[0].mxu0 %v6218
        %v6407 = vpop.f32.mrb[0].mxu0
        %v6408 = vadd.f32 %v6213, %v6407
        %v6409 = vpop.f32.mrb[0].mxu0
        %v6410 = vadd.f32 %v6213, %v6409
        %v6411 = vpop.f32.mrb[0].mxu0
        %v6412 = vpop.f32.mrb[0].mxu0
        %6413 = vdwg.mxu0
        %v6414 = vmax.f32 %v6285, 0.0
        %v6415 = vmax.f32 %v6287, 0.0
        %v6416 = vmax.f32 %v6326, 0.0
        %v6417 = vmax.f32 %v6328, 0.0
        %v6418 = vmax.f32 %v6367, 0.0
        %v6419 = vmax.f32 %v6369, 0.0
        %v6420 = vmax.f32 %v6408, 0.0
        %v6421 = vmax.f32 %v6410, 0.0
        %v6422 = vmul.f32 %v6414, %v2367
        %v6423 = vmul.f32 %v6415, %v2371
        %v6424 = vmul.f32 %v6416, %v2375
        %v6425 = vmul.f32 %v6417, %v2379
        %v6426 = vmul.f32 %v6418, %v2383
        %v6427 = vmul.f32 %v6419, %v2387
        %v6428 = vmul.f32 %v6420, %v2391
        %v6429 = vmul.f32 %v6421, %v2395
        %6430 = vst [vmem:[#allocation2 + $0x8] sm:$0xff] %v6422
        %6431 = vst [vmem:[#allocation2 + $0x10] sm:$0xff] %v6423
        %6432 = vst [vmem:[#allocation2 + $0x18] sm:$0xff] %v6424
        %6433 = vst [vmem:[#allocation2 + $0x20] sm:$0xff] %v6425
        %6434 = vst [vmem:[#allocation2 + $0x28] sm:$0xff] %v6426
        %6435 = vst [vmem:[#allocation2 + $0x30] sm:$0xff] %v6427
        %6436 = vst [vmem:[#allocation2 + $0x38] sm:$0xff] %v6428
        %6437 = vst [vmem:[#allocation2 + $0x40] sm:$0xff] %v6429
        %v6438 = vld [vmem:[#allocation2 + $0x8] sm:$0xff]
        %v6439 = vld [vmem:[#allocation2 + $0x10] sm:$0xff]
        %v6440 = vld [vmem:[#allocation2 + $0x18] sm:$0xff]
        %v6441 = vld [vmem:[#allocation2 + $0x20] sm:$0xff]
        %v6442 = vld [vmem:[#allocation2 + $0x28] sm:$0xff]
        %v6443 = vld [vmem:[#allocation2 + $0x30] sm:$0xff]
        %v6444 = vld [vmem:[#allocation2 + $0x38] sm:$0xff]
        %v6445 = vld [vmem:[#allocation2 + $0x40] sm:$0xff]
        %v6446 = vld [vmem:[#allocation2 + $0x8] sm:$0xff]
        %v6447 = vld [vmem:[#allocation2 + $0x10] sm:$0xff]
        %v6448 = vld [vmem:[#allocation2 + $0x18] sm:$0xff]
        %v6449 = vld [vmem:[#allocation2 + $0x20] sm:$0xff]
        %v6450 = vld [vmem:[#allocation2 + $0x28] sm:$0xff]
        %v6451 = vld [vmem:[#allocation2 + $0x30] sm:$0xff]
        %v6452 = vld [vmem:[#allocation2 + $0x38] sm:$0xff]
        %v6453 = vld [vmem:[#allocation2 + $0x40] sm:$0xff]
        %v6454 = vld [vmem:[#allocation2 + $0x48] sm:$0xff]
        %6464 = vrot.lane.b32.xlu0 %v6446, 127
        %v6465 = vpop.permute.xlu0 %6464
        %6466 = vrot.lane.b32.xlu0 %v6447, 127
        %v6467 = vpop.permute.xlu0 %6466
        %6468 = vrot.lane.b32.xlu0 %v6448, 127
        %v6469 = vpop.permute.xlu0 %6468
        %6470 = vrot.lane.b32.xlu0 %v6449, 127
        %v6471 = vpop.permute.xlu0 %6470
        %6472 = vrot.lane.b32.xlu0 %v6450, 127
        %v6473 = vpop.permute.xlu0 %6472
        %6474 = vrot.lane.b32.xlu0 %v6451, 127
        %v6475 = vpop.permute.xlu0 %6474
        %6476 = vrot.lane.b32.xlu0 %v6452, 127
        %v6477 = vpop.permute.xlu0 %6476
        %6478 = vrot.lane.b32.xlu0 %v6453, 127
        %v6479 = vpop.permute.xlu0 %6478
        %6480 = vrot.lane.b32.xlu0 %v6454, 127
        %v6481 = vpop.permute.xlu0 %6480
        %v6482 = vsel %vm729, %v6465, %v6467
        %v6483 = vsel %vm729, %v6467, %v6469
        %v6484 = vsel %vm729, %v6469, %v6471
        %v6485 = vsel %vm729, %v6471, %v6473
        %v6486 = vsel %vm729, %v6473, %v6475
        %v6487 = vsel %vm729, %v6475, %v6477
        %v6488 = vsel %vm729, %v6477, %v6479
        %v6489 = vsel %vm729, %v6479, %v6481
        %v6498 = vmax.f32 %v6438, %v6482
        %v6499 = vmax.f32 %v6439, %v6483
        %v6500 = vmax.f32 %v6440, %v6484
        %v6501 = vmax.f32 %v6441, %v6485
        %v6502 = vmax.f32 %v6442, %v6486
        %v6503 = vmax.f32 %v6443, %v6487
        %v6504 = vmax.f32 %v6444, %v6488
        %v6505 = vmax.f32 %v6445, %v6489
        %6506 = vrot.lane.b32.xlu0 %v6446, 126
        %v6507 = vpop.permute.xlu0 %6506
        %6508 = vrot.lane.b32.xlu0 %v6447, 126
        %v6509 = vpop.permute.xlu0 %6508
        %6510 = vrot.lane.b32.xlu0 %v6448, 126
        %v6511 = vpop.permute.xlu0 %6510
        %6512 = vrot.lane.b32.xlu0 %v6449, 126
        %v6513 = vpop.permute.xlu0 %6512
        %6514 = vrot.lane.b32.xlu0 %v6450, 126
        %v6515 = vpop.permute.xlu0 %6514
        %6516 = vrot.lane.b32.xlu0 %v6451, 126
        %v6517 = vpop.permute.xlu0 %6516
        %6518 = vrot.lane.b32.xlu0 %v6452, 126
        %v6519 = vpop.permute.xlu0 %6518
        %6520 = vrot.lane.b32.xlu0 %v6453, 126
        %v6521 = vpop.permute.xlu0 %6520
        %6522 = vrot.lane.b32.xlu0 %v6454, 126
        %v6523 = vpop.permute.xlu0 %6522
        %v6524 = vsel %vm796, %v6507, %v6509
        %v6525 = vsel %vm796, %v6509, %v6511
        %v6526 = vsel %vm796, %v6511, %v6513
        %v6527 = vsel %vm796, %v6513, %v6515
        %v6528 = vsel %vm796, %v6515, %v6517
        %v6529 = vsel %vm796, %v6517, %v6519
        %v6530 = vsel %vm796, %v6519, %v6521
        %v6531 = vsel %vm796, %v6521, %v6523
        %v6540 = vmax.f32 %v6498, %v6524
        %v6541 = vmax.f32 %v6499, %v6525
        %v6542 = vmax.f32 %v6500, %v6526
        %v6543 = vmax.f32 %v6501, %v6527
        %v6544 = vmax.f32 %v6502, %v6528
        %v6545 = vmax.f32 %v6503, %v6529
        %v6546 = vmax.f32 %v6504, %v6530
        %v6547 = vmax.f32 %v6505, %v6531
        %6548 = vrot.lane.b32.xlu0 %v6446, 125
        %v6549 = vpop.permute.xlu0 %6548
        %6550 = vrot.lane.b32.xlu0 %v6447, 125
        %v6551 = vpop.permute.xlu0 %6550
        %6552 = vrot.lane.b32.xlu0 %v6448, 125
        %v6553 = vpop.permute.xlu0 %6552
        %6554 = vrot.lane.b32.xlu0 %v6449, 125
        %v6555 = vpop.permute.xlu0 %6554
        %6556 = vrot.lane.b32.xlu0 %v6450, 125
        %v6557 = vpop.permute.xlu0 %6556
        %6558 = vrot.lane.b32.xlu0 %v6451, 125
        %v6559 = vpop.permute.xlu0 %6558
        %6560 = vrot.lane.b32.xlu0 %v6452, 125
        %v6561 = vpop.permute.xlu0 %6560
        %6562 = vrot.lane.b32.xlu0 %v6453, 125
        %v6563 = vpop.permute.xlu0 %6562
        %6564 = vrot.lane.b32.xlu0 %v6454, 125
        %v6565 = vpop.permute.xlu0 %6564
        %v6566 = vsel %vm863, %v6549, %v6551
        %v6567 = vsel %vm863, %v6551, %v6553
        %v6568 = vsel %vm863, %v6553, %v6555
        %v6569 = vsel %vm863, %v6555, %v6557
        %v6570 = vsel %vm863, %v6557, %v6559
        %v6571 = vsel %vm863, %v6559, %v6561
        %v6572 = vsel %vm863, %v6561, %v6563
        %v6573 = vsel %vm863, %v6563, %v6565
        %v6582 = vmax.f32 %v6540, %v6566
        %v6583 = vmax.f32 %v6541, %v6567
        %v6584 = vmax.f32 %v6542, %v6568
        %v6585 = vmax.f32 %v6543, %v6569
        %v6586 = vmax.f32 %v6544, %v6570
        %v6587 = vmax.f32 %v6545, %v6571
        %v6588 = vmax.f32 %v6546, %v6572
        %v6589 = vmax.f32 %v6547, %v6573
        %6590 = vrot.lane.b32.xlu0 %v6446, 96
        %v6591 = vpop.permute.xlu0 %6590
        %6592 = vrot.lane.b32.xlu0 %v6447, 96
        %v6593 = vpop.permute.xlu0 %6592
        %6594 = vrot.lane.b32.xlu0 %v6448, 96
        %v6595 = vpop.permute.xlu0 %6594
        %6596 = vrot.lane.b32.xlu0 %v6449, 96
        %v6597 = vpop.permute.xlu0 %6596
        %6598 = vrot.lane.b32.xlu0 %v6450, 96
        %v6599 = vpop.permute.xlu0 %6598
        %6600 = vrot.lane.b32.xlu0 %v6451, 96
        %v6601 = vpop.permute.xlu0 %6600
        %6602 = vrot.lane.b32.xlu0 %v6452, 96
        %v6603 = vpop.permute.xlu0 %6602
        %6604 = vrot.lane.b32.xlu0 %v6453, 96
        %v6605 = vpop.permute.xlu0 %6604
        %6606 = vrot.lane.b32.xlu0 %v6454, 96
        %v6607 = vpop.permute.xlu0 %6606
        %v6608 = vsel %vm997, %v6591, %v6593
        %v6609 = vsel %vm997, %v6593, %v6595
        %v6610 = vsel %vm997, %v6595, %v6597
        %v6611 = vsel %vm997, %v6597, %v6599
        %v6612 = vsel %vm997, %v6599, %v6601
        %v6613 = vsel %vm997, %v6601, %v6603
        %v6614 = vsel %vm997, %v6603, %v6605
        %v6615 = vsel %vm997, %v6605, %v6607
        %v6624 = vmax.f32 %v6582, %v6608
        %v6625 = vmax.f32 %v6583, %v6609
        %v6626 = vmax.f32 %v6584, %v6610
        %v6627 = vmax.f32 %v6585, %v6611
        %v6628 = vmax.f32 %v6586, %v6612
        %v6629 = vmax.f32 %v6587, %v6613
        %v6630 = vmax.f32 %v6588, %v6614
        %v6631 = vmax.f32 %v6589, %v6615
        %6632 = vrot.lane.b32.xlu0 %v6446, 95
        %v6633 = vpop.permute.xlu0 %6632
        %6634 = vrot.lane.b32.xlu0 %v6447, 95
        %v6635 = vpop.permute.xlu0 %6634
        %6636 = vrot.lane.b32.xlu0 %v6448, 95
        %v6637 = vpop.permute.xlu0 %6636
        %6638 = vrot.lane.b32.xlu0 %v6449, 95
        %v6639 = vpop.permute.xlu0 %6638
        %6640 = vrot.lane.b32.xlu0 %v6450, 95
        %v6641 = vpop.permute.xlu0 %6640
        %6642 = vrot.lane.b32.xlu0 %v6451, 95
        %v6643 = vpop.permute.xlu0 %6642
        %6644 = vrot.lane.b32.xlu0 %v6452, 95
        %v6645 = vpop.permute.xlu0 %6644
        %6646 = vrot.lane.b32.xlu0 %v6453, 95
        %v6647 = vpop.permute.xlu0 %6646
        %6648 = vrot.lane.b32.xlu0 %v6454, 95
        %v6649 = vpop.permute.xlu0 %6648
        %v6650 = vsel %vm1064, %v6633, %v6635
        %v6651 = vsel %vm1064, %v6635, %v6637
        %v6652 = vsel %vm1064, %v6637, %v6639
        %v6653 = vsel %vm1064, %v6639, %v6641
        %v6654 = vsel %vm1064, %v6641, %v6643
        %v6655 = vsel %vm1064, %v6643, %v6645
        %v6656 = vsel %vm1064, %v6645, %v6647
        %v6657 = vsel %vm1064, %v6647, %v6649
        %v6666 = vmax.f32 %v6624, %v6650
        %v6667 = vmax.f32 %v6625, %v6651
        %v6668 = vmax.f32 %v6626, %v6652
        %v6669 = vmax.f32 %v6627, %v6653
        %v6670 = vmax.f32 %v6628, %v6654
        %v6671 = vmax.f32 %v6629, %v6655
        %v6672 = vmax.f32 %v6630, %v6656
        %v6673 = vmax.f32 %v6631, %v6657
        %6674 = vrot.lane.b32.xlu0 %v6446, 94
        %v6675 = vpop.permute.xlu0 %6674
        %6676 = vrot.lane.b32.xlu0 %v6447, 94
        %v6677 = vpop.permute.xlu0 %6676
        %6678 = vrot.lane.b32.xlu0 %v6448, 94
        %v6679 = vpop.permute.xlu0 %6678
        %6680 = vrot.lane.b32.xlu0 %v6449, 94
        %v6681 = vpop.permute.xlu0 %6680
        %6682 = vrot.lane.b32.xlu0 %v6450, 94
        %v6683 = vpop.permute.xlu0 %6682
        %6684 = vrot.lane.b32.xlu0 %v6451, 94
        %v6685 = vpop.permute.xlu0 %6684
        %6686 = vrot.lane.b32.xlu0 %v6452, 94
        %v6687 = vpop.permute.xlu0 %6686
        %6688 = vrot.lane.b32.xlu0 %v6453, 94
        %v6689 = vpop.permute.xlu0 %6688
        %6690 = vrot.lane.b32.xlu0 %v6454, 94
        %v6691 = vpop.permute.xlu0 %6690
        %v6692 = vsel %vm1131, %v6675, %v6677
        %v6693 = vsel %vm1131, %v6677, %v6679
        %v6694 = vsel %vm1131, %v6679, %v6681
        %v6695 = vsel %vm1131, %v6681, %v6683
        %v6696 = vsel %vm1131, %v6683, %v6685
        %v6697 = vsel %vm1131, %v6685, %v6687
        %v6698 = vsel %vm1131, %v6687, %v6689
        %v6699 = vsel %vm1131, %v6689, %v6691
        %v6708 = vmax.f32 %v6666, %v6692
        %v6709 = vmax.f32 %v6667, %v6693
        %v6710 = vmax.f32 %v6668, %v6694
        %v6711 = vmax.f32 %v6669, %v6695
        %v6712 = vmax.f32 %v6670, %v6696
        %v6713 = vmax.f32 %v6671, %v6697
        %v6714 = vmax.f32 %v6672, %v6698
        %v6715 = vmax.f32 %v6673, %v6699
        %6716 = vrot.lane.b32.xlu0 %v6446, 93
        %v6717 = vpop.permute.xlu0 %6716
        %6718 = vrot.lane.b32.xlu0 %v6447, 93
        %v6719 = vpop.permute.xlu0 %6718
        %6720 = vrot.lane.b32.xlu0 %v6448, 93
        %v6721 = vpop.permute.xlu0 %6720
        %6722 = vrot.lane.b32.xlu0 %v6449, 93
        %v6723 = vpop.permute.xlu0 %6722
        %6724 = vrot.lane.b32.xlu0 %v6450, 93
        %v6725 = vpop.permute.xlu0 %6724
        %6726 = vrot.lane.b32.xlu0 %v6451, 93
        %v6727 = vpop.permute.xlu0 %6726
        %6728 = vrot.lane.b32.xlu0 %v6452, 93
        %v6729 = vpop.permute.xlu0 %6728
        %6730 = vrot.lane.b32.xlu0 %v6453, 93
        %v6731 = vpop.permute.xlu0 %6730
        %6732 = vrot.lane.b32.xlu0 %v6454, 93
        %v6733 = vpop.permute.xlu0 %6732
        %v6734 = vsel %vm1198, %v6717, %v6719
        %v6735 = vsel %vm1198, %v6719, %v6721
        %v6736 = vsel %vm1198, %v6721, %v6723
        %v6737 = vsel %vm1198, %v6723, %v6725
        %v6738 = vsel %vm1198, %v6725, %v6727
        %v6739 = vsel %vm1198, %v6727, %v6729
        %v6740 = vsel %vm1198, %v6729, %v6731
        %v6741 = vsel %vm1198, %v6731, %v6733
        %v6750 = vmax.f32 %v6708, %v6734
        %v6751 = vmax.f32 %v6709, %v6735
        %v6752 = vmax.f32 %v6710, %v6736
        %v6753 = vmax.f32 %v6711, %v6737
        %v6754 = vmax.f32 %v6712, %v6738
        %v6755 = vmax.f32 %v6713, %v6739
        %v6756 = vmax.f32 %v6714, %v6740
        %v6757 = vmax.f32 %v6715, %v6741
        %6758 = vrot.lane.b32.xlu0 %v6446, 64
        %v6759 = vpop.permute.xlu0 %6758
        %6760 = vrot.lane.b32.xlu0 %v6447, 64
        %v6761 = vpop.permute.xlu0 %6760
        %6762 = vrot.lane.b32.xlu0 %v6448, 64
        %v6763 = vpop.permute.xlu0 %6762
        %6764 = vrot.lane.b32.xlu0 %v6449, 64
        %v6765 = vpop.permute.xlu0 %6764
        %6766 = vrot.lane.b32.xlu0 %v6450, 64
        %v6767 = vpop.permute.xlu0 %6766
        %6768 = vrot.lane.b32.xlu0 %v6451, 64
        %v6769 = vpop.permute.xlu0 %6768
        %6770 = vrot.lane.b32.xlu0 %v6452, 64
        %v6771 = vpop.permute.xlu0 %6770
        %6772 = vrot.lane.b32.xlu0 %v6453, 64
        %v6773 = vpop.permute.xlu0 %6772
        %6774 = vrot.lane.b32.xlu0 %v6454, 64
        %v6775 = vpop.permute.xlu0 %6774
        %v6776 = vsel %vm1332, %v6759, %v6761
        %v6777 = vsel %vm1332, %v6761, %v6763
        %v6778 = vsel %vm1332, %v6763, %v6765
        %v6779 = vsel %vm1332, %v6765, %v6767
        %v6780 = vsel %vm1332, %v6767, %v6769
        %v6781 = vsel %vm1332, %v6769, %v6771
        %v6782 = vsel %vm1332, %v6771, %v6773
        %v6783 = vsel %vm1332, %v6773, %v6775
        %v6792 = vmax.f32 %v6750, %v6776
        %v6793 = vmax.f32 %v6751, %v6777
        %v6794 = vmax.f32 %v6752, %v6778
        %v6795 = vmax.f32 %v6753, %v6779
        %v6796 = vmax.f32 %v6754, %v6780
        %v6797 = vmax.f32 %v6755, %v6781
        %v6798 = vmax.f32 %v6756, %v6782
        %v6799 = vmax.f32 %v6757, %v6783
        %6800 = vrot.lane.b32.xlu0 %v6446, 63
        %v6801 = vpop.permute.xlu0 %6800
        %6802 = vrot.lane.b32.xlu0 %v6447, 63
        %v6803 = vpop.permute.xlu0 %6802
        %6804 = vrot.lane.b32.xlu0 %v6448, 63
        %v6805 = vpop.permute.xlu0 %6804
        %6806 = vrot.lane.b32.xlu0 %v6449, 63
        %v6807 = vpop.permute.xlu0 %6806
        %6808 = vrot.lane.b32.xlu0 %v6450, 63
        %v6809 = vpop.permute.xlu0 %6808
        %6810 = vrot.lane.b32.xlu0 %v6451, 63
        %v6811 = vpop.permute.xlu0 %6810
        %6812 = vrot.lane.b32.xlu0 %v6452, 63
        %v6813 = vpop.permute.xlu0 %6812
        %6814 = vrot.lane.b32.xlu0 %v6453, 63
        %v6815 = vpop.permute.xlu0 %6814
        %6816 = vrot.lane.b32.xlu0 %v6454, 63
        %v6817 = vpop.permute.xlu0 %6816
        %v6818 = vsel %vm1399, %v6801, %v6803
        %v6819 = vsel %vm1399, %v6803, %v6805
        %v6820 = vsel %vm1399, %v6805, %v6807
        %v6821 = vsel %vm1399, %v6807, %v6809
        %v6822 = vsel %vm1399, %v6809, %v6811
        %v6823 = vsel %vm1399, %v6811, %v6813
        %v6824 = vsel %vm1399, %v6813, %v6815
        %v6825 = vsel %vm1399, %v6815, %v6817
        %v6834 = vmax.f32 %v6792, %v6818
        %v6835 = vmax.f32 %v6793, %v6819
        %v6836 = vmax.f32 %v6794, %v6820
        %v6837 = vmax.f32 %v6795, %v6821
        %v6838 = vmax.f32 %v6796, %v6822
        %v6839 = vmax.f32 %v6797, %v6823
        %v6840 = vmax.f32 %v6798, %v6824
        %v6841 = vmax.f32 %v6799, %v6825
        %6842 = vrot.lane.b32.xlu0 %v6446, 62
        %v6843 = vpop.permute.xlu0 %6842
        %6844 = vrot.lane.b32.xlu0 %v6447, 62
        %v6845 = vpop.permute.xlu0 %6844
        %6846 = vrot.lane.b32.xlu0 %v6448, 62
        %v6847 = vpop.permute.xlu0 %6846
        %6848 = vrot.lane.b32.xlu0 %v6449, 62
        %v6849 = vpop.permute.xlu0 %6848
        %6850 = vrot.lane.b32.xlu0 %v6450, 62
        %v6851 = vpop.permute.xlu0 %6850
        %6852 = vrot.lane.b32.xlu0 %v6451, 62
        %v6853 = vpop.permute.xlu0 %6852
        %6854 = vrot.lane.b32.xlu0 %v6452, 62
        %v6855 = vpop.permute.xlu0 %6854
        %6856 = vrot.lane.b32.xlu0 %v6453, 62
        %v6857 = vpop.permute.xlu0 %6856
        %6858 = vrot.lane.b32.xlu0 %v6454, 62
        %v6859 = vpop.permute.xlu0 %6858
        %v6860 = vsel %vm1506, %v6843, %v6845
        %v6861 = vsel %vm1506, %v6845, %v6847
        %v6862 = vsel %vm1506, %v6847, %v6849
        %v6863 = vsel %vm1506, %v6849, %v6851
        %v6864 = vsel %vm1506, %v6851, %v6853
        %v6865 = vsel %vm1506, %v6853, %v6855
        %v6866 = vsel %vm1506, %v6855, %v6857
        %v6867 = vsel %vm1506, %v6857, %v6859
        %v6876 = vmax.f32 %v6834, %v6860
        %v6877 = vmax.f32 %v6835, %v6861
        %v6878 = vmax.f32 %v6836, %v6862
        %v6879 = vmax.f32 %v6837, %v6863
        %v6880 = vmax.f32 %v6838, %v6864
        %v6881 = vmax.f32 %v6839, %v6865
        %v6882 = vmax.f32 %v6840, %v6866
        %v6883 = vmax.f32 %v6841, %v6867
        %6884 = vrot.lane.b32.xlu0 %v6446, 61
        %v6885 = vpop.permute.xlu0 %6884
        %6886 = vrot.lane.b32.xlu0 %v6447, 61
        %v6887 = vpop.permute.xlu0 %6886
        %6888 = vrot.lane.b32.xlu0 %v6448, 61
        %v6889 = vpop.permute.xlu0 %6888
        %6890 = vrot.lane.b32.xlu0 %v6449, 61
        %v6891 = vpop.permute.xlu0 %6890
        %6892 = vrot.lane.b32.xlu0 %v6450, 61
        %v6893 = vpop.permute.xlu0 %6892
        %6894 = vrot.lane.b32.xlu0 %v6451, 61
        %v6895 = vpop.permute.xlu0 %6894
        %6896 = vrot.lane.b32.xlu0 %v6452, 61
        %v6897 = vpop.permute.xlu0 %6896
        %6898 = vrot.lane.b32.xlu0 %v6453, 61
        %v6899 = vpop.permute.xlu0 %6898
        %6900 = vrot.lane.b32.xlu0 %v6454, 61
        %v6901 = vpop.permute.xlu0 %6900
        %v6902 = vsel %vm1625, %v6885, %v6887
        %v6903 = vsel %vm1625, %v6887, %v6889
        %v6904 = vsel %vm1625, %v6889, %v6891
        %v6905 = vsel %vm1625, %v6891, %v6893
        %v6906 = vsel %vm1625, %v6893, %v6895
        %v6907 = vsel %vm1625, %v6895, %v6897
        %v6908 = vsel %vm1625, %v6897, %v6899
        %v6909 = vsel %vm1625, %v6899, %v6901
        %v6918 = vmax.f32 %v6876, %v6902
        %v6919 = vmax.f32 %v6877, %v6903
        %v6920 = vmax.f32 %v6878, %v6904
        %v6921 = vmax.f32 %v6879, %v6905
        %v6922 = vmax.f32 %v6880, %v6906
        %v6923 = vmax.f32 %v6881, %v6907
        %v6924 = vmax.f32 %v6882, %v6908
        %v6925 = vmax.f32 %v6883, %v6909
        %6926 = vrot.lane.b32.xlu0 %v6446, 32
        %v6927 = vpop.permute.xlu0 %6926
        %6928 = vrot.lane.b32.xlu0 %v6447, 32
        %v6929 = vpop.permute.xlu0 %6928
        %6930 = vrot.lane.b32.xlu0 %v6448, 32
        %v6931 = vpop.permute.xlu0 %6930
        %6932 = vrot.lane.b32.xlu0 %v6449, 32
        %v6933 = vpop.permute.xlu0 %6932
        %6934 = vrot.lane.b32.xlu0 %v6450, 32
        %v6935 = vpop.permute.xlu0 %6934
        %6936 = vrot.lane.b32.xlu0 %v6451, 32
        %v6937 = vpop.permute.xlu0 %6936
        %6938 = vrot.lane.b32.xlu0 %v6452, 32
        %v6939 = vpop.permute.xlu0 %6938
        %6940 = vrot.lane.b32.xlu0 %v6453, 32
        %v6941 = vpop.permute.xlu0 %6940
        %6942 = vrot.lane.b32.xlu0 %v6454, 32
        %v6943 = vpop.permute.xlu0 %6942
        %v6944 = vsel %vm1759, %v6927, %v6929
        %v6945 = vsel %vm1759, %v6929, %v6931
        %v6946 = vsel %vm1759, %v6931, %v6933
        %v6947 = vsel %vm1759, %v6933, %v6935
        %v6948 = vsel %vm1759, %v6935, %v6937
        %v6949 = vsel %vm1759, %v6937, %v6939
        %v6950 = vsel %vm1759, %v6939, %v6941
        %v6951 = vsel %vm1759, %v6941, %v6943
        %v6960 = vmax.f32 %v6918, %v6944
        %v6961 = vmax.f32 %v6919, %v6945
        %v6962 = vmax.f32 %v6920, %v6946
        %v6963 = vmax.f32 %v6921, %v6947
        %v6964 = vmax.f32 %v6922, %v6948
        %v6965 = vmax.f32 %v6923, %v6949
        %v6966 = vmax.f32 %v6924, %v6950
        %v6967 = vmax.f32 %v6925, %v6951
        %6968 = vrot.lane.b32.xlu0 %v6446, 31
        %v6969 = vpop.permute.xlu0 %6968
        %6970 = vrot.lane.b32.xlu0 %v6447, 31
        %v6971 = vpop.permute.xlu0 %6970
        %6972 = vrot.lane.b32.xlu0 %v6448, 31
        %v6973 = vpop.permute.xlu0 %6972
        %6974 = vrot.lane.b32.xlu0 %v6449, 31
        %v6975 = vpop.permute.xlu0 %6974
        %6976 = vrot.lane.b32.xlu0 %v6450, 31
        %v6977 = vpop.permute.xlu0 %6976
        %6978 = vrot.lane.b32.xlu0 %v6451, 31
        %v6979 = vpop.permute.xlu0 %6978
        %6980 = vrot.lane.b32.xlu0 %v6452, 31
        %v6981 = vpop.permute.xlu0 %6980
        %6982 = vrot.lane.b32.xlu0 %v6453, 31
        %v6983 = vpop.permute.xlu0 %6982
        %6984 = vrot.lane.b32.xlu0 %v6454, 31
        %v6985 = vpop.permute.xlu0 %6984
        %v6986 = vsel %vm1826, %v6969, %v6971
        %v6987 = vsel %vm1826, %v6971, %v6973
        %v6988 = vsel %vm1826, %v6973, %v6975
        %v6989 = vsel %vm1826, %v6975, %v6977
        %v6990 = vsel %vm1826, %v6977, %v6979
        %v6991 = vsel %vm1826, %v6979, %v6981
        %v6992 = vsel %vm1826, %v6981, %v6983
        %v6993 = vsel %vm1826, %v6983, %v6985
        %v7002 = vmax.f32 %v6960, %v6986
        %v7003 = vmax.f32 %v6961, %v6987
        %v7004 = vmax.f32 %v6962, %v6988
        %v7005 = vmax.f32 %v6963, %v6989
        %v7006 = vmax.f32 %v6964, %v6990
        %v7007 = vmax.f32 %v6965, %v6991
        %v7008 = vmax.f32 %v6966, %v6992
        %v7009 = vmax.f32 %v6967, %v6993
        %7010 = vrot.lane.b32.xlu0 %v6446, 30
        %v7011 = vpop.permute.xlu0 %7010
        %7012 = vrot.lane.b32.xlu0 %v6447, 30
        %v7013 = vpop.permute.xlu0 %7012
        %7014 = vrot.lane.b32.xlu0 %v6448, 30
        %v7015 = vpop.permute.xlu0 %7014
        %7016 = vrot.lane.b32.xlu0 %v6449, 30
        %v7017 = vpop.permute.xlu0 %7016
        %7018 = vrot.lane.b32.xlu0 %v6450, 30
        %v7019 = vpop.permute.xlu0 %7018
        %7020 = vrot.lane.b32.xlu0 %v6451, 30
        %v7021 = vpop.permute.xlu0 %7020
        %7022 = vrot.lane.b32.xlu0 %v6452, 30
        %v7023 = vpop.permute.xlu0 %7022
        %7024 = vrot.lane.b32.xlu0 %v6453, 30
        %v7025 = vpop.permute.xlu0 %7024
        %7026 = vrot.lane.b32.xlu0 %v6454, 30
        %v7027 = vpop.permute.xlu0 %7026
        %v7028 = vsel %vm1893, %v7011, %v7013
        %v7029 = vsel %vm1893, %v7013, %v7015
        %v7030 = vsel %vm1893, %v7015, %v7017
        %v7031 = vsel %vm1893, %v7017, %v7019
        %v7032 = vsel %vm1893, %v7019, %v7021
        %v7033 = vsel %vm1893, %v7021, %v7023
        %v7034 = vsel %vm1893, %v7023, %v7025
        %v7035 = vsel %vm1893, %v7025, %v7027
        %v7044 = vmax.f32 %v7002, %v7028
        %v7045 = vmax.f32 %v7003, %v7029
        %v7046 = vmax.f32 %v7004, %v7030
        %v7047 = vmax.f32 %v7005, %v7031
        %v7048 = vmax.f32 %v7006, %v7032
        %v7049 = vmax.f32 %v7007, %v7033
        %v7050 = vmax.f32 %v7008, %v7034
        %v7051 = vmax.f32 %v7009, %v7035
        %7052 = vrot.lane.b32.xlu0 %v6446, 29
        %v7053 = vpop.permute.xlu0 %7052
        %7054 = vrot.lane.b32.xlu0 %v6447, 29
        %v7055 = vpop.permute.xlu0 %7054
        %7056 = vrot.lane.b32.xlu0 %v6448, 29
        %v7057 = vpop.permute.xlu0 %7056
        %7058 = vrot.lane.b32.xlu0 %v6449, 29
        %v7059 = vpop.permute.xlu0 %7058
        %7060 = vrot.lane.b32.xlu0 %v6450, 29
        %v7061 = vpop.permute.xlu0 %7060
        %7062 = vrot.lane.b32.xlu0 %v6451, 29
        %v7063 = vpop.permute.xlu0 %7062
        %7064 = vrot.lane.b32.xlu0 %v6452, 29
        %v7065 = vpop.permute.xlu0 %7064
        %7066 = vrot.lane.b32.xlu0 %v6453, 29
        %v7067 = vpop.permute.xlu0 %7066
        %7068 = vrot.lane.b32.xlu0 %v6454, 29
        %v7069 = vpop.permute.xlu0 %7068
        %v7070 = vsel %vm1960, %v7053, %v7055
        %v7071 = vsel %vm1960, %v7055, %v7057
        %v7072 = vsel %vm1960, %v7057, %v7059
        %v7073 = vsel %vm1960, %v7059, %v7061
        %v7074 = vsel %vm1960, %v7061, %v7063
        %v7075 = vsel %vm1960, %v7063, %v7065
        %v7076 = vsel %vm1960, %v7065, %v7067
        %v7077 = vsel %vm1960, %v7067, %v7069
        %v7086 = vmax.f32 %v7044, %v7070
        %v7087 = vmax.f32 %v7045, %v7071
        %v7088 = vmax.f32 %v7046, %v7072
        %v7089 = vmax.f32 %v7047, %v7073
        %v7090 = vmax.f32 %v7048, %v7074
        %v7091 = vmax.f32 %v7049, %v7075
        %v7092 = vmax.f32 %v7050, %v7076
        %v7093 = vmax.f32 %v7051, %v7077
        %v7094 = vpack.c.bf16 %v7086, %v7086
        %v7095 = vpack.c.bf16 %v7087, %v7087
        %v7096 = vpack.c.bf16 %v7088, %v7088
        %v7097 = vpack.c.bf16 %v7089, %v7089
        %v7098 = vpack.c.bf16 %v7090, %v7090
        %v7099 = vpack.c.bf16 %v7091, %v7091
        %v7100 = vpack.c.bf16 %v7092, %v7092
        %v7101 = vpack.c.bf16 %v7093, %v7093
        %v7230 = vunpack.c.l.b16 %v485
        %v7231 = vunpack.c.l.b16 %v486
        %v7232 = vunpack.c.l.b16 %v487
        %v7233 = vunpack.c.l.b16 %v488
        %v7234 = vunpack.c.l.b16 %v489
        %v7235 = vunpack.c.l.b16 %v490
        %v7236 = vunpack.c.l.b16 %v491
        %v7237 = vunpack.c.l.b16 %v492
        %v7238 = vunpack.c.l.b16 %v493
        %v7239 = vunpack.c.l.b16 %v494
        %v7240 = vunpack.c.l.b16 %v495
        %v7241 = vunpack.c.l.b16 %v496
        %v7242 = vunpack.c.l.b16 %v497
        %v7243 = vunpack.c.l.b16 %v498
        %v7244 = vunpack.c.l.b16 %v499
        %v7245 = vunpack.c.l.b16 %v500
        %v7246 = vunpack.c.l.b16 %v501
        %v7247 = vunpack.c.l.b16 %v502
        %v7248 = vunpack.c.l.b16 %v503
        %v7249 = vunpack.c.l.b16 %v504
        %v7250 = vunpack.c.l.b16 %v505
        %v7251 = vunpack.c.l.b16 %v506
        %v7252 = vunpack.c.l.b16 %v507
        %v7253 = vunpack.c.l.b16 %v508
        %v7254 = vunpack.c.l.b16 %v509
        %v7255 = vunpack.c.l.b16 %v510
        %v7256 = vunpack.c.l.b16 %v511
        %v7257 = vunpack.c.l.b16 %v512
        %v7258 = vunpack.c.l.b16 %v513
        %v7259 = vunpack.c.l.b16 %v514
        %v7260 = vunpack.c.l.b16 %v515
        %v7261 = vunpack.c.l.b16 %v516
        %v7262 = vunpack.c.l.b16 %v517
        %v7263 = vunpack.c.l.b16 %v518
        %v7264 = vunpack.c.l.b16 %v519
        %v7265 = vunpack.c.l.b16 %v520
        %v7266 = vunpack.c.l.b16 %v521
        %v7267 = vunpack.c.l.b16 %v522
        %v7268 = vunpack.c.l.b16 %v523
        %v7269 = vunpack.c.l.b16 %v524
        %v7270 = vunpack.c.l.b16 %v525
        %v7271 = vunpack.c.l.b16 %v526
        %v7272 = vunpack.c.l.b16 %v527
        %v7273 = vunpack.c.l.b16 %v528
        %v7274 = vunpack.c.l.b16 %v529
        %v7275 = vunpack.c.l.b16 %v530
        %v7276 = vunpack.c.l.b16 %v531
        %v7277 = vunpack.c.l.b16 %v532
        %v7278 = vunpack.c.l.b16 %v533
        %v7279 = vunpack.c.l.b16 %v534
        %v7280 = vunpack.c.l.b16 %v535
        %v7281 = vunpack.c.l.b16 %v536
        %v7282 = vunpack.c.l.b16 %v537
        %v7283 = vunpack.c.l.b16 %v538
        %v7284 = vunpack.c.l.b16 %v539
        %v7285 = vunpack.c.l.b16 %v540
        %v7286 = vunpack.c.l.b16 %v541
        %v7287 = vunpack.c.l.b16 %v542
        %v7288 = vunpack.c.l.b16 %v543
        %v7289 = vunpack.c.l.b16 %v544
        %v7290 = vunpack.c.l.b16 %v545
        %v7291 = vunpack.c.l.b16 %v546
        %v7292 = vunpack.c.l.b16 %v547
        %v7293 = vunpack.c.l.b16 %v548
        %v7294 = vunpack.c.l.b16 %v549
        %v7295 = vunpack.c.l.b16 %v550
        %v7296 = vunpack.c.l.b16 %v551
        %v7297 = vunpack.c.l.b16 %v552
        %v7298 = vunpack.c.l.b16 %v553
        %v7299 = vunpack.c.l.b16 %v554
        %v7300 = vunpack.c.l.b16 %v555
        %v7301 = vunpack.c.l.b16 %v556
        %v7302 = vunpack.c.l.b16 %v557
        %v7303 = vunpack.c.l.b16 %v558
        %v7304 = vunpack.c.l.b16 %v559
        %v7305 = vunpack.c.l.b16 %v560
        %v7306 = vunpack.c.l.b16 %v561
        %v7307 = vunpack.c.l.b16 %v562
        %v7308 = vunpack.c.l.b16 %v563
        %v7309 = vunpack.c.l.b16 %v564
        %v7310 = vunpack.c.l.b16 %v565
        %v7311 = vunpack.c.l.b16 %v566
        %v7312 = vunpack.c.l.b16 %v567
        %v7313 = vunpack.c.l.b16 %v568
        %v7314 = vunpack.c.l.b16 %v569
        %v7315 = vunpack.c.l.b16 %v570
        %v7316 = vunpack.c.l.b16 %v571
        %v7317 = vunpack.c.l.b16 %v572
        %v7318 = vunpack.c.l.b16 %v573
        %v7319 = vunpack.c.l.b16 %v574
        %v7320 = vunpack.c.l.b16 %v575
        %v7321 = vunpack.c.l.b16 %v576
        %v7322 = vunpack.c.l.b16 %v577
        %v7323 = vunpack.c.l.b16 %v578
        %v7324 = vunpack.c.l.b16 %v579
        %v7325 = vunpack.c.l.b16 %v580
        %v7326 = vunpack.c.l.b16 %v581
        %v7327 = vunpack.c.l.b16 %v582
        %v7328 = vunpack.c.l.b16 %v583
        %v7329 = vunpack.c.l.b16 %v584
        %v7330 = vunpack.c.l.b16 %v585
        %v7331 = vunpack.c.l.b16 %v586
        %v7332 = vunpack.c.l.b16 %v587
        %v7333 = vunpack.c.l.b16 %v588
        %v7334 = vunpack.c.l.b16 %v589
        %v7335 = vunpack.c.l.b16 %v590
        %v7336 = vunpack.c.l.b16 %v591
        %v7337 = vunpack.c.l.b16 %v592
        %v7338 = vunpack.c.l.b16 %v593
        %v7339 = vunpack.c.l.b16 %v594
        %v7340 = vunpack.c.l.b16 %v595
        %v7341 = vunpack.c.l.b16 %v596
        %v7342 = vunpack.c.l.b16 %v597
        %v7343 = vunpack.c.l.b16 %v598
        %v7344 = vunpack.c.l.b16 %v599
        %v7345 = vunpack.c.l.b16 %v600
        %v7346 = vunpack.c.l.b16 %v601
        %v7347 = vunpack.c.l.b16 %v602
        %v7348 = vunpack.c.l.b16 %v603
        %v7349 = vunpack.c.l.b16 %v604
        %v7350 = vunpack.c.l.b16 %v605
        %v7351 = vunpack.c.l.b16 %v606
        %v7352 = vunpack.c.l.b16 %v607
        %v7353 = vunpack.c.l.b16 %v608
        %v7354 = vunpack.c.l.b16 %v609
        %v7355 = vunpack.c.l.b16 %v610
        %v7356 = vunpack.c.l.b16 %v611
        %v7357 = vunpack.c.l.b16 %v612
        %v7358 = vpack.c.b16 %v7231, %v7230
        %v7359 = vpack.c.b16 %v7233, %v7232
        %v7360 = vpack.c.b16 %v7235, %v7234
        %v7361 = vpack.c.b16 %v7237, %v7236
        %v7362 = vpack.c.b16 %v7239, %v7238
        %v7363 = vpack.c.b16 %v7241, %v7240
        %v7364 = vpack.c.b16 %v7243, %v7242
        %v7365 = vpack.c.b16 %v7245, %v7244
        %v7366 = vpack.c.b16 %v7247, %v7246
        %v7367 = vpack.c.b16 %v7249, %v7248
        %v7368 = vpack.c.b16 %v7251, %v7250
        %v7369 = vpack.c.b16 %v7253, %v7252
        %v7370 = vpack.c.b16 %v7255, %v7254
        %v7371 = vpack.c.b16 %v7257, %v7256
        %v7372 = vpack.c.b16 %v7259, %v7258
        %v7373 = vpack.c.b16 %v7261, %v7260
        %v7374 = vpack.c.b16 %v7263, %v7262
        %v7375 = vpack.c.b16 %v7265, %v7264
        %v7376 = vpack.c.b16 %v7267, %v7266
        %v7377 = vpack.c.b16 %v7269, %v7268
        %v7378 = vpack.c.b16 %v7271, %v7270
        %v7379 = vpack.c.b16 %v7273, %v7272
        %v7380 = vpack.c.b16 %v7275, %v7274
        %v7381 = vpack.c.b16 %v7277, %v7276
        %v7382 = vpack.c.b16 %v7279, %v7278
        %v7383 = vpack.c.b16 %v7281, %v7280
        %v7384 = vpack.c.b16 %v7283, %v7282
        %v7385 = vpack.c.b16 %v7285, %v7284
        %v7386 = vpack.c.b16 %v7287, %v7286
        %v7387 = vpack.c.b16 %v7289, %v7288
        %v7388 = vpack.c.b16 %v7291, %v7290
        %v7389 = vpack.c.b16 %v7293, %v7292
        %v7390 = vpack.c.b16 %v7295, %v7294
        %v7391 = vpack.c.b16 %v7297, %v7296
        %v7392 = vpack.c.b16 %v7299, %v7298
        %v7393 = vpack.c.b16 %v7301, %v7300
        %v7394 = vpack.c.b16 %v7303, %v7302
        %v7395 = vpack.c.b16 %v7305, %v7304
        %v7396 = vpack.c.b16 %v7307, %v7306
        %v7397 = vpack.c.b16 %v7309, %v7308
        %v7398 = vpack.c.b16 %v7311, %v7310
        %v7399 = vpack.c.b16 %v7313, %v7312
        %v7400 = vpack.c.b16 %v7315, %v7314
        %v7401 = vpack.c.b16 %v7317, %v7316
        %v7402 = vpack.c.b16 %v7319, %v7318
        %v7403 = vpack.c.b16 %v7321, %v7320
        %v7404 = vpack.c.b16 %v7323, %v7322
        %v7405 = vpack.c.b16 %v7325, %v7324
        %v7406 = vpack.c.b16 %v7327, %v7326
        %v7407 = vpack.c.b16 %v7329, %v7328
        %v7408 = vpack.c.b16 %v7331, %v7330
        %v7409 = vpack.c.b16 %v7333, %v7332
        %v7410 = vpack.c.b16 %v7335, %v7334
        %v7411 = vpack.c.b16 %v7337, %v7336
        %v7412 = vpack.c.b16 %v7339, %v7338
        %v7413 = vpack.c.b16 %v7341, %v7340
        %v7414 = vpack.c.b16 %v7343, %v7342
        %v7415 = vpack.c.b16 %v7345, %v7344
        %v7416 = vpack.c.b16 %v7347, %v7346
        %v7417 = vpack.c.b16 %v7349, %v7348
        %v7418 = vpack.c.b16 %v7351, %v7350
        %v7419 = vpack.c.b16 %v7353, %v7352
        %v7420 = vpack.c.b16 %v7355, %v7354
        %v7421 = vpack.c.b16 %v7357, %v7356
        %7486 = vmatprep.subr.bf16.mxu0 0
        %7487 = vmatpush1.bf16.msra.mxu0 %v7358
        %7488 = vmatprep.subr.bf16.mxu0 0
        %7489 = vmatpush1.bf16.msra.mxu0 %v7359
        %7490 = vmatprep.subr.bf16.mxu0 0
        %7491 = vmatpush1.bf16.msra.mxu0 %v7360
        %7492 = vmatprep.subr.bf16.mxu0 0
        %7493 = vmatpush1.bf16.msra.mxu0 %v7361
        %7494 = vmatprep.subr.bf16.mxu0 0
        %7495 = vmatpush1.bf16.msra.mxu0 %v7362
        %7496 = vmatprep.subr.bf16.mxu0 0
        %7497 = vmatpush1.bf16.msra.mxu0 %v7363
        %7498 = vmatprep.subr.bf16.mxu0 0
        %7499 = vmatpush1.bf16.msra.mxu0 %v7364
        %7500 = vmatprep.subr.bf16.mxu0 0
        %7501 = vmatpush1.bf16.msra.mxu0 %v7365
        %7502 = vmatprep.subr.bf16.mxu0 0
        %7503 = vmatpush1.bf16.msra.mxu0 %v7366
        %7504 = vmatprep.subr.bf16.mxu0 0
        %7505 = vmatpush1.bf16.msra.mxu0 %v7367
        %7506 = vmatprep.subr.bf16.mxu0 0
        %7507 = vmatpush1.bf16.msra.mxu0 %v7368
        %7508 = vmatprep.subr.bf16.mxu0 0
        %7509 = vmatpush1.bf16.msra.mxu0 %v7369
        %7510 = vmatprep.subr.bf16.mxu0 0
        %7511 = vmatpush1.bf16.msra.mxu0 %v7370
        %7512 = vmatprep.subr.bf16.mxu0 0
        %7513 = vmatpush1.bf16.msra.mxu0 %v7371
        %7514 = vmatprep.subr.bf16.mxu0 0
        %7515 = vmatpush1.bf16.msra.mxu0 %v7372
        %7516 = vmatprep.subr.bf16.mxu0 0
        %7517 = vmatpush1.bf16.msra.mxu0 %v7373
        %7518 = vmatprep.mubr.bf16.mxu0 %v7095
        %7519 = vmatmul.mubr.bf16.gmra.mrb[0].mxu0 %v7094
        %v7520 = vpop.f32.mrb[0].mxu0
        %v7521 = vadd.f32 0.0, %v7520
        %v7522 = vpop.f32.mrb[0].mxu0
        %v7523 = vpop.f32.mrb[0].mxu0
        %v7524 = vpop.f32.mrb[0].mxu0
        %7525 = vdwg.mxu0
        %7526 = vmatprep.subr.bf16.mxu0 0
        %7527 = vmatpush1.bf16.msra.mxu0 %v7374
        %7528 = vmatprep.subr.bf16.mxu0 0
        %7529 = vmatpush1.bf16.msra.mxu0 %v7375
        %7530 = vmatprep.subr.bf16.mxu0 0
        %7531 = vmatpush1.bf16.msra.mxu0 %v7376
        %7532 = vmatprep.subr.bf16.mxu0 0
        %7533 = vmatpush1.bf16.msra.mxu0 %v7377
        %7534 = vmatprep.subr.bf16.mxu0 0
        %7535 = vmatpush1.bf16.msra.mxu0 %v7378
        %7536 = vmatprep.subr.bf16.mxu0 0
        %7537 = vmatpush1.bf16.msra.mxu0 %v7379
        %7538 = vmatprep.subr.bf16.mxu0 0
        %7539 = vmatpush1.bf16.msra.mxu0 %v7380
        %7540 = vmatprep.subr.bf16.mxu0 0
        %7541 = vmatpush1.bf16.msra.mxu0 %v7381
        %7542 = vmatprep.subr.bf16.mxu0 0
        %7543 = vmatpush1.bf16.msra.mxu0 %v7382
        %7544 = vmatprep.subr.bf16.mxu0 0
        %7545 = vmatpush1.bf16.msra.mxu0 %v7383
        %7546 = vmatprep.subr.bf16.mxu0 0
        %7547 = vmatpush1.bf16.msra.mxu0 %v7384
        %7548 = vmatprep.subr.bf16.mxu0 0
        %7549 = vmatpush1.bf16.msra.mxu0 %v7385
        %7550 = vmatprep.subr.bf16.mxu0 0
        %7551 = vmatpush1.bf16.msra.mxu0 %v7386
        %7552 = vmatprep.subr.bf16.mxu0 0
        %7553 = vmatpush1.bf16.msra.mxu0 %v7387
        %7554 = vmatprep.subr.bf16.mxu0 0
        %7555 = vmatpush1.bf16.msra.mxu0 %v7388
        %7556 = vmatprep.subr.bf16.mxu0 0
        %7557 = vmatpush1.bf16.msra.mxu0 %v7389
        %7558 = vmatprep.mubr.bf16.mxu0 %v7097
        %7559 = vmatmul.mubr.bf16.gmra.mrb[0].mxu0 %v7096
        %v7560 = vpop.f32.mrb[0].mxu0
        %v7561 = vadd.f32 %v7521, %v7560
        %v7562 = vpop.f32.mrb[0].mxu0
        %v7563 = vpop.f32.mrb[0].mxu0
        %v7564 = vpop.f32.mrb[0].mxu0
        %7565 = vdwg.mxu0
        %7566 = vmatprep.subr.bf16.mxu0 0
        %7567 = vmatpush1.bf16.msra.mxu0 %v7390
        %7568 = vmatprep.subr.bf16.mxu0 0
        %7569 = vmatpush1.bf16.msra.mxu0 %v7391
        %7570 = vmatprep.subr.bf16.mxu0 0
        %7571 = vmatpush1.bf16.msra.mxu0 %v7392
        %7572 = vmatprep.subr.bf16.mxu0 0
        %7573 = vmatpush1.bf16.msra.mxu0 %v7393
        %7574 = vmatprep.subr.bf16.mxu0 0
        %7575 = vmatpush1.bf16.msra.mxu0 %v7394
        %7576 = vmatprep.subr.bf16.mxu0 0
        %7577 = vmatpush1.bf16.msra.mxu0 %v7395
        %7578 = vmatprep.subr.bf16.mxu0 0
        %7579 = vmatpush1.bf16.msra.mxu0 %v7396
        %7580 = vmatprep.subr.bf16.mxu0 0
        %7581 = vmatpush1.bf16.msra.mxu0 %v7397
        %7582 = vmatprep.subr.bf16.mxu0 0
        %7583 = vmatpush1.bf16.msra.mxu0 %v7398
        %7584 = vmatprep.subr.bf16.mxu0 0
        %7585 = vmatpush1.bf16.msra.mxu0 %v7399
        %7586 = vmatprep.subr.bf16.mxu0 0
        %7587 = vmatpush1.bf16.msra.mxu0 %v7400
        %7588 = vmatprep.subr.bf16.mxu0 0
        %7589 = vmatpush1.bf16.msra.mxu0 %v7401
        %7590 = vmatprep.subr.bf16.mxu0 0
        %7591 = vmatpush1.bf16.msra.mxu0 %v7402
        %7592 = vmatprep.subr.bf16.mxu0 0
        %7593 = vmatpush1.bf16.msra.mxu0 %v7403
        %7594 = vmatprep.subr.bf16.mxu0 0
        %7595 = vmatpush1.bf16.msra.mxu0 %v7404
        %7596 = vmatprep.subr.bf16.mxu0 0
        %7597 = vmatpush1.bf16.msra.mxu0 %v7405
        %7598 = vmatprep.mubr.bf16.mxu0 %v7099
        %7599 = vmatmul.mubr.bf16.gmra.mrb[0].mxu0 %v7098
        %v7600 = vpop.f32.mrb[0].mxu0
        %v7601 = vadd.f32 %v7561, %v7600
        %v7602 = vpop.f32.mrb[0].mxu0
        %v7603 = vpop.f32.mrb[0].mxu0
        %v7604 = vpop.f32.mrb[0].mxu0
        %7605 = vdwg.mxu0
        %7606 = vmatprep.subr.bf16.mxu0 0
        %7607 = vmatpush1.bf16.msra.mxu0 %v7406
        %7608 = vmatprep.subr.bf16.mxu0 0
        %7609 = vmatpush1.bf16.msra.mxu0 %v7407
        %7610 = vmatprep.subr.bf16.mxu0 0
        %7611 = vmatpush1.bf16.msra.mxu0 %v7408
        %7612 = vmatprep.subr.bf16.mxu0 0
        %7613 = vmatpush1.bf16.msra.mxu0 %v7409
        %7614 = vmatprep.subr.bf16.mxu0 0
        %7615 = vmatpush1.bf16.msra.mxu0 %v7410
        %7616 = vmatprep.subr.bf16.mxu0 0
        %7617 = vmatpush1.bf16.msra.mxu0 %v7411
        %7618 = vmatprep.subr.bf16.mxu0 0
        %7619 = vmatpush1.bf16.msra.mxu0 %v7412
        %7620 = vmatprep.subr.bf16.mxu0 0
        %7621 = vmatpush1.bf16.msra.mxu0 %v7413
        %7622 = vmatprep.subr.bf16.mxu0 0
        %7623 = vmatpush1.bf16.msra.mxu0 %v7414
        %7624 = vmatprep.subr.bf16.mxu0 0
        %7625 = vmatpush1.bf16.msra.mxu0 %v7415
        %7626 = vmatprep.subr.bf16.mxu0 0
        %7627 = vmatpush1.bf16.msra.mxu0 %v7416
        %7628 = vmatprep.subr.bf16.mxu0 0
        %7629 = vmatpush1.bf16.msra.mxu0 %v7417
        %7630 = vmatprep.subr.bf16.mxu0 0
        %7631 = vmatpush1.bf16.msra.mxu0 %v7418
        %7632 = vmatprep.subr.bf16.mxu0 0
        %7633 = vmatpush1.bf16.msra.mxu0 %v7419
        %7634 = vmatprep.subr.bf16.mxu0 0
        %7635 = vmatpush1.bf16.msra.mxu0 %v7420
        %7636 = vmatprep.subr.bf16.mxu0 0
        %7637 = vmatpush1.bf16.msra.mxu0 %v7421
        %7638 = vmatprep.mubr.bf16.mxu0 %v7101
        %7639 = vmatmul.mubr.bf16.gmra.mrb[0].mxu0 %v7100
        %v7640 = vpop.f32.mrb[0].mxu0
        %v7641 = vadd.f32 %v7601, %v7640
        %v7642 = vpop.f32.mrb[0].mxu0
        %v7643 = vpop.f32.mrb[0].mxu0
        %v7644 = vpop.f32.mrb[0].mxu0
        %7645 = vdwg.mxu0
        %7647 = vrot.lane.b32.xlu0 %v7641, 64
        %v7648 = vpop.permute.xlu0 %7647
        %v7650 = vsel %vm1332, %v7641, %v7648
        %v7651 = vmul.f32 %v7650, %v613
        %v7652 = vmul.f32 %v7650, %v614
        %v7653 = vmul.f32 %v7650, %v615
        %v7654 = vmul.f32 %v7650, %v616
        %v7655 = vrot.slane %v7651, 4
        %v7656 = vadd.f32 %v7651, %v7655
        %v7657 = vrot.slane %v7656, 2
        %v7658 = vadd.f32 %v7656, %v7657
        %v7659 = vrot.slane %v7658, 1
        %v7660 = vadd.f32 %v7658, %v7659
        %v7661 = vrot.slane %v7652, 4
        %v7662 = vadd.f32 %v7652, %v7661
        %v7663 = vrot.slane %v7662, 2
        %v7664 = vadd.f32 %v7662, %v7663
        %v7665 = vrot.slane %v7664, 1
        %v7666 = vadd.f32 %v7664, %v7665
        %v7667 = vrot.slane %v7653, 4
        %v7668 = vadd.f32 %v7653, %v7667
        %v7669 = vrot.slane %v7668, 2
        %v7670 = vadd.f32 %v7668, %v7669
        %v7671 = vrot.slane %v7670, 1
        %v7672 = vadd.f32 %v7670, %v7671
        %v7673 = vrot.slane %v7654, 4
        %v7674 = vadd.f32 %v7654, %v7673
        %v7675 = vrot.slane %v7674, 2
        %v7676 = vadd.f32 %v7674, %v7675
        %v7677 = vrot.slane %v7676, 1
        %v7678 = vadd.f32 %v7676, %v7677
        %v7683 = vcombine.low %v7660, %v7666
        %v7684 = vcombine.low %v7672, %v7678
        %v7686 = vunpack.c.l.s4 1966171168
        %v7687 = vunpack.c.0.s8 %v7686
        %v7688 = vlaneseq
        %v7689 = vshrl.u32 %v7688, 7
        %v7690 = vsub.s32 %v7687, %v7689
        %v7691 = vrot.slane %v7683, %v7690
        %v7693 = vunpack.c.l.s4 1966171168
        %v7694 = vunpack.c.0.s8 %v7693
        %v7695 = vlaneseq
        %v7696 = vshrl.u32 %v7695, 7
        %v7697 = vsub.s32 %v7694, %v7696
        %v7698 = vrot.slane %v7684, %v7697
        %v7699 = vcombine.low %v7691, %v7698
        %v7701 = vunpack.c.l.s4 1966171168
        %v7702 = vunpack.c.0.s8 %v7701
        %v7703 = vlaneseq
        %v7704 = vshrl.u32 %v7703, 7
        %v7705 = vsub.s32 %v7702, %v7704
        %v7706 = vrot.slane %v7699, %v7705
        %v7708 = vlaneseq
        %vm7709 = vcmp.ge.s32.totalorder %v7708, 0
        %vm7710 = vcmp.lt.s32.totalorder %v7708, 512
        %vm7711 = vmand %vm7709, %vm7710
        %7712 = vst.msk [vmem:[#allocation4] sm:$0xf] %vm7711, %v7706
        %v7713 = vld [vmem:[#allocation4] sm:$0xf]
        %v7715 = vlaneseq
        %v7716 = vshrl.u32 %v7715, 7
        %v7717 = vsub.s32 0, %v7716
        %v7718 = vrot.slane %v7713, %v7717
        %v7719 = vlaneseq
        %v7720 = vshrl.u32 %v7719, 7
        %v7721 = vsub.s32 1, %v7720
        %v7722 = vrot.slane %v7713, %v7721
        %v7723 = vlaneseq
        %v7724 = vshrl.u32 %v7723, 7
        %v7725 = vsub.s32 2, %v7724
        %v7726 = vrot.slane %v7713, %v7725
        %v7727 = vlaneseq
        %v7728 = vshrl.u32 %v7727, 7
        %v7729 = vsub.s32 3, %v7728
        %v7730 = vrot.slane %v7713, %v7729
        %v7735 = vpack.c.bf16 %v7718, %v7718
        %v7736 = vpack.c.bf16 %v7722, %v7722
        %v7737 = vpack.c.bf16 %v7726, %v7726
        %v7738 = vpack.c.bf16 %v7730, %v7730
        %v7739 = vld [vmem:[#allocation5] sm:$0xff]
        %v7740 = vld [vmem:[#allocation5 + $0x8] sm:$0xff]
        %v7741 = vld [vmem:[#allocation5 + $0x10] sm:$0xff]
        %v7742 = vld [vmem:[#allocation5 + $0x18] sm:$0xff]
        %v7743 = vld [vmem:[#allocation5 + $0x20] sm:$0xff]
        %v7744 = vld [vmem:[#allocation5 + $0x28] sm:$0xff]
        %v7745 = vld [vmem:[#allocation5 + $0x30] sm:$0xff]
        %v7746 = vld [vmem:[#allocation5 + $0x38] sm:$0xff]
        %v7747 = vld [vmem:[#allocation5 + $0x40] sm:$0xff]
        %v7748 = vld [vmem:[#allocation5 + $0x48] sm:$0xff]
        %v7749 = vld [vmem:[#allocation5 + $0x50] sm:$0xff]
        %v7750 = vld [vmem:[#allocation5 + $0x58] sm:$0xff]
        %v7751 = vld [vmem:[#allocation5 + $0x60] sm:$0xff]
        %v7752 = vld [vmem:[#allocation5 + $0x68] sm:$0xff]
        %v7753 = vld [vmem:[#allocation5 + $0x70] sm:$0xff]
        %v7754 = vld [vmem:[#allocation5 + $0x78] sm:$0xff]
        %v7755 = vld [vmem:[#allocation5 + $0x80] sm:$0xff]
        %v7756 = vld [vmem:[#allocation5 + $0x88] sm:$0xff]
        %v7757 = vld [vmem:[#allocation5 + $0x90] sm:$0xff]
        %v7758 = vld [vmem:[#allocation5 + $0x98] sm:$0xff]
        %v7759 = vld [vmem:[#allocation5 + $0xa0] sm:$0xff]
        %v7760 = vld [vmem:[#allocation5 + $0xa8] sm:$0xff]
        %v7761 = vld [vmem:[#allocation5 + $0xb0] sm:$0xff]
        %v7762 = vld [vmem:[#allocation5 + $0xb8] sm:$0xff]
        %v7763 = vld [vmem:[#allocation5 + $0xc0] sm:$0xff]
        %v7764 = vld [vmem:[#allocation5 + $0xc8] sm:$0xff]
        %v7765 = vld [vmem:[#allocation5 + $0xd0] sm:$0xff]
        %v7766 = vld [vmem:[#allocation5 + $0xd8] sm:$0xff]
        %v7767 = vld [vmem:[#allocation5 + $0xe0] sm:$0xff]
        %v7768 = vld [vmem:[#allocation5 + $0xe8] sm:$0xff]
        %v7769 = vld [vmem:[#allocation5 + $0xf0] sm:$0xff]
        %v7770 = vld [vmem:[#allocation5 + $0xf8] sm:$0xff]
        %v7771 = vld [vmem:[#allocation5 + $0x100] sm:$0xff]
        %v7772 = vld [vmem:[#allocation5 + $0x108] sm:$0xff]
        %v7773 = vld [vmem:[#allocation5 + $0x110] sm:$0xff]
        %v7774 = vld [vmem:[#allocation5 + $0x118] sm:$0xff]
        %v7775 = vld [vmem:[#allocation5 + $0x120] sm:$0xff]
        %v7776 = vld [vmem:[#allocation5 + $0x128] sm:$0xff]
        %v7777 = vld [vmem:[#allocation5 + $0x130] sm:$0xff]
        %v7778 = vld [vmem:[#allocation5 + $0x138] sm:$0xff]
        %v7779 = vld [vmem:[#allocation5 + $0x140] sm:$0xff]
        %v7780 = vld [vmem:[#allocation5 + $0x148] sm:$0xff]
        %v7781 = vld [vmem:[#allocation5 + $0x150] sm:$0xff]
        %v7782 = vld [vmem:[#allocation5 + $0x158] sm:$0xff]
        %v7783 = vld [vmem:[#allocation5 + $0x160] sm:$0xff]
        %v7784 = vld [vmem:[#allocation5 + $0x168] sm:$0xff]
        %v7785 = vld [vmem:[#allocation5 + $0x170] sm:$0xff]
        %v7786 = vld [vmem:[#allocation5 + $0x178] sm:$0xff]
        %v7787 = vld [vmem:[#allocation5 + $0x180] sm:$0xff]
        %v7788 = vld [vmem:[#allocation5 + $0x188] sm:$0xff]
        %v7789 = vld [vmem:[#allocation5 + $0x190] sm:$0xff]
        %v7790 = vld [vmem:[#allocation5 + $0x198] sm:$0xff]
        %v7791 = vld [vmem:[#allocation5 + $0x1a0] sm:$0xff]
        %v7792 = vld [vmem:[#allocation5 + $0x1a8] sm:$0xff]
        %v7793 = vld [vmem:[#allocation5 + $0x1b0] sm:$0xff]
        %v7794 = vld [vmem:[#allocation5 + $0x1b8] sm:$0xff]
        %v7795 = vld [vmem:[#allocation5 + $0x1c0] sm:$0xff]
        %v7796 = vld [vmem:[#allocation5 + $0x1c8] sm:$0xff]
        %v7797 = vld [vmem:[#allocation5 + $0x1d0] sm:$0xff]
        %v7798 = vld [vmem:[#allocation5 + $0x1d8] sm:$0xff]
        %v7799 = vld [vmem:[#allocation5 + $0x1e0] sm:$0xff]
        %v7800 = vld [vmem:[#allocation5 + $0x1e8] sm:$0xff]
        %v7801 = vld [vmem:[#allocation5 + $0x1f0] sm:$0xff]
        %v7802 = vld [vmem:[#allocation5 + $0x1f8] sm:$0xff]
        %v7803 = vld [vmem:[#allocation5 + $0x200] sm:$0xff]
        %v7804 = vld [vmem:[#allocation5 + $0x208] sm:$0xff]
        %v7805 = vld [vmem:[#allocation5 + $0x210] sm:$0xff]
        %v7806 = vld [vmem:[#allocation5 + $0x218] sm:$0xff]
        %v7807 = vld [vmem:[#allocation5 + $0x220] sm:$0xff]
        %v7808 = vld [vmem:[#allocation5 + $0x228] sm:$0xff]
        %v7809 = vld [vmem:[#allocation5 + $0x230] sm:$0xff]
        %v7810 = vld [vmem:[#allocation5 + $0x238] sm:$0xff]
        %v7811 = vld [vmem:[#allocation5 + $0x240] sm:$0xff]
        %v7812 = vld [vmem:[#allocation5 + $0x248] sm:$0xff]
        %v7813 = vld [vmem:[#allocation5 + $0x250] sm:$0xff]
        %v7814 = vld [vmem:[#allocation5 + $0x258] sm:$0xff]
        %v7815 = vld [vmem:[#allocation5 + $0x260] sm:$0xff]
        %v7816 = vld [vmem:[#allocation5 + $0x268] sm:$0xff]
        %v7817 = vld [vmem:[#allocation5 + $0x270] sm:$0xff]
        %v7818 = vld [vmem:[#allocation5 + $0x278] sm:$0xff]
        %v7819 = vld [vmem:[#allocation5 + $0x280] sm:$0xff]
        %v7820 = vld [vmem:[#allocation5 + $0x288] sm:$0xff]
        %v7821 = vld [vmem:[#allocation5 + $0x290] sm:$0xff]
        %v7822 = vld [vmem:[#allocation5 + $0x298] sm:$0xff]
        %v7823 = vld [vmem:[#allocation5 + $0x2a0] sm:$0xff]
        %v7824 = vld [vmem:[#allocation5 + $0x2a8] sm:$0xff]
        %v7825 = vld [vmem:[#allocation5 + $0x2b0] sm:$0xff]
        %v7826 = vld [vmem:[#allocation5 + $0x2b8] sm:$0xff]
        %v7827 = vld [vmem:[#allocation5 + $0x2c0] sm:$0xff]
        %v7828 = vld [vmem:[#allocation5 + $0x2c8] sm:$0xff]
        %v7829 = vld [vmem:[#allocation5 + $0x2d0] sm:$0xff]
        %v7830 = vld [vmem:[#allocation5 + $0x2d8] sm:$0xff]
        %v7831 = vld [vmem:[#allocation5 + $0x2e0] sm:$0xff]
        %v7832 = vld [vmem:[#allocation5 + $0x2e8] sm:$0xff]
        %v7833 = vld [vmem:[#allocation5 + $0x2f0] sm:$0xff]
        %v7834 = vld [vmem:[#allocation5 + $0x2f8] sm:$0xff]
        %v7835 = vld [vmem:[#allocation5 + $0x300] sm:$0xff]
        %v7836 = vld [vmem:[#allocation5 + $0x308] sm:$0xff]
        %v7837 = vld [vmem:[#allocation5 + $0x310] sm:$0xff]
        %v7838 = vld [vmem:[#allocation5 + $0x318] sm:$0xff]
        %v7839 = vld [vmem:[#allocation5 + $0x320] sm:$0xff]
        %v7840 = vld [vmem:[#allocation5 + $0x328] sm:$0xff]
        %v7841 = vld [vmem:[#allocation5 + $0x330] sm:$0xff]
        %v7842 = vld [vmem:[#allocation5 + $0x338] sm:$0xff]
        %v7843 = vld [vmem:[#allocation5 + $0x340] sm:$0xff]
        %v7844 = vld [vmem:[#allocation5 + $0x348] sm:$0xff]
        %v7845 = vld [vmem:[#allocation5 + $0x350] sm:$0xff]
        %v7846 = vld [vmem:[#allocation5 + $0x358] sm:$0xff]
        %v7847 = vld [vmem:[#allocation5 + $0x360] sm:$0xff]
        %v7848 = vld [vmem:[#allocation5 + $0x368] sm:$0xff]
        %v7849 = vld [vmem:[#allocation5 + $0x370] sm:$0xff]
        %v7850 = vld [vmem:[#allocation5 + $0x378] sm:$0xff]
        %v7851 = vld [vmem:[#allocation5 + $0x380] sm:$0xff]
        %v7852 = vld [vmem:[#allocation5 + $0x388] sm:$0xff]
        %v7853 = vld [vmem:[#allocation5 + $0x390] sm:$0xff]
        %v7854 = vld [vmem:[#allocation5 + $0x398] sm:$0xff]
        %v7855 = vld [vmem:[#allocation5 + $0x3a0] sm:$0xff]
        %v7856 = vld [vmem:[#allocation5 + $0x3a8] sm:$0xff]
        %v7857 = vld [vmem:[#allocation5 + $0x3b0] sm:$0xff]
        %v7858 = vld [vmem:[#allocation5 + $0x3b8] sm:$0xff]
        %v7859 = vld [vmem:[#allocation5 + $0x3c0] sm:$0xff]
        %v7860 = vld [vmem:[#allocation5 + $0x3c8] sm:$0xff]
        %v7861 = vld [vmem:[#allocation5 + $0x3d0] sm:$0xff]
        %v7862 = vld [vmem:[#allocation5 + $0x3d8] sm:$0xff]
        %v7863 = vld [vmem:[#allocation5 + $0x3e0] sm:$0xff]
        %v7864 = vld [vmem:[#allocation5 + $0x3e8] sm:$0xff]
        %v7865 = vld [vmem:[#allocation5 + $0x3f0] sm:$0xff]
        %v7866 = vld [vmem:[#allocation5 + $0x3f8] sm:$0xff]
        %v7867 = vld [vmem:[%s11] sm:$0xf]
        %v7996 = vunpack.c.l.b16 %v7739
        %v7997 = vunpack.c.h.b16 %v7739
        %v7998 = vunpack.c.l.b16 %v7740
        %v7999 = vunpack.c.h.b16 %v7740
        %v8000 = vunpack.c.l.b16 %v7741
        %v8001 = vunpack.c.h.b16 %v7741
        %v8002 = vunpack.c.l.b16 %v7742
        %v8003 = vunpack.c.h.b16 %v7742
        %v8004 = vunpack.c.l.b16 %v7743
        %v8005 = vunpack.c.h.b16 %v7743
        %v8006 = vunpack.c.l.b16 %v7744
        %v8007 = vunpack.c.h.b16 %v7744
        %v8008 = vunpack.c.l.b16 %v7745
        %v8009 = vunpack.c.h.b16 %v7745
        %v8010 = vunpack.c.l.b16 %v7746
        %v8011 = vunpack.c.h.b16 %v7746
        %v8012 = vunpack.c.l.b16 %v7747
        %v8013 = vunpack.c.h.b16 %v7747
        %v8014 = vunpack.c.l.b16 %v7748
        %v8015 = vunpack.c.h.b16 %v7748
        %v8016 = vunpack.c.l.b16 %v7749
        %v8017 = vunpack.c.h.b16 %v7749
        %v8018 = vunpack.c.l.b16 %v7750
        %v8019 = vunpack.c.h.b16 %v7750
        %v8020 = vunpack.c.l.b16 %v7751
        %v8021 = vunpack.c.h.b16 %v7751
        %v8022 = vunpack.c.l.b16 %v7752
        %v8023 = vunpack.c.h.b16 %v7752
        %v8024 = vunpack.c.l.b16 %v7753
        %v8025 = vunpack.c.h.b16 %v7753
        %v8026 = vunpack.c.l.b16 %v7754
        %v8027 = vunpack.c.h.b16 %v7754
        %v8028 = vunpack.c.l.b16 %v7755
        %v8029 = vunpack.c.h.b16 %v7755
        %v8030 = vunpack.c.l.b16 %v7756
        %v8031 = vunpack.c.h.b16 %v7756
        %v8032 = vunpack.c.l.b16 %v7757
        %v8033 = vunpack.c.h.b16 %v7757
        %v8034 = vunpack.c.l.b16 %v7758
        %v8035 = vunpack.c.h.b16 %v7758
        %v8036 = vunpack.c.l.b16 %v7759
        %v8037 = vunpack.c.h.b16 %v7759
        %v8038 = vunpack.c.l.b16 %v7760
        %v8039 = vunpack.c.h.b16 %v7760
        %v8040 = vunpack.c.l.b16 %v7761
        %v8041 = vunpack.c.h.b16 %v7761
        %v8042 = vunpack.c.l.b16 %v7762
        %v8043 = vunpack.c.h.b16 %v7762
        %v8044 = vunpack.c.l.b16 %v7763
        %v8045 = vunpack.c.h.b16 %v7763
        %v8046 = vunpack.c.l.b16 %v7764
        %v8047 = vunpack.c.h.b16 %v7764
        %v8048 = vunpack.c.l.b16 %v7765
        %v8049 = vunpack.c.h.b16 %v7765
        %v8050 = vunpack.c.l.b16 %v7766
        %v8051 = vunpack.c.h.b16 %v7766
        %v8052 = vunpack.c.l.b16 %v7767
        %v8053 = vunpack.c.h.b16 %v7767
        %v8054 = vunpack.c.l.b16 %v7768
        %v8055 = vunpack.c.h.b16 %v7768
        %v8056 = vunpack.c.l.b16 %v7769
        %v8057 = vunpack.c.h.b16 %v7769
        %v8058 = vunpack.c.l.b16 %v7770
        %v8059 = vunpack.c.h.b16 %v7770
        %v8060 = vunpack.c.l.b16 %v7771
        %v8061 = vunpack.c.h.b16 %v7771
        %v8062 = vunpack.c.l.b16 %v7772
        %v8063 = vunpack.c.h.b16 %v7772
        %v8064 = vunpack.c.l.b16 %v7773
        %v8065 = vunpack.c.h.b16 %v7773
        %v8066 = vunpack.c.l.b16 %v7774
        %v8067 = vunpack.c.h.b16 %v7774
        %v8068 = vunpack.c.l.b16 %v7775
        %v8069 = vunpack.c.h.b16 %v7775
        %v8070 = vunpack.c.l.b16 %v7776
        %v8071 = vunpack.c.h.b16 %v7776
        %v8072 = vunpack.c.l.b16 %v7777
        %v8073 = vunpack.c.h.b16 %v7777
        %v8074 = vunpack.c.l.b16 %v7778
        %v8075 = vunpack.c.h.b16 %v7778
        %v8076 = vunpack.c.l.b16 %v7779
        %v8077 = vunpack.c.h.b16 %v7779
        %v8078 = vunpack.c.l.b16 %v7780
        %v8079 = vunpack.c.h.b16 %v7780
        %v8080 = vunpack.c.l.b16 %v7781
        %v8081 = vunpack.c.h.b16 %v7781
        %v8082 = vunpack.c.l.b16 %v7782
        %v8083 = vunpack.c.h.b16 %v7782
        %v8084 = vunpack.c.l.b16 %v7783
        %v8085 = vunpack.c.h.b16 %v7783
        %v8086 = vunpack.c.l.b16 %v7784
        %v8087 = vunpack.c.h.b16 %v7784
        %v8088 = vunpack.c.l.b16 %v7785
        %v8089 = vunpack.c.h.b16 %v7785
        %v8090 = vunpack.c.l.b16 %v7786
        %v8091 = vunpack.c.h.b16 %v7786
        %v8092 = vunpack.c.l.b16 %v7787
        %v8093 = vunpack.c.h.b16 %v7787
        %v8094 = vunpack.c.l.b16 %v7788
        %v8095 = vunpack.c.h.b16 %v7788
        %v8096 = vunpack.c.l.b16 %v7789
        %v8097 = vunpack.c.h.b16 %v7789
        %v8098 = vunpack.c.l.b16 %v7790
        %v8099 = vunpack.c.h.b16 %v7790
        %v8100 = vunpack.c.l.b16 %v7791
        %v8101 = vunpack.c.h.b16 %v7791
        %v8102 = vunpack.c.l.b16 %v7792
        %v8103 = vunpack.c.h.b16 %v7792
        %v8104 = vunpack.c.l.b16 %v7793
        %v8105 = vunpack.c.h.b16 %v7793
        %v8106 = vunpack.c.l.b16 %v7794
        %v8107 = vunpack.c.h.b16 %v7794
        %v8108 = vunpack.c.l.b16 %v7795
        %v8109 = vunpack.c.h.b16 %v7795
        %v8110 = vunpack.c.l.b16 %v7796
        %v8111 = vunpack.c.h.b16 %v7796
        %v8112 = vunpack.c.l.b16 %v7797
        %v8113 = vunpack.c.h.b16 %v7797
        %v8114 = vunpack.c.l.b16 %v7798
        %v8115 = vunpack.c.h.b16 %v7798
        %v8116 = vunpack.c.l.b16 %v7799
        %v8117 = vunpack.c.h.b16 %v7799
        %v8118 = vunpack.c.l.b16 %v7800
        %v8119 = vunpack.c.h.b16 %v7800
        %v8120 = vunpack.c.l.b16 %v7801
        %v8121 = vunpack.c.h.b16 %v7801
        %v8122 = vunpack.c.l.b16 %v7802
        %v8123 = vunpack.c.h.b16 %v7802
        %v8124 = vunpack.c.l.b16 %v7803
        %v8125 = vunpack.c.h.b16 %v7803
        %v8126 = vunpack.c.l.b16 %v7804
        %v8127 = vunpack.c.h.b16 %v7804
        %v8128 = vunpack.c.l.b16 %v7805
        %v8129 = vunpack.c.h.b16 %v7805
        %v8130 = vunpack.c.l.b16 %v7806
        %v8131 = vunpack.c.h.b16 %v7806
        %v8132 = vunpack.c.l.b16 %v7807
        %v8133 = vunpack.c.h.b16 %v7807
        %v8134 = vunpack.c.l.b16 %v7808
        %v8135 = vunpack.c.h.b16 %v7808
        %v8136 = vunpack.c.l.b16 %v7809
        %v8137 = vunpack.c.h.b16 %v7809
        %v8138 = vunpack.c.l.b16 %v7810
        %v8139 = vunpack.c.h.b16 %v7810
        %v8140 = vunpack.c.l.b16 %v7811
        %v8141 = vunpack.c.h.b16 %v7811
        %v8142 = vunpack.c.l.b16 %v7812
        %v8143 = vunpack.c.h.b16 %v7812
        %v8144 = vunpack.c.l.b16 %v7813
        %v8145 = vunpack.c.h.b16 %v7813
        %v8146 = vunpack.c.l.b16 %v7814
        %v8147 = vunpack.c.h.b16 %v7814
        %v8148 = vunpack.c.l.b16 %v7815
        %v8149 = vunpack.c.h.b16 %v7815
        %v8150 = vunpack.c.l.b16 %v7816
        %v8151 = vunpack.c.h.b16 %v7816
        %v8152 = vunpack.c.l.b16 %v7817
        %v8153 = vunpack.c.h.b16 %v7817
        %v8154 = vunpack.c.l.b16 %v7818
        %v8155 = vunpack.c.h.b16 %v7818
        %v8156 = vunpack.c.l.b16 %v7819
        %v8157 = vunpack.c.h.b16 %v7819
        %v8158 = vunpack.c.l.b16 %v7820
        %v8159 = vunpack.c.h.b16 %v7820
        %v8160 = vunpack.c.l.b16 %v7821
        %v8161 = vunpack.c.h.b16 %v7821
        %v8162 = vunpack.c.l.b16 %v7822
        %v8163 = vunpack.c.h.b16 %v7822
        %v8164 = vunpack.c.l.b16 %v7823
        %v8165 = vunpack.c.h.b16 %v7823
        %v8166 = vunpack.c.l.b16 %v7824
        %v8167 = vunpack.c.h.b16 %v7824
        %v8168 = vunpack.c.l.b16 %v7825
        %v8169 = vunpack.c.h.b16 %v7825
        %v8170 = vunpack.c.l.b16 %v7826
        %v8171 = vunpack.c.h.b16 %v7826
        %v8172 = vunpack.c.l.b16 %v7827
        %v8173 = vunpack.c.h.b16 %v7827
        %v8174 = vunpack.c.l.b16 %v7828
        %v8175 = vunpack.c.h.b16 %v7828
        %v8176 = vunpack.c.l.b16 %v7829
        %v8177 = vunpack.c.h.b16 %v7829
        %v8178 = vunpack.c.l.b16 %v7830
        %v8179 = vunpack.c.h.b16 %v7830
        %v8180 = vunpack.c.l.b16 %v7831
        %v8181 = vunpack.c.h.b16 %v7831
        %v8182 = vunpack.c.l.b16 %v7832
        %v8183 = vunpack.c.h.b16 %v7832
        %v8184 = vunpack.c.l.b16 %v7833
        %v8185 = vunpack.c.h.b16 %v7833
        %v8186 = vunpack.c.l.b16 %v7834
        %v8187 = vunpack.c.h.b16 %v7834
        %v8188 = vunpack.c.l.b16 %v7835
        %v8189 = vunpack.c.h.b16 %v7835
        %v8190 = vunpack.c.l.b16 %v7836
        %v8191 = vunpack.c.h.b16 %v7836
        %v8192 = vunpack.c.l.b16 %v7837
        %v8193 = vunpack.c.h.b16 %v7837
        %v8194 = vunpack.c.l.b16 %v7838
        %v8195 = vunpack.c.h.b16 %v7838
        %v8196 = vunpack.c.l.b16 %v7839
        %v8197 = vunpack.c.h.b16 %v7839
        %v8198 = vunpack.c.l.b16 %v7840
        %v8199 = vunpack.c.h.b16 %v7840
        %v8200 = vunpack.c.l.b16 %v7841
        %v8201 = vunpack.c.h.b16 %v7841
        %v8202 = vunpack.c.l.b16 %v7842
        %v8203 = vunpack.c.h.b16 %v7842
        %v8204 = vunpack.c.l.b16 %v7843
        %v8205 = vunpack.c.h.b16 %v7843
        %v8206 = vunpack.c.l.b16 %v7844
        %v8207 = vunpack.c.h.b16 %v7844
        %v8208 = vunpack.c.l.b16 %v7845
        %v8209 = vunpack.c.h.b16 %v7845
        %v8210 = vunpack.c.l.b16 %v7846
        %v8211 = vunpack.c.h.b16 %v7846
        %v8212 = vunpack.c.l.b16 %v7847
        %v8213 = vunpack.c.h.b16 %v7847
        %v8214 = vunpack.c.l.b16 %v7848
        %v8215 = vunpack.c.h.b16 %v7848
        %v8216 = vunpack.c.l.b16 %v7849
        %v8217 = vunpack.c.h.b16 %v7849
        %v8218 = vunpack.c.l.b16 %v7850
        %v8219 = vunpack.c.h.b16 %v7850
        %v8220 = vunpack.c.l.b16 %v7851
        %v8221 = vunpack.c.h.b16 %v7851
        %v8222 = vunpack.c.l.b16 %v7852
        %v8223 = vunpack.c.h.b16 %v7852
        %v8224 = vunpack.c.l.b16 %v7853
        %v8225 = vunpack.c.h.b16 %v7853
        %v8226 = vunpack.c.l.b16 %v7854
        %v8227 = vunpack.c.h.b16 %v7854
        %v8228 = vunpack.c.l.b16 %v7855
        %v8229 = vunpack.c.h.b16 %v7855
        %v8230 = vunpack.c.l.b16 %v7856
        %v8231 = vunpack.c.h.b16 %v7856
        %v8232 = vunpack.c.l.b16 %v7857
        %v8233 = vunpack.c.h.b16 %v7857
        %v8234 = vunpack.c.l.b16 %v7858
        %v8235 = vunpack.c.h.b16 %v7858
        %v8236 = vunpack.c.l.b16 %v7859
        %v8237 = vunpack.c.h.b16 %v7859
        %v8238 = vunpack.c.l.b16 %v7860
        %v8239 = vunpack.c.h.b16 %v7860
        %v8240 = vunpack.c.l.b16 %v7861
        %v8241 = vunpack.c.h.b16 %v7861
        %v8242 = vunpack.c.l.b16 %v7862
        %v8243 = vunpack.c.h.b16 %v7862
        %v8244 = vunpack.c.l.b16 %v7863
        %v8245 = vunpack.c.h.b16 %v7863
        %v8246 = vunpack.c.l.b16 %v7864
        %v8247 = vunpack.c.h.b16 %v7864
        %v8248 = vunpack.c.l.b16 %v7865
        %v8249 = vunpack.c.h.b16 %v7865
        %v8250 = vunpack.c.l.b16 %v7866
        %v8251 = vunpack.c.h.b16 %v7866
        %v8252 = vpack.c.b16 %v8000, %v7996
        %v8253 = vpack.c.b16 %v8001, %v7997
        %v8254 = vpack.c.b16 %v8002, %v7998
        %v8255 = vpack.c.b16 %v8003, %v7999
        %v8256 = vpack.c.b16 %v8008, %v8004
        %v8257 = vpack.c.b16 %v8009, %v8005
        %v8258 = vpack.c.b16 %v8010, %v8006
        %v8259 = vpack.c.b16 %v8011, %v8007
        %v8260 = vpack.c.b16 %v8016, %v8012
        %v8261 = vpack.c.b16 %v8017, %v8013
        %v8262 = vpack.c.b16 %v8018, %v8014
        %v8263 = vpack.c.b16 %v8019, %v8015
        %v8264 = vpack.c.b16 %v8024, %v8020
        %v8265 = vpack.c.b16 %v8025, %v8021
        %v8266 = vpack.c.b16 %v8026, %v8022
        %v8267 = vpack.c.b16 %v8027, %v8023
        %v8268 = vpack.c.b16 %v8032, %v8028
        %v8269 = vpack.c.b16 %v8033, %v8029
        %v8270 = vpack.c.b16 %v8034, %v8030
        %v8271 = vpack.c.b16 %v8035, %v8031
        %v8272 = vpack.c.b16 %v8040, %v8036
        %v8273 = vpack.c.b16 %v8041, %v8037
        %v8274 = vpack.c.b16 %v8042, %v8038
        %v8275 = vpack.c.b16 %v8043, %v8039
        %v8276 = vpack.c.b16 %v8048, %v8044
        %v8277 = vpack.c.b16 %v8049, %v8045
        %v8278 = vpack.c.b16 %v8050, %v8046
        %v8279 = vpack.c.b16 %v8051, %v8047
        %v8280 = vpack.c.b16 %v8056, %v8052
        %v8281 = vpack.c.b16 %v8057, %v8053
        %v8282 = vpack.c.b16 %v8058, %v8054
        %v8283 = vpack.c.b16 %v8059, %v8055
        %v8284 = vpack.c.b16 %v8064, %v8060
        %v8285 = vpack.c.b16 %v8065, %v8061
        %v8286 = vpack.c.b16 %v8066, %v8062
        %v8287 = vpack.c.b16 %v8067, %v8063
        %v8288 = vpack.c.b16 %v8072, %v8068
        %v8289 = vpack.c.b16 %v8073, %v8069
        %v8290 = vpack.c.b16 %v8074, %v8070
        %v8291 = vpack.c.b16 %v8075, %v8071
        %v8292 = vpack.c.b16 %v8080, %v8076
        %v8293 = vpack.c.b16 %v8081, %v8077
        %v8294 = vpack.c.b16 %v8082, %v8078
        %v8295 = vpack.c.b16 %v8083, %v8079
        %v8296 = vpack.c.b16 %v8088, %v8084
        %v8297 = vpack.c.b16 %v8089, %v8085
        %v8298 = vpack.c.b16 %v8090, %v8086
        %v8299 = vpack.c.b16 %v8091, %v8087
        %v8300 = vpack.c.b16 %v8096, %v8092
        %v8301 = vpack.c.b16 %v8097, %v8093
        %v8302 = vpack.c.b16 %v8098, %v8094
        %v8303 = vpack.c.b16 %v8099, %v8095
        %v8304 = vpack.c.b16 %v8104, %v8100
        %v8305 = vpack.c.b16 %v8105, %v8101
        %v8306 = vpack.c.b16 %v8106, %v8102
        %v8307 = vpack.c.b16 %v8107, %v8103
        %v8308 = vpack.c.b16 %v8112, %v8108
        %v8309 = vpack.c.b16 %v8113, %v8109
        %v8310 = vpack.c.b16 %v8114, %v8110
        %v8311 = vpack.c.b16 %v8115, %v8111
        %v8312 = vpack.c.b16 %v8120, %v8116
        %v8313 = vpack.c.b16 %v8121, %v8117
        %v8314 = vpack.c.b16 %v8122, %v8118
        %v8315 = vpack.c.b16 %v8123, %v8119
        %v8316 = vpack.c.b16 %v8128, %v8124
        %v8317 = vpack.c.b16 %v8129, %v8125
        %v8318 = vpack.c.b16 %v8130, %v8126
        %v8319 = vpack.c.b16 %v8131, %v8127
        %v8320 = vpack.c.b16 %v8136, %v8132
        %v8321 = vpack.c.b16 %v8137, %v8133
        %v8322 = vpack.c.b16 %v8138, %v8134
        %v8323 = vpack.c.b16 %v8139, %v8135
        %v8324 = vpack.c.b16 %v8144, %v8140
        %v8325 = vpack.c.b16 %v8145, %v8141
        %v8326 = vpack.c.b16 %v8146, %v8142
        %v8327 = vpack.c.b16 %v8147, %v8143
        %v8328 = vpack.c.b16 %v8152, %v8148
        %v8329 = vpack.c.b16 %v8153, %v8149
        %v8330 = vpack.c.b16 %v8154, %v8150
        %v8331 = vpack.c.b16 %v8155, %v8151
        %v8332 = vpack.c.b16 %v8160, %v8156
        %v8333 = vpack.c.b16 %v8161, %v8157
        %v8334 = vpack.c.b16 %v8162, %v8158
        %v8335 = vpack.c.b16 %v8163, %v8159
        %v8336 = vpack.c.b16 %v8168, %v8164
        %v8337 = vpack.c.b16 %v8169, %v8165
        %v8338 = vpack.c.b16 %v8170, %v8166
        %v8339 = vpack.c.b16 %v8171, %v8167
        %v8340 = vpack.c.b16 %v8176, %v8172
        %v8341 = vpack.c.b16 %v8177, %v8173
        %v8342 = vpack.c.b16 %v8178, %v8174
        %v8343 = vpack.c.b16 %v8179, %v8175
        %v8344 = vpack.c.b16 %v8184, %v8180
        %v8345 = vpack.c.b16 %v8185, %v8181
        %v8346 = vpack.c.b16 %v8186, %v8182
        %v8347 = vpack.c.b16 %v8187, %v8183
        %v8348 = vpack.c.b16 %v8192, %v8188
        %v8349 = vpack.c.b16 %v8193, %v8189
        %v8350 = vpack.c.b16 %v8194, %v8190
        %v8351 = vpack.c.b16 %v8195, %v8191
        %v8352 = vpack.c.b16 %v8200, %v8196
        %v8353 = vpack.c.b16 %v8201, %v8197
        %v8354 = vpack.c.b16 %v8202, %v8198
        %v8355 = vpack.c.b16 %v8203, %v8199
        %v8356 = vpack.c.b16 %v8208, %v8204
        %v8357 = vpack.c.b16 %v8209, %v8205
        %v8358 = vpack.c.b16 %v8210, %v8206
        %v8359 = vpack.c.b16 %v8211, %v8207
        %v8360 = vpack.c.b16 %v8216, %v8212
        %v8361 = vpack.c.b16 %v8217, %v8213
        %v8362 = vpack.c.b16 %v8218, %v8214
        %v8363 = vpack.c.b16 %v8219, %v8215
        %v8364 = vpack.c.b16 %v8224, %v8220
        %v8365 = vpack.c.b16 %v8225, %v8221
        %v8366 = vpack.c.b16 %v8226, %v8222
        %v8367 = vpack.c.b16 %v8227, %v8223
        %v8368 = vpack.c.b16 %v8232, %v8228
        %v8369 = vpack.c.b16 %v8233, %v8229
        %v8370 = vpack.c.b16 %v8234, %v8230
        %v8371 = vpack.c.b16 %v8235, %v8231
        %v8372 = vpack.c.b16 %v8240, %v8236
        %v8373 = vpack.c.b16 %v8241, %v8237
        %v8374 = vpack.c.b16 %v8242, %v8238
        %v8375 = vpack.c.b16 %v8243, %v8239
        %v8376 = vpack.c.b16 %v8248, %v8244
        %v8377 = vpack.c.b16 %v8249, %v8245
        %v8378 = vpack.c.b16 %v8250, %v8246
        %v8379 = vpack.c.b16 %v8251, %v8247
        %v8509 = vlaneseq
        %v8510 = vshrl.u32 %v8509, 7
        %v8511 = vsub.s32 0, %v8510
        %v8512 = vrot.slane %v7867, %v8511
        %v8513 = vlaneseq
        %v8514 = vshrl.u32 %v8513, 7
        %v8515 = vsub.s32 1, %v8514
        %v8516 = vrot.slane %v7867, %v8515
        %v8517 = vlaneseq
        %v8518 = vshrl.u32 %v8517, 7
        %v8519 = vsub.s32 2, %v8518
        %v8520 = vrot.slane %v7867, %v8519
        %v8521 = vlaneseq
        %v8522 = vshrl.u32 %v8521, 7
        %v8523 = vsub.s32 3, %v8522
        %v8524 = vrot.slane %v7867, %v8523
        %8529 = vmatprep.subr.bf16.mxu0 %v8253
        %8530 = vmatpush1.bf16.msra.mxu0 %v8252
        %8531 = vmatprep.subr.bf16.mxu0 %v8257
        %8532 = vmatpush1.bf16.msra.mxu0 %v8256
        %8533 = vmatprep.subr.bf16.mxu0 %v8261
        %8534 = vmatpush1.bf16.msra.mxu0 %v8260
        %8535 = vmatprep.subr.bf16.mxu0 %v8265
        %8536 = vmatpush1.bf16.msra.mxu0 %v8264
        %8537 = vmatprep.subr.bf16.mxu0 %v8269
        %8538 = vmatpush1.bf16.msra.mxu0 %v8268
        %8539 = vmatprep.subr.bf16.mxu0 %v8273
        %8540 = vmatpush1.bf16.msra.mxu0 %v8272
        %8541 = vmatprep.subr.bf16.mxu0 %v8277
        %8542 = vmatpush1.bf16.msra.mxu0 %v8276
        %8543 = vmatprep.subr.bf16.mxu0 %v8281
        %8544 = vmatpush1.bf16.msra.mxu0 %v8280
        %8545 = vmatprep.subr.bf16.mxu0 %v8285
        %8546 = vmatpush1.bf16.msra.mxu0 %v8284
        %8547 = vmatprep.subr.bf16.mxu0 %v8289
        %8548 = vmatpush1.bf16.msra.mxu0 %v8288
        %8549 = vmatprep.subr.bf16.mxu0 %v8293
        %8550 = vmatpush1.bf16.msra.mxu0 %v8292
        %8551 = vmatprep.subr.bf16.mxu0 %v8297
        %8552 = vmatpush1.bf16.msra.mxu0 %v8296
        %8553 = vmatprep.subr.bf16.mxu0 %v8301
        %8554 = vmatpush1.bf16.msra.mxu0 %v8300
        %8555 = vmatprep.subr.bf16.mxu0 %v8305
        %8556 = vmatpush1.bf16.msra.mxu0 %v8304
        %8557 = vmatprep.subr.bf16.mxu0 %v8309
        %8558 = vmatpush1.bf16.msra.mxu0 %v8308
        %8559 = vmatprep.subr.bf16.mxu0 %v8313
        %8560 = vmatpush1.bf16.msra.mxu0 %v8312
        %8561 = vmatprep.mubr.bf16.mxu0 %v7736
        %8562 = vmatmul.mubr.bf16.gmra.mrb[0].mxu0 %v7735
        %v8563 = vpop.f32.mrb[0].mxu0
        %v8564 = vadd.f32 %v8512, %v8563
        %v8565 = vpop.f32.mrb[0].mxu0
        %v8566 = vadd.f32 %v8516, %v8565
        %v8567 = vpop.f32.mrb[0].mxu0
        %v8568 = vpop.f32.mrb[0].mxu0
        %8569 = vdwg.mxu0
        %8570 = vmatprep.subr.bf16.mxu0 %v8317
        %8571 = vmatpush1.bf16.msra.mxu0 %v8316
        %8572 = vmatprep.subr.bf16.mxu0 %v8321
        %8573 = vmatpush1.bf16.msra.mxu0 %v8320
        %8574 = vmatprep.subr.bf16.mxu0 %v8325
        %8575 = vmatpush1.bf16.msra.mxu0 %v8324
        %8576 = vmatprep.subr.bf16.mxu0 %v8329
        %8577 = vmatpush1.bf16.msra.mxu0 %v8328
        %8578 = vmatprep.subr.bf16.mxu0 %v8333
        %8579 = vmatpush1.bf16.msra.mxu0 %v8332
        %8580 = vmatprep.subr.bf16.mxu0 %v8337
        %8581 = vmatpush1.bf16.msra.mxu0 %v8336
        %8582 = vmatprep.subr.bf16.mxu0 %v8341
        %8583 = vmatpush1.bf16.msra.mxu0 %v8340
        %8584 = vmatprep.subr.bf16.mxu0 %v8345
        %8585 = vmatpush1.bf16.msra.mxu0 %v8344
        %8586 = vmatprep.subr.bf16.mxu0 %v8349
        %8587 = vmatpush1.bf16.msra.mxu0 %v8348
        %8588 = vmatprep.subr.bf16.mxu0 %v8353
        %8589 = vmatpush1.bf16.msra.mxu0 %v8352
        %8590 = vmatprep.subr.bf16.mxu0 %v8357
        %8591 = vmatpush1.bf16.msra.mxu0 %v8356
        %8592 = vmatprep.subr.bf16.mxu0 %v8361
        %8593 = vmatpush1.bf16.msra.mxu0 %v8360
        %8594 = vmatprep.subr.bf16.mxu0 %v8365
        %8595 = vmatpush1.bf16.msra.mxu0 %v8364
        %8596 = vmatprep.subr.bf16.mxu0 %v8369
        %8597 = vmatpush1.bf16.msra.mxu0 %v8368
        %8598 = vmatprep.subr.bf16.mxu0 %v8373
        %8599 = vmatpush1.bf16.msra.mxu0 %v8372
        %8600 = vmatprep.subr.bf16.mxu0 %v8377
        %8601 = vmatpush1.bf16.msra.mxu0 %v8376
        %8602 = vmatprep.mubr.bf16.mxu0 %v7738
        %8603 = vmatmul.mubr.bf16.gmra.mrb[0].mxu0 %v7737
        %v8604 = vpop.f32.mrb[0].mxu0
        %v8605 = vadd.f32 %v8564, %v8604
        %v8606 = vpop.f32.mrb[0].mxu0
        %v8607 = vadd.f32 %v8566, %v8606
        %v8608 = vpop.f32.mrb[0].mxu0
        %v8609 = vpop.f32.mrb[0].mxu0
        %8610 = vdwg.mxu0
        %8611 = vmatprep.subr.bf16.mxu0 %v8255
        %8612 = vmatpush1.bf16.msra.mxu0 %v8254
        %8613 = vmatprep.subr.bf16.mxu0 %v8259
        %8614 = vmatpush1.bf16.msra.mxu0 %v8258
        %8615 = vmatprep.subr.bf16.mxu0 %v8263
        %8616 = vmatpush1.bf16.msra.mxu0 %v8262
        %8617 = vmatprep.subr.bf16.mxu0 %v8267
        %8618 = vmatpush1.bf16.msra.mxu0 %v8266
        %8619 = vmatprep.subr.bf16.mxu0 %v8271
        %8620 = vmatpush1.bf16.msra.mxu0 %v8270
        %8621 = vmatprep.subr.bf16.mxu0 %v8275
        %8622 = vmatpush1.bf16.msra.mxu0 %v8274
        %8623 = vmatprep.subr.bf16.mxu0 %v8279
        %8624 = vmatpush1.bf16.msra.mxu0 %v8278
        %8625 = vmatprep.subr.bf16.mxu0 %v8283
        %8626 = vmatpush1.bf16.msra.mxu0 %v8282
        %8627 = vmatprep.subr.bf16.mxu0 %v8287
        %8628 = vmatpush1.bf16.msra.mxu0 %v8286
        %8629 = vmatprep.subr.bf16.mxu0 %v8291
        %8630 = vmatpush1.bf16.msra.mxu0 %v8290
        %8631 = vmatprep.subr.bf16.mxu0 %v8295
        %8632 = vmatpush1.bf16.msra.mxu0 %v8294
        %8633 = vmatprep.subr.bf16.mxu0 %v8299
        %8634 = vmatpush1.bf16.msra.mxu0 %v8298
        %8635 = vmatprep.subr.bf16.mxu0 %v8303
        %8636 = vmatpush1.bf16.msra.mxu0 %v8302
        %8637 = vmatprep.subr.bf16.mxu0 %v8307
        %8638 = vmatpush1.bf16.msra.mxu0 %v8306
        %8639 = vmatprep.subr.bf16.mxu0 %v8311
        %8640 = vmatpush1.bf16.msra.mxu0 %v8310
        %8641 = vmatprep.subr.bf16.mxu0 %v8315
        %8642 = vmatpush1.bf16.msra.mxu0 %v8314
        %8643 = vmatprep.mubr.bf16.mxu0 %v7736
        %8644 = vmatmul.mubr.bf16.gmra.mrb[0].mxu0 %v7735
        %v8645 = vpop.f32.mrb[0].mxu0
        %v8646 = vadd.f32 %v8520, %v8645
        %v8647 = vpop.f32.mrb[0].mxu0
        %v8648 = vadd.f32 %v8524, %v8647
        %v8649 = vpop.f32.mrb[0].mxu0
        %v8650 = vpop.f32.mrb[0].mxu0
        %8651 = vdwg.mxu0
        %8652 = vmatprep.subr.bf16.mxu0 %v8319
        %8653 = vmatpush1.bf16.msra.mxu0 %v8318
        %8654 = vmatprep.subr.bf16.mxu0 %v8323
        %8655 = vmatpush1.bf16.msra.mxu0 %v8322
        %8656 = vmatprep.subr.bf16.mxu0 %v8327
        %8657 = vmatpush1.bf16.msra.mxu0 %v8326
        %8658 = vmatprep.subr.bf16.mxu0 %v8331
        %8659 = vmatpush1.bf16.msra.mxu0 %v8330
        %8660 = vmatprep.subr.bf16.mxu0 %v8335
        %8661 = vmatpush1.bf16.msra.mxu0 %v8334
        %8662 = vmatprep.subr.bf16.mxu0 %v8339
        %8663 = vmatpush1.bf16.msra.mxu0 %v8338
        %8664 = vmatprep.subr.bf16.mxu0 %v8343
        %8665 = vmatpush1.bf16.msra.mxu0 %v8342
        %8666 = vmatprep.subr.bf16.mxu0 %v8347
        %8667 = vmatpush1.bf16.msra.mxu0 %v8346
        %8668 = vmatprep.subr.bf16.mxu0 %v8351
        %8669 = vmatpush1.bf16.msra.mxu0 %v8350
        %8670 = vmatprep.subr.bf16.mxu0 %v8355
        %8671 = vmatpush1.bf16.msra.mxu0 %v8354
        %8672 = vmatprep.subr.bf16.mxu0 %v8359
        %8673 = vmatpush1.bf16.msra.mxu0 %v8358
        %8674 = vmatprep.subr.bf16.mxu0 %v8363
        %8675 = vmatpush1.bf16.msra.mxu0 %v8362
        %8676 = vmatprep.subr.bf16.mxu0 %v8367
        %8677 = vmatpush1.bf16.msra.mxu0 %v8366
        %8678 = vmatprep.subr.bf16.mxu0 %v8371
        %8679 = vmatpush1.bf16.msra.mxu0 %v8370
        %8680 = vmatprep.subr.bf16.mxu0 %v8375
        %8681 = vmatpush1.bf16.msra.mxu0 %v8374
        %8682 = vmatprep.subr.bf16.mxu0 %v8379
        %8683 = vmatpush1.bf16.msra.mxu0 %v8378
        %8684 = vmatprep.mubr.bf16.mxu0 %v7738
        %8685 = vmatmul.mubr.bf16.gmra.mrb[0].mxu0 %v7737
        %v8686 = vpop.f32.mrb[0].mxu0
        %v8687 = vadd.f32 %v8646, %v8686
        %v8688 = vpop.f32.mrb[0].mxu0
        %v8689 = vadd.f32 %v8648, %v8688
        %v8690 = vpop.f32.mrb[0].mxu0
        %v8691 = vpop.f32.mrb[0].mxu0
        %8692 = vdwg.mxu0
        %v8693 = vmax.f32 %v8605, 0.0
        %v8694 = vmax.f32 %v8607, 0.0
        %v8695 = vmax.f32 %v8687, 0.0
        %v8696 = vmax.f32 %v8689, 0.0
        %v8697 = vpack.c.bf16 %v8693, %v8693
        %v8698 = vpack.c.bf16 %v8694, %v8694
        %v8699 = vpack.c.bf16 %v8695, %v8695
        %v8700 = vpack.c.bf16 %v8696, %v8696
        %v8701 = vld [vmem:[%s12] sm:$0xf]
        %v8702 = vld [vmem:[%s12 + $0x4] sm:$0xf]
        %v8703 = vld [vmem:[%s12 + $0x8] sm:$0xf]
        %v8704 = vld [vmem:[%s12 + $0xc] sm:$0xf]
        %v8705 = vld [vmem:[%s12 + $0x10] sm:$0xf]
        %v8706 = vld [vmem:[%s12 + $0x14] sm:$0xf]
        %v8707 = vld [vmem:[%s12 + $0x18] sm:$0xf]
        %v8708 = vld [vmem:[%s12 + $0x1c] sm:$0xf]
        %v8709 = vld [vmem:[%s12 + $0x20] sm:$0xf]
        %v8710 = vld [vmem:[%s12 + $0x24] sm:$0xf]
        %v8711 = vld [vmem:[%s12 + $0x28] sm:$0xf]
        %v8712 = vld [vmem:[%s12 + $0x2c] sm:$0xf]
        %v8713 = vld [vmem:[%s12 + $0x30] sm:$0xf]
        %v8714 = vld [vmem:[%s12 + $0x34] sm:$0xf]
        %v8715 = vld [vmem:[%s12 + $0x38] sm:$0xf]
        %v8716 = vld [vmem:[%s12 + $0x3c] sm:$0xf]
        %v8717 = vld [vmem:[%s12 + $0x40] sm:$0xf]
        %v8718 = vld [vmem:[%s12 + $0x44] sm:$0xf]
        %v8719 = vld [vmem:[%s12 + $0x48] sm:$0xf]
        %v8720 = vld [vmem:[%s12 + $0x4c] sm:$0xf]
        %v8721 = vld [vmem:[%s12 + $0x50] sm:$0xf]
        %v8722 = vld [vmem:[%s12 + $0x54] sm:$0xf]
        %v8723 = vld [vmem:[%s12 + $0x58] sm:$0xf]
        %v8724 = vld [vmem:[%s12 + $0x5c] sm:$0xf]
        %v8725 = vld [vmem:[%s12 + $0x60] sm:$0xf]
        %v8726 = vld [vmem:[%s12 + $0x64] sm:$0xf]
        %v8727 = vld [vmem:[%s12 + $0x68] sm:$0xf]
        %v8728 = vld [vmem:[%s12 + $0x6c] sm:$0xf]
        %v8729 = vld [vmem:[%s12 + $0x70] sm:$0xf]
        %v8730 = vld [vmem:[%s12 + $0x74] sm:$0xf]
        %v8731 = vld [vmem:[%s12 + $0x78] sm:$0xf]
        %v8732 = vld [vmem:[%s12 + $0x7c] sm:$0xf]
        %v8733 = vld [vmem:[%s12 + $0x80] sm:$0xf]
        %v8734 = vld [vmem:[%s12 + $0x84] sm:$0xf]
        %v8735 = vld [vmem:[%s12 + $0x88] sm:$0xf]
        %v8736 = vld [vmem:[%s12 + $0x8c] sm:$0xf]
        %v8737 = vld [vmem:[%s12 + $0x90] sm:$0xf]
        %v8738 = vld [vmem:[%s12 + $0x94] sm:$0xf]
        %v8739 = vld [vmem:[%s12 + $0x98] sm:$0xf]
        %v8740 = vld [vmem:[%s12 + $0x9c] sm:$0xf]
        %v8741 = vld [vmem:[%s12 + $0xa0] sm:$0xf]
        %v8742 = vld [vmem:[%s12 + $0xa4] sm:$0xf]
        %v8743 = vld [vmem:[%s12 + $0xa8] sm:$0xf]
        %v8744 = vld [vmem:[%s12 + $0xac] sm:$0xf]
        %v8745 = vld [vmem:[%s12 + $0xb0] sm:$0xf]
        %v8746 = vld [vmem:[%s12 + $0xb4] sm:$0xf]
        %v8747 = vld [vmem:[%s12 + $0xb8] sm:$0xf]
        %v8748 = vld [vmem:[%s12 + $0xbc] sm:$0xf]
        %v8749 = vld [vmem:[%s12 + $0xc0] sm:$0xf]
        %v8750 = vld [vmem:[%s12 + $0xc4] sm:$0xf]
        %v8751 = vld [vmem:[%s12 + $0xc8] sm:$0xf]
        %v8752 = vld [vmem:[%s12 + $0xcc] sm:$0xf]
        %v8753 = vld [vmem:[%s12 + $0xd0] sm:$0xf]
        %v8754 = vld [vmem:[%s12 + $0xd4] sm:$0xf]
        %v8755 = vld [vmem:[%s12 + $0xd8] sm:$0xf]
        %v8756 = vld [vmem:[%s12 + $0xdc] sm:$0xf]
        %v8757 = vld [vmem:[%s12 + $0xe0] sm:$0xf]
        %v8758 = vld [vmem:[%s12 + $0xe4] sm:$0xf]
        %v8759 = vld [vmem:[%s12 + $0xe8] sm:$0xf]
        %v8760 = vld [vmem:[%s12 + $0xec] sm:$0xf]
        %v8761 = vld [vmem:[%s12 + $0xf0] sm:$0xf]
        %v8762 = vld [vmem:[%s12 + $0xf4] sm:$0xf]
        %v8763 = vld [vmem:[%s12 + $0xf8] sm:$0xf]
        %v8764 = vld [vmem:[%s12 + $0xfc] sm:$0xf]
        %v8765 = vld [vmem:[%s13] sm:$0x1]
        %v8830 = vunpack.c.l.b16 %v8701
        %v8831 = vunpack.c.l.b16 %v8702
        %v8832 = vunpack.c.l.b16 %v8703
        %v8833 = vunpack.c.l.b16 %v8704
        %v8834 = vunpack.c.l.b16 %v8705
        %v8835 = vunpack.c.l.b16 %v8706
        %v8836 = vunpack.c.l.b16 %v8707
        %v8837 = vunpack.c.l.b16 %v8708
        %v8838 = vunpack.c.l.b16 %v8709
        %v8839 = vunpack.c.l.b16 %v8710
        %v8840 = vunpack.c.l.b16 %v8711
        %v8841 = vunpack.c.l.b16 %v8712
        %v8842 = vunpack.c.l.b16 %v8713
        %v8843 = vunpack.c.l.b16 %v8714
        %v8844 = vunpack.c.l.b16 %v8715
        %v8845 = vunpack.c.l.b16 %v8716
        %v8846 = vunpack.c.l.b16 %v8717
        %v8847 = vunpack.c.l.b16 %v8718
        %v8848 = vunpack.c.l.b16 %v8719
        %v8849 = vunpack.c.l.b16 %v8720
        %v8850 = vunpack.c.l.b16 %v8721
        %v8851 = vunpack.c.l.b16 %v8722
        %v8852 = vunpack.c.l.b16 %v8723
        %v8853 = vunpack.c.l.b16 %v8724
        %v8854 = vunpack.c.l.b16 %v8725
        %v8855 = vunpack.c.l.b16 %v8726
        %v8856 = vunpack.c.l.b16 %v8727
        %v8857 = vunpack.c.l.b16 %v8728
        %v8858 = vunpack.c.l.b16 %v8729
        %v8859 = vunpack.c.l.b16 %v8730
        %v8860 = vunpack.c.l.b16 %v8731
        %v8861 = vunpack.c.l.b16 %v8732
        %v8862 = vunpack.c.l.b16 %v8733
        %v8863 = vunpack.c.l.b16 %v8734
        %v8864 = vunpack.c.l.b16 %v8735
        %v8865 = vunpack.c.l.b16 %v8736
        %v8866 = vunpack.c.l.b16 %v8737
        %v8867 = vunpack.c.l.b16 %v8738
        %v8868 = vunpack.c.l.b16 %v8739
        %v8869 = vunpack.c.l.b16 %v8740
        %v8870 = vunpack.c.l.b16 %v8741
        %v8871 = vunpack.c.l.b16 %v8742
        %v8872 = vunpack.c.l.b16 %v8743
        %v8873 = vunpack.c.l.b16 %v8744
        %v8874 = vunpack.c.l.b16 %v8745
        %v8875 = vunpack.c.l.b16 %v8746
        %v8876 = vunpack.c.l.b16 %v8747
        %v8877 = vunpack.c.l.b16 %v8748
        %v8878 = vunpack.c.l.b16 %v8749
        %v8879 = vunpack.c.l.b16 %v8750
        %v8880 = vunpack.c.l.b16 %v8751
        %v8881 = vunpack.c.l.b16 %v8752
        %v8882 = vunpack.c.l.b16 %v8753
        %v8883 = vunpack.c.l.b16 %v8754
        %v8884 = vunpack.c.l.b16 %v8755
        %v8885 = vunpack.c.l.b16 %v8756
        %v8886 = vunpack.c.l.b16 %v8757
        %v8887 = vunpack.c.l.b16 %v8758
        %v8888 = vunpack.c.l.b16 %v8759
        %v8889 = vunpack.c.l.b16 %v8760
        %v8890 = vunpack.c.l.b16 %v8761
        %v8891 = vunpack.c.l.b16 %v8762
        %v8892 = vunpack.c.l.b16 %v8763
        %v8893 = vunpack.c.l.b16 %v8764
        %v8894 = vpack.c.b16 %v8831, %v8830
        %v8895 = vpack.c.b16 %v8833, %v8832
        %v8896 = vpack.c.b16 %v8835, %v8834
        %v8897 = vpack.c.b16 %v8837, %v8836
        %v8898 = vpack.c.b16 %v8839, %v8838
        %v8899 = vpack.c.b16 %v8841, %v8840
        %v8900 = vpack.c.b16 %v8843, %v8842
        %v8901 = vpack.c.b16 %v8845, %v8844
        %v8902 = vpack.c.b16 %v8847, %v8846
        %v8903 = vpack.c.b16 %v8849, %v8848
        %v8904 = vpack.c.b16 %v8851, %v8850
        %v8905 = vpack.c.b16 %v8853, %v8852
        %v8906 = vpack.c.b16 %v8855, %v8854
        %v8907 = vpack.c.b16 %v8857, %v8856
        %v8908 = vpack.c.b16 %v8859, %v8858
        %v8909 = vpack.c.b16 %v8861, %v8860
        %v8910 = vpack.c.b16 %v8863, %v8862
        %v8911 = vpack.c.b16 %v8865, %v8864
        %v8912 = vpack.c.b16 %v8867, %v8866
        %v8913 = vpack.c.b16 %v8869, %v8868
        %v8914 = vpack.c.b16 %v8871, %v8870
        %v8915 = vpack.c.b16 %v8873, %v8872
        %v8916 = vpack.c.b16 %v8875, %v8874
        %v8917 = vpack.c.b16 %v8877, %v8876
        %v8918 = vpack.c.b16 %v8879, %v8878
        %v8919 = vpack.c.b16 %v8881, %v8880
        %v8920 = vpack.c.b16 %v8883, %v8882
        %v8921 = vpack.c.b16 %v8885, %v8884
        %v8922 = vpack.c.b16 %v8887, %v8886
        %v8923 = vpack.c.b16 %v8889, %v8888
        %v8924 = vpack.c.b16 %v8891, %v8890
        %v8925 = vpack.c.b16 %v8893, %v8892
        %8958 = vmatprep.subr.bf16.mxu0 0
        %8959 = vmatpush1.bf16.msra.mxu0 %v8894
        %8960 = vmatprep.subr.bf16.mxu0 0
        %8961 = vmatpush1.bf16.msra.mxu0 %v8895
        %8962 = vmatprep.subr.bf16.mxu0 0
        %8963 = vmatpush1.bf16.msra.mxu0 %v8896
        %8964 = vmatprep.subr.bf16.mxu0 0
        %8965 = vmatpush1.bf16.msra.mxu0 %v8897
        %8966 = vmatprep.subr.bf16.mxu0 0
        %8967 = vmatpush1.bf16.msra.mxu0 %v8898
        %8968 = vmatprep.subr.bf16.mxu0 0
        %8969 = vmatpush1.bf16.msra.mxu0 %v8899
        %8970 = vmatprep.subr.bf16.mxu0 0
        %8971 = vmatpush1.bf16.msra.mxu0 %v8900
        %8972 = vmatprep.subr.bf16.mxu0 0
        %8973 = vmatpush1.bf16.msra.mxu0 %v8901
        %8974 = vmatprep.subr.bf16.mxu0 0
        %8975 = vmatpush1.bf16.msra.mxu0 %v8902
        %8976 = vmatprep.subr.bf16.mxu0 0
        %8977 = vmatpush1.bf16.msra.mxu0 %v8903
        %8978 = vmatprep.subr.bf16.mxu0 0
        %8979 = vmatpush1.bf16.msra.mxu0 %v8904
        %8980 = vmatprep.subr.bf16.mxu0 0
        %8981 = vmatpush1.bf16.msra.mxu0 %v8905
        %8982 = vmatprep.subr.bf16.mxu0 0
        %8983 = vmatpush1.bf16.msra.mxu0 %v8906
        %8984 = vmatprep.subr.bf16.mxu0 0
        %8985 = vmatpush1.bf16.msra.mxu0 %v8907
        %8986 = vmatprep.subr.bf16.mxu0 0
        %8987 = vmatpush1.bf16.msra.mxu0 %v8908
        %8988 = vmatprep.subr.bf16.mxu0 0
        %8989 = vmatpush1.bf16.msra.mxu0 %v8909
        %8990 = vmatprep.mubr.bf16.mxu0 %v8698
        %8991 = vmatmul.mubr.bf16.gmra.mrb[0].mxu0 %v8697
        %v8992 = vpop.f32.mrb[0].mxu0
        %v8993 = vadd.f32 %v8765, %v8992
        %v8994 = vpop.f32.mrb[0].mxu0
        %v8995 = vpop.f32.mrb[0].mxu0
        %v8996 = vpop.f32.mrb[0].mxu0
        %8997 = vdwg.mxu0
        %8998 = vmatprep.subr.bf16.mxu0 0
        %8999 = vmatpush1.bf16.msra.mxu0 %v8910
        %9000 = vmatprep.subr.bf16.mxu0 0
        %9001 = vmatpush1.bf16.msra.mxu0 %v8911
        %9002 = vmatprep.subr.bf16.mxu0 0
        %9003 = vmatpush1.bf16.msra.mxu0 %v8912
        %9004 = vmatprep.subr.bf16.mxu0 0
        %9005 = vmatpush1.bf16.msra.mxu0 %v8913
        %9006 = vmatprep.subr.bf16.mxu0 0
        %9007 = vmatpush1.bf16.msra.mxu0 %v8914
        %9008 = vmatprep.subr.bf16.mxu0 0
        %9009 = vmatpush1.bf16.msra.mxu0 %v8915
        %9010 = vmatprep.subr.bf16.mxu0 0
        %9011 = vmatpush1.bf16.msra.mxu0 %v8916
        %9012 = vmatprep.subr.bf16.mxu0 0
        %9013 = vmatpush1.bf16.msra.mxu0 %v8917
        %9014 = vmatprep.subr.bf16.mxu0 0
        %9015 = vmatpush1.bf16.msra.mxu0 %v8918
        %9016 = vmatprep.subr.bf16.mxu0 0
        %9017 = vmatpush1.bf16.msra.mxu0 %v8919
        %9018 = vmatprep.subr.bf16.mxu0 0
        %9019 = vmatpush1.bf16.msra.mxu0 %v8920
        %9020 = vmatprep.subr.bf16.mxu0 0
        %9021 = vmatpush1.bf16.msra.mxu0 %v8921
        %9022 = vmatprep.subr.bf16.mxu0 0
        %9023 = vmatpush1.bf16.msra.mxu0 %v8922
        %9024 = vmatprep.subr.bf16.mxu0 0
        %9025 = vmatpush1.bf16.msra.mxu0 %v8923
        %9026 = vmatprep.subr.bf16.mxu0 0
        %9027 = vmatpush1.bf16.msra.mxu0 %v8924
        %9028 = vmatprep.subr.bf16.mxu0 0
        %9029 = vmatpush1.bf16.msra.mxu0 %v8925
        %9030 = vmatprep.mubr.bf16.mxu0 %v8700
        %9031 = vmatmul.mubr.bf16.gmra.mrb[0].mxu0 %v8699
        %v9032 = vpop.f32.mrb[0].mxu0
        %v9033 = vadd.f32 %v8993, %v9032
        %v9034 = vpop.f32.mrb[0].mxu0
        %v9035 = vpop.f32.mrb[0].mxu0
        %v9036 = vpop.f32.mrb[0].mxu0
        %9037 = vdwg.mxu0
        %9038 = vst [vmem:[%s472] sm:$0x1] %v9033
        %s9039 = sand.u32 %s336, 1
        %s9040 = scalar_lea.sflag [#allocation7], %s9039
        %s9041 = sand.u32 %s336, 1
        %s9042 = scalar_lea.vmem [#allocation8], %s9041
        // Predicated region
        $region81: #{model_forward.1} parent=75 // pred_check
          %p9043 = pneg %p346
        $region82: #{model_forward.1} parent=75 // pred_check_branch
          %9045 = sbr.rel (%p9043) target = $region84
        $region83: #{model_forward.1} parent=75 // pred_region
          %s9047 = ssub.s32 16, 16
          %9048 = vsyncadd %s9040, %s9047
          %s9049 = smul.addr %s29, 16
          %s9050 = scalar_lea.hbm %s14, %s9049
          %s9052 = sshll.u32 %s9042, 4
          %s9053 = int_to_ptr.vmem [resolvable:$true] %s9052
          %9055 = dma.vmem_to_hbm [thread:$0]  %s9053, 16, %s9050, %s9040
        $region84: #{model_forward.1} parent=75 // pred_fallthru
          _
      $region76: #{model_forward.1} parent=5 // pred_fallthru
        _
      %p9056 = scmp.le.s32.totalorder 2, %s24
      // Predicated region
      $region85: #{model_forward.1} parent=5 // pred_check
        %p9057 = pneg %p9056
      $region86: #{model_forward.1} parent=5 // pred_check_branch
        %9059 = sbr.rel (%p9057) target = $region88
      $region87: #{model_forward.1} parent=5 // pred_region
        %s9060 = ssub.s32 %s24, 2
        // Predicated region
        $region89: #{model_forward.1} parent=87 // pred_check
          %p9061 = pneg %p352
        $region90: #{model_forward.1} parent=87 // pred_check_branch
          %9063 = sbr.rel (%p9061) target = $region92
        $region91: #{model_forward.1} parent=87 // pred_region
          %s9064 = sand.u32 %s337, 1
          %s9065 = scalar_lea.sflag [#allocation7], %s9064
          %s9066 = sand.u32 %s337, 1
          %s9067 = scalar_lea.vmem [#allocation8], %s9066
          %9068 = dma.done %s9065, 16
        $region92: #{model_forward.1} parent=87 // pred_fallthru
          _
      $region88: #{model_forward.1} parent=5 // pred_fallthru
        _
    $region6: #{model_forward.1} parent=1 // loop_footer
      %s28 = sadd.s32 1, %s24
    $region7: #{model_forward.1} parent=1 // loop_footer_branch
      %23 = sbr.rel target = $region3
    $region8: #{model_forward.1} parent=1 // loop_exit
      _
    %9069 = vsyncpa [#allocation6], 1
    %s9070 = scalar_lea.sflag [#allocation6], 1
    %9071 = vsyncpa %s9070, 1
    %9072 = vsyncpa [#allocation7], 1
    %s9073 = scalar_lea.sflag [#allocation7], 1
    %9074 = vsyncpa %s9073, 1

</llo_original>
